<compile_context>
chip_gen: v7x
topology: tpu7x:2x2x1
jax: 0.10.0
libtpu: 0.0.40
codegen_flags: <defaults>
</compile_context>

<pallas_src>
import math
import jax
import jax.numpy as jnp
from jax import lax
from jax.experimental import pallas as pl
from jax.experimental.pallas import tpu as pltpu


def make_wavenet_kernel(dilations, C, K, N, T, B_tile, in_ch, out_ch, padw, compute_dtype):
    L = len(dilations)
    half = C // 2
    res_scale = math.sqrt(0.5)
    skip_scale = math.sqrt(1.0 / L)
    cdt = compute_dtype
    fma_in = in_ch <= 4        # depth-1..4 contraction: VPU FMA beats paying an MXU fill
    reduce_out = out_ch == 1   # single output row: VPU mul + sublane reduce beats MXU

    def kernel(x_ref, w_in_ref, b_in_ref, w_dil_ref, b_dil_ref,
               w_sr_ref, b_sr_ref, w_out_ref, b_out_ref, o_ref, hp_ref):
        x = x_ref[0]                                                  # (in_ch, N) f32

        # ---- conv_in (1x1 conv) ----
        if fma_in:
            h = w_in_ref[:, 0:1] * x[0:1, :]
            for i in range(1, in_ch):
                h = h + w_in_ref[:, i:i + 1] * x[i:i + 1, :]
            h = h + b_in_ref[...]                                     # (C, N) f32
        else:
            h = jnp.dot(w_in_ref[...], x,
                        preferred_element_type=jnp.float32) + b_in_ref[...]

        skip = jnp.zeros((C, N), jnp.float32)

        # TODO(synk): for deep configs (L > ~8) convert this static unroll into
        # lax.fori_loop with the dilation offsets in an SMEM table (scalar prefetch)
        # and dynamic indexing of w_dil/w_sr, so live ranges stay bounded to one layer.
        for li, d in enumerate(dilations):
            pad = d * (K - 1) // 2
            r = h
            hc = h.astype(cdt)

            # ---- dilated conv with 'same' padding ----
            # Tap k of the stacked operand lives in scratch rows [k*C, (k+1)*C).
            # Writing h at lane offset padw + pad - k*d makes the aligned read window
            # [padw, padw+N) hold exactly h[:, t - pad + k*d] for every element.  Only
            # the <= pad edge columns of each element's window (the 'same' zero padding,
            # which the uniform shift would otherwise fill with the neighbouring
            # element's samples or with stale data from an earlier layer) are zeroed,
            # so no full-scratch memset and no tap concatenate are ever needed.
            for k in range(K):
                o = pad - k * d
                rows = slice(k * C, (k + 1) * C)
                hp_ref[rows, pl.ds(padw + o, N)] = hc
                if o > 0:
                    zpad = jnp.zeros((C, o), cdt)
                    for b in range(B_tile):
                        hp_ref[rows, pl.ds(padw + b * T, o)] = zpad
                elif o < 0:
                    zpad = jnp.zeros((C, -o), cdt)
                    for b in range(B_tile):
                        hp_ref[rows, pl.ds(padw + (b + 1) * T + o, -o)] = zpad

            # One lane-aligned operand read + one fused (C, K*C)x(K*C, N) MXU matmul.
            # TODO(synk): on v7x the MRB accumulates in place, so K accumulating
            # per-tap dots (no shifted writes) may be preferable there.
            stacked = hp_ref[:, pl.ds(padw, N)]                       # (K*C, N) cdt
            acc = jnp.dot(w_dil_ref[li], stacked,
                          preferred_element_type=jnp.float32) + b_dil_ref[li]

            # ---- gated activation (f32 on VPU/EUP) ----
            z = jnp.tanh(acc[:half]) * jax.nn.sigmoid(acc[half:])     # (half, N) f32

            # ---- fused skip + residual 1x1 convs: one (2C, half) matmul ----
            sr = jnp.dot(w_sr_ref[li], z.astype(cdt),
                         preferred_element_type=jnp.float32) + b_sr_ref[li]   # (2C, N)
            skip = skip + sr[:C]
            h = (sr[C:] + r) * res_scale

        skip = skip * skip_scale

        # ---- conv_out (1x1 conv) ----
        if reduce_out:
            out = jnp.sum(w_out_ref[...] * skip, axis=0, keepdims=True) + b_out_ref[...]
        else:
            out = jnp.dot(w_out_ref[...], skip,
                          preferred_element_type=jnp.float32) + b_out_ref[...]
        o_ref[0] = out.astype(o_ref.dtype)

    return kernel


def wavenet_forward(x, params, dilations, K, *, compute_dtype=jnp.bfloat16,
                    padw=128, batch_tile=2, single_buffer_weights=True):
    B, in_ch, T = x.shape
    C = params['w_in'].shape[0]
    out_ch = params['w_out'].shape[0]
    L = len(dilations)

    max_pad = max(d * (K - 1) // 2 for d in dilations)
    assert T % 128 == 0, "time axis must be lane-dense (multiple of 128)"
    assert padw % 128 == 0, "padw must be a multiple of 128 so the operand read stays lane-aligned"
    assert padw >= max_pad, "scratch padding must cover the largest dilation halo"
    assert C % 2 == 0

    B_tile = max(1, min(batch_tile, B))
    while B % B_tile != 0:
        B_tile -= 1
    G = B // B_tile
    N = B_tile * T
    cdt = compute_dtype

    # ---- host-side packing: concat B_tile elements' time axes into the matmul N dim ----
    xp = x.reshape(G, B_tile, in_ch, T).transpose(0, 2, 1, 3).reshape(G, in_ch, N)
    xp = xp.astype(jnp.float32)

    # ---- host-side weight repack (layout + fusion); hot-path matmul weights in cdt ----
    w_in = params['w_in'].astype(jnp.float32)                              # (C, in_ch)
    b_in = params['b_in'][:, None].astype(jnp.float32)                     # (C, 1)
    # (L,C,Cin,K) -> (L,C,K,Cin) -> (L,C,K*Cin): column k*C + c_in pairs with tap-k rows.
    w_dil = jnp.transpose(params['w_dil'], (0, 1, 3, 2)).reshape(L, C, K * C).astype(cdt)
    b_dil = params['b_dil'][..., None].astype(jnp.float32)                 # (L, C, 1)
    # fused skip + residual 1x1 convs
    w_sr = jnp.concatenate([params['w_skip'], params['w_res']], axis=1).astype(cdt)       # (L, 2C, half)
    b_sr = jnp.concatenate([params['b_skip'], params['b_res']], axis=1)[..., None].astype(jnp.float32)
    if out_ch == 1:
        w_out = params['w_out'].T.astype(jnp.float32)                      # (C, 1): VPU + reduce path
    else:
        w_out = params['w_out'].astype(jnp.float32)                        # (out_ch, C): MXU path
    b_out = params['b_out'][:, None].astype(jnp.float32)                   # (out_ch, 1)

    kernel = make_wavenet_kernel(dilations, C, K, N, T, B_tile, in_ch, out_ch, padw, cdt)
    args = (xp, w_in, b_in, w_dil, b_dil, w_sr, b_sr, w_out, b_out)

    def weight_spec(arr):
        n = arr.ndim
        idx = lambda g, _n=n: (0,) * _n
        if single_buffer_weights:
            # Grid-invariant block: double-buffering only doubles resident weight VMEM.
            return pl.BlockSpec(arr.shape, idx, pipeline_mode=pl.Buffered(1))
        return pl.BlockSpec(arr.shape, idx)

    in_specs = [pl.BlockSpec((1, in_ch, N), lambda g: (g, 0, 0))]
    in_specs += [weight_spec(a) for a in args[1:]]
    out_spec = pl.BlockSpec((1, out_ch, N), lambda g: (g, 0, 0))

    # Explicit VMEM budget: pipelined x/out blocks + weights + the tap scratch + headroom,
    # capped at v7x's 64 MiB physical VMEM.
    # TODO(synk): for production sizes (C>=256, L~30) stream per-layer w_dil/w_sr from HBM
    # (memory_space=pl.ANY + pltpu.make_async_copy) instead of keeping all layers resident.
    itemsize = jnp.dtype(cdt).itemsize
    weight_bytes = sum(int(a.size) * a.dtype.itemsize for a in args[1:])
    block_bytes = 2 * (in_ch + out_ch) * N * 4
    scratch_bytes = K * C * (N + 2 * padw) * itemsize
    vmem_limit = int(min(64 * 2 ** 20,
                         max(16 * 2 ** 20,
                             2 * (weight_bytes + block_bytes) + scratch_bytes + (4 << 20))))

    outp = pl.pallas_call(
        kernel,
        out_shape=jax.ShapeDtypeStruct((G, out_ch, N), jnp.float32),
        grid_spec=pltpu.PrefetchScalarGridSpec(
            num_scalar_prefetch=0,
            grid=(G,),
            in_specs=in_specs,
            out_specs=out_spec,
            scratch_shapes=[pltpu.VMEM((K * C, N + 2 * padw), cdt)],
        ),
        compiler_params=pltpu.CompilerParams(
            dimension_semantics=("parallel",),
            vmem_limit_bytes=vmem_limit,
        ),
    )(*args)

    # ---- host-side unpack back to (B, out_ch, T) ----
    return outp.reshape(G, out_ch, B_tile, T).transpose(0, 2, 1, 3).reshape(B, out_ch, T)


# ----------------------- pure-JAX reference (for checking) -----------------------
def _conv1d(x, w, b, dilation=1):
    # x: (B, Cin, T), w: (Cout, Cin, K), 'same' padding, stride 1
    y = lax.conv_general_dilated(
        x, w, window_strides=(1,), padding='SAME',
        rhs_dilation=(dilation,), dimension_numbers=('NCH', 'OIH', 'NCH'))
    return y + b[None, :, None]


def wavenet_ref(x, p, dilations, K):
    L = len(dilations)
    h = _conv1d(x, p['w_in'][..., None], p['b_in'])
    half = h.shape[1] // 2
    s = jnp.zeros_like(h)
    for li, d in enumerate(dilations):
        r = h
        y = _conv1d(h, p['w_dil'][li], p['b_dil'][li], dilation=d)
        a, g = y[:, :half], y[:, half:]
        z = jnp.tanh(a) * jax.nn.sigmoid(g)
        sk = _conv1d(z, p['w_skip'][li][..., None], p['b_skip'][li])
        o = _conv1d(z, p['w_res'][li][..., None], p['b_res'][li])
        h = (o + r) * math.sqrt(0.5)
        s = s + sk
    s = s * math.sqrt(1.0 / L)
    return _conv1d(s, p['w_out'][..., None], p['b_out'])


def init_params(key, stacks, layers, in_ch, C, out_ch, K):
    L = stacks * layers
    half = C // 2
    ks = jax.random.split(key, 10)

    def rnd(k, shape, fan_in):
        return jax.random.normal(k, shape, jnp.float32) / jnp.sqrt(jnp.float32(fan_in))

    return {
        'w_in':   rnd(ks[0], (C, in_ch), in_ch),
        'b_in':   rnd(ks[1], (C,), 4.0),
        'w_dil':  rnd(ks[2], (L, C, C, K), C * K),
        'b_dil':  rnd(ks[3], (L, C), 4.0),
        'w_skip': rnd(ks[4], (L, C, half), half),
        'b_skip': rnd(ks[5], (L, C), 4.0),
        'w_res':  rnd(ks[6], (L, C, half), half),
        'b_res':  rnd(ks[7], (L, C), 4.0),
        'w_out':  rnd(ks[8], (out_ch, C), C),
        'b_out':  rnd(ks[9], (out_ch,), 4.0),
    }


if __name__ == "__main__":
    # small forward-consistent config: B=8 elements, batch_tile=2 -> 4 grid steps,
    # each step computes on a lane-dense N = 512 slab (T=256 per element).
    stacks, layers = 2, 3
    in_ch, wavenet_channels, out_ch = 1, 16, 1
    kernel_size, dilation_base = 3, 2
    B, T = 8, 256
    batch_tile = 2

    dilations = [dilation_base ** i for _ in range(stacks) for i in range(layers)]

    key = jax.random.PRNGKey(0)
    kp, kx = jax.random.split(key)
    params = init_params(kp, stacks, layers, in_ch, wavenet_channels, out_ch, kernel_size)
    x = jax.random.normal(kx, (B, in_ch, T), jnp.float32)

    ref = wavenet_ref(x, params, dilations, kernel_size)

    def run(compute_dtype, sbw):
        return jax.block_until_ready(
            wavenet_forward(x, params, dilations, kernel_size,
                            compute_dtype=compute_dtype,
                            batch_tile=batch_tile,
                            single_buffer_weights=sbw))

    # strict correctness check in f32 compute mode
    sbw = True
    try:
        out_f32 = run(jnp.float32, sbw)
    except Exception:
        # This Pallas build rejects pipeline_mode=pl.Buffered(1); fall back to the
        # default double-buffered weight blocks (semantics identical).
        sbw = False
        out_f32 = run(jnp.float32, sbw)
    assert out_f32.shape == (B, out_ch, T), out_f32.shape
    err_f32 = float(jnp.max(jnp.abs(out_f32 - ref)))
    assert err_f32 < 1e-3, f"f32 max abs error {err_f32}"

    # bf16 MXU-operand mode (f32 accumulation): loose sanity bound vs the f32 reference
    out_bf16 = run(jnp.bfloat16, sbw)
    err_bf16 = float(jnp.max(jnp.abs(out_bf16 - ref)))
    assert err_bf16 < 2e-1, f"bf16 max abs error {err_bf16}"

    print("KERNEL_OK")
</pallas_src>

<mosaic_0001>
module attributes {stable_mosaic.version = 11 : i64} {
  func.func @kernel(%arg0: i32, %arg1: memref<1x1x512xf32, #tpu.memory_space<vmem>>, %arg2: memref<16x1xf32, #tpu.memory_space<vmem>>, %arg3: memref<16x1xf32, #tpu.memory_space<vmem>>, %arg4: memref<6x16x48xf32, #tpu.memory_space<vmem>>, %arg5: memref<6x16x1xf32, #tpu.memory_space<vmem>>, %arg6: memref<6x32x8xf32, #tpu.memory_space<vmem>>, %arg7: memref<6x32x1xf32, #tpu.memory_space<vmem>>, %arg8: memref<16x1xf32, #tpu.memory_space<vmem>>, %arg9: memref<1x1xf32, #tpu.memory_space<vmem>>, %arg10: memref<1x1x512xf32, #tpu.memory_space<vmem>>, %arg11: memref<48x768xf32, #tpu.memory_space<vmem>>) attributes {dimension_semantics = [#tpu.dimension_semantics<parallel>], iteration_bounds = array<i64: 4>, scalar_prefetch = 0 : i64, scratch_operands = 1 : i64, tpu.core_type = #tpu.core_type<tc>, window_params = [{transform_indices = @transform_0, window_bounds = array<i64: 1, 1, 512>}, {pipeline_mode = #tpu.pipeline_mode<synchronous>, transform_indices = @transform_1, window_bounds = array<i64: 16, 1>}, {pipeline_mode = #tpu.pipeline_mode<synchronous>, transform_indices = @transform_2, window_bounds = array<i64: 16, 1>}, {pipeline_mode = #tpu.pipeline_mode<synchronous>, transform_indices = @transform_3, window_bounds = array<i64: 6, 16, 48>}, {pipeline_mode = #tpu.pipeline_mode<synchronous>, transform_indices = @transform_4, window_bounds = array<i64: 6, 16, 1>}, {pipeline_mode = #tpu.pipeline_mode<synchronous>, transform_indices = @transform_5, window_bounds = array<i64: 6, 32, 8>}, {pipeline_mode = #tpu.pipeline_mode<synchronous>, transform_indices = @transform_6, window_bounds = array<i64: 6, 32, 1>}, {pipeline_mode = #tpu.pipeline_mode<synchronous>, transform_indices = @transform_7, window_bounds = array<i64: 16, 1>}, {pipeline_mode = #tpu.pipeline_mode<synchronous>, transform_indices = @transform_8, window_bounds = array<i64: 1, 1>}, {transform_indices = @transform_9, window_bounds = array<i64: 1, 1, 512>}]} {
    %c0 = arith.constant 0 : index
    %c0_0 = arith.constant 0 : index
    %c0_1 = arith.constant 0 : index
    %0 = vector.load %arg1[%c0, %c0_0, %c0_1] : memref<1x1x512xf32, #tpu.memory_space<vmem>>, vector<1x1x512xf32>
    %1 = vector.shape_cast %0 : vector<1x1x512xf32> to vector<1x512xf32>
    %c0_2 = arith.constant 0 : index
    %c0_3 = arith.constant 0 : index
    %2 = vector.load %arg2[%c0_2, %c0_3] : memref<16x1xf32, #tpu.memory_space<vmem>>, vector<16x1xf32>
    %3 = vector.broadcast %2 : vector<16x1xf32> to vector<16x512xf32>
    %4 = vector.broadcast %1 : vector<1x512xf32> to vector<16x512xf32>
    %5 = arith.mulf %3, %4 : vector<16x512xf32>
    %c0_4 = arith.constant 0 : index
    %c0_5 = arith.constant 0 : index
    %6 = vector.load %arg3[%c0_4, %c0_5] : memref<16x1xf32, #tpu.memory_space<vmem>>, vector<16x1xf32>
    %7 = vector.broadcast %6 : vector<16x1xf32> to vector<16x512xf32>
    %8 = arith.addf %5, %7 : vector<16x512xf32>
    %cst = arith.constant 0.000000e+00 : f32
    %9 = vector.broadcast %cst : f32 to vector<16x512xf32>
    %c0_6 = arith.constant 0 : index
    %c129 = arith.constant 129 : index
    %10 = vector.load %arg11[%c0_6, %c129] : memref<48x768xf32, #tpu.memory_space<vmem>>, vector<16x512xf32>
    tpu.vector_store %arg11[%c0_6, %c129], %8 {strides = array<i32>} : memref<48x768xf32, #tpu.memory_space<vmem>>, vector<16x512xf32>,
    %cst_7 = arith.constant 0.000000e+00 : f32
    %11 = vector.broadcast %cst_7 : f32 to vector<16x1xf32>
    %c0_8 = arith.constant 0 : index
    %c128 = arith.constant 128 : index
    %12 = vector.load %arg11[%c0_8, %c128] : memref<48x768xf32, #tpu.memory_space<vmem>>, vector<16x1xf32>
    tpu.vector_store %arg11[%c0_8, %c128], %11 {strides = array<i32>} : memref<48x768xf32, #tpu.memory_space<vmem>>, vector<16x1xf32>,
    %c0_9 = arith.constant 0 : index
    %c384 = arith.constant 384 : index
    %13 = vector.load %arg11[%c0_9, %c384] : memref<48x768xf32, #tpu.memory_space<vmem>>, vector<16x1xf32>
    tpu.vector_store %arg11[%c0_9, %c384], %11 {strides = array<i32>} : memref<48x768xf32, #tpu.memory_space<vmem>>, vector<16x1xf32>,
    %c16 = arith.constant 16 : index
    %c128_10 = arith.constant 128 : index
    %14 = vector.load %arg11[%c16, %c128_10] : memref<48x768xf32, #tpu.memory_space<vmem>>, vector<16x512xf32>
    tpu.vector_store %arg11[%c16, %c128_10], %8 {strides = array<i32>} : memref<48x768xf32, #tpu.memory_space<vmem>>, vector<16x512xf32>,
    %c32 = arith.constant 32 : index
    %c127 = arith.constant 127 : index
    %15 = vector.load %arg11[%c32, %c127] : memref<48x768xf32, #tpu.memory_space<vmem>>, vector<16x512xf32>
    tpu.vector_store %arg11[%c32, %c127], %8 {strides = array<i32>} : memref<48x768xf32, #tpu.memory_space<vmem>>, vector<16x512xf32>,
    %cst_11 = arith.constant 0.000000e+00 : f32
    %16 = vector.broadcast %cst_11 : f32 to vector<16x1xf32>
    %c32_12 = arith.constant 32 : index
    %c383 = arith.constant 383 : index
    %17 = vector.load %arg11[%c32_12, %c383] : memref<48x768xf32, #tpu.memory_space<vmem>>, vector<16x1xf32>
    tpu.vector_store %arg11[%c32_12, %c383], %16 {strides = array<i32>} : memref<48x768xf32, #tpu.memory_space<vmem>>, vector<16x1xf32>,
    %c32_13 = arith.constant 32 : index
    %c639 = arith.constant 639 : index
    %18 = vector.load %arg11[%c32_13, %c639] : memref<48x768xf32, #tpu.memory_space<vmem>>, vector<16x1xf32>
    tpu.vector_store %arg11[%c32_13, %c639], %16 {strides = array<i32>} : memref<48x768xf32, #tpu.memory_space<vmem>>, vector<16x1xf32>,
    %c0_14 = arith.constant 0 : index
    %c128_15 = arith.constant 128 : index
    %19 = vector.load %arg11[%c0_14, %c128_15] : memref<48x768xf32, #tpu.memory_space<vmem>>, vector<48x512xf32>
    %c0_16 = arith.constant 0 : index
    %c0_17 = arith.constant 0 : index
    %c0_18 = arith.constant 0 : index
    %20 = vector.load %arg4[%c0_16, %c0_17, %c0_18] : memref<6x16x48xf32, #tpu.memory_space<vmem>>, vector<1x16x48xf32>
    %21 = vector.shape_cast %20 : vector<1x16x48xf32> to vector<16x48xf32>
    %cst_19 = arith.constant dense<0.000000e+00> : vector<16x512xf32>
    %22 = tpu.matmul %21, %19, %cst_19 {dimension_numbers = #tpu.dot_dimension_numbers<[1], [0], [0], [1], [0, 0, 1, 1], [], []>} : vector<16x48xf32>, vector<48x512xf32>, vector<16x512xf32> -> vector<16x512xf32>
    %c0_20 = arith.constant 0 : index
    %c0_21 = arith.constant 0 : index
    %c0_22 = arith.constant 0 : index
    %23 = vector.load %arg5[%c0_20, %c0_21, %c0_22] : memref<6x16x1xf32, #tpu.memory_space<vmem>>, vector<1x16x1xf32>
    %24 = vector.shape_cast %23 : vector<1x16x1xf32> to vector<16x1xf32>
    %25 = vector.broadcast %24 : vector<16x1xf32> to vector<16x512xf32>
    %26 = arith.addf %22, %25 : vector<16x512xf32>
    %27 = vector.extract_strided_slice %26 {offsets = [0, 0], sizes = [8, 512], strides = [1, 1]} : vector<16x512xf32> to vector<8x512xf32>
    %28 = math.tanh %27 : vector<8x512xf32>
    %29 = vector.extract_strided_slice %26 {offsets = [8, 0], sizes = [8, 512], strides = [1, 1]} : vector<16x512xf32> to vector<8x512xf32>
    %30 = arith.negf %29 : vector<8x512xf32>
    %31 = math.exp %30 : vector<8x512xf32>
    %cst_23 = arith.constant 1.000000e+00 : f32
    %32 = vector.broadcast %cst_23 : f32 to vector<8x512xf32>
    %33 = arith.addf %32, %31 : vector<8x512xf32>
    %34 = arith.divf %32, %33 : vector<8x512xf32>
    %35 = arith.mulf %28, %34 : vector<8x512xf32>
    %c0_24 = arith.constant 0 : index
    %c0_25 = arith.constant 0 : index
    %c0_26 = arith.constant 0 : index
    %36 = vector.load %arg6[%c0_24, %c0_25, %c0_26] : memref<6x32x8xf32, #tpu.memory_space<vmem>>, vector<1x32x8xf32>
    %37 = vector.shape_cast %36 : vector<1x32x8xf32> to vector<32x8xf32>
    %cst_27 = arith.constant dense<0.000000e+00> : vector<32x512xf32>
    %38 = tpu.matmul %37, %35, %cst_27 {dimension_numbers = #tpu.dot_dimension_numbers<[1], [0], [0], [1], [0, 0, 1, 1], [], []>} : vector<32x8xf32>, vector<8x512xf32>, vector<32x512xf32> -> vector<32x512xf32>
    %c0_28 = arith.constant 0 : index
    %c0_29 = arith.constant 0 : index
    %c0_30 = arith.constant 0 : index
    %39 = vector.load %arg7[%c0_28, %c0_29, %c0_30] : memref<6x32x1xf32, #tpu.memory_space<vmem>>, vector<1x32x1xf32>
    %40 = vector.shape_cast %39 : vector<1x32x1xf32> to vector<32x1xf32>
    %41 = vector.broadcast %40 : vector<32x1xf32> to vector<32x512xf32>
    %42 = arith.addf %38, %41 : vector<32x512xf32>
    %43 = vector.extract_strided_slice %42 {offsets = [0, 0], sizes = [16, 512], strides = [1, 1]} : vector<32x512xf32> to vector<16x512xf32>
    %44 = arith.addf %9, %43 : vector<16x512xf32>
    %45 = vector.extract_strided_slice %42 {offsets = [16, 0], sizes = [16, 512], strides = [1, 1]} : vector<32x512xf32> to vector<16x512xf32>
    %46 = arith.addf %45, %8 : vector<16x512xf32>
    %cst_31 = arith.constant 0.707106769 : f32
    %47 = vector.broadcast %cst_31 : f32 to vector<16x512xf32>
    %48 = arith.mulf %46, %47 : vector<16x512xf32>
    %c0_32 = arith.constant 0 : index
    %c130 = arith.constant 130 : index
    %49 = vector.load %arg11[%c0_32, %c130] : memref<48x768xf32, #tpu.memory_space<vmem>>, vector<16x512xf32>
    tpu.vector_store %arg11[%c0_32, %c130], %48 {strides = array<i32>} : memref<48x768xf32, #tpu.memory_space<vmem>>, vector<16x512xf32>,
    %cst_33 = arith.constant 0.000000e+00 : f32
    %50 = vector.broadcast %cst_33 : f32 to vector<16x2xf32>
    %c0_34 = arith.constant 0 : index
    %c128_35 = arith.constant 128 : index
    %51 = vector.load %arg11[%c0_34, %c128_35] : memref<48x768xf32, #tpu.memory_space<vmem>>, vector<16x2xf32>
    tpu.vector_store %arg11[%c0_34, %c128_35], %50 {strides = array<i32>} : memref<48x768xf32, #tpu.memory_space<vmem>>, vector<16x2xf32>,
    %c0_36 = arith.constant 0 : index
    %c384_37 = arith.constant 384 : index
    %52 = vector.load %arg11[%c0_36, %c384_37] : memref<48x768xf32, #tpu.memory_space<vmem>>, vector<16x2xf32>
    tpu.vector_store %arg11[%c0_36, %c384_37], %50 {strides = array<i32>} : memref<48x768xf32, #tpu.memory_space<vmem>>, vector<16x2xf32>,
    %c16_38 = arith.constant 16 : index
    %c128_39 = arith.constant 128 : index
    %53 = vector.load %arg11[%c16_38, %c128_39] : memref<48x768xf32, #tpu.memory_space<vmem>>, vector<16x512xf32>
    tpu.vector_store %arg11[%c16_38, %c128_39], %48 {strides = array<i32>} : memref<48x768xf32, #tpu.memory_space<vmem>>, vector<16x512xf32>,
    %c32_40 = arith.constant 32 : index
    %c126 = arith.constant 126 : index
    %54 = vector.load %arg11[%c32_40, %c126] : memref<48x768xf32, #tpu.memory_space<vmem>>, vector<16x512xf32>
    tpu.vector_store %arg11[%c32_40, %c126], %48 {strides = array<i32>} : memref<48x768xf32, #tpu.memory_space<vmem>>, vector<16x512xf32>,
    %cst_41 = arith.constant 0.000000e+00 : f32
    %55 = vector.broadcast %cst_41 : f32 to vector<16x2xf32>
    %c32_42 = arith.constant 32 : index
    %c382 = arith.constant 382 : index
    %56 = vector.load %arg11[%c32_42, %c382] : memref<48x768xf32, #tpu.memory_space<vmem>>, vector<16x2xf32>
    tpu.vector_store %arg11[%c32_42, %c382], %55 {strides = array<i32>} : memref<48x768xf32, #tpu.memory_space<vmem>>, vector<16x2xf32>,
    %c32_43 = arith.constant 32 : index
    %c638 = arith.constant 638 : index
    %57 = vector.load %arg11[%c32_43, %c638] : memref<48x768xf32, #tpu.memory_space<vmem>>, vector<16x2xf32>
    tpu.vector_store %arg11[%c32_43, %c638], %55 {strides = array<i32>} : memref<48x768xf32, #tpu.memory_space<vmem>>, vector<16x2xf32>,
    %c0_44 = arith.constant 0 : index
    %c128_45 = arith.constant 128 : index
    %58 = vector.load %arg11[%c0_44, %c128_45] : memref<48x768xf32, #tpu.memory_space<vmem>>, vector<48x512xf32>
    %c1 = arith.constant 1 : index
    %c0_46 = arith.constant 0 : index
    %c0_47 = arith.constant 0 : index
    %59 = vector.load %arg4[%c1, %c0_46, %c0_47] : memref<6x16x48xf32, #tpu.memory_space<vmem>>, vector<1x16x48xf32>
    %60 = vector.shape_cast %59 : vector<1x16x48xf32> to vector<16x48xf32>
    %cst_48 = arith.constant dense<0.000000e+00> : vector<16x512xf32>
    %61 = tpu.matmul %60, %58, %cst_48 {dimension_numbers = #tpu.dot_dimension_numbers<[1], [0], [0], [1], [0, 0, 1, 1], [], []>} : vector<16x48xf32>, vector<48x512xf32>, vector<16x512xf32> -> vector<16x512xf32>
    %c1_49 = arith.constant 1 : index
    %c0_50 = arith.constant 0 : index
    %c0_51 = arith.constant 0 : index
    %62 = vector.load %arg5[%c1_49, %c0_50, %c0_51] : memref<6x16x1xf32, #tpu.memory_space<vmem>>, vector<1x16x1xf32>
    %63 = vector.shape_cast %62 : vector<1x16x1xf32> to vector<16x1xf32>
    %64 = vector.broadcast %63 : vector<16x1xf32> to vector<16x512xf32>
    %65 = arith.addf %61, %64 : vector<16x512xf32>
    %66 = vector.extract_strided_slice %65 {offsets = [0, 0], sizes = [8, 512], strides = [1, 1]} : vector<16x512xf32> to vector<8x512xf32>
    %67 = math.tanh %66 : vector<8x512xf32>
    %68 = vector.extract_strided_slice %65 {offsets = [8, 0], sizes = [8, 512], strides = [1, 1]} : vector<16x512xf32> to vector<8x512xf32>
    %69 = arith.negf %68 : vector<8x512xf32>
    %70 = math.exp %69 : vector<8x512xf32>
    %cst_52 = arith.constant 1.000000e+00 : f32
    %71 = vector.broadcast %cst_52 : f32 to vector<8x512xf32>
    %72 = arith.addf %71, %70 : vector<8x512xf32>
    %73 = arith.divf %71, %72 : vector<8x512xf32>
    %74 = arith.mulf %67, %73 : vector<8x512xf32>
    %c1_53 = arith.constant 1 : index
    %c0_54 = arith.constant 0 : index
    %c0_55 = arith.constant 0 : index
    %75 = vector.load %arg6[%c1_53, %c0_54, %c0_55] : memref<6x32x8xf32, #tpu.memory_space<vmem>>, vector<1x32x8xf32>
    %76 = vector.shape_cast %75 : vector<1x32x8xf32> to vector<32x8xf32>
    %cst_56 = arith.constant dense<0.000000e+00> : vector<32x512xf32>
    %77 = tpu.matmul %76, %74, %cst_56 {dimension_numbers = #tpu.dot_dimension_numbers<[1], [0], [0], [1], [0, 0, 1, 1], [], []>} : vector<32x8xf32>, vector<8x512xf32>, vector<32x512xf32> -> vector<32x512xf32>
    %c1_57 = arith.constant 1 : index
    %c0_58 = arith.constant 0 : index
    %c0_59 = arith.constant 0 : index
    %78 = vector.load %arg7[%c1_57, %c0_58, %c0_59] : memref<6x32x1xf32, #tpu.memory_space<vmem>>, vector<1x32x1xf32>
    %79 = vector.shape_cast %78 : vector<1x32x1xf32> to vector<32x1xf32>
    %80 = vector.broadcast %79 : vector<32x1xf32> to vector<32x512xf32>
    %81 = arith.addf %77, %80 : vector<32x512xf32>
    %82 = vector.extract_strided_slice %81 {offsets = [0, 0], sizes = [16, 512], strides = [1, 1]} : vector<32x512xf32> to vector<16x512xf32>
    %83 = arith.addf %44, %82 : vector<16x512xf32>
    %84 = vector.extract_strided_slice %81 {offsets = [16, 0], sizes = [16, 512], strides = [1, 1]} : vector<32x512xf32> to vector<16x512xf32>
    %85 = arith.addf %84, %48 : vector<16x512xf32>
    %cst_60 = arith.constant 0.707106769 : f32
    %86 = vector.broadcast %cst_60 : f32 to vector<16x512xf32>
    %87 = arith.mulf %85, %86 : vector<16x512xf32>
    %c0_61 = arith.constant 0 : index
    %c132 = arith.constant 132 : index
    %88 = vector.load %arg11[%c0_61, %c132] : memref<48x768xf32, #tpu.memory_space<vmem>>, vector<16x512xf32>
    tpu.vector_store %arg11[%c0_61, %c132], %87 {strides = array<i32>} : memref<48x768xf32, #tpu.memory_space<vmem>>, vector<16x512xf32>,
    %cst_62 = arith.constant 0.000000e+00 : f32
    %89 = vector.broadcast %cst_62 : f32 to vector<16x4xf32>
    %c0_63 = arith.constant 0 : index
    %c128_64 = arith.constant 128 : index
    %90 = vector.load %arg11[%c0_63, %c128_64] : memref<48x768xf32, #tpu.memory_space<vmem>>, vector<16x4xf32>
    tpu.vector_store %arg11[%c0_63, %c128_64], %89 {strides = array<i32>} : memref<48x768xf32, #tpu.memory_space<vmem>>, vector<16x4xf32>,
    %c0_65 = arith.constant 0 : index
    %c384_66 = arith.constant 384 : index
    %91 = vector.load %arg11[%c0_65, %c384_66] : memref<48x768xf32, #tpu.memory_space<vmem>>, vector<16x4xf32>
    tpu.vector_store %arg11[%c0_65, %c384_66], %89 {strides = array<i32>} : memref<48x768xf32, #tpu.memory_space<vmem>>, vector<16x4xf32>,
    %c16_67 = arith.constant 16 : index
    %c128_68 = arith.constant 128 : index
    %92 = vector.load %arg11[%c16_67, %c128_68] : memref<48x768xf32, #tpu.memory_space<vmem>>, vector<16x512xf32>
    tpu.vector_store %arg11[%c16_67, %c128_68], %87 {strides = array<i32>} : memref<48x768xf32, #tpu.memory_space<vmem>>, vector<16x512xf32>,
    %c32_69 = arith.constant 32 : index
    %c124 = arith.constant 124 : index
    %93 = vector.load %arg11[%c32_69, %c124] : memref<48x768xf32, #tpu.memory_space<vmem>>, vector<16x512xf32>
    tpu.vector_store %arg11[%c32_69, %c124], %87 {strides = array<i32>} : memref<48x768xf32, #tpu.memory_space<vmem>>, vector<16x512xf32>,
    %cst_70 = arith.constant 0.000000e+00 : f32
    %94 = vector.broadcast %cst_70 : f32 to vector<16x4xf32>
    %c32_71 = arith.constant 32 : index
    %c380 = arith.constant 380 : index
    %95 = vector.load %arg11[%c32_71, %c380] : memref<48x768xf32, #tpu.memory_space<vmem>>, vector<16x4xf32>
    tpu.vector_store %arg11[%c32_71, %c380], %94 {strides = array<i32>} : memref<48x768xf32, #tpu.memory_space<vmem>>, vector<16x4xf32>,
    %c32_72 = arith.constant 32 : index
    %c636 = arith.constant 636 : index
    %96 = vector.load %arg11[%c32_72, %c636] : memref<48x768xf32, #tpu.memory_space<vmem>>, vector<16x4xf32>
    tpu.vector_store %arg11[%c32_72, %c636], %94 {strides = array<i32>} : memref<48x768xf32, #tpu.memory_space<vmem>>, vector<16x4xf32>,
    %c0_73 = arith.constant 0 : index
    %c128_74 = arith.constant 128 : index
    %97 = vector.load %arg11[%c0_73, %c128_74] : memref<48x768xf32, #tpu.memory_space<vmem>>, vector<48x512xf32>
    %c2 = arith.constant 2 : index
    %c0_75 = arith.constant 0 : index
    %c0_76 = arith.constant 0 : index
    %98 = vector.load %arg4[%c2, %c0_75, %c0_76] : memref<6x16x48xf32, #tpu.memory_space<vmem>>, vector<1x16x48xf32>
    %99 = vector.shape_cast %98 : vector<1x16x48xf32> to vector<16x48xf32>
    %cst_77 = arith.constant dense<0.000000e+00> : vector<16x512xf32>
    %100 = tpu.matmul %99, %97, %cst_77 {dimension_numbers = #tpu.dot_dimension_numbers<[1], [0], [0], [1], [0, 0, 1, 1], [], []>} : vector<16x48xf32>, vector<48x512xf32>, vector<16x512xf32> -> vector<16x512xf32>
    %c2_78 = arith.constant 2 : index
    %c0_79 = arith.constant 0 : index
    %c0_80 = arith.constant 0 : index
    %101 = vector.load %arg5[%c2_78, %c0_79, %c0_80] : memref<6x16x1xf32, #tpu.memory_space<vmem>>, vector<1x16x1xf32>
    %102 = vector.shape_cast %101 : vector<1x16x1xf32> to vector<16x1xf32>
    %103 = vector.broadcast %102 : vector<16x1xf32> to vector<16x512xf32>
    %104 = arith.addf %100, %103 : vector<16x512xf32>
    %105 = vector.extract_strided_slice %104 {offsets = [0, 0], sizes = [8, 512], strides = [1, 1]} : vector<16x512xf32> to vector<8x512xf32>
    %106 = math.tanh %105 : vector<8x512xf32>
    %107 = vector.extract_strided_slice %104 {offsets = [8, 0], sizes = [8, 512], strides = [1, 1]} : vector<16x512xf32> to vector<8x512xf32>
    %108 = arith.negf %107 : vector<8x512xf32>
    %109 = math.exp %108 : vector<8x512xf32>
    %cst_81 = arith.constant 1.000000e+00 : f32
    %110 = vector.broadcast %cst_81 : f32 to vector<8x512xf32>
    %111 = arith.addf %110, %109 : vector<8x512xf32>
    %112 = arith.divf %110, %111 : vector<8x512xf32>
    %113 = arith.mulf %106, %112 : vector<8x512xf32>
    %c2_82 = arith.constant 2 : index
    %c0_83 = arith.constant 0 : index
    %c0_84 = arith.constant 0 : index
    %114 = vector.load %arg6[%c2_82, %c0_83, %c0_84] : memref<6x32x8xf32, #tpu.memory_space<vmem>>, vector<1x32x8xf32>
    %115 = vector.shape_cast %114 : vector<1x32x8xf32> to vector<32x8xf32>
    %cst_85 = arith.constant dense<0.000000e+00> : vector<32x512xf32>
    %116 = tpu.matmul %115, %113, %cst_85 {dimension_numbers = #tpu.dot_dimension_numbers<[1], [0], [0], [1], [0, 0, 1, 1], [], []>} : vector<32x8xf32>, vector<8x512xf32>, vector<32x512xf32> -> vector<32x512xf32>
    %c2_86 = arith.constant 2 : index
    %c0_87 = arith.constant 0 : index
    %c0_88 = arith.constant 0 : index
    %117 = vector.load %arg7[%c2_86, %c0_87, %c0_88] : memref<6x32x1xf32, #tpu.memory_space<vmem>>, vector<1x32x1xf32>
    %118 = vector.shape_cast %117 : vector<1x32x1xf32> to vector<32x1xf32>
    %119 = vector.broadcast %118 : vector<32x1xf32> to vector<32x512xf32>
    %120 = arith.addf %116, %119 : vector<32x512xf32>
    %121 = vector.extract_strided_slice %120 {offsets = [0, 0], sizes = [16, 512], strides = [1, 1]} : vector<32x512xf32> to vector<16x512xf32>
    %122 = arith.addf %83, %121 : vector<16x512xf32>
    %123 = vector.extract_strided_slice %120 {offsets = [16, 0], sizes = [16, 512], strides = [1, 1]} : vector<32x512xf32> to vector<16x512xf32>
    %124 = arith.addf %123, %87 : vector<16x512xf32>
    %cst_89 = arith.constant 0.707106769 : f32
    %125 = vector.broadcast %cst_89 : f32 to vector<16x512xf32>
    %126 = arith.mulf %124, %125 : vector<16x512xf32>
    %c0_90 = arith.constant 0 : index
    %c129_91 = arith.constant 129 : index
    %127 = vector.load %arg11[%c0_90, %c129_91] : memref<48x768xf32, #tpu.memory_space<vmem>>, vector<16x512xf32>
    tpu.vector_store %arg11[%c0_90, %c129_91], %126 {strides = array<i32>} : memref<48x768xf32, #tpu.memory_space<vmem>>, vector<16x512xf32>,
    %cst_92 = arith.constant 0.000000e+00 : f32
    %128 = vector.broadcast %cst_92 : f32 to vector<16x1xf32>
    %c0_93 = arith.constant 0 : index
    %c128_94 = arith.constant 128 : index
    %129 = vector.load %arg11[%c0_93, %c128_94] : memref<48x768xf32, #tpu.memory_space<vmem>>, vector<16x1xf32>
    tpu.vector_store %arg11[%c0_93, %c128_94], %128 {strides = array<i32>} : memref<48x768xf32, #tpu.memory_space<vmem>>, vector<16x1xf32>,
    %c0_95 = arith.constant 0 : index
    %c384_96 = arith.constant 384 : index
    %130 = vector.load %arg11[%c0_95, %c384_96] : memref<48x768xf32, #tpu.memory_space<vmem>>, vector<16x1xf32>
    tpu.vector_store %arg11[%c0_95, %c384_96], %128 {strides = array<i32>} : memref<48x768xf32, #tpu.memory_space<vmem>>, vector<16x1xf32>,
    %c16_97 = arith.constant 16 : index
    %c128_98 = arith.constant 128 : index
    %131 = vector.load %arg11[%c16_97, %c128_98] : memref<48x768xf32, #tpu.memory_space<vmem>>, vector<16x512xf32>
    tpu.vector_store %arg11[%c16_97, %c128_98], %126 {strides = array<i32>} : memref<48x768xf32, #tpu.memory_space<vmem>>, vector<16x512xf32>,
    %c32_99 = arith.constant 32 : index
    %c127_100 = arith.constant 127 : index
    %132 = vector.load %arg11[%c32_99, %c127_100] : memref<48x768xf32, #tpu.memory_space<vmem>>, vector<16x512xf32>
    tpu.vector_store %arg11[%c32_99, %c127_100], %126 {strides = array<i32>} : memref<48x768xf32, #tpu.memory_space<vmem>>, vector<16x512xf32>,
    %cst_101 = arith.constant 0.000000e+00 : f32
    %133 = vector.broadcast %cst_101 : f32 to vector<16x1xf32>
    %c32_102 = arith.constant 32 : index
    %c383_103 = arith.constant 383 : index
    %134 = vector.load %arg11[%c32_102, %c383_103] : memref<48x768xf32, #tpu.memory_space<vmem>>, vector<16x1xf32>
    tpu.vector_store %arg11[%c32_102, %c383_103], %133 {strides = array<i32>} : memref<48x768xf32, #tpu.memory_space<vmem>>, vector<16x1xf32>,
    %c32_104 = arith.constant 32 : index
    %c639_105 = arith.constant 639 : index
    %135 = vector.load %arg11[%c32_104, %c639_105] : memref<48x768xf32, #tpu.memory_space<vmem>>, vector<16x1xf32>
    tpu.vector_store %arg11[%c32_104, %c639_105], %133 {strides = array<i32>} : memref<48x768xf32, #tpu.memory_space<vmem>>, vector<16x1xf32>,
    %c0_106 = arith.constant 0 : index
    %c128_107 = arith.constant 128 : index
    %136 = vector.load %arg11[%c0_106, %c128_107] : memref<48x768xf32, #tpu.memory_space<vmem>>, vector<48x512xf32>
    %c3 = arith.constant 3 : index
    %c0_108 = arith.constant 0 : index
    %c0_109 = arith.constant 0 : index
    %137 = vector.load %arg4[%c3, %c0_108, %c0_109] : memref<6x16x48xf32, #tpu.memory_space<vmem>>, vector<1x16x48xf32>
    %138 = vector.shape_cast %137 : vector<1x16x48xf32> to vector<16x48xf32>
    %cst_110 = arith.constant dense<0.000000e+00> : vector<16x512xf32>
    %139 = tpu.matmul %138, %136, %cst_110 {dimension_numbers = #tpu.dot_dimension_numbers<[1], [0], [0], [1], [0, 0, 1, 1], [], []>} : vector<16x48xf32>, vector<48x512xf32>, vector<16x512xf32> -> vector<16x512xf32>
    %c3_111 = arith.constant 3 : index
    %c0_112 = arith.constant 0 : index
    %c0_113 = arith.constant 0 : index
    %140 = vector.load %arg5[%c3_111, %c0_112, %c0_113] : memref<6x16x1xf32, #tpu.memory_space<vmem>>, vector<1x16x1xf32>
    %141 = vector.shape_cast %140 : vector<1x16x1xf32> to vector<16x1xf32>
    %142 = vector.broadcast %141 : vector<16x1xf32> to vector<16x512xf32>
    %143 = arith.addf %139, %142 : vector<16x512xf32>
    %144 = vector.extract_strided_slice %143 {offsets = [0, 0], sizes = [8, 512], strides = [1, 1]} : vector<16x512xf32> to vector<8x512xf32>
    %145 = math.tanh %144 : vector<8x512xf32>
    %146 = vector.extract_strided_slice %143 {offsets = [8, 0], sizes = [8, 512], strides = [1, 1]} : vector<16x512xf32> to vector<8x512xf32>
    %147 = arith.negf %146 : vector<8x512xf32>
    %148 = math.exp %147 : vector<8x512xf32>
    %cst_114 = arith.constant 1.000000e+00 : f32
    %149 = vector.broadcast %cst_114 : f32 to vector<8x512xf32>
    %150 = arith.addf %149, %148 : vector<8x512xf32>
    %151 = arith.divf %149, %150 : vector<8x512xf32>
    %152 = arith.mulf %145, %151 : vector<8x512xf32>
    %c3_115 = arith.constant 3 : index
    %c0_116 = arith.constant 0 : index
    %c0_117 = arith.constant 0 : index
    %153 = vector.load %arg6[%c3_115, %c0_116, %c0_117] : memref<6x32x8xf32, #tpu.memory_space<vmem>>, vector<1x32x8xf32>
    %154 = vector.shape_cast %153 : vector<1x32x8xf32> to vector<32x8xf32>
    %cst_118 = arith.constant dense<0.000000e+00> : vector<32x512xf32>
    %155 = tpu.matmul %154, %152, %cst_118 {dimension_numbers = #tpu.dot_dimension_numbers<[1], [0], [0], [1], [0, 0, 1, 1], [], []>} : vector<32x8xf32>, vector<8x512xf32>, vector<32x512xf32> -> vector<32x512xf32>
    %c3_119 = arith.constant 3 : index
    %c0_120 = arith.constant 0 : index
    %c0_121 = arith.constant 0 : index
    %156 = vector.load %arg7[%c3_119, %c0_120, %c0_121] : memref<6x32x1xf32, #tpu.memory_space<vmem>>, vector<1x32x1xf32>
    %157 = vector.shape_cast %156 : vector<1x32x1xf32> to vector<32x1xf32>
    %158 = vector.broadcast %157 : vector<32x1xf32> to vector<32x512xf32>
    %159 = arith.addf %155, %158 : vector<32x512xf32>
    %160 = vector.extract_strided_slice %159 {offsets = [0, 0], sizes = [16, 512], strides = [1, 1]} : vector<32x512xf32> to vector<16x512xf32>
    %161 = arith.addf %122, %160 : vector<16x512xf32>
    %162 = vector.extract_strided_slice %159 {offsets = [16, 0], sizes = [16, 512], strides = [1, 1]} : vector<32x512xf32> to vector<16x512xf32>
    %163 = arith.addf %162, %126 : vector<16x512xf32>
    %cst_122 = arith.constant 0.707106769 : f32
    %164 = vector.broadcast %cst_122 : f32 to vector<16x512xf32>
    %165 = arith.mulf %163, %164 : vector<16x512xf32>
    %c0_123 = arith.constant 0 : index
    %c130_124 = arith.constant 130 : index
    %166 = vector.load %arg11[%c0_123, %c130_124] : memref<48x768xf32, #tpu.memory_space<vmem>>, vector<16x512xf32>
    tpu.vector_store %arg11[%c0_123, %c130_124], %165 {strides = array<i32>} : memref<48x768xf32, #tpu.memory_space<vmem>>, vector<16x512xf32>,
    %cst_125 = arith.constant 0.000000e+00 : f32
    %167 = vector.broadcast %cst_125 : f32 to vector<16x2xf32>
    %c0_126 = arith.constant 0 : index
    %c128_127 = arith.constant 128 : index
    %168 = vector.load %arg11[%c0_126, %c128_127] : memref<48x768xf32, #tpu.memory_space<vmem>>, vector<16x2xf32>
    tpu.vector_store %arg11[%c0_126, %c128_127], %167 {strides = array<i32>} : memref<48x768xf32, #tpu.memory_space<vmem>>, vector<16x2xf32>,
    %c0_128 = arith.constant 0 : index
    %c384_129 = arith.constant 384 : index
    %169 = vector.load %arg11[%c0_128, %c384_129] : memref<48x768xf32, #tpu.memory_space<vmem>>, vector<16x2xf32>
    tpu.vector_store %arg11[%c0_128, %c384_129], %167 {strides = array<i32>} : memref<48x768xf32, #tpu.memory_space<vmem>>, vector<16x2xf32>,
    %c16_130 = arith.constant 16 : index
    %c128_131 = arith.constant 128 : index
    %170 = vector.load %arg11[%c16_130, %c128_131] : memref<48x768xf32, #tpu.memory_space<vmem>>, vector<16x512xf32>
    tpu.vector_store %arg11[%c16_130, %c128_131], %165 {strides = array<i32>} : memref<48x768xf32, #tpu.memory_space<vmem>>, vector<16x512xf32>,
    %c32_132 = arith.constant 32 : index
    %c126_133 = arith.constant 126 : index
    %171 = vector.load %arg11[%c32_132, %c126_133] : memref<48x768xf32, #tpu.memory_space<vmem>>, vector<16x512xf32>
    tpu.vector_store %arg11[%c32_132, %c126_133], %165 {strides = array<i32>} : memref<48x768xf32, #tpu.memory_space<vmem>>, vector<16x512xf32>,
    %cst_134 = arith.constant 0.000000e+00 : f32
    %172 = vector.broadcast %cst_134 : f32 to vector<16x2xf32>
    %c32_135 = arith.constant 32 : index
    %c382_136 = arith.constant 382 : index
    %173 = vector.load %arg11[%c32_135, %c382_136] : memref<48x768xf32, #tpu.memory_space<vmem>>, vector<16x2xf32>
    tpu.vector_store %arg11[%c32_135, %c382_136], %172 {strides = array<i32>} : memref<48x768xf32, #tpu.memory_space<vmem>>, vector<16x2xf32>,
    %c32_137 = arith.constant 32 : index
    %c638_138 = arith.constant 638 : index
    %174 = vector.load %arg11[%c32_137, %c638_138] : memref<48x768xf32, #tpu.memory_space<vmem>>, vector<16x2xf32>
    tpu.vector_store %arg11[%c32_137, %c638_138], %172 {strides = array<i32>} : memref<48x768xf32, #tpu.memory_space<vmem>>, vector<16x2xf32>,
    %c0_139 = arith.constant 0 : index
    %c128_140 = arith.constant 128 : index
    %175 = vector.load %arg11[%c0_139, %c128_140] : memref<48x768xf32, #tpu.memory_space<vmem>>, vector<48x512xf32>
    %c4 = arith.constant 4 : index
    %c0_141 = arith.constant 0 : index
    %c0_142 = arith.constant 0 : index
    %176 = vector.load %arg4[%c4, %c0_141, %c0_142] : memref<6x16x48xf32, #tpu.memory_space<vmem>>, vector<1x16x48xf32>
    %177 = vector.shape_cast %176 : vector<1x16x48xf32> to vector<16x48xf32>
    %cst_143 = arith.constant dense<0.000000e+00> : vector<16x512xf32>
    %178 = tpu.matmul %177, %175, %cst_143 {dimension_numbers = #tpu.dot_dimension_numbers<[1], [0], [0], [1], [0, 0, 1, 1], [], []>} : vector<16x48xf32>, vector<48x512xf32>, vector<16x512xf32> -> vector<16x512xf32>
    %c4_144 = arith.constant 4 : index
    %c0_145 = arith.constant 0 : index
    %c0_146 = arith.constant 0 : index
    %179 = vector.load %arg5[%c4_144, %c0_145, %c0_146] : memref<6x16x1xf32, #tpu.memory_space<vmem>>, vector<1x16x1xf32>
    %180 = vector.shape_cast %179 : vector<1x16x1xf32> to vector<16x1xf32>
    %181 = vector.broadcast %180 : vector<16x1xf32> to vector<16x512xf32>
    %182 = arith.addf %178, %181 : vector<16x512xf32>
    %183 = vector.extract_strided_slice %182 {offsets = [0, 0], sizes = [8, 512], strides = [1, 1]} : vector<16x512xf32> to vector<8x512xf32>
    %184 = math.tanh %183 : vector<8x512xf32>
    %185 = vector.extract_strided_slice %182 {offsets = [8, 0], sizes = [8, 512], strides = [1, 1]} : vector<16x512xf32> to vector<8x512xf32>
    %186 = arith.negf %185 : vector<8x512xf32>
    %187 = math.exp %186 : vector<8x512xf32>
    %cst_147 = arith.constant 1.000000e+00 : f32
    %188 = vector.broadcast %cst_147 : f32 to vector<8x512xf32>
    %189 = arith.addf %188, %187 : vector<8x512xf32>
    %190 = arith.divf %188, %189 : vector<8x512xf32>
    %191 = arith.mulf %184, %190 : vector<8x512xf32>
    %c4_148 = arith.constant 4 : index
    %c0_149 = arith.constant 0 : index
    %c0_150 = arith.constant 0 : index
    %192 = vector.load %arg6[%c4_148, %c0_149, %c0_150] : memref<6x32x8xf32, #tpu.memory_space<vmem>>, vector<1x32x8xf32>
    %193 = vector.shape_cast %192 : vector<1x32x8xf32> to vector<32x8xf32>
    %cst_151 = arith.constant dense<0.000000e+00> : vector<32x512xf32>
    %194 = tpu.matmul %193, %191, %cst_151 {dimension_numbers = #tpu.dot_dimension_numbers<[1], [0], [0], [1], [0, 0, 1, 1], [], []>} : vector<32x8xf32>, vector<8x512xf32>, vector<32x512xf32> -> vector<32x512xf32>
    %c4_152 = arith.constant 4 : index
    %c0_153 = arith.constant 0 : index
    %c0_154 = arith.constant 0 : index
    %195 = vector.load %arg7[%c4_152, %c0_153, %c0_154] : memref<6x32x1xf32, #tpu.memory_space<vmem>>, vector<1x32x1xf32>
    %196 = vector.shape_cast %195 : vector<1x32x1xf32> to vector<32x1xf32>
    %197 = vector.broadcast %196 : vector<32x1xf32> to vector<32x512xf32>
    %198 = arith.addf %194, %197 : vector<32x512xf32>
    %199 = vector.extract_strided_slice %198 {offsets = [0, 0], sizes = [16, 512], strides = [1, 1]} : vector<32x512xf32> to vector<16x512xf32>
    %200 = arith.addf %161, %199 : vector<16x512xf32>
    %201 = vector.extract_strided_slice %198 {offsets = [16, 0], sizes = [16, 512], strides = [1, 1]} : vector<32x512xf32> to vector<16x512xf32>
    %202 = arith.addf %201, %165 : vector<16x512xf32>
    %cst_155 = arith.constant 0.707106769 : f32
    %203 = vector.broadcast %cst_155 : f32 to vector<16x512xf32>
    %204 = arith.mulf %202, %203 : vector<16x512xf32>
    %c0_156 = arith.constant 0 : index
    %c132_157 = arith.constant 132 : index
    %205 = vector.load %arg11[%c0_156, %c132_157] : memref<48x768xf32, #tpu.memory_space<vmem>>, vector<16x512xf32>
    tpu.vector_store %arg11[%c0_156, %c132_157], %204 {strides = array<i32>} : memref<48x768xf32, #tpu.memory_space<vmem>>, vector<16x512xf32>,
    %cst_158 = arith.constant 0.000000e+00 : f32
    %206 = vector.broadcast %cst_158 : f32 to vector<16x4xf32>
    %c0_159 = arith.constant 0 : index
    %c128_160 = arith.constant 128 : index
    %207 = vector.load %arg11[%c0_159, %c128_160] : memref<48x768xf32, #tpu.memory_space<vmem>>, vector<16x4xf32>
    tpu.vector_store %arg11[%c0_159, %c128_160], %206 {strides = array<i32>} : memref<48x768xf32, #tpu.memory_space<vmem>>, vector<16x4xf32>,
    %c0_161 = arith.constant 0 : index
    %c384_162 = arith.constant 384 : index
    %208 = vector.load %arg11[%c0_161, %c384_162] : memref<48x768xf32, #tpu.memory_space<vmem>>, vector<16x4xf32>
    tpu.vector_store %arg11[%c0_161, %c384_162], %206 {strides = array<i32>} : memref<48x768xf32, #tpu.memory_space<vmem>>, vector<16x4xf32>,
    %c16_163 = arith.constant 16 : index
    %c128_164 = arith.constant 128 : index
    %209 = vector.load %arg11[%c16_163, %c128_164] : memref<48x768xf32, #tpu.memory_space<vmem>>, vector<16x512xf32>
    tpu.vector_store %arg11[%c16_163, %c128_164], %204 {strides = array<i32>} : memref<48x768xf32, #tpu.memory_space<vmem>>, vector<16x512xf32>,
    %c32_165 = arith.constant 32 : index
    %c124_166 = arith.constant 124 : index
    %210 = vector.load %arg11[%c32_165, %c124_166] : memref<48x768xf32, #tpu.memory_space<vmem>>, vector<16x512xf32>
    tpu.vector_store %arg11[%c32_165, %c124_166], %204 {strides = array<i32>} : memref<48x768xf32, #tpu.memory_space<vmem>>, vector<16x512xf32>,
    %cst_167 = arith.constant 0.000000e+00 : f32
    %211 = vector.broadcast %cst_167 : f32 to vector<16x4xf32>
    %c32_168 = arith.constant 32 : index
    %c380_169 = arith.constant 380 : index
    %212 = vector.load %arg11[%c32_168, %c380_169] : memref<48x768xf32, #tpu.memory_space<vmem>>, vector<16x4xf32>
    tpu.vector_store %arg11[%c32_168, %c380_169], %211 {strides = array<i32>} : memref<48x768xf32, #tpu.memory_space<vmem>>, vector<16x4xf32>,
    %c32_170 = arith.constant 32 : index
    %c636_171 = arith.constant 636 : index
    %213 = vector.load %arg11[%c32_170, %c636_171] : memref<48x768xf32, #tpu.memory_space<vmem>>, vector<16x4xf32>
    tpu.vector_store %arg11[%c32_170, %c636_171], %211 {strides = array<i32>} : memref<48x768xf32, #tpu.memory_space<vmem>>, vector<16x4xf32>,
    %c0_172 = arith.constant 0 : index
    %c128_173 = arith.constant 128 : index
    %214 = vector.load %arg11[%c0_172, %c128_173] : memref<48x768xf32, #tpu.memory_space<vmem>>, vector<48x512xf32>
    %c5 = arith.constant 5 : index
    %c0_174 = arith.constant 0 : index
    %c0_175 = arith.constant 0 : index
    %215 = vector.load %arg4[%c5, %c0_174, %c0_175] : memref<6x16x48xf32, #tpu.memory_space<vmem>>, vector<1x16x48xf32>
    %216 = vector.shape_cast %215 : vector<1x16x48xf32> to vector<16x48xf32>
    %cst_176 = arith.constant dense<0.000000e+00> : vector<16x512xf32>
    %217 = tpu.matmul %216, %214, %cst_176 {dimension_numbers = #tpu.dot_dimension_numbers<[1], [0], [0], [1], [0, 0, 1, 1], [], []>} : vector<16x48xf32>, vector<48x512xf32>, vector<16x512xf32> -> vector<16x512xf32>
    %c5_177 = arith.constant 5 : index
    %c0_178 = arith.constant 0 : index
    %c0_179 = arith.constant 0 : index
    %218 = vector.load %arg5[%c5_177, %c0_178, %c0_179] : memref<6x16x1xf32, #tpu.memory_space<vmem>>, vector<1x16x1xf32>
    %219 = vector.shape_cast %218 : vector<1x16x1xf32> to vector<16x1xf32>
    %220 = vector.broadcast %219 : vector<16x1xf32> to vector<16x512xf32>
    %221 = arith.addf %217, %220 : vector<16x512xf32>
    %222 = vector.extract_strided_slice %221 {offsets = [0, 0], sizes = [8, 512], strides = [1, 1]} : vector<16x512xf32> to vector<8x512xf32>
    %223 = math.tanh %222 : vector<8x512xf32>
    %224 = vector.extract_strided_slice %221 {offsets = [8, 0], sizes = [8, 512], strides = [1, 1]} : vector<16x512xf32> to vector<8x512xf32>
    %225 = arith.negf %224 : vector<8x512xf32>
    %226 = math.exp %225 : vector<8x512xf32>
    %cst_180 = arith.constant 1.000000e+00 : f32
    %227 = vector.broadcast %cst_180 : f32 to vector<8x512xf32>
    %228 = arith.addf %227, %226 : vector<8x512xf32>
    %229 = arith.divf %227, %228 : vector<8x512xf32>
    %230 = arith.mulf %223, %229 : vector<8x512xf32>
    %c5_181 = arith.constant 5 : index
    %c0_182 = arith.constant 0 : index
    %c0_183 = arith.constant 0 : index
    %231 = vector.load %arg6[%c5_181, %c0_182, %c0_183] : memref<6x32x8xf32, #tpu.memory_space<vmem>>, vector<1x32x8xf32>
    %232 = vector.shape_cast %231 : vector<1x32x8xf32> to vector<32x8xf32>
    %cst_184 = arith.constant dense<0.000000e+00> : vector<32x512xf32>
    %233 = tpu.matmul %232, %230, %cst_184 {dimension_numbers = #tpu.dot_dimension_numbers<[1], [0], [0], [1], [0, 0, 1, 1], [], []>} : vector<32x8xf32>, vector<8x512xf32>, vector<32x512xf32> -> vector<32x512xf32>
    %c5_185 = arith.constant 5 : index
    %c0_186 = arith.constant 0 : index
    %c0_187 = arith.constant 0 : index
    %234 = vector.load %arg7[%c5_185, %c0_186, %c0_187] : memref<6x32x1xf32, #tpu.memory_space<vmem>>, vector<1x32x1xf32>
    %235 = vector.shape_cast %234 : vector<1x32x1xf32> to vector<32x1xf32>
    %236 = vector.broadcast %235 : vector<32x1xf32> to vector<32x512xf32>
    %237 = arith.addf %233, %236 : vector<32x512xf32>
    %238 = vector.extract_strided_slice %237 {offsets = [0, 0], sizes = [16, 512], strides = [1, 1]} : vector<32x512xf32> to vector<16x512xf32>
    %239 = arith.addf %200, %238 : vector<16x512xf32>
    %cst_188 = arith.constant 0.408248305 : f32
    %240 = vector.broadcast %cst_188 : f32 to vector<16x512xf32>
    %241 = arith.mulf %239, %240 : vector<16x512xf32>
    %c0_189 = arith.constant 0 : index
    %c0_190 = arith.constant 0 : index
    %242 = vector.load %arg8[%c0_189, %c0_190] : memref<16x1xf32, #tpu.memory_space<vmem>>, vector<16x1xf32>
    %243 = vector.broadcast %242 : vector<16x1xf32> to vector<16x512xf32>
    %244 = arith.mulf %243, %241 : vector<16x512xf32>
    %cst_191 = arith.constant dense<0.000000e+00> : vector<512xf32>
    %245 = vector.multi_reduction <add>, %244, %cst_191 [0] : vector<16x512xf32> to vector<512xf32>
    %246 = vector.shape_cast %245 : vector<512xf32> to vector<1x512xf32>
    %c0_192 = arith.constant 0 : index
    %c0_193 = arith.constant 0 : index
    %247 = vector.load %arg9[%c0_192, %c0_193] : memref<1x1xf32, #tpu.memory_space<vmem>>, vector<1x1xf32>
    %248 = vector.broadcast %247 : vector<1x1xf32> to vector<1x512xf32>
    %249 = arith.addf %246, %248 : vector<1x512xf32>
    %c0_194 = arith.constant 0 : index
    %c0_195 = arith.constant 0 : index
    %c0_196 = arith.constant 0 : index
    %250 = vector.load %arg10[%c0_194, %c0_195, %c0_196] : memref<1x1x512xf32, #tpu.memory_space<vmem>>, vector<1x1x512xf32>
    %251 = vector.shape_cast %250 : vector<1x1x512xf32> to vector<1x512xf32>
    %252 = vector.shape_cast %249 : vector<1x512xf32> to vector<1x1x512xf32>
    tpu.vector_store %arg10[%c0_194, %c0_195, %c0_196], %252 {strides = array<i32>} : memref<1x1x512xf32, #tpu.memory_space<vmem>>, vector<1x1x512xf32>,
    return
  }
  func.func @transform_0(%arg0: i32) -> (i32, i32, i32) {
    %c0_i32 = arith.constant 0 : i32
    %c0_i32_0 = arith.constant 0 : i32
    %c0_i32_1 = arith.constant 0 : i32
    return %arg0, %c0_i32, %c0_i32_0 : i32, i32, i32
  }
  func.func @transform_1(%arg0: i32) -> (i32, i32) {
    %c0_i32 = arith.constant 0 : i32
    %c0_i32_0 = arith.constant 0 : i32
    %c0_i32_1 = arith.constant 0 : i32
    return %c0_i32, %c0_i32_0 : i32, i32
  }
  func.func @transform_2(%arg0: i32) -> (i32, i32) {
    %c0_i32 = arith.constant 0 : i32
    %c0_i32_0 = arith.constant 0 : i32
    %c0_i32_1 = arith.constant 0 : i32
    return %c0_i32, %c0_i32_0 : i32, i32
  }
  func.func @transform_3(%arg0: i32) -> (i32, i32, i32) {
    %c0_i32 = arith.constant 0 : i32
    %c0_i32_0 = arith.constant 0 : i32
    %c0_i32_1 = arith.constant 0 : i32
    %c0_i32_2 = arith.constant 0 : i32
    return %c0_i32, %c0_i32_0, %c0_i32_1 : i32, i32, i32
  }
  func.func @transform_4(%arg0: i32) -> (i32, i32, i32) {
    %c0_i32 = arith.constant 0 : i32
    %c0_i32_0 = arith.constant 0 : i32
    %c0_i32_1 = arith.constant 0 : i32
    %c0_i32_2 = arith.constant 0 : i32
    return %c0_i32, %c0_i32_0, %c0_i32_1 : i32, i32, i32
  }
  func.func @transform_5(%arg0: i32) -> (i32, i32, i32) {
    %c0_i32 = arith.constant 0 : i32
    %c0_i32_0 = arith.constant 0 : i32
    %c0_i32_1 = arith.constant 0 : i32
    %c0_i32_2 = arith.constant 0 : i32
    return %c0_i32, %c0_i32_0, %c0_i32_1 : i32, i32, i32
  }
  func.func @transform_6(%arg0: i32) -> (i32, i32, i32) {
    %c0_i32 = arith.constant 0 : i32
    %c0_i32_0 = arith.constant 0 : i32
    %c0_i32_1 = arith.constant 0 : i32
    %c0_i32_2 = arith.constant 0 : i32
    return %c0_i32, %c0_i32_0, %c0_i32_1 : i32, i32, i32
  }
  func.func @transform_7(%arg0: i32) -> (i32, i32) {
    %c0_i32 = arith.constant 0 : i32
    %c0_i32_0 = arith.constant 0 : i32
    %c0_i32_1 = arith.constant 0 : i32
    return %c0_i32, %c0_i32_0 : i32, i32
  }
  func.func @transform_8(%arg0: i32) -> (i32, i32) {
    %c0_i32 = arith.constant 0 : i32
    %c0_i32_0 = arith.constant 0 : i32
    %c0_i32_1 = arith.constant 0 : i32
    return %c0_i32, %c0_i32_0 : i32, i32
  }
  func.func @transform_9(%arg0: i32) -> (i32, i32, i32) {
    %c0_i32 = arith.constant 0 : i32
    %c0_i32_0 = arith.constant 0 : i32
    %c0_i32_1 = arith.constant 0 : i32
    return %arg0, %c0_i32, %c0_i32_0 : i32, i32, i32
  }
}

module attributes {stable_mosaic.version = 11 : i64} {
  func.func @kernel(%arg0: i32, %arg1: memref<1x1x512xf32, #tpu.memory_space<vmem>>, %arg2: memref<16x1xf32, #tpu.memory_space<vmem>>, %arg3: memref<16x1xf32, #tpu.memory_space<vmem>>, %arg4: memref<6x16x48xf32, #tpu.memory_space<vmem>>, %arg5: memref<6x16x1xf32, #tpu.memory_space<vmem>>, %arg6: memref<6x32x8xf32, #tpu.memory_space<vmem>>, %arg7: memref<6x32x1xf32, #tpu.memory_space<vmem>>, %arg8: memref<16x1xf32, #tpu.memory_space<vmem>>, %arg9: memref<1x1xf32, #tpu.memory_space<vmem>>, %arg10: memref<1x1x512xf32, #tpu.memory_space<vmem>>, %arg11: memref<48x768xf32, #tpu.memory_space<vmem>>) attributes {dimension_semantics = [#tpu.dimension_semantics<parallel>], iteration_bounds = array<i64: 4>, scalar_prefetch = 0 : i64, scratch_operands = 1 : i64, tpu.core_type = #tpu.core_type<tc>, window_params = [{transform_indices = @transform_0, window_bounds = array<i64: 1, 1, 512>}, {pipeline_mode = #tpu.pipeline_mode<synchronous>, transform_indices = @transform_1, window_bounds = array<i64: 16, 1>}, {pipeline_mode = #tpu.pipeline_mode<synchronous>, transform_indices = @transform_2, window_bounds = array<i64: 16, 1>}, {pipeline_mode = #tpu.pipeline_mode<synchronous>, transform_indices = @transform_3, window_bounds = array<i64: 6, 16, 48>}, {pipeline_mode = #tpu.pipeline_mode<synchronous>, transform_indices = @transform_4, window_bounds = array<i64: 6, 16, 1>}, {pipeline_mode = #tpu.pipeline_mode<synchronous>, transform_indices = @transform_5, window_bounds = array<i64: 6, 32, 8>}, {pipeline_mode = #tpu.pipeline_mode<synchronous>, transform_indices = @transform_6, window_bounds = array<i64: 6, 32, 1>}, {pipeline_mode = #tpu.pipeline_mode<synchronous>, transform_indices = @transform_7, window_bounds = array<i64: 16, 1>}, {pipeline_mode = #tpu.pipeline_mode<synchronous>, transform_indices = @transform_8, window_bounds = array<i64: 1, 1>}, {transform_indices = @transform_9, window_bounds = array<i64: 1, 1, 512>}]} {
    %c0 = arith.constant 0 : index
    %c0_0 = arith.constant 0 : index
    %c0_1 = arith.constant 0 : index
    %0 = vector.load %arg1[%c0, %c0_0, %c0_1] : memref<1x1x512xf32, #tpu.memory_space<vmem>>, vector<1x1x512xf32>
    %1 = vector.shape_cast %0 : vector<1x1x512xf32> to vector<1x512xf32>
    %c0_2 = arith.constant 0 : index
    %c0_3 = arith.constant 0 : index
    %2 = vector.load %arg2[%c0_2, %c0_3] : memref<16x1xf32, #tpu.memory_space<vmem>>, vector<16x1xf32>
    %3 = vector.broadcast %2 : vector<16x1xf32> to vector<16x512xf32>
    %4 = vector.broadcast %1 : vector<1x512xf32> to vector<16x512xf32>
    %5 = arith.mulf %3, %4 : vector<16x512xf32>
    %c0_4 = arith.constant 0 : index
    %c0_5 = arith.constant 0 : index
    %6 = vector.load %arg3[%c0_4, %c0_5] : memref<16x1xf32, #tpu.memory_space<vmem>>, vector<16x1xf32>
    %7 = vector.broadcast %6 : vector<16x1xf32> to vector<16x512xf32>
    %8 = arith.addf %5, %7 : vector<16x512xf32>
    %cst = arith.constant 0.000000e+00 : f32
    %9 = vector.broadcast %cst : f32 to vector<16x512xf32>
    %c0_6 = arith.constant 0 : index
    %c129 = arith.constant 129 : index
    %10 = vector.load %arg11[%c0_6, %c129] : memref<48x768xf32, #tpu.memory_space<vmem>>, vector<16x512xf32>
    tpu.vector_store %arg11[%c0_6, %c129], %8 {strides = array<i32>} : memref<48x768xf32, #tpu.memory_space<vmem>>, vector<16x512xf32>,
    %cst_7 = arith.constant 0.000000e+00 : f32
    %11 = vector.broadcast %cst_7 : f32 to vector<16x1xf32>
    %c0_8 = arith.constant 0 : index
    %c128 = arith.constant 128 : index
    %12 = vector.load %arg11[%c0_8, %c128] : memref<48x768xf32, #tpu.memory_space<vmem>>, vector<16x1xf32>
    tpu.vector_store %arg11[%c0_8, %c128], %11 {strides = array<i32>} : memref<48x768xf32, #tpu.memory_space<vmem>>, vector<16x1xf32>,
    %c0_9 = arith.constant 0 : index
    %c384 = arith.constant 384 : index
    %13 = vector.load %arg11[%c0_9, %c384] : memref<48x768xf32, #tpu.memory_space<vmem>>, vector<16x1xf32>
    tpu.vector_store %arg11[%c0_9, %c384], %11 {strides = array<i32>} : memref<48x768xf32, #tpu.memory_space<vmem>>, vector<16x1xf32>,
    %c16 = arith.constant 16 : index
    %c128_10 = arith.constant 128 : index
    %14 = vector.load %arg11[%c16, %c128_10] : memref<48x768xf32, #tpu.memory_space<vmem>>, vector<16x512xf32>
    tpu.vector_store %arg11[%c16, %c128_10], %8 {strides = array<i32>} : memref<48x768xf32, #tpu.memory_space<vmem>>, vector<16x512xf32>,
    %c32 = arith.constant 32 : index
    %c127 = arith.constant 127 : index
    %15 = vector.load %arg11[%c32, %c127] : memref<48x768xf32, #tpu.memory_space<vmem>>, vector<16x512xf32>
    tpu.vector_store %arg11[%c32, %c127], %8 {strides = array<i32>} : memref<48x768xf32, #tpu.memory_space<vmem>>, vector<16x512xf32>,
    %cst_11 = arith.constant 0.000000e+00 : f32
    %16 = vector.broadcast %cst_11 : f32 to vector<16x1xf32>
    %c32_12 = arith.constant 32 : index
    %c383 = arith.constant 383 : index
    %17 = vector.load %arg11[%c32_12, %c383] : memref<48x768xf32, #tpu.memory_space<vmem>>, vector<16x1xf32>
    tpu.vector_store %arg11[%c32_12, %c383], %16 {strides = array<i32>} : memref<48x768xf32, #tpu.memory_space<vmem>>, vector<16x1xf32>,
    %c32_13 = arith.constant 32 : index
    %c639 = arith.constant 639 : index
    %18 = vector.load %arg11[%c32_13, %c639] : memref<48x768xf32, #tpu.memory_space<vmem>>, vector<16x1xf32>
    tpu.vector_store %arg11[%c32_13, %c639], %16 {strides = array<i32>} : memref<48x768xf32, #tpu.memory_space<vmem>>, vector<16x1xf32>,
    %c0_14 = arith.constant 0 : index
    %c128_15 = arith.constant 128 : index
    %19 = vector.load %arg11[%c0_14, %c128_15] : memref<48x768xf32, #tpu.memory_space<vmem>>, vector<48x512xf32>
    %c0_16 = arith.constant 0 : index
    %c0_17 = arith.constant 0 : index
    %c0_18 = arith.constant 0 : index
    %20 = vector.load %arg4[%c0_16, %c0_17, %c0_18] : memref<6x16x48xf32, #tpu.memory_space<vmem>>, vector<1x16x48xf32>
    %21 = vector.shape_cast %20 : vector<1x16x48xf32> to vector<16x48xf32>
    %cst_19 = arith.constant dense<0.000000e+00> : vector<16x512xf32>
    %22 = tpu.matmul %21, %19, %cst_19 {dimension_numbers = #tpu.dot_dimension_numbers<[1], [0], [0], [1], [0, 0, 1, 1], [], []>} : vector<16x48xf32>, vector<48x512xf32>, vector<16x512xf32> -> vector<16x512xf32>
    %c0_20 = arith.constant 0 : index
    %c0_21 = arith.constant 0 : index
    %c0_22 = arith.constant 0 : index
    %23 = vector.load %arg5[%c0_20, %c0_21, %c0_22] : memref<6x16x1xf32, #tpu.memory_space<vmem>>, vector<1x16x1xf32>
    %24 = vector.shape_cast %23 : vector<1x16x1xf32> to vector<16x1xf32>
    %25 = vector.broadcast %24 : vector<16x1xf32> to vector<16x512xf32>
    %26 = arith.addf %22, %25 : vector<16x512xf32>
    %27 = vector.extract_strided_slice %26 {offsets = [0, 0], sizes = [8, 512], strides = [1, 1]} : vector<16x512xf32> to vector<8x512xf32>
    %28 = math.tanh %27 : vector<8x512xf32>
    %29 = vector.extract_strided_slice %26 {offsets = [8, 0], sizes = [8, 512], strides = [1, 1]} : vector<16x512xf32> to vector<8x512xf32>
    %30 = arith.negf %29 : vector<8x512xf32>
    %31 = math.exp %30 : vector<8x512xf32>
    %cst_23 = arith.constant 1.000000e+00 : f32
    %32 = vector.broadcast %cst_23 : f32 to vector<8x512xf32>
    %33 = arith.addf %32, %31 : vector<8x512xf32>
    %34 = arith.divf %32, %33 : vector<8x512xf32>
    %35 = arith.mulf %28, %34 : vector<8x512xf32>
    %c0_24 = arith.constant 0 : index
    %c0_25 = arith.constant 0 : index
    %c0_26 = arith.constant 0 : index
    %36 = vector.load %arg6[%c0_24, %c0_25, %c0_26] : memref<6x32x8xf32, #tpu.memory_space<vmem>>, vector<1x32x8xf32>
    %37 = vector.shape_cast %36 : vector<1x32x8xf32> to vector<32x8xf32>
    %cst_27 = arith.constant dense<0.000000e+00> : vector<32x512xf32>
    %38 = tpu.matmul %37, %35, %cst_27 {dimension_numbers = #tpu.dot_dimension_numbers<[1], [0], [0], [1], [0, 0, 1, 1], [], []>} : vector<32x8xf32>, vector<8x512xf32>, vector<32x512xf32> -> vector<32x512xf32>
    %c0_28 = arith.constant 0 : index
    %c0_29 = arith.constant 0 : index
    %c0_30 = arith.constant 0 : index
    %39 = vector.load %arg7[%c0_28, %c0_29, %c0_30] : memref<6x32x1xf32, #tpu.memory_space<vmem>>, vector<1x32x1xf32>
    %40 = vector.shape_cast %39 : vector<1x32x1xf32> to vector<32x1xf32>
    %41 = vector.broadcast %40 : vector<32x1xf32> to vector<32x512xf32>
    %42 = arith.addf %38, %41 : vector<32x512xf32>
    %43 = vector.extract_strided_slice %42 {offsets = [0, 0], sizes = [16, 512], strides = [1, 1]} : vector<32x512xf32> to vector<16x512xf32>
    %44 = arith.addf %9, %43 : vector<16x512xf32>
    %45 = vector.extract_strided_slice %42 {offsets = [16, 0], sizes = [16, 512], strides = [1, 1]} : vector<32x512xf32> to vector<16x512xf32>
    %46 = arith.addf %45, %8 : vector<16x512xf32>
    %cst_31 = arith.constant 0.707106769 : f32
    %47 = vector.broadcast %cst_31 : f32 to vector<16x512xf32>
    %48 = arith.mulf %46, %47 : vector<16x512xf32>
    %c0_32 = arith.constant 0 : index
    %c130 = arith.constant 130 : index
    %49 = vector.load %arg11[%c0_32, %c130] : memref<48x768xf32, #tpu.memory_space<vmem>>, vector<16x512xf32>
    tpu.vector_store %arg11[%c0_32, %c130], %48 {strides = array<i32>} : memref<48x768xf32, #tpu.memory_space<vmem>>, vector<16x512xf32>,
    %cst_33 = arith.constant 0.000000e+00 : f32
    %50 = vector.broadcast %cst_33 : f32 to vector<16x2xf32>
    %c0_34 = arith.constant 0 : index
    %c128_35 = arith.constant 128 : index
    %51 = vector.load %arg11[%c0_34, %c128_35] : memref<48x768xf32, #tpu.memory_space<vmem>>, vector<16x2xf32>
    tpu.vector_store %arg11[%c0_34, %c128_35], %50 {strides = array<i32>} : memref<48x768xf32, #tpu.memory_space<vmem>>, vector<16x2xf32>,
    %c0_36 = arith.constant 0 : index
    %c384_37 = arith.constant 384 : index
    %52 = vector.load %arg11[%c0_36, %c384_37] : memref<48x768xf32, #tpu.memory_space<vmem>>, vector<16x2xf32>
    tpu.vector_store %arg11[%c0_36, %c384_37], %50 {strides = array<i32>} : memref<48x768xf32, #tpu.memory_space<vmem>>, vector<16x2xf32>,
    %c16_38 = arith.constant 16 : index
    %c128_39 = arith.constant 128 : index
    %53 = vector.load %arg11[%c16_38, %c128_39] : memref<48x768xf32, #tpu.memory_space<vmem>>, vector<16x512xf32>
    tpu.vector_store %arg11[%c16_38, %c128_39], %48 {strides = array<i32>} : memref<48x768xf32, #tpu.memory_space<vmem>>, vector<16x512xf32>,
    %c32_40 = arith.constant 32 : index
    %c126 = arith.constant 126 : index
    %54 = vector.load %arg11[%c32_40, %c126] : memref<48x768xf32, #tpu.memory_space<vmem>>, vector<16x512xf32>
    tpu.vector_store %arg11[%c32_40, %c126], %48 {strides = array<i32>} : memref<48x768xf32, #tpu.memory_space<vmem>>, vector<16x512xf32>,
    %cst_41 = arith.constant 0.000000e+00 : f32
    %55 = vector.broadcast %cst_41 : f32 to vector<16x2xf32>
    %c32_42 = arith.constant 32 : index
    %c382 = arith.constant 382 : index
    %56 = vector.load %arg11[%c32_42, %c382] : memref<48x768xf32, #tpu.memory_space<vmem>>, vector<16x2xf32>
    tpu.vector_store %arg11[%c32_42, %c382], %55 {strides = array<i32>} : memref<48x768xf32, #tpu.memory_space<vmem>>, vector<16x2xf32>,
    %c32_43 = arith.constant 32 : index
    %c638 = arith.constant 638 : index
    %57 = vector.load %arg11[%c32_43, %c638] : memref<48x768xf32, #tpu.memory_space<vmem>>, vector<16x2xf32>
    tpu.vector_store %arg11[%c32_43, %c638], %55 {strides = array<i32>} : memref<48x768xf32, #tpu.memory_space<vmem>>, vector<16x2xf32>,
    %c0_44 = arith.constant 0 : index
    %c128_45 = arith.constant 128 : index
    %58 = vector.load %arg11[%c0_44, %c128_45] : memref<48x768xf32, #tpu.memory_space<vmem>>, vector<48x512xf32>
    %c1 = arith.constant 1 : index
    %c0_46 = arith.constant 0 : index
    %c0_47 = arith.constant 0 : index
    %59 = vector.load %arg4[%c1, %c0_46, %c0_47] : memref<6x16x48xf32, #tpu.memory_space<vmem>>, vector<1x16x48xf32>
    %60 = vector.shape_cast %59 : vector<1x16x48xf32> to vector<16x48xf32>
    %cst_48 = arith.constant dense<0.000000e+00> : vector<16x512xf32>
    %61 = tpu.matmul %60, %58, %cst_48 {dimension_numbers = #tpu.dot_dimension_numbers<[1], [0], [0], [1], [0, 0, 1, 1], [], []>} : vector<16x48xf32>, vector<48x512xf32>, vector<16x512xf32> -> vector<16x512xf32>
    %c1_49 = arith.constant 1 : index
    %c0_50 = arith.constant 0 : index
    %c0_51 = arith.constant 0 : index
    %62 = vector.load %arg5[%c1_49, %c0_50, %c0_51] : memref<6x16x1xf32, #tpu.memory_space<vmem>>, vector<1x16x1xf32>
    %63 = vector.shape_cast %62 : vector<1x16x1xf32> to vector<16x1xf32>
    %64 = vector.broadcast %63 : vector<16x1xf32> to vector<16x512xf32>
    %65 = arith.addf %61, %64 : vector<16x512xf32>
    %66 = vector.extract_strided_slice %65 {offsets = [0, 0], sizes = [8, 512], strides = [1, 1]} : vector<16x512xf32> to vector<8x512xf32>
    %67 = math.tanh %66 : vector<8x512xf32>
    %68 = vector.extract_strided_slice %65 {offsets = [8, 0], sizes = [8, 512], strides = [1, 1]} : vector<16x512xf32> to vector<8x512xf32>
    %69 = arith.negf %68 : vector<8x512xf32>
    %70 = math.exp %69 : vector<8x512xf32>
    %cst_52 = arith.constant 1.000000e+00 : f32
    %71 = vector.broadcast %cst_52 : f32 to vector<8x512xf32>
    %72 = arith.addf %71, %70 : vector<8x512xf32>
    %73 = arith.divf %71, %72 : vector<8x512xf32>
    %74 = arith.mulf %67, %73 : vector<8x512xf32>
    %c1_53 = arith.constant 1 : index
    %c0_54 = arith.constant 0 : index
    %c0_55 = arith.constant 0 : index
    %75 = vector.load %arg6[%c1_53, %c0_54, %c0_55] : memref<6x32x8xf32, #tpu.memory_space<vmem>>, vector<1x32x8xf32>
    %76 = vector.shape_cast %75 : vector<1x32x8xf32> to vector<32x8xf32>
    %cst_56 = arith.constant dense<0.000000e+00> : vector<32x512xf32>
    %77 = tpu.matmul %76, %74, %cst_56 {dimension_numbers = #tpu.dot_dimension_numbers<[1], [0], [0], [1], [0, 0, 1, 1], [], []>} : vector<32x8xf32>, vector<8x512xf32>, vector<32x512xf32> -> vector<32x512xf32>
    %c1_57 = arith.constant 1 : index
    %c0_58 = arith.constant 0 : index
    %c0_59 = arith.constant 0 : index
    %78 = vector.load %arg7[%c1_57, %c0_58, %c0_59] : memref<6x32x1xf32, #tpu.memory_space<vmem>>, vector<1x32x1xf32>
    %79 = vector.shape_cast %78 : vector<1x32x1xf32> to vector<32x1xf32>
    %80 = vector.broadcast %79 : vector<32x1xf32> to vector<32x512xf32>
    %81 = arith.addf %77, %80 : vector<32x512xf32>
    %82 = vector.extract_strided_slice %81 {offsets = [0, 0], sizes = [16, 512], strides = [1, 1]} : vector<32x512xf32> to vector<16x512xf32>
    %83 = arith.addf %44, %82 : vector<16x512xf32>
    %84 = vector.extract_strided_slice %81 {offsets = [16, 0], sizes = [16, 512], strides = [1, 1]} : vector<32x512xf32> to vector<16x512xf32>
    %85 = arith.addf %84, %48 : vector<16x512xf32>
    %cst_60 = arith.constant 0.707106769 : f32
    %86 = vector.broadcast %cst_60 : f32 to vector<16x512xf32>
    %87 = arith.mulf %85, %86 : vector<16x512xf32>
    %c0_61 = arith.constant 0 : index
    %c132 = arith.constant 132 : index
    %88 = vector.load %arg11[%c0_61, %c132] : memref<48x768xf32, #tpu.memory_space<vmem>>, vector<16x512xf32>
    tpu.vector_store %arg11[%c0_61, %c132], %87 {strides = array<i32>} : memref<48x768xf32, #tpu.memory_space<vmem>>, vector<16x512xf32>,
    %cst_62 = arith.constant 0.000000e+00 : f32
    %89 = vector.broadcast %cst_62 : f32 to vector<16x4xf32>
    %c0_63 = arith.constant 0 : index
    %c128_64 = arith.constant 128 : index
    %90 = vector.load %arg11[%c0_63, %c128_64] : memref<48x768xf32, #tpu.memory_space<vmem>>, vector<16x4xf32>
    tpu.vector_store %arg11[%c0_63, %c128_64], %89 {strides = array<i32>} : memref<48x768xf32, #tpu.memory_space<vmem>>, vector<16x4xf32>,
    %c0_65 = arith.constant 0 : index
    %c384_66 = arith.constant 384 : index
    %91 = vector.load %arg11[%c0_65, %c384_66] : memref<48x768xf32, #tpu.memory_space<vmem>>, vector<16x4xf32>
    tpu.vector_store %arg11[%c0_65, %c384_66], %89 {strides = array<i32>} : memref<48x768xf32, #tpu.memory_space<vmem>>, vector<16x4xf32>,
    %c16_67 = arith.constant 16 : index
    %c128_68 = arith.constant 128 : index
    %92 = vector.load %arg11[%c16_67, %c128_68] : memref<48x768xf32, #tpu.memory_space<vmem>>, vector<16x512xf32>
    tpu.vector_store %arg11[%c16_67, %c128_68], %87 {strides = array<i32>} : memref<48x768xf32, #tpu.memory_space<vmem>>, vector<16x512xf32>,
    %c32_69 = arith.constant 32 : index
    %c124 = arith.constant 124 : index
    %93 = vector.load %arg11[%c32_69, %c124] : memref<48x768xf32, #tpu.memory_space<vmem>>, vector<16x512xf32>
    tpu.vector_store %arg11[%c32_69, %c124], %87 {strides = array<i32>} : memref<48x768xf32, #tpu.memory_space<vmem>>, vector<16x512xf32>,
    %cst_70 = arith.constant 0.000000e+00 : f32
    %94 = vector.broadcast %cst_70 : f32 to vector<16x4xf32>
    %c32_71 = arith.constant 32 : index
    %c380 = arith.constant 380 : index
    %95 = vector.load %arg11[%c32_71, %c380] : memref<48x768xf32, #tpu.memory_space<vmem>>, vector<16x4xf32>
    tpu.vector_store %arg11[%c32_71, %c380], %94 {strides = array<i32>} : memref<48x768xf32, #tpu.memory_space<vmem>>, vector<16x4xf32>,
    %c32_72 = arith.constant 32 : index
    %c636 = arith.constant 636 : index
    %96 = vector.load %arg11[%c32_72, %c636] : memref<48x768xf32, #tpu.memory_space<vmem>>, vector<16x4xf32>
    tpu.vector_store %arg11[%c32_72, %c636], %94 {strides = array<i32>} : memref<48x768xf32, #tpu.memory_space<vmem>>, vector<16x4xf32>,
    %c0_73 = arith.constant 0 : index
    %c128_74 = arith.constant 128 : index
    %97 = vector.load %arg11[%c0_73, %c128_74] : memref<48x768xf32, #tpu.memory_space<vmem>>, vector<48x512xf32>
    %c2 = arith.constant 2 : index
    %c0_75 = arith.constant 0 : index
    %c0_76 = arith.constant 0 : index
    %98 = vector.load %arg4[%c2, %c0_75, %c0_76] : memref<6x16x48xf32, #tpu.memory_space<vmem>>, vector<1x16x48xf32>
    %99 = vector.shape_cast %98 : vector<1x16x48xf32> to vector<16x48xf32>
    %cst_77 = arith.constant dense<0.000000e+00> : vector<16x512xf32>
    %100 = tpu.matmul %99, %97, %cst_77 {dimension_numbers = #tpu.dot_dimension_numbers<[1], [0], [0], [1], [0, 0, 1, 1], [], []>} : vector<16x48xf32>, vector<48x512xf32>, vector<16x512xf32> -> vector<16x512xf32>
    %c2_78 = arith.constant 2 : index
    %c0_79 = arith.constant 0 : index
    %c0_80 = arith.constant 0 : index
    %101 = vector.load %arg5[%c2_78, %c0_79, %c0_80] : memref<6x16x1xf32, #tpu.memory_space<vmem>>, vector<1x16x1xf32>
    %102 = vector.shape_cast %101 : vector<1x16x1xf32> to vector<16x1xf32>
    %103 = vector.broadcast %102 : vector<16x1xf32> to vector<16x512xf32>
    %104 = arith.addf %100, %103 : vector<16x512xf32>
    %105 = vector.extract_strided_slice %104 {offsets = [0, 0], sizes = [8, 512], strides = [1, 1]} : vector<16x512xf32> to vector<8x512xf32>
    %106 = math.tanh %105 : vector<8x512xf32>
    %107 = vector.extract_strided_slice %104 {offsets = [8, 0], sizes = [8, 512], strides = [1, 1]} : vector<16x512xf32> to vector<8x512xf32>
    %108 = arith.negf %107 : vector<8x512xf32>
    %109 = math.exp %108 : vector<8x512xf32>
    %cst_81 = arith.constant 1.000000e+00 : f32
    %110 = vector.broadcast %cst_81 : f32 to vector<8x512xf32>
    %111 = arith.addf %110, %109 : vector<8x512xf32>
    %112 = arith.divf %110, %111 : vector<8x512xf32>
    %113 = arith.mulf %106, %112 : vector<8x512xf32>
    %c2_82 = arith.constant 2 : index
    %c0_83 = arith.constant 0 : index
    %c0_84 = arith.constant 0 : index
    %114 = vector.load %arg6[%c2_82, %c0_83, %c0_84] : memref<6x32x8xf32, #tpu.memory_space<vmem>>, vector<1x32x8xf32>
    %115 = vector.shape_cast %114 : vector<1x32x8xf32> to vector<32x8xf32>
    %cst_85 = arith.constant dense<0.000000e+00> : vector<32x512xf32>
    %116 = tpu.matmul %115, %113, %cst_85 {dimension_numbers = #tpu.dot_dimension_numbers<[1], [0], [0], [1], [0, 0, 1, 1], [], []>} : vector<32x8xf32>, vector<8x512xf32>, vector<32x512xf32> -> vector<32x512xf32>
    %c2_86 = arith.constant 2 : index
    %c0_87 = arith.constant 0 : index
    %c0_88 = arith.constant 0 : index
    %117 = vector.load %arg7[%c2_86, %c0_87, %c0_88] : memref<6x32x1xf32, #tpu.memory_space<vmem>>, vector<1x32x1xf32>
    %118 = vector.shape_cast %117 : vector<1x32x1xf32> to vector<32x1xf32>
    %119 = vector.broadcast %118 : vector<32x1xf32> to vector<32x512xf32>
    %120 = arith.addf %116, %119 : vector<32x512xf32>
    %121 = vector.extract_strided_slice %120 {offsets = [0, 0], sizes = [16, 512], strides = [1, 1]} : vector<32x512xf32> to vector<16x512xf32>
    %122 = arith.addf %83, %121 : vector<16x512xf32>
    %123 = vector.extract_strided_slice %120 {offsets = [16, 0], sizes = [16, 512], strides = [1, 1]} : vector<32x512xf32> to vector<16x512xf32>
    %124 = arith.addf %123, %87 : vector<16x512xf32>
    %cst_89 = arith.constant 0.707106769 : f32
    %125 = vector.broadcast %cst_89 : f32 to vector<16x512xf32>
    %126 = arith.mulf %124, %125 : vector<16x512xf32>
    %c0_90 = arith.constant 0 : index
    %c129_91 = arith.constant 129 : index
    %127 = vector.load %arg11[%c0_90, %c129_91] : memref<48x768xf32, #tpu.memory_space<vmem>>, vector<16x512xf32>
    tpu.vector_store %arg11[%c0_90, %c129_91], %126 {strides = array<i32>} : memref<48x768xf32, #tpu.memory_space<vmem>>, vector<16x512xf32>,
    %cst_92 = arith.constant 0.000000e+00 : f32
    %128 = vector.broadcast %cst_92 : f32 to vector<16x1xf32>
    %c0_93 = arith.constant 0 : index
    %c128_94 = arith.constant 128 : index
    %129 = vector.load %arg11[%c0_93, %c128_94] : memref<48x768xf32, #tpu.memory_space<vmem>>, vector<16x1xf32>
    tpu.vector_store %arg11[%c0_93, %c128_94], %128 {strides = array<i32>} : memref<48x768xf32, #tpu.memory_space<vmem>>, vector<16x1xf32>,
    %c0_95 = arith.constant 0 : index
    %c384_96 = arith.constant 384 : index
    %130 = vector.load %arg11[%c0_95, %c384_96] : memref<48x768xf32, #tpu.memory_space<vmem>>, vector<16x1xf32>
    tpu.vector_store %arg11[%c0_95, %c384_96], %128 {strides = array<i32>} : memref<48x768xf32, #tpu.memory_space<vmem>>, vector<16x1xf32>,
    %c16_97 = arith.constant 16 : index
    %c128_98 = arith.constant 128 : index
    %131 = vector.load %arg11[%c16_97, %c128_98] : memref<48x768xf32, #tpu.memory_space<vmem>>, vector<16x512xf32>
    tpu.vector_store %arg11[%c16_97, %c128_98], %126 {strides = array<i32>} : memref<48x768xf32, #tpu.memory_space<vmem>>, vector<16x512xf32>,
    %c32_99 = arith.constant 32 : index
    %c127_100 = arith.constant 127 : index
    %132 = vector.load %arg11[%c32_99, %c127_100] : memref<48x768xf32, #tpu.memory_space<vmem>>, vector<16x512xf32>
    tpu.vector_store %arg11[%c32_99, %c127_100], %126 {strides = array<i32>} : memref<48x768xf32, #tpu.memory_space<vmem>>, vector<16x512xf32>,
    %cst_101 = arith.constant 0.000000e+00 : f32
    %133 = vector.broadcast %cst_101 : f32 to vector<16x1xf32>
    %c32_102 = arith.constant 32 : index
    %c383_103 = arith.constant 383 : index
    %134 = vector.load %arg11[%c32_102, %c383_103] : memref<48x768xf32, #tpu.memory_space<vmem>>, vector<16x1xf32>
    tpu.vector_store %arg11[%c32_102, %c383_103], %133 {strides = array<i32>} : memref<48x768xf32, #tpu.memory_space<vmem>>, vector<16x1xf32>,
    %c32_104 = arith.constant 32 : index
    %c639_105 = arith.constant 639 : index
    %135 = vector.load %arg11[%c32_104, %c639_105] : memref<48x768xf32, #tpu.memory_space<vmem>>, vector<16x1xf32>
    tpu.vector_store %arg11[%c32_104, %c639_105], %133 {strides = array<i32>} : memref<48x768xf32, #tpu.memory_space<vmem>>, vector<16x1xf32>,
    %c0_106 = arith.constant 0 : index
    %c128_107 = arith.constant 128 : index
    %136 = vector.load %arg11[%c0_106, %c128_107] : memref<48x768xf32, #tpu.memory_space<vmem>>, vector<48x512xf32>
    %c3 = arith.constant 3 : index
    %c0_108 = arith.constant 0 : index
    %c0_109 = arith.constant 0 : index
    %137 = vector.load %arg4[%c3, %c0_108, %c0_109] : memref<6x16x48xf32, #tpu.memory_space<vmem>>, vector<1x16x48xf32>
    %138 = vector.shape_cast %137 : vector<1x16x48xf32> to vector<16x48xf32>
    %cst_110 = arith.constant dense<0.000000e+00> : vector<16x512xf32>
    %139 = tpu.matmul %138, %136, %cst_110 {dimension_numbers = #tpu.dot_dimension_numbers<[1], [0], [0], [1], [0, 0, 1, 1], [], []>} : vector<16x48xf32>, vector<48x512xf32>, vector<16x512xf32> -> vector<16x512xf32>
    %c3_111 = arith.constant 3 : index
    %c0_112 = arith.constant 0 : index
    %c0_113 = arith.constant 0 : index
    %140 = vector.load %arg5[%c3_111, %c0_112, %c0_113] : memref<6x16x1xf32, #tpu.memory_space<vmem>>, vector<1x16x1xf32>
    %141 = vector.shape_cast %140 : vector<1x16x1xf32> to vector<16x1xf32>
    %142 = vector.broadcast %141 : vector<16x1xf32> to vector<16x512xf32>
    %143 = arith.addf %139, %142 : vector<16x512xf32>
    %144 = vector.extract_strided_slice %143 {offsets = [0, 0], sizes = [8, 512], strides = [1, 1]} : vector<16x512xf32> to vector<8x512xf32>
    %145 = math.tanh %144 : vector<8x512xf32>
    %146 = vector.extract_strided_slice %143 {offsets = [8, 0], sizes = [8, 512], strides = [1, 1]} : vector<16x512xf32> to vector<8x512xf32>
    %147 = arith.negf %146 : vector<8x512xf32>
    %148 = math.exp %147 : vector<8x512xf32>
    %cst_114 = arith.constant 1.000000e+00 : f32
    %149 = vector.broadcast %cst_114 : f32 to vector<8x512xf32>
    %150 = arith.addf %149, %148 : vector<8x512xf32>
    %151 = arith.divf %149, %150 : vector<8x512xf32>
    %152 = arith.mulf %145, %151 : vector<8x512xf32>
    %c3_115 = arith.constant 3 : index
    %c0_116 = arith.constant 0 : index
    %c0_117 = arith.constant 0 : index
    %153 = vector.load %arg6[%c3_115, %c0_116, %c0_117] : memref<6x32x8xf32, #tpu.memory_space<vmem>>, vector<1x32x8xf32>
    %154 = vector.shape_cast %153 : vector<1x32x8xf32> to vector<32x8xf32>
    %cst_118 = arith.constant dense<0.000000e+00> : vector<32x512xf32>
    %155 = tpu.matmul %154, %152, %cst_118 {dimension_numbers = #tpu.dot_dimension_numbers<[1], [0], [0], [1], [0, 0, 1, 1], [], []>} : vector<32x8xf32>, vector<8x512xf32>, vector<32x512xf32> -> vector<32x512xf32>
    %c3_119 = arith.constant 3 : index
    %c0_120 = arith.constant 0 : index
    %c0_121 = arith.constant 0 : index
    %156 = vector.load %arg7[%c3_119, %c0_120, %c0_121] : memref<6x32x1xf32, #tpu.memory_space<vmem>>, vector<1x32x1xf32>
    %157 = vector.shape_cast %156 : vector<1x32x1xf32> to vector<32x1xf32>
    %158 = vector.broadcast %157 : vector<32x1xf32> to vector<32x512xf32>
    %159 = arith.addf %155, %158 : vector<32x512xf32>
    %160 = vector.extract_strided_slice %159 {offsets = [0, 0], sizes = [16, 512], strides = [1, 1]} : vector<32x512xf32> to vector<16x512xf32>
    %161 = arith.addf %122, %160 : vector<16x512xf32>
    %162 = vector.extract_strided_slice %159 {offsets = [16, 0], sizes = [16, 512], strides = [1, 1]} : vector<32x512xf32> to vector<16x512xf32>
    %163 = arith.addf %162, %126 : vector<16x512xf32>
    %cst_122 = arith.constant 0.707106769 : f32
    %164 = vector.broadcast %cst_122 : f32 to vector<16x512xf32>
    %165 = arith.mulf %163, %164 : vector<16x512xf32>
    %c0_123 = arith.constant 0 : index
    %c130_124 = arith.constant 130 : index
    %166 = vector.load %arg11[%c0_123, %c130_124] : memref<48x768xf32, #tpu.memory_space<vmem>>, vector<16x512xf32>
    tpu.vector_store %arg11[%c0_123, %c130_124], %165 {strides = array<i32>} : memref<48x768xf32, #tpu.memory_space<vmem>>, vector<16x512xf32>,
    %cst_125 = arith.constant 0.000000e+00 : f32
    %167 = vector.broadcast %cst_125 : f32 to vector<16x2xf32>
    %c0_126 = arith.constant 0 : index
    %c128_127 = arith.constant 128 : index
    %168 = vector.load %arg11[%c0_126, %c128_127] : memref<48x768xf32, #tpu.memory_space<vmem>>, vector<16x2xf32>
    tpu.vector_store %arg11[%c0_126, %c128_127], %167 {strides = array<i32>} : memref<48x768xf32, #tpu.memory_space<vmem>>, vector<16x2xf32>,
    %c0_128 = arith.constant 0 : index
    %c384_129 = arith.constant 384 : index
    %169 = vector.load %arg11[%c0_128, %c384_129] : memref<48x768xf32, #tpu.memory_space<vmem>>, vector<16x2xf32>
    tpu.vector_store %arg11[%c0_128, %c384_129], %167 {strides = array<i32>} : memref<48x768xf32, #tpu.memory_space<vmem>>, vector<16x2xf32>,
    %c16_130 = arith.constant 16 : index
    %c128_131 = arith.constant 128 : index
    %170 = vector.load %arg11[%c16_130, %c128_131] : memref<48x768xf32, #tpu.memory_space<vmem>>, vector<16x512xf32>
    tpu.vector_store %arg11[%c16_130, %c128_131], %165 {strides = array<i32>} : memref<48x768xf32, #tpu.memory_space<vmem>>, vector<16x512xf32>,
    %c32_132 = arith.constant 32 : index
    %c126_133 = arith.constant 126 : index
    %171 = vector.load %arg11[%c32_132, %c126_133] : memref<48x768xf32, #tpu.memory_space<vmem>>, vector<16x512xf32>
    tpu.vector_store %arg11[%c32_132, %c126_133], %165 {strides = array<i32>} : memref<48x768xf32, #tpu.memory_space<vmem>>, vector<16x512xf32>,
    %cst_134 = arith.constant 0.000000e+00 : f32
    %172 = vector.broadcast %cst_134 : f32 to vector<16x2xf32>
    %c32_135 = arith.constant 32 : index
    %c382_136 = arith.constant 382 : index
    %173 = vector.load %arg11[%c32_135, %c382_136] : memref<48x768xf32, #tpu.memory_space<vmem>>, vector<16x2xf32>
    tpu.vector_store %arg11[%c32_135, %c382_136], %172 {strides = array<i32>} : memref<48x768xf32, #tpu.memory_space<vmem>>, vector<16x2xf32>,
    %c32_137 = arith.constant 32 : index
    %c638_138 = arith.constant 638 : index
    %174 = vector.load %arg11[%c32_137, %c638_138] : memref<48x768xf32, #tpu.memory_space<vmem>>, vector<16x2xf32>
    tpu.vector_store %arg11[%c32_137, %c638_138], %172 {strides = array<i32>} : memref<48x768xf32, #tpu.memory_space<vmem>>, vector<16x2xf32>,
    %c0_139 = arith.constant 0 : index
    %c128_140 = arith.constant 128 : index
    %175 = vector.load %arg11[%c0_139, %c128_140] : memref<48x768xf32, #tpu.memory_space<vmem>>, vector<48x512xf32>
    %c4 = arith.constant 4 : index
    %c0_141 = arith.constant 0 : index
    %c0_142 = arith.constant 0 : index
    %176 = vector.load %arg4[%c4, %c0_141, %c0_142] : memref<6x16x48xf32, #tpu.memory_space<vmem>>, vector<1x16x48xf32>
    %177 = vector.shape_cast %176 : vector<1x16x48xf32> to vector<16x48xf32>
    %cst_143 = arith.constant dense<0.000000e+00> : vector<16x512xf32>
    %178 = tpu.matmul %177, %175, %cst_143 {dimension_numbers = #tpu.dot_dimension_numbers<[1], [0], [0], [1], [0, 0, 1, 1], [], []>} : vector<16x48xf32>, vector<48x512xf32>, vector<16x512xf32> -> vector<16x512xf32>
    %c4_144 = arith.constant 4 : index
    %c0_145 = arith.constant 0 : index
    %c0_146 = arith.constant 0 : index
    %179 = vector.load %arg5[%c4_144, %c0_145, %c0_146] : memref<6x16x1xf32, #tpu.memory_space<vmem>>, vector<1x16x1xf32>
    %180 = vector.shape_cast %179 : vector<1x16x1xf32> to vector<16x1xf32>
    %181 = vector.broadcast %180 : vector<16x1xf32> to vector<16x512xf32>
    %182 = arith.addf %178, %181 : vector<16x512xf32>
    %183 = vector.extract_strided_slice %182 {offsets = [0, 0], sizes = [8, 512], strides = [1, 1]} : vector<16x512xf32> to vector<8x512xf32>
    %184 = math.tanh %183 : vector<8x512xf32>
    %185 = vector.extract_strided_slice %182 {offsets = [8, 0], sizes = [8, 512], strides = [1, 1]} : vector<16x512xf32> to vector<8x512xf32>
    %186 = arith.negf %185 : vector<8x512xf32>
    %187 = math.exp %186 : vector<8x512xf32>
    %cst_147 = arith.constant 1.000000e+00 : f32
    %188 = vector.broadcast %cst_147 : f32 to vector<8x512xf32>
    %189 = arith.addf %188, %187 : vector<8x512xf32>
    %190 = arith.divf %188, %189 : vector<8x512xf32>
    %191 = arith.mulf %184, %190 : vector<8x512xf32>
    %c4_148 = arith.constant 4 : index
    %c0_149 = arith.constant 0 : index
    %c0_150 = arith.constant 0 : index
    %192 = vector.load %arg6[%c4_148, %c0_149, %c0_150] : memref<6x32x8xf32, #tpu.memory_space<vmem>>, vector<1x32x8xf32>
    %193 = vector.shape_cast %192 : vector<1x32x8xf32> to vector<32x8xf32>
    %cst_151 = arith.constant dense<0.000000e+00> : vector<32x512xf32>
    %194 = tpu.matmul %193, %191, %cst_151 {dimension_numbers = #tpu.dot_dimension_numbers<[1], [0], [0], [1], [0, 0, 1, 1], [], []>} : vector<32x8xf32>, vector<8x512xf32>, vector<32x512xf32> -> vector<32x512xf32>
    %c4_152 = arith.constant 4 : index
    %c0_153 = arith.constant 0 : index
    %c0_154 = arith.constant 0 : index
    %195 = vector.load %arg7[%c4_152, %c0_153, %c0_154] : memref<6x32x1xf32, #tpu.memory_space<vmem>>, vector<1x32x1xf32>
    %196 = vector.shape_cast %195 : vector<1x32x1xf32> to vector<32x1xf32>
    %197 = vector.broadcast %196 : vector<32x1xf32> to vector<32x512xf32>
    %198 = arith.addf %194, %197 : vector<32x512xf32>
    %199 = vector.extract_strided_slice %198 {offsets = [0, 0], sizes = [16, 512], strides = [1, 1]} : vector<32x512xf32> to vector<16x512xf32>
    %200 = arith.addf %161, %199 : vector<16x512xf32>
    %201 = vector.extract_strided_slice %198 {offsets = [16, 0], sizes = [16, 512], strides = [1, 1]} : vector<32x512xf32> to vector<16x512xf32>
    %202 = arith.addf %201, %165 : vector<16x512xf32>
    %cst_155 = arith.constant 0.707106769 : f32
    %203 = vector.broadcast %cst_155 : f32 to vector<16x512xf32>
    %204 = arith.mulf %202, %203 : vector<16x512xf32>
    %c0_156 = arith.constant 0 : index
    %c132_157 = arith.constant 132 : index
    %205 = vector.load %arg11[%c0_156, %c132_157] : memref<48x768xf32, #tpu.memory_space<vmem>>, vector<16x512xf32>
    tpu.vector_store %arg11[%c0_156, %c132_157], %204 {strides = array<i32>} : memref<48x768xf32, #tpu.memory_space<vmem>>, vector<16x512xf32>,
    %cst_158 = arith.constant 0.000000e+00 : f32
    %206 = vector.broadcast %cst_158 : f32 to vector<16x4xf32>
    %c0_159 = arith.constant 0 : index
    %c128_160 = arith.constant 128 : index
    %207 = vector.load %arg11[%c0_159, %c128_160] : memref<48x768xf32, #tpu.memory_space<vmem>>, vector<16x4xf32>
    tpu.vector_store %arg11[%c0_159, %c128_160], %206 {strides = array<i32>} : memref<48x768xf32, #tpu.memory_space<vmem>>, vector<16x4xf32>,
    %c0_161 = arith.constant 0 : index
    %c384_162 = arith.constant 384 : index
    %208 = vector.load %arg11[%c0_161, %c384_162] : memref<48x768xf32, #tpu.memory_space<vmem>>, vector<16x4xf32>
    tpu.vector_store %arg11[%c0_161, %c384_162], %206 {strides = array<i32>} : memref<48x768xf32, #tpu.memory_space<vmem>>, vector<16x4xf32>,
    %c16_163 = arith.constant 16 : index
    %c128_164 = arith.constant 128 : index
    %209 = vector.load %arg11[%c16_163, %c128_164] : memref<48x768xf32, #tpu.memory_space<vmem>>, vector<16x512xf32>
    tpu.vector_store %arg11[%c16_163, %c128_164], %204 {strides = array<i32>} : memref<48x768xf32, #tpu.memory_space<vmem>>, vector<16x512xf32>,
    %c32_165 = arith.constant 32 : index
    %c124_166 = arith.constant 124 : index
    %210 = vector.load %arg11[%c32_165, %c124_166] : memref<48x768xf32, #tpu.memory_space<vmem>>, vector<16x512xf32>
    tpu.vector_store %arg11[%c32_165, %c124_166], %204 {strides = array<i32>} : memref<48x768xf32, #tpu.memory_space<vmem>>, vector<16x512xf32>,
    %cst_167 = arith.constant 0.000000e+00 : f32
    %211 = vector.broadcast %cst_167 : f32 to vector<16x4xf32>
    %c32_168 = arith.constant 32 : index
    %c380_169 = arith.constant 380 : index
    %212 = vector.load %arg11[%c32_168, %c380_169] : memref<48x768xf32, #tpu.memory_space<vmem>>, vector<16x4xf32>
    tpu.vector_store %arg11[%c32_168, %c380_169], %211 {strides = array<i32>} : memref<48x768xf32, #tpu.memory_space<vmem>>, vector<16x4xf32>,
    %c32_170 = arith.constant 32 : index
    %c636_171 = arith.constant 636 : index
    %213 = vector.load %arg11[%c32_170, %c636_171] : memref<48x768xf32, #tpu.memory_space<vmem>>, vector<16x4xf32>
    tpu.vector_store %arg11[%c32_170, %c636_171], %211 {strides = array<i32>} : memref<48x768xf32, #tpu.memory_space<vmem>>, vector<16x4xf32>,
    %c0_172 = arith.constant 0 : index
    %c128_173 = arith.constant 128 : index
    %214 = vector.load %arg11[%c0_172, %c128_173] : memref<48x768xf32, #tpu.memory_space<vmem>>, vector<48x512xf32>
    %c5 = arith.constant 5 : index
    %c0_174 = arith.constant 0 : index
    %c0_175 = arith.constant 0 : index
    %215 = vector.load %arg4[%c5, %c0_174, %c0_175] : memref<6x16x48xf32, #tpu.memory_space<vmem>>, vector<1x16x48xf32>
    %216 = vector.shape_cast %215 : vector<1x16x48xf32> to vector<16x48xf32>
    %cst_176 = arith.constant dense<0.000000e+00> : vector<16x512xf32>
    %217 = tpu.matmul %216, %214, %cst_176 {dimension_numbers = #tpu.dot_dimension_numbers<[1], [0], [0], [1], [0, 0, 1, 1], [], []>} : vector<16x48xf32>, vector<48x512xf32>, vector<16x512xf32> -> vector<16x512xf32>
    %c5_177 = arith.constant 5 : index
    %c0_178 = arith.constant 0 : index
    %c0_179 = arith.constant 0 : index
    %218 = vector.load %arg5[%c5_177, %c0_178, %c0_179] : memref<6x16x1xf32, #tpu.memory_space<vmem>>, vector<1x16x1xf32>
    %219 = vector.shape_cast %218 : vector<1x16x1xf32> to vector<16x1xf32>
    %220 = vector.broadcast %219 : vector<16x1xf32> to vector<16x512xf32>
    %221 = arith.addf %217, %220 : vector<16x512xf32>
    %222 = vector.extract_strided_slice %221 {offsets = [0, 0], sizes = [8, 512], strides = [1, 1]} : vector<16x512xf32> to vector<8x512xf32>
    %223 = math.tanh %222 : vector<8x512xf32>
    %224 = vector.extract_strided_slice %221 {offsets = [8, 0], sizes = [8, 512], strides = [1, 1]} : vector<16x512xf32> to vector<8x512xf32>
    %225 = arith.negf %224 : vector<8x512xf32>
    %226 = math.exp %225 : vector<8x512xf32>
    %cst_180 = arith.constant 1.000000e+00 : f32
    %227 = vector.broadcast %cst_180 : f32 to vector<8x512xf32>
    %228 = arith.addf %227, %226 : vector<8x512xf32>
    %229 = arith.divf %227, %228 : vector<8x512xf32>
    %230 = arith.mulf %223, %229 : vector<8x512xf32>
    %c5_181 = arith.constant 5 : index
    %c0_182 = arith.constant 0 : index
    %c0_183 = arith.constant 0 : index
    %231 = vector.load %arg6[%c5_181, %c0_182, %c0_183] : memref<6x32x8xf32, #tpu.memory_space<vmem>>, vector<1x32x8xf32>
    %232 = vector.shape_cast %231 : vector<1x32x8xf32> to vector<32x8xf32>
    %cst_184 = arith.constant dense<0.000000e+00> : vector<32x512xf32>
    %233 = tpu.matmul %232, %230, %cst_184 {dimension_numbers = #tpu.dot_dimension_numbers<[1], [0], [0], [1], [0, 0, 1, 1], [], []>} : vector<32x8xf32>, vector<8x512xf32>, vector<32x512xf32> -> vector<32x512xf32>
    %c5_185 = arith.constant 5 : index
    %c0_186 = arith.constant 0 : index
    %c0_187 = arith.constant 0 : index
    %234 = vector.load %arg7[%c5_185, %c0_186, %c0_187] : memref<6x32x1xf32, #tpu.memory_space<vmem>>, vector<1x32x1xf32>
    %235 = vector.shape_cast %234 : vector<1x32x1xf32> to vector<32x1xf32>
    %236 = vector.broadcast %235 : vector<32x1xf32> to vector<32x512xf32>
    %237 = arith.addf %233, %236 : vector<32x512xf32>
    %238 = vector.extract_strided_slice %237 {offsets = [0, 0], sizes = [16, 512], strides = [1, 1]} : vector<32x512xf32> to vector<16x512xf32>
    %239 = arith.addf %200, %238 : vector<16x512xf32>
    %cst_188 = arith.constant 0.408248305 : f32
    %240 = vector.broadcast %cst_188 : f32 to vector<16x512xf32>
    %241 = arith.mulf %239, %240 : vector<16x512xf32>
    %c0_189 = arith.constant 0 : index
    %c0_190 = arith.constant 0 : index
    %242 = vector.load %arg8[%c0_189, %c0_190] : memref<16x1xf32, #tpu.memory_space<vmem>>, vector<16x1xf32>
    %243 = vector.broadcast %242 : vector<16x1xf32> to vector<16x512xf32>
    %244 = arith.mulf %243, %241 : vector<16x512xf32>
    %cst_191 = arith.constant dense<0.000000e+00> : vector<512xf32>
    %245 = vector.multi_reduction <add>, %244, %cst_191 [0] : vector<16x512xf32> to vector<512xf32>
    %246 = vector.shape_cast %245 : vector<512xf32> to vector<1x512xf32>
    %c0_192 = arith.constant 0 : index
    %c0_193 = arith.constant 0 : index
    %247 = vector.load %arg9[%c0_192, %c0_193] : memref<1x1xf32, #tpu.memory_space<vmem>>, vector<1x1xf32>
    %248 = vector.broadcast %247 : vector<1x1xf32> to vector<1x512xf32>
    %249 = arith.addf %246, %248 : vector<1x512xf32>
    %c0_194 = arith.constant 0 : index
    %c0_195 = arith.constant 0 : index
    %c0_196 = arith.constant 0 : index
    %250 = vector.load %arg10[%c0_194, %c0_195, %c0_196] : memref<1x1x512xf32, #tpu.memory_space<vmem>>, vector<1x1x512xf32>
    %251 = vector.shape_cast %250 : vector<1x1x512xf32> to vector<1x512xf32>
    %252 = vector.shape_cast %249 : vector<1x512xf32> to vector<1x1x512xf32>
    tpu.vector_store %arg10[%c0_194, %c0_195, %c0_196], %252 {strides = array<i32>} : memref<1x1x512xf32, #tpu.memory_space<vmem>>, vector<1x1x512xf32>,
    return
  }
  func.func @transform_0(%arg0: i32) -> (i32, i32, i32) {
    %c0_i32 = arith.constant 0 : i32
    %c0_i32_0 = arith.constant 0 : i32
    %c0_i32_1 = arith.constant 0 : i32
    return %arg0, %c0_i32, %c0_i32_0 : i32, i32, i32
  }
  func.func @transform_1(%arg0: i32) -> (i32, i32) {
    %c0_i32 = arith.constant 0 : i32
    %c0_i32_0 = arith.constant 0 : i32
    %c0_i32_1 = arith.constant 0 : i32
    return %c0_i32, %c0_i32_0 : i32, i32
  }
  func.func @transform_2(%arg0: i32) -> (i32, i32) {
    %c0_i32 = arith.constant 0 : i32
    %c0_i32_0 = arith.constant 0 : i32
    %c0_i32_1 = arith.constant 0 : i32
    return %c0_i32, %c0_i32_0 : i32, i32
  }
  func.func @transform_3(%arg0: i32) -> (i32, i32, i32) {
    %c0_i32 = arith.constant 0 : i32
    %c0_i32_0 = arith.constant 0 : i32
    %c0_i32_1 = arith.constant 0 : i32
    %c0_i32_2 = arith.constant 0 : i32
    return %c0_i32, %c0_i32_0, %c0_i32_1 : i32, i32, i32
  }
  func.func @transform_4(%arg0: i32) -> (i32, i32, i32) {
    %c0_i32 = arith.constant 0 : i32
    %c0_i32_0 = arith.constant 0 : i32
    %c0_i32_1 = arith.constant 0 : i32
    %c0_i32_2 = arith.constant 0 : i32
    return %c0_i32, %c0_i32_0, %c0_i32_1 : i32, i32, i32
  }
  func.func @transform_5(%arg0: i32) -> (i32, i32, i32) {
    %c0_i32 = arith.constant 0 : i32
    %c0_i32_0 = arith.constant 0 : i32
    %c0_i32_1 = arith.constant 0 : i32
    %c0_i32_2 = arith.constant 0 : i32
    return %c0_i32, %c0_i32_0, %c0_i32_1 : i32, i32, i32
  }
  func.func @transform_6(%arg0: i32) -> (i32, i32, i32) {
    %c0_i32 = arith.constant 0 : i32
    %c0_i32_0 = arith.constant 0 : i32
    %c0_i32_1 = arith.constant 0 : i32
    %c0_i32_2 = arith.constant 0 : i32
    return %c0_i32, %c0_i32_0, %c0_i32_1 : i32, i32, i32
  }
  func.func @transform_7(%arg0: i32) -> (i32, i32) {
    %c0_i32 = arith.constant 0 : i32
    %c0_i32_0 = arith.constant 0 : i32
    %c0_i32_1 = arith.constant 0 : i32
    return %c0_i32, %c0_i32_0 : i32, i32
  }
  func.func @transform_8(%arg0: i32) -> (i32, i32) {
    %c0_i32 = arith.constant 0 : i32
    %c0_i32_0 = arith.constant 0 : i32
    %c0_i32_1 = arith.constant 0 : i32
    return %c0_i32, %c0_i32_0 : i32, i32
  }
  func.func @transform_9(%arg0: i32) -> (i32, i32, i32) {
    %c0_i32 = arith.constant 0 : i32
    %c0_i32_0 = arith.constant 0 : i32
    %c0_i32_1 = arith.constant 0 : i32
    return %arg0, %c0_i32, %c0_i32_0 : i32, i32, i32
  }
}

</mosaic_0001>

<llo_original>
// kernel: tpu_custom_call.1
$region0: #{tpu_custom_call.1}
  #allocation0 [shape = 'u32[]', space=smem, size = 0x4, offset = 0x4, fixed_abs, tag = 'smem constant byte address 0x4 - core index']
  #allocation1 [shape = 'u32[144,128]{1,0:T(1,128)}', space=vmem, size = 0x12000, scoped, tag = 'internal scratch']
  #allocation2 [shape = 'f32[48,768]{1,0:T(8,128)}', space=vmem, size = 0x24000, scoped, tag = 'scratch operand']
  #allocation3 [shape = 'f32[1,1]{1,0:T(1,128)S(1)}', space=vmem, size = 0x200, scoped, tag = 'scoped memory for tpu_custom_call.1']
  %s0 = inlined_call_operand.vmem [shape: f32[4,1,512], index: 0, kind: input, shape index: {}]
  %s1 = inlined_call_operand.vmem [shape: f32[16,1], index: 1, kind: input, shape index: {}]
  %s2 = inlined_call_operand.vmem [shape: f32[16,1], index: 2, kind: input, shape index: {}]
  %s3 = inlined_call_operand.vmem [shape: f32[6,16,48], index: 3, kind: input, shape index: {}]
  %s4 = inlined_call_operand.vmem [shape: f32[6,16,1], index: 4, kind: input, shape index: {}]
  %s5 = inlined_call_operand.vmem [shape: f32[6,32,8], index: 5, kind: input, shape index: {}]
  %s6 = inlined_call_operand.vmem [shape: f32[6,32,1], index: 6, kind: input, shape index: {}]
  %s7 = inlined_call_operand.vmem [shape: f32[16,1], index: 7, kind: input, shape index: {}]
  %s8 = inlined_call_operand.<no memory space> [shape: f32[1,1], index: 8, kind: input, shape index: {}]
  %s9 = inlined_call_operand.hbm [shape: f32[4,1,512], index: 9, kind: output, shape index: {}]
  %s10 = sld [smem:[#allocation0]]
  $region69: #{tpu_custom_call.1} parent=0
    _
  %s12 = ssub.s32 1, %s10
  %s13 = scalar_select 0, %s12, %s10
  %v14 = vstv %s8
  %15 = vst [vmem:[#allocation3] sm:$0x1] %v14
  $region1: #{tpu_custom_call.1} parent=0
    #allocation4 [shape = 'u8[4096]{0}', space=vmem, size = 0x1000, scoped, tag = 'output window, operand 0']
    #allocation5 [shape = 's32[2]{0}', space=sflag, size = 0x8, scoped, tag = 'scoped memory for tpu_custom_call.1']
    %16 = vsyncpa [#allocation5], 0
    %s17 = scalar_lea.sflag [#allocation5], 1
    %18 = vsyncpa %s17, 0
    loop: start=0, step=1, limit=6
    $region2: #{tpu_custom_call.1} parent=1 // loop_pre_header
      _
    $region3: #{tpu_custom_call.1} parent=1 // loop_header
      %s20 = sphi 0, %s24
      %p21 = scmp.ge.s32.totalorder %s20, 6
      %s30 = sphi 0, %s32
      %s33 = sphi 0, %s30
      %s34 = sphi 0, %s33
      %s50 = sphi 0, %s34
      %s54 = sphi 0, %s54
      %s56 = sphi 0, %s54
      %s57 = sphi 0, %s56
      %s71 = sphi 0, %s57
      %s75 = sphi 0, %s75
      %s77 = sphi 0, %s75
      %s78 = sphi 0, %s77
      %s92 = sphi 0, %s78
      %s96 = sphi 0, %s96
      %s98 = sphi 0, %s96
      %s99 = sphi 0, %s98
      %s113 = sphi 0, %s99
      %s117 = sphi 0, %s117
      %s119 = sphi 0, %s117
      %s120 = sphi 0, %s119
      %s134 = sphi 0, %s120
      %s138 = sphi 0, %s138
      %s140 = sphi 0, %s138
      %s141 = sphi 0, %s140
      %s155 = sphi 0, %s141
      %s159 = sphi 0, %s159
      %s161 = sphi 0, %s159
      %s162 = sphi 0, %s161
      %s176 = sphi 0, %s162
      %s180 = sphi 0, %s180
      %s182 = sphi 0, %s180
      %s183 = sphi 0, %s182
      %s197 = sphi 0, %s183
      %s201 = sphi 0, %s201
      %s203 = sphi 0, %s201
      %s204 = sphi 0, %s203
      %s218 = sphi 0, %s204
      %s224 = sphi 0, %s226
      %s227 = sphi 0, %s224
      %s228 = sphi 0, %s227
      %s244 = sphi 0, %s228
    $region4: #{tpu_custom_call.1} parent=1 // loop_header_branch
      %23 = sbr.rel (%p21) target = $region8
    $region5: #{tpu_custom_call.1} parent=1 // loop_body
      %s25 = ssub.s32 %s20, 1
      %s26 = ssub.s32 %s20, 2
      %s27 = sadd.s32 %s20, 1
      %s28 = ssub.s32 %s20, %s27
      %p29 = scmp.eq.s32.totalorder %s28, 0
      %s31 = sadd.s32 %s30, 1
      %s32 = scalar_select %p29, %s30, %s31
      %p35 = pneg %p29
      %p36 = scmp.eq.s32.totalorder %s20, 3
      %p37 = por %p35, %p36
      %p38 = scmp.ne.s32.totalorder %s30, %s33
      %p39 = scmp.eq.s32.totalorder %s20, 0
      %p40 = por %p38, %p39
      %p41 = scmp.ne.s32.totalorder %s30, %s33
      %p42 = scmp.eq.s32.totalorder %s25, 3
      %p43 = por %p41, %p42
      %p44 = scmp.ne.s32.totalorder %s33, %s34
      %p45 = scmp.eq.s32.totalorder %s25, 0
      %p46 = por %p44, %p45
      %p47 = scmp.ne.s32.totalorder %s33, %s34
      %p48 = scmp.eq.s32.totalorder %s26, 3
      %p49 = por %p47, %p48
      %p51 = scmp.ne.s32.totalorder %s34, %s50
      %p52 = scmp.eq.s32.totalorder %s26, 0
      %p53 = por %p51, %p52
      %s55 = sadd.s32 %s54, 1
      %p58 = scmp.eq.s32.totalorder %s20, 3
      %p59 = scmp.ne.s32.totalorder %s54, %s56
      %p60 = scmp.eq.s32.totalorder %s20, 0
      %p61 = por %p59, %p60
      %p62 = scmp.ne.s32.totalorder %s54, %s56
      %p63 = scmp.eq.s32.totalorder %s25, 3
      %p64 = por %p62, %p63
      %p65 = scmp.ne.s32.totalorder %s56, %s57
      %p66 = scmp.eq.s32.totalorder %s25, 0
      %p67 = por %p65, %p66
      %p68 = scmp.ne.s32.totalorder %s56, %s57
      %p69 = scmp.eq.s32.totalorder %s26, 3
      %p70 = por %p68, %p69
      %p72 = scmp.ne.s32.totalorder %s57, %s71
      %p73 = scmp.eq.s32.totalorder %s26, 0
      %p74 = por %p72, %p73
      %s76 = sadd.s32 %s75, 1
      %p79 = scmp.eq.s32.totalorder %s20, 3
      %p80 = scmp.ne.s32.totalorder %s75, %s77
      %p81 = scmp.eq.s32.totalorder %s20, 0
      %p82 = por %p80, %p81
      %p83 = scmp.ne.s32.totalorder %s75, %s77
      %p84 = scmp.eq.s32.totalorder %s25, 3
      %p85 = por %p83, %p84
      %p86 = scmp.ne.s32.totalorder %s77, %s78
      %p87 = scmp.eq.s32.totalorder %s25, 0
      %p88 = por %p86, %p87
      %p89 = scmp.ne.s32.totalorder %s77, %s78
      %p90 = scmp.eq.s32.totalorder %s26, 3
      %p91 = por %p89, %p90
      %p93 = scmp.ne.s32.totalorder %s78, %s92
      %p94 = scmp.eq.s32.totalorder %s26, 0
      %p95 = por %p93, %p94
      %s97 = sadd.s32 %s96, 1
      %p100 = scmp.eq.s32.totalorder %s20, 3
      %p101 = scmp.ne.s32.totalorder %s96, %s98
      %p102 = scmp.eq.s32.totalorder %s20, 0
      %p103 = por %p101, %p102
      %p104 = scmp.ne.s32.totalorder %s96, %s98
      %p105 = scmp.eq.s32.totalorder %s25, 3
      %p106 = por %p104, %p105
      %p107 = scmp.ne.s32.totalorder %s98, %s99
      %p108 = scmp.eq.s32.totalorder %s25, 0
      %p109 = por %p107, %p108
      %p110 = scmp.ne.s32.totalorder %s98, %s99
      %p111 = scmp.eq.s32.totalorder %s26, 3
      %p112 = por %p110, %p111
      %p114 = scmp.ne.s32.totalorder %s99, %s113
      %p115 = scmp.eq.s32.totalorder %s26, 0
      %p116 = por %p114, %p115
      %s118 = sadd.s32 %s117, 1
      %p121 = scmp.eq.s32.totalorder %s20, 3
      %p122 = scmp.ne.s32.totalorder %s117, %s119
      %p123 = scmp.eq.s32.totalorder %s20, 0
      %p124 = por %p122, %p123
      %p125 = scmp.ne.s32.totalorder %s117, %s119
      %p126 = scmp.eq.s32.totalorder %s25, 3
      %p127 = por %p125, %p126
      %p128 = scmp.ne.s32.totalorder %s119, %s120
      %p129 = scmp.eq.s32.totalorder %s25, 0
      %p130 = por %p128, %p129
      %p131 = scmp.ne.s32.totalorder %s119, %s120
      %p132 = scmp.eq.s32.totalorder %s26, 3
      %p133 = por %p131, %p132
      %p135 = scmp.ne.s32.totalorder %s120, %s134
      %p136 = scmp.eq.s32.totalorder %s26, 0
      %p137 = por %p135, %p136
      %s139 = sadd.s32 %s138, 1
      %p142 = scmp.eq.s32.totalorder %s20, 3
      %p143 = scmp.ne.s32.totalorder %s138, %s140
      %p144 = scmp.eq.s32.totalorder %s20, 0
      %p145 = por %p143, %p144
      %p146 = scmp.ne.s32.totalorder %s138, %s140
      %p147 = scmp.eq.s32.totalorder %s25, 3
      %p148 = por %p146, %p147
      %p149 = scmp.ne.s32.totalorder %s140, %s141
      %p150 = scmp.eq.s32.totalorder %s25, 0
      %p151 = por %p149, %p150
      %p152 = scmp.ne.s32.totalorder %s140, %s141
      %p153 = scmp.eq.s32.totalorder %s26, 3
      %p154 = por %p152, %p153
      %p156 = scmp.ne.s32.totalorder %s141, %s155
      %p157 = scmp.eq.s32.totalorder %s26, 0
      %p158 = por %p156, %p157
      %s160 = sadd.s32 %s159, 1
      %p163 = scmp.eq.s32.totalorder %s20, 3
      %p164 = scmp.ne.s32.totalorder %s159, %s161
      %p165 = scmp.eq.s32.totalorder %s20, 0
      %p166 = por %p164, %p165
      %p167 = scmp.ne.s32.totalorder %s159, %s161
      %p168 = scmp.eq.s32.totalorder %s25, 3
      %p169 = por %p167, %p168
      %p170 = scmp.ne.s32.totalorder %s161, %s162
      %p171 = scmp.eq.s32.totalorder %s25, 0
      %p172 = por %p170, %p171
      %p173 = scmp.ne.s32.totalorder %s161, %s162
      %p174 = scmp.eq.s32.totalorder %s26, 3
      %p175 = por %p173, %p174
      %p177 = scmp.ne.s32.totalorder %s162, %s176
      %p178 = scmp.eq.s32.totalorder %s26, 0
      %p179 = por %p177, %p178
      %s181 = sadd.s32 %s180, 1
      %p184 = scmp.eq.s32.totalorder %s20, 3
      %p185 = scmp.ne.s32.totalorder %s180, %s182
      %p186 = scmp.eq.s32.totalorder %s20, 0
      %p187 = por %p185, %p186
      %p188 = scmp.ne.s32.totalorder %s180, %s182
      %p189 = scmp.eq.s32.totalorder %s25, 3
      %p190 = por %p188, %p189
      %p191 = scmp.ne.s32.totalorder %s182, %s183
      %p192 = scmp.eq.s32.totalorder %s25, 0
      %p193 = por %p191, %p192
      %p194 = scmp.ne.s32.totalorder %s182, %s183
      %p195 = scmp.eq.s32.totalorder %s26, 3
      %p196 = por %p194, %p195
      %p198 = scmp.ne.s32.totalorder %s183, %s197
      %p199 = scmp.eq.s32.totalorder %s26, 0
      %p200 = por %p198, %p199
      %s202 = sadd.s32 %s201, 1
      %p205 = scmp.eq.s32.totalorder %s20, 3
      %p206 = scmp.ne.s32.totalorder %s201, %s203
      %p207 = scmp.eq.s32.totalorder %s20, 0
      %p208 = por %p206, %p207
      %p209 = scmp.ne.s32.totalorder %s201, %s203
      %p210 = scmp.eq.s32.totalorder %s25, 3
      %p211 = por %p209, %p210
      %p212 = scmp.ne.s32.totalorder %s203, %s204
      %p213 = scmp.eq.s32.totalorder %s25, 0
      %p214 = por %p212, %p213
      %p215 = scmp.ne.s32.totalorder %s203, %s204
      %p216 = scmp.eq.s32.totalorder %s26, 3
      %p217 = por %p215, %p216
      %p219 = scmp.ne.s32.totalorder %s204, %s218
      %p220 = scmp.eq.s32.totalorder %s26, 0
      %p221 = por %p219, %p220
      %s222 = ssub.s32 %s20, %s27
      %p223 = scmp.eq.s32.totalorder %s222, 0
      %s225 = sadd.s32 %s224, 1
      %s226 = scalar_select %p223, %s224, %s225
      %p229 = pneg %p223
      %p230 = scmp.eq.s32.totalorder %s20, 3
      %p231 = por %p229, %p230
      %p232 = scmp.ne.s32.totalorder %s224, %s227
      %p233 = scmp.eq.s32.totalorder %s20, 0
      %p234 = por %p232, %p233
      %p235 = scmp.ne.s32.totalorder %s224, %s227
      %p236 = scmp.eq.s32.totalorder %s25, 3
      %p237 = por %p235, %p236
      %p238 = scmp.ne.s32.totalorder %s227, %s228
      %p239 = scmp.eq.s32.totalorder %s25, 0
      %p240 = por %p238, %p239
      %p241 = scmp.ne.s32.totalorder %s227, %s228
      %p242 = scmp.eq.s32.totalorder %s26, 3
      %p243 = por %p241, %p242
      %p245 = scmp.ne.s32.totalorder %s228, %s244
      %p246 = scmp.eq.s32.totalorder %s26, 0
      %p247 = por %p245, %p246
      %p248 = scmp.le.s32.totalorder 1, %s20
      %p249 = scmp.lt.s32.totalorder %s20, 5
      %p250 = pnand %p248, %p249
      %p251 = pneg %p250
      // Predicated region
      $region9: #{tpu_custom_call.1} parent=5 // pred_check
        _
      $region10: #{tpu_custom_call.1} parent=5 // pred_check_branch
        %253 = sbr.rel (%p250) target = $region12
      $region11: #{tpu_custom_call.1} parent=5 // pred_region
        %s254 = ssub.s32 %s20, 1
        // Predicated region
        $region13: #{tpu_custom_call.1} parent=11 // pred_check
          %p255 = pneg %p67
        $region14: #{tpu_custom_call.1} parent=11 // pred_check_branch
          %257 = sbr.rel (%p255) target = $region16
        $region15: #{tpu_custom_call.1} parent=11 // pred_region
          _
        $region16: #{tpu_custom_call.1} parent=11 // pred_fallthru
          _
        // Predicated region
        $region17: #{tpu_custom_call.1} parent=11 // pred_check
          %p258 = pneg %p88
        $region18: #{tpu_custom_call.1} parent=11 // pred_check_branch
          %260 = sbr.rel (%p258) target = $region20
        $region19: #{tpu_custom_call.1} parent=11 // pred_region
          _
        $region20: #{tpu_custom_call.1} parent=11 // pred_fallthru
          _
        // Predicated region
        $region21: #{tpu_custom_call.1} parent=11 // pred_check
          %p261 = pneg %p109
        $region22: #{tpu_custom_call.1} parent=11 // pred_check_branch
          %263 = sbr.rel (%p261) target = $region24
        $region23: #{tpu_custom_call.1} parent=11 // pred_region
          _
        $region24: #{tpu_custom_call.1} parent=11 // pred_fallthru
          _
        // Predicated region
        $region25: #{tpu_custom_call.1} parent=11 // pred_check
          %p264 = pneg %p130
        $region26: #{tpu_custom_call.1} parent=11 // pred_check_branch
          %266 = sbr.rel (%p264) target = $region28
        $region27: #{tpu_custom_call.1} parent=11 // pred_region
          _
        $region28: #{tpu_custom_call.1} parent=11 // pred_fallthru
          _
        // Predicated region
        $region29: #{tpu_custom_call.1} parent=11 // pred_check
          %p267 = pneg %p151
        $region30: #{tpu_custom_call.1} parent=11 // pred_check_branch
          %269 = sbr.rel (%p267) target = $region32
        $region31: #{tpu_custom_call.1} parent=11 // pred_region
          _
        $region32: #{tpu_custom_call.1} parent=11 // pred_fallthru
          _
        // Predicated region
        $region33: #{tpu_custom_call.1} parent=11 // pred_check
          %p270 = pneg %p172
        $region34: #{tpu_custom_call.1} parent=11 // pred_check_branch
          %272 = sbr.rel (%p270) target = $region36
        $region35: #{tpu_custom_call.1} parent=11 // pred_region
          _
        $region36: #{tpu_custom_call.1} parent=11 // pred_fallthru
          _
        // Predicated region
        $region37: #{tpu_custom_call.1} parent=11 // pred_check
          %p273 = pneg %p193
        $region38: #{tpu_custom_call.1} parent=11 // pred_check_branch
          %275 = sbr.rel (%p273) target = $region40
        $region39: #{tpu_custom_call.1} parent=11 // pred_region
          _
        $region40: #{tpu_custom_call.1} parent=11 // pred_fallthru
          _
        // Predicated region
        $region41: #{tpu_custom_call.1} parent=11 // pred_check
          %p276 = pneg %p214
        $region42: #{tpu_custom_call.1} parent=11 // pred_check_branch
          %278 = sbr.rel (%p276) target = $region44
        $region43: #{tpu_custom_call.1} parent=11 // pred_region
          _
        $region44: #{tpu_custom_call.1} parent=11 // pred_fallthru
          _
      $region12: #{tpu_custom_call.1} parent=5 // pred_fallthru
        _
      %p279 = scmp.lt.s32.totalorder %s20, 4
      // Predicated region
      $region45: #{tpu_custom_call.1} parent=5 // pred_check
        %p280 = pneg %p279
      $region46: #{tpu_custom_call.1} parent=5 // pred_check_branch
        %282 = sbr.rel (%p280) target = $region48
      $region47: #{tpu_custom_call.1} parent=5 // pred_region
        // Predicated region
        $region49: #{tpu_custom_call.1} parent=47 // pred_check
          %p283 = pneg %p40
        $region50: #{tpu_custom_call.1} parent=47 // pred_check_branch
          %285 = sbr.rel (%p283) target = $region52
        $region51: #{tpu_custom_call.1} parent=47 // pred_region
          %p286 = scmp.lt.s32.totalorder %s20, 3
          %s287 = scalar_select %p286, %s20, 3
          %s288 = smul.addr %s287, 4
          %s289 = scalar_lea.vmem %s0, %s288
        $region52: #{tpu_custom_call.1} parent=47 // pred_fallthru
          _
      $region48: #{tpu_custom_call.1} parent=5 // pred_fallthru
        _
      %p290 = scmp.le.s32.totalorder 1, %s20
      %p291 = scmp.lt.s32.totalorder %s20, 5
      %p292 = pnand %p290, %p291
      %p293 = pneg %p292
      // Predicated region
      $region53: #{tpu_custom_call.1} parent=5 // pred_check
        _
      $region54: #{tpu_custom_call.1} parent=5 // pred_check_branch
        %295 = sbr.rel (%p292) target = $region56
      $region55: #{tpu_custom_call.1} parent=5 // pred_region
        %s296 = ssub.s32 %s20, 1
        %p297 = scmp.lt.s32.totalorder %s25, 3
        %s298 = scalar_select %p297, %s25, 3
        %s299 = smul.addr %s298, 4
        %s300 = scalar_lea.vmem %s0, %s299
        %p301 = pneg %p46
        %p302 = pneg %p43
        %p303 = pneg %p67
        %p304 = pneg %p64
        %p305 = pneg %p88
        %p306 = pneg %p85
        %p307 = pneg %p109
        %p308 = pneg %p106
        %p309 = pneg %p130
        %p310 = pneg %p127
        %p311 = pneg %p151
        %p312 = pneg %p148
        %p313 = pneg %p172
        %p314 = pneg %p169
        %p315 = pneg %p193
        %p316 = pneg %p190
        %p317 = pneg %p214
        %p318 = pneg %p211
        %p319 = pneg %p240
        %p320 = pneg %p237
        %s321 = sand.u32 %s227, 1
        %s322 = scalar_lea.sflag [#allocation5], %s321
        %s323 = sand.u32 %s227, 1
        %s324 = smul.addr %s323, 4
        %s325 = scalar_lea.vmem [#allocation4], %s324
        %p326 = scmp.lt.s32.totalorder %s25, 3
        %s327 = scalar_select %p326, %s25, 3
        %s328 = smul.addr %s327, 4
        %s329 = scalar_lea.vmem %s0, %s328
        %v330 = vld [vmem:[%s329] sm:$0xf]
        %v331 = vld [vmem:[%s1] sm:$0xff]
        %v332 = vld [vmem:[%s1 + $0x8] sm:$0xff]
        %334 = vset.pattern.permute.xlu0 0
        %335 = vperm.xlu0 %334, %v331
        %v336 = vpop.permute.xlu0 %335
        %339 = vset.pattern.permute.xlu0 0
        %340 = vperm.xlu0 %339, %v332
        %v341 = vpop.permute.xlu0 %340
        %v344 = vlaneseq
        %v345 = vshrl.u32 %v344, 7
        %v346 = vsub.s32 0, %v345
        %v347 = vrot.slane %v330, %v346
        %v348 = vlaneseq
        %v349 = vshrl.u32 %v348, 7
        %v350 = vsub.s32 1, %v349
        %v351 = vrot.slane %v330, %v350
        %v352 = vlaneseq
        %v353 = vshrl.u32 %v352, 7
        %v354 = vsub.s32 2, %v353
        %v355 = vrot.slane %v330, %v354
        %v356 = vlaneseq
        %v357 = vshrl.u32 %v356, 7
        %v358 = vsub.s32 3, %v357
        %v359 = vrot.slane %v330, %v358
        %v364 = vmul.f32 %v336, %v347
        %v365 = vmul.f32 %v336, %v351
        %v366 = vmul.f32 %v336, %v355
        %v367 = vmul.f32 %v336, %v359
        %v368 = vmul.f32 %v341, %v347
        %v369 = vmul.f32 %v341, %v351
        %v370 = vmul.f32 %v341, %v355
        %v371 = vmul.f32 %v341, %v359
        %v372 = vld [vmem:[%s2] sm:$0xff]
        %v373 = vld [vmem:[%s2 + $0x8] sm:$0xff]
        %375 = vset.pattern.permute.xlu0 0
        %376 = vperm.xlu0 %375, %v372
        %v377 = vpop.permute.xlu0 %376
        %380 = vset.pattern.permute.xlu0 0
        %381 = vperm.xlu0 %380, %v373
        %v382 = vpop.permute.xlu0 %381
        %v384 = vadd.f32 %v364, %v377
        %v385 = vadd.f32 %v365, %v377
        %v386 = vadd.f32 %v366, %v377
        %v387 = vadd.f32 %v367, %v377
        %v388 = vadd.f32 %v368, %v382
        %v389 = vadd.f32 %v369, %v382
        %v390 = vadd.f32 %v370, %v382
        %v391 = vadd.f32 %v371, %v382
        %400 = vrot.lane.b32.xlu0 %v384, 1
        %v401 = vpop.permute.xlu0 %400
        %402 = vrot.lane.b32.xlu0 %v385, 1
        %v403 = vpop.permute.xlu0 %402
        %404 = vrot.lane.b32.xlu0 %v386, 1
        %v405 = vpop.permute.xlu0 %404
        %406 = vrot.lane.b32.xlu0 %v387, 1
        %v407 = vpop.permute.xlu0 %406
        %408 = vrot.lane.b32.xlu0 %v388, 1
        %v409 = vpop.permute.xlu0 %408
        %410 = vrot.lane.b32.xlu0 %v389, 1
        %v411 = vpop.permute.xlu0 %410
        %412 = vrot.lane.b32.xlu0 %v390, 1
        %v413 = vpop.permute.xlu0 %412
        %414 = vrot.lane.b32.xlu0 %v391, 1
        %v415 = vpop.permute.xlu0 %414
        %vm416 = vcmask 7168
        %v417 = vsel %vm416, %v401, %v403
        %v418 = vsel %vm416, %v403, %v405
        %v419 = vsel %vm416, %v405, %v407
        %v420 = vsel %vm416, %v409, %v411
        %v421 = vsel %vm416, %v411, %v413
        %v422 = vsel %vm416, %v413, %v415
        %vm433 = vcmask 1047560
        %434 = vst.msk [vmem:[#allocation2 + $0x8] sm:$0xff] %vm433, %v401
        %435 = vst [vmem:[#allocation2 + $0x10] sm:$0xff] %v417
        %436 = vst [vmem:[#allocation2 + $0x18] sm:$0xff] %v418
        %437 = vst [vmem:[#allocation2 + $0x20] sm:$0xff] %v419
        %438 = vst.msk [vmem:[#allocation2 + $0x28] sm:$0xff] %vm416, %v407
        %439 = vst.msk [vmem:[#allocation2 + $0x38] sm:$0xff] %vm433, %v409
        %440 = vst [vmem:[#allocation2 + $0x40] sm:$0xff] %v420
        %441 = vst [vmem:[#allocation2 + $0x48] sm:$0xff] %v421
        %442 = vst [vmem:[#allocation2 + $0x50] sm:$0xff] %v422
        %443 = vst.msk [vmem:[#allocation2 + $0x58] sm:$0xff] %vm416, %v415
        %444 = vst.msk [vmem:[#allocation2 + $0x8] sm:$0xff] %vm416, 0.0
        %445 = vst.msk [vmem:[#allocation2 + $0x38] sm:$0xff] %vm416, 0.0
        %446 = vst.msk [vmem:[#allocation2 + $0x18] sm:$0xff] %vm416, 0.0
        %447 = vst.msk [vmem:[#allocation2 + $0x48] sm:$0xff] %vm416, 0.0
        %448 = vst [vmem:[#allocation2 + $0x68] sm:$0xff] %v384
        %449 = vst [vmem:[#allocation2 + $0x70] sm:$0xff] %v385
        %450 = vst [vmem:[#allocation2 + $0x78] sm:$0xff] %v386
        %451 = vst [vmem:[#allocation2 + $0x80] sm:$0xff] %v387
        %452 = vst [vmem:[#allocation2 + $0x98] sm:$0xff] %v388
        %453 = vst [vmem:[#allocation2 + $0xa0] sm:$0xff] %v389
        %454 = vst [vmem:[#allocation2 + $0xa8] sm:$0xff] %v390
        %455 = vst [vmem:[#allocation2 + $0xb0] sm:$0xff] %v391
        %456 = vrot.lane.b32.xlu0 %v384, 127
        %v457 = vpop.permute.xlu0 %456
        %458 = vrot.lane.b32.xlu0 %v385, 127
        %v459 = vpop.permute.xlu0 %458
        %460 = vrot.lane.b32.xlu0 %v386, 127
        %v461 = vpop.permute.xlu0 %460
        %462 = vrot.lane.b32.xlu0 %v387, 127
        %v463 = vpop.permute.xlu0 %462
        %464 = vrot.lane.b32.xlu0 %v388, 127
        %v465 = vpop.permute.xlu0 %464
        %466 = vrot.lane.b32.xlu0 %v389, 127
        %v467 = vpop.permute.xlu0 %466
        %468 = vrot.lane.b32.xlu0 %v390, 127
        %v469 = vpop.permute.xlu0 %468
        %470 = vrot.lane.b32.xlu0 %v391, 127
        %v471 = vpop.permute.xlu0 %470
        %vm472 = vcmask 1039360
        %v473 = vsel %vm472, %v457, %v459
        %v474 = vsel %vm472, %v459, %v461
        %v475 = vsel %vm472, %v461, %v463
        %v476 = vsel %vm472, %v465, %v467
        %v477 = vsel %vm472, %v467, %v469
        %v478 = vsel %vm472, %v469, %v471
        %vm489 = vcmask 1048568
        %490 = vst.msk [vmem:[#allocation2 + $0xc0] sm:$0xff] %vm489, %v457
        %491 = vst [vmem:[#allocation2 + $0xc8] sm:$0xff] %v473
        %492 = vst [vmem:[#allocation2 + $0xd0] sm:$0xff] %v474
        %493 = vst [vmem:[#allocation2 + $0xd8] sm:$0xff] %v475
        %494 = vst.msk [vmem:[#allocation2 + $0xe0] sm:$0xff] %vm472, %v463
        %495 = vst.msk [vmem:[#allocation2 + $0xf0] sm:$0xff] %vm489, %v465
        %496 = vst [vmem:[#allocation2 + $0xf8] sm:$0xff] %v476
        %497 = vst [vmem:[#allocation2 + $0x100] sm:$0xff] %v477
        %498 = vst [vmem:[#allocation2 + $0x108] sm:$0xff] %v478
        %499 = vst.msk [vmem:[#allocation2 + $0x110] sm:$0xff] %vm472, %v471
        %500 = vst.msk [vmem:[#allocation2 + $0xd0] sm:$0xff] %vm489, 0.0
        %501 = vst.msk [vmem:[#allocation2 + $0x100] sm:$0xff] %vm489, 0.0
        %502 = vst.msk [vmem:[#allocation2 + $0xe0] sm:$0xff] %vm489, 0.0
        %503 = vst.msk [vmem:[#allocation2 + $0x110] sm:$0xff] %vm489, 0.0
        %v504 = vld [vmem:[#allocation2 + $0x8] sm:$0xff]
        %v505 = vld [vmem:[#allocation2 + $0x10] sm:$0xff]
        %v506 = vld [vmem:[#allocation2 + $0x18] sm:$0xff]
        %v507 = vld [vmem:[#allocation2 + $0x20] sm:$0xff]
        %v508 = vld [vmem:[#allocation2 + $0x38] sm:$0xff]
        %v509 = vld [vmem:[#allocation2 + $0x40] sm:$0xff]
        %v510 = vld [vmem:[#allocation2 + $0x48] sm:$0xff]
        %v511 = vld [vmem:[#allocation2 + $0x50] sm:$0xff]
        %v512 = vld [vmem:[#allocation2 + $0x68] sm:$0xff]
        %v513 = vld [vmem:[#allocation2 + $0x70] sm:$0xff]
        %v514 = vld [vmem:[#allocation2 + $0x78] sm:$0xff]
        %v515 = vld [vmem:[#allocation2 + $0x80] sm:$0xff]
        %v516 = vld [vmem:[#allocation2 + $0x98] sm:$0xff]
        %v517 = vld [vmem:[#allocation2 + $0xa0] sm:$0xff]
        %v518 = vld [vmem:[#allocation2 + $0xa8] sm:$0xff]
        %v519 = vld [vmem:[#allocation2 + $0xb0] sm:$0xff]
        %v520 = vld [vmem:[#allocation2 + $0xc8] sm:$0xff]
        %v521 = vld [vmem:[#allocation2 + $0xd0] sm:$0xff]
        %v522 = vld [vmem:[#allocation2 + $0xd8] sm:$0xff]
        %v523 = vld [vmem:[#allocation2 + $0xe0] sm:$0xff]
        %v524 = vld [vmem:[#allocation2 + $0xf8] sm:$0xff]
        %v525 = vld [vmem:[#allocation2 + $0x100] sm:$0xff]
        %v526 = vld [vmem:[#allocation2 + $0x108] sm:$0xff]
        %v527 = vld [vmem:[#allocation2 + $0x110] sm:$0xff]
        %v528 = vld [vmem:[%s3] sm:$0xff]
        %v529 = vld [vmem:[%s3 + $0x8] sm:$0xff]
        %v530 = vld [vmem:[%s4] sm:$0xff]
        %v531 = vld [vmem:[%s4 + $0x8] sm:$0xff]
        %533 = vset.pattern.permute.xlu0 0
        %534 = vperm.xlu0 %533, %v530
        %v535 = vpop.permute.xlu0 %534
        %538 = vset.pattern.permute.xlu0 0
        %539 = vperm.xlu0 %538, %v531
        %v540 = vpop.permute.xlu0 %539
        %vm542 = vcmask 392192
        %v544 = vsel %vm542, %v528, 0
        %v547 = vsel %vm542, %v529, 0
        %549 = vmatprep.subr.mxu0 %v505
        %550 = vmatpush1.msra.mxu0 %v504
        %551 = vmatprep.subr.mxu0 %v509
        %552 = vmatpush1.msra.mxu0 %v508
        %553 = vmatprep.subr.mxu0 %v513
        %554 = vmatpush1.msra.mxu0 %v512
        %555 = vmatprep.subr.mxu0 %v517
        %556 = vmatpush1.msra.mxu0 %v516
        %557 = vmatprep.subr.mxu0 %v521
        %558 = vmatpush1.msra.mxu0 %v520
        %559 = vmatprep.subr.mxu0 %v525
        %560 = vmatpush1.msra.mxu0 %v524
        %561 = vmatprep.subr.mxu0 0.0
        %562 = vmatpush1.msra.mxu0 0.0
        %563 = vmatprep.subr.mxu0 0.0
        %564 = vmatpush1.msra.mxu0 0.0
        %565 = vmatprep.subr.mxu0 0.0
        %566 = vmatpush1.msra.mxu0 0.0
        %567 = vmatprep.subr.mxu0 0.0
        %568 = vmatpush1.msra.mxu0 0.0
        %569 = vmatprep.subr.mxu0 0.0
        %570 = vmatpush1.msra.mxu0 0.0
        %571 = vmatprep.subr.mxu0 0.0
        %572 = vmatpush1.msra.mxu0 0.0
        %573 = vmatprep.subr.mxu0 0.0
        %574 = vmatpush1.msra.mxu0 0.0
        %575 = vmatprep.subr.mxu0 0.0
        %576 = vmatpush1.msra.mxu0 0.0
        %577 = vmatprep.subr.mxu0 0.0
        %578 = vmatpush1.msra.mxu0 0.0
        %579 = vmatprep.subr.mxu0 0.0
        %580 = vmatpush1.msra.mxu0 0.0
        %581 = vmatprep.subr.mxu0 0.0
        %582 = vmatpush1.msra.mxu0 0.0
        %583 = vmatprep.subr.mxu0 0.0
        %584 = vmatpush1.msra.mxu0 0.0
        %585 = vmatprep.subr.mxu0 0.0
        %586 = vmatpush1.msra.mxu0 0.0
        %587 = vmatprep.subr.mxu0 0.0
        %588 = vmatpush1.msra.mxu0 0.0
        %589 = vmatprep.subr.mxu0 0.0
        %590 = vmatpush1.msra.mxu0 0.0
        %591 = vmatprep.subr.mxu0 0.0
        %592 = vmatpush1.msra.mxu0 0.0
        %593 = vmatprep.subr.mxu0 0.0
        %594 = vmatpush1.msra.mxu0 0.0
        %595 = vmatprep.subr.mxu0 0.0
        %596 = vmatpush1.msra.mxu0 0.0
        %597 = vmatprep.subr.mxu0 0.0
        %598 = vmatpush1.msra.mxu0 0.0
        %599 = vmatprep.subr.mxu0 0.0
        %600 = vmatpush1.msra.mxu0 0.0
        %601 = vmatprep.subr.mxu0 0.0
        %602 = vmatpush1.msra.mxu0 0.0
        %603 = vmatprep.subr.mxu0 0.0
        %604 = vmatpush1.msra.mxu0 0.0
        %605 = vmatprep.subr.mxu0 0.0
        %606 = vmatpush1.msra.mxu0 0.0
        %607 = vmatprep.subr.mxu0 0.0
        %608 = vmatpush1.msra.mxu0 0.0
        %609 = vmatprep.subr.mxu0 0.0
        %610 = vmatpush1.msra.mxu0 0.0
        %611 = vmatprep.subr.mxu0 0.0
        %612 = vmatpush1.msra.mxu0 0.0
        %613 = vmatprep.mubr.f32.mxu0 0.0
        %614 = vmatmul.mubr.f32.gmra.mrb[0].mxu0 %v544
        %v615 = vpop.f32.mrb[0].mxu0
        %v616 = vadd.f32 %v535, %v615
        %v617 = vpop.f32.mrb[0].mxu0
        %v618 = vadd.f32 %v535, %v617
        %619 = vmatprep.mubr.f32.mxu0 0.0
        %620 = vmatmul.mubr.f32.gmra.mrb[0].mxu0 %v547
        %v621 = vpop.f32.mrb[0].mxu0
        %v622 = vadd.f32 %v540, %v621
        %v623 = vpop.f32.mrb[0].mxu0
        %v624 = vadd.f32 %v540, %v623
        %625 = vdwg.mxu0
        %626 = vmatprep.subr.mxu0 %v507
        %627 = vmatpush1.msra.mxu0 %v506
        %628 = vmatprep.subr.mxu0 %v511
        %629 = vmatpush1.msra.mxu0 %v510
        %630 = vmatprep.subr.mxu0 %v515
        %631 = vmatpush1.msra.mxu0 %v514
        %632 = vmatprep.subr.mxu0 %v519
        %633 = vmatpush1.msra.mxu0 %v518
        %634 = vmatprep.subr.mxu0 %v523
        %635 = vmatpush1.msra.mxu0 %v522
        %636 = vmatprep.subr.mxu0 %v527
        %637 = vmatpush1.msra.mxu0 %v526
        %638 = vmatprep.subr.mxu0 0.0
        %639 = vmatpush1.msra.mxu0 0.0
        %640 = vmatprep.subr.mxu0 0.0
        %641 = vmatpush1.msra.mxu0 0.0
        %642 = vmatprep.subr.mxu0 0.0
        %643 = vmatpush1.msra.mxu0 0.0
        %644 = vmatprep.subr.mxu0 0.0
        %645 = vmatpush1.msra.mxu0 0.0
        %646 = vmatprep.subr.mxu0 0.0
        %647 = vmatpush1.msra.mxu0 0.0
        %648 = vmatprep.subr.mxu0 0.0
        %649 = vmatpush1.msra.mxu0 0.0
        %650 = vmatprep.subr.mxu0 0.0
        %651 = vmatpush1.msra.mxu0 0.0
        %652 = vmatprep.subr.mxu0 0.0
        %653 = vmatpush1.msra.mxu0 0.0
        %654 = vmatprep.subr.mxu0 0.0
        %655 = vmatpush1.msra.mxu0 0.0
        %656 = vmatprep.subr.mxu0 0.0
        %657 = vmatpush1.msra.mxu0 0.0
        %658 = vmatprep.subr.mxu0 0.0
        %659 = vmatpush1.msra.mxu0 0.0
        %660 = vmatprep.subr.mxu0 0.0
        %661 = vmatpush1.msra.mxu0 0.0
        %662 = vmatprep.subr.mxu0 0.0
        %663 = vmatpush1.msra.mxu0 0.0
        %664 = vmatprep.subr.mxu0 0.0
        %665 = vmatpush1.msra.mxu0 0.0
        %666 = vmatprep.subr.mxu0 0.0
        %667 = vmatpush1.msra.mxu0 0.0
        %668 = vmatprep.subr.mxu0 0.0
        %669 = vmatpush1.msra.mxu0 0.0
        %670 = vmatprep.subr.mxu0 0.0
        %671 = vmatpush1.msra.mxu0 0.0
        %672 = vmatprep.subr.mxu0 0.0
        %673 = vmatpush1.msra.mxu0 0.0
        %674 = vmatprep.subr.mxu0 0.0
        %675 = vmatpush1.msra.mxu0 0.0
        %676 = vmatprep.subr.mxu0 0.0
        %677 = vmatpush1.msra.mxu0 0.0
        %678 = vmatprep.subr.mxu0 0.0
        %679 = vmatpush1.msra.mxu0 0.0
        %680 = vmatprep.subr.mxu0 0.0
        %681 = vmatpush1.msra.mxu0 0.0
        %682 = vmatprep.subr.mxu0 0.0
        %683 = vmatpush1.msra.mxu0 0.0
        %684 = vmatprep.subr.mxu0 0.0
        %685 = vmatpush1.msra.mxu0 0.0
        %686 = vmatprep.subr.mxu0 0.0
        %687 = vmatpush1.msra.mxu0 0.0
        %688 = vmatprep.subr.mxu0 0.0
        %689 = vmatpush1.msra.mxu0 0.0
        %690 = vmatprep.mubr.f32.mxu0 0.0
        %691 = vmatmul.mubr.f32.gmra.mrb[0].mxu0 %v544
        %v692 = vpop.f32.mrb[0].mxu0
        %v693 = vadd.f32 %v535, %v692
        %v694 = vpop.f32.mrb[0].mxu0
        %v695 = vadd.f32 %v535, %v694
        %696 = vmatprep.mubr.f32.mxu0 0.0
        %697 = vmatmul.mubr.f32.gmra.mrb[0].mxu0 %v547
        %v698 = vpop.f32.mrb[0].mxu0
        %v699 = vadd.f32 %v540, %v698
        %v700 = vpop.f32.mrb[0].mxu0
        %v701 = vadd.f32 %v540, %v700
        %702 = vdwg.mxu0
        %v703 = vtanh.pop %v616
        %v704 = vtanh.pop %v618
        %v705 = vtanh.pop %v693
        %v706 = vtanh.pop %v695
        %v707 = vxor.u32 %v622, 2147483648
        %v708 = vxor.u32 %v624, 2147483648
        %v709 = vxor.u32 %v699, 2147483648
        %v710 = vxor.u32 %v701, 2147483648
        %v711 = vmul.f32 %v707, 1.442695
        %v712 = vpow.pop %v711
        %v713 = vmul.f32 %v708, 1.442695
        %v714 = vpow.pop %v713
        %v715 = vmul.f32 %v709, 1.442695
        %v716 = vpow.pop %v715
        %v717 = vmul.f32 %v710, 1.442695
        %v718 = vpow.pop %v717
        %v719 = vadd.f32 %v712, 1.0
        %v720 = vadd.f32 %v714, 1.0
        %v721 = vadd.f32 %v716, 1.0
        %v722 = vadd.f32 %v718, 1.0
        %v723 = vrcp.pop %v719
        %v724 = vmul.f32 1.0, %v723
        %v725 = vrcp.pop %v720
        %v726 = vmul.f32 1.0, %v725
        %v727 = vrcp.pop %v721
        %v728 = vmul.f32 1.0, %v727
        %v729 = vrcp.pop %v722
        %v730 = vmul.f32 1.0, %v729
        %v731 = vmul.f32 %v703, %v724
        %v732 = vmul.f32 %v704, %v726
        %v733 = vmul.f32 %v705, %v728
        %v734 = vmul.f32 %v706, %v730
        %v735 = vld [vmem:[%s5] sm:$0xff]
        %v736 = vld [vmem:[%s5 + $0x8] sm:$0xff]
        %v737 = vld [vmem:[%s5 + $0x10] sm:$0xff]
        %v738 = vld [vmem:[%s5 + $0x18] sm:$0xff]
        %v739 = vld [vmem:[%s6] sm:$0xff]
        %v740 = vld [vmem:[%s6 + $0x8] sm:$0xff]
        %v741 = vld [vmem:[%s6 + $0x10] sm:$0xff]
        %v742 = vld [vmem:[%s6 + $0x18] sm:$0xff]
        %744 = vset.pattern.permute.xlu0 0
        %745 = vperm.xlu0 %744, %v739
        %v746 = vpop.permute.xlu0 %745
        %749 = vset.pattern.permute.xlu0 0
        %750 = vperm.xlu0 %749, %v740
        %v751 = vpop.permute.xlu0 %750
        %754 = vset.pattern.permute.xlu0 0
        %755 = vperm.xlu0 %754, %v741
        %v756 = vpop.permute.xlu0 %755
        %759 = vset.pattern.permute.xlu0 0
        %760 = vperm.xlu0 %759, %v742
        %v761 = vpop.permute.xlu0 %760
        %vm763 = vcmask 64512
        %v765 = vsel %vm763, %v735, 0
        %v768 = vsel %vm763, %v736, 0
        %v771 = vsel %vm763, %v737, 0
        %v774 = vsel %vm763, %v738, 0
        %776 = vmatprep.subr.mxu0 %v732
        %777 = vmatpush1.msra.mxu0 %v731
        %778 = vmatprep.subr.mxu0 0.0
        %779 = vmatpush1.msra.mxu0 0.0
        %780 = vmatprep.subr.mxu0 0.0
        %781 = vmatpush1.msra.mxu0 0.0
        %782 = vmatprep.subr.mxu0 0.0
        %783 = vmatpush1.msra.mxu0 0.0
        %784 = vmatprep.subr.mxu0 0.0
        %785 = vmatpush1.msra.mxu0 0.0
        %786 = vmatprep.subr.mxu0 0.0
        %787 = vmatpush1.msra.mxu0 0.0
        %788 = vmatprep.subr.mxu0 0.0
        %789 = vmatpush1.msra.mxu0 0.0
        %790 = vmatprep.subr.mxu0 0.0
        %791 = vmatpush1.msra.mxu0 0.0
        %792 = vmatprep.subr.mxu0 0.0
        %793 = vmatpush1.msra.mxu0 0.0
        %794 = vmatprep.subr.mxu0 0.0
        %795 = vmatpush1.msra.mxu0 0.0
        %796 = vmatprep.subr.mxu0 0.0
        %797 = vmatpush1.msra.mxu0 0.0
        %798 = vmatprep.subr.mxu0 0.0
        %799 = vmatpush1.msra.mxu0 0.0
        %800 = vmatprep.subr.mxu0 0.0
        %801 = vmatpush1.msra.mxu0 0.0
        %802 = vmatprep.subr.mxu0 0.0
        %803 = vmatpush1.msra.mxu0 0.0
        %804 = vmatprep.subr.mxu0 0.0
        %805 = vmatpush1.msra.mxu0 0.0
        %806 = vmatprep.subr.mxu0 0.0
        %807 = vmatpush1.msra.mxu0 0.0
        %808 = vmatprep.subr.mxu0 0.0
        %809 = vmatpush1.msra.mxu0 0.0
        %810 = vmatprep.subr.mxu0 0.0
        %811 = vmatpush1.msra.mxu0 0.0
        %812 = vmatprep.subr.mxu0 0.0
        %813 = vmatpush1.msra.mxu0 0.0
        %814 = vmatprep.subr.mxu0 0.0
        %815 = vmatpush1.msra.mxu0 0.0
        %816 = vmatprep.subr.mxu0 0.0
        %817 = vmatpush1.msra.mxu0 0.0
        %818 = vmatprep.subr.mxu0 0.0
        %819 = vmatpush1.msra.mxu0 0.0
        %820 = vmatprep.subr.mxu0 0.0
        %821 = vmatpush1.msra.mxu0 0.0
        %822 = vmatprep.subr.mxu0 0.0
        %823 = vmatpush1.msra.mxu0 0.0
        %824 = vmatprep.subr.mxu0 0.0
        %825 = vmatpush1.msra.mxu0 0.0
        %826 = vmatprep.subr.mxu0 0.0
        %827 = vmatpush1.msra.mxu0 0.0
        %828 = vmatprep.subr.mxu0 0.0
        %829 = vmatpush1.msra.mxu0 0.0
        %830 = vmatprep.subr.mxu0 0.0
        %831 = vmatpush1.msra.mxu0 0.0
        %832 = vmatprep.subr.mxu0 0.0
        %833 = vmatpush1.msra.mxu0 0.0
        %834 = vmatprep.subr.mxu0 0.0
        %835 = vmatpush1.msra.mxu0 0.0
        %836 = vmatprep.subr.mxu0 0.0
        %837 = vmatpush1.msra.mxu0 0.0
        %838 = vmatprep.subr.mxu0 0.0
        %839 = vmatpush1.msra.mxu0 0.0
        %840 = vmatprep.mubr.f32.mxu0 0.0
        %841 = vmatmul.mubr.f32.gmra.mrb[0].mxu0 %v765
        %v842 = vpop.f32.mrb[0].mxu0
        %v843 = vadd.f32 %v746, %v842
        %v844 = vpop.f32.mrb[0].mxu0
        %v845 = vadd.f32 %v746, %v844
        %846 = vmatprep.mubr.f32.mxu0 0.0
        %847 = vmatmul.mubr.f32.gmra.mrb[0].mxu0 %v768
        %v848 = vpop.f32.mrb[0].mxu0
        %v849 = vadd.f32 %v751, %v848
        %v850 = vpop.f32.mrb[0].mxu0
        %v851 = vadd.f32 %v751, %v850
        %852 = vmatprep.mubr.f32.mxu0 0.0
        %853 = vmatmul.mubr.f32.gmra.mrb[0].mxu0 %v771
        %v854 = vpop.f32.mrb[0].mxu0
        %v855 = vadd.f32 %v756, %v854
        %v856 = vpop.f32.mrb[0].mxu0
        %v857 = vadd.f32 %v756, %v856
        %858 = vmatprep.mubr.f32.mxu0 0.0
        %859 = vmatmul.mubr.f32.gmra.mrb[0].mxu0 %v774
        %v860 = vpop.f32.mrb[0].mxu0
        %v861 = vadd.f32 %v761, %v860
        %v862 = vpop.f32.mrb[0].mxu0
        %v863 = vadd.f32 %v761, %v862
        %864 = vdwg.mxu0
        %865 = vmatprep.subr.mxu0 %v734
        %866 = vmatpush1.msra.mxu0 %v733
        %867 = vmatprep.subr.mxu0 0.0
        %868 = vmatpush1.msra.mxu0 0.0
        %869 = vmatprep.subr.mxu0 0.0
        %870 = vmatpush1.msra.mxu0 0.0
        %871 = vmatprep.subr.mxu0 0.0
        %872 = vmatpush1.msra.mxu0 0.0
        %873 = vmatprep.subr.mxu0 0.0
        %874 = vmatpush1.msra.mxu0 0.0
        %875 = vmatprep.subr.mxu0 0.0
        %876 = vmatpush1.msra.mxu0 0.0
        %877 = vmatprep.subr.mxu0 0.0
        %878 = vmatpush1.msra.mxu0 0.0
        %879 = vmatprep.subr.mxu0 0.0
        %880 = vmatpush1.msra.mxu0 0.0
        %881 = vmatprep.subr.mxu0 0.0
        %882 = vmatpush1.msra.mxu0 0.0
        %883 = vmatprep.subr.mxu0 0.0
        %884 = vmatpush1.msra.mxu0 0.0
        %885 = vmatprep.subr.mxu0 0.0
        %886 = vmatpush1.msra.mxu0 0.0
        %887 = vmatprep.subr.mxu0 0.0
        %888 = vmatpush1.msra.mxu0 0.0
        %889 = vmatprep.subr.mxu0 0.0
        %890 = vmatpush1.msra.mxu0 0.0
        %891 = vmatprep.subr.mxu0 0.0
        %892 = vmatpush1.msra.mxu0 0.0
        %893 = vmatprep.subr.mxu0 0.0
        %894 = vmatpush1.msra.mxu0 0.0
        %895 = vmatprep.subr.mxu0 0.0
        %896 = vmatpush1.msra.mxu0 0.0
        %897 = vmatprep.subr.mxu0 0.0
        %898 = vmatpush1.msra.mxu0 0.0
        %899 = vmatprep.subr.mxu0 0.0
        %900 = vmatpush1.msra.mxu0 0.0
        %901 = vmatprep.subr.mxu0 0.0
        %902 = vmatpush1.msra.mxu0 0.0
        %903 = vmatprep.subr.mxu0 0.0
        %904 = vmatpush1.msra.mxu0 0.0
        %905 = vmatprep.subr.mxu0 0.0
        %906 = vmatpush1.msra.mxu0 0.0
        %907 = vmatprep.subr.mxu0 0.0
        %908 = vmatpush1.msra.mxu0 0.0
        %909 = vmatprep.subr.mxu0 0.0
        %910 = vmatpush1.msra.mxu0 0.0
        %911 = vmatprep.subr.mxu0 0.0
        %912 = vmatpush1.msra.mxu0 0.0
        %913 = vmatprep.subr.mxu0 0.0
        %914 = vmatpush1.msra.mxu0 0.0
        %915 = vmatprep.subr.mxu0 0.0
        %916 = vmatpush1.msra.mxu0 0.0
        %917 = vmatprep.subr.mxu0 0.0
        %918 = vmatpush1.msra.mxu0 0.0
        %919 = vmatprep.subr.mxu0 0.0
        %920 = vmatpush1.msra.mxu0 0.0
        %921 = vmatprep.subr.mxu0 0.0
        %922 = vmatpush1.msra.mxu0 0.0
        %923 = vmatprep.subr.mxu0 0.0
        %924 = vmatpush1.msra.mxu0 0.0
        %925 = vmatprep.subr.mxu0 0.0
        %926 = vmatpush1.msra.mxu0 0.0
        %927 = vmatprep.subr.mxu0 0.0
        %928 = vmatpush1.msra.mxu0 0.0
        %929 = vmatprep.mubr.f32.mxu0 0.0
        %930 = vmatmul.mubr.f32.gmra.mrb[0].mxu0 %v765
        %v931 = vpop.f32.mrb[0].mxu0
        %v932 = vadd.f32 %v746, %v931
        %v933 = vpop.f32.mrb[0].mxu0
        %v934 = vadd.f32 %v746, %v933
        %935 = vmatprep.mubr.f32.mxu0 0.0
        %936 = vmatmul.mubr.f32.gmra.mrb[0].mxu0 %v768
        %v937 = vpop.f32.mrb[0].mxu0
        %v938 = vadd.f32 %v751, %v937
        %v939 = vpop.f32.mrb[0].mxu0
        %v940 = vadd.f32 %v751, %v939
        %941 = vmatprep.mubr.f32.mxu0 0.0
        %942 = vmatmul.mubr.f32.gmra.mrb[0].mxu0 %v771
        %v943 = vpop.f32.mrb[0].mxu0
        %v944 = vadd.f32 %v756, %v943
        %v945 = vpop.f32.mrb[0].mxu0
        %v946 = vadd.f32 %v756, %v945
        %947 = vmatprep.mubr.f32.mxu0 0.0
        %948 = vmatmul.mubr.f32.gmra.mrb[0].mxu0 %v774
        %v949 = vpop.f32.mrb[0].mxu0
        %v950 = vadd.f32 %v761, %v949
        %v951 = vpop.f32.mrb[0].mxu0
        %v952 = vadd.f32 %v761, %v951
        %953 = vdwg.mxu0
        %v954 = vadd.f32 %v843, 0.0
        %v955 = vadd.f32 %v845, 0.0
        %v956 = vadd.f32 %v932, 0.0
        %v957 = vadd.f32 %v934, 0.0
        %v958 = vadd.f32 %v849, 0.0
        %v959 = vadd.f32 %v851, 0.0
        %v960 = vadd.f32 %v938, 0.0
        %v961 = vadd.f32 %v940, 0.0
        %v962 = vadd.f32 %v855, %v384
        %v963 = vadd.f32 %v857, %v385
        %v964 = vadd.f32 %v944, %v386
        %v965 = vadd.f32 %v946, %v387
        %v966 = vadd.f32 %v861, %v388
        %v967 = vadd.f32 %v863, %v389
        %v968 = vadd.f32 %v950, %v390
        %v969 = vadd.f32 %v952, %v391
        %v970 = vmul.f32 %v962, 0.70710677
        %v971 = vmul.f32 %v963, 0.70710677
        %v972 = vmul.f32 %v964, 0.70710677
        %v973 = vmul.f32 %v965, 0.70710677
        %v974 = vmul.f32 %v966, 0.70710677
        %v975 = vmul.f32 %v967, 0.70710677
        %v976 = vmul.f32 %v968, 0.70710677
        %v977 = vmul.f32 %v969, 0.70710677
        %986 = vrot.lane.b32.xlu0 %v970, 2
        %v987 = vpop.permute.xlu0 %986
        %988 = vrot.lane.b32.xlu0 %v971, 2
        %v989 = vpop.permute.xlu0 %988
        %990 = vrot.lane.b32.xlu0 %v972, 2
        %v991 = vpop.permute.xlu0 %990
        %992 = vrot.lane.b32.xlu0 %v973, 2
        %v993 = vpop.permute.xlu0 %992
        %994 = vrot.lane.b32.xlu0 %v974, 2
        %v995 = vpop.permute.xlu0 %994
        %996 = vrot.lane.b32.xlu0 %v975, 2
        %v997 = vpop.permute.xlu0 %996
        %998 = vrot.lane.b32.xlu0 %v976, 2
        %v999 = vpop.permute.xlu0 %998
        %1000 = vrot.lane.b32.xlu0 %v977, 2
        %v1001 = vpop.permute.xlu0 %1000
        %vm1002 = vcmask 15360
        %v1003 = vsel %vm1002, %v987, %v989
        %v1004 = vsel %vm1002, %v989, %v991
        %v1005 = vsel %vm1002, %v991, %v993
        %v1006 = vsel %vm1002, %v995, %v997
        %v1007 = vsel %vm1002, %v997, %v999
        %v1008 = vsel %vm1002, %v999, %v1001
        %vm1019 = vcmask 1047568
        %1020 = vst.msk [vmem:[#allocation2 + $0x8] sm:$0xff] %vm1019, %v987
        %1021 = vst [vmem:[#allocation2 + $0x10] sm:$0xff] %v1003
        %1022 = vst [vmem:[#allocation2 + $0x18] sm:$0xff] %v1004
        %1023 = vst [vmem:[#allocation2 + $0x20] sm:$0xff] %v1005
        %1024 = vst.msk [vmem:[#allocation2 + $0x28] sm:$0xff] %vm1002, %v993
        %1025 = vst.msk [vmem:[#allocation2 + $0x38] sm:$0xff] %vm1019, %v995
        %1026 = vst [vmem:[#allocation2 + $0x40] sm:$0xff] %v1006
        %1027 = vst [vmem:[#allocation2 + $0x48] sm:$0xff] %v1007
        %1028 = vst [vmem:[#allocation2 + $0x50] sm:$0xff] %v1008
        %1029 = vst.msk [vmem:[#allocation2 + $0x58] sm:$0xff] %vm1002, %v1001
        %1030 = vst.msk [vmem:[#allocation2 + $0x8] sm:$0xff] %vm1002, 0.0
        %1031 = vst.msk [vmem:[#allocation2 + $0x38] sm:$0xff] %vm1002, 0.0
        %1032 = vst.msk [vmem:[#allocation2 + $0x18] sm:$0xff] %vm1002, 0.0
        %1033 = vst.msk [vmem:[#allocation2 + $0x48] sm:$0xff] %vm1002, 0.0
        %1034 = vst [vmem:[#allocation2 + $0x68] sm:$0xff] %v970
        %1035 = vst [vmem:[#allocation2 + $0x70] sm:$0xff] %v971
        %1036 = vst [vmem:[#allocation2 + $0x78] sm:$0xff] %v972
        %1037 = vst [vmem:[#allocation2 + $0x80] sm:$0xff] %v973
        %1038 = vst [vmem:[#allocation2 + $0x98] sm:$0xff] %v974
        %1039 = vst [vmem:[#allocation2 + $0xa0] sm:$0xff] %v975
        %1040 = vst [vmem:[#allocation2 + $0xa8] sm:$0xff] %v976
        %1041 = vst [vmem:[#allocation2 + $0xb0] sm:$0xff] %v977
        %1042 = vrot.lane.b32.xlu0 %v970, 126
        %v1043 = vpop.permute.xlu0 %1042
        %1044 = vrot.lane.b32.xlu0 %v971, 126
        %v1045 = vpop.permute.xlu0 %1044
        %1046 = vrot.lane.b32.xlu0 %v972, 126
        %v1047 = vpop.permute.xlu0 %1046
        %1048 = vrot.lane.b32.xlu0 %v973, 126
        %v1049 = vpop.permute.xlu0 %1048
        %1050 = vrot.lane.b32.xlu0 %v974, 126
        %v1051 = vpop.permute.xlu0 %1050
        %1052 = vrot.lane.b32.xlu0 %v975, 126
        %v1053 = vpop.permute.xlu0 %1052
        %1054 = vrot.lane.b32.xlu0 %v976, 126
        %v1055 = vpop.permute.xlu0 %1054
        %1056 = vrot.lane.b32.xlu0 %v977, 126
        %v1057 = vpop.permute.xlu0 %1056
        %vm1058 = vcmask 1031168
        %v1059 = vsel %vm1058, %v1043, %v1045
        %v1060 = vsel %vm1058, %v1045, %v1047
        %v1061 = vsel %vm1058, %v1047, %v1049
        %v1062 = vsel %vm1058, %v1051, %v1053
        %v1063 = vsel %vm1058, %v1053, %v1055
        %v1064 = vsel %vm1058, %v1055, %v1057
        %vm1075 = vcmask 1048560
        %1076 = vst.msk [vmem:[#allocation2 + $0xc0] sm:$0xff] %vm1075, %v1043
        %1077 = vst [vmem:[#allocation2 + $0xc8] sm:$0xff] %v1059
        %1078 = vst [vmem:[#allocation2 + $0xd0] sm:$0xff] %v1060
        %1079 = vst [vmem:[#allocation2 + $0xd8] sm:$0xff] %v1061
        %1080 = vst.msk [vmem:[#allocation2 + $0xe0] sm:$0xff] %vm1058, %v1049
        %1081 = vst.msk [vmem:[#allocation2 + $0xf0] sm:$0xff] %vm1075, %v1051
        %1082 = vst [vmem:[#allocation2 + $0xf8] sm:$0xff] %v1062
        %1083 = vst [vmem:[#allocation2 + $0x100] sm:$0xff] %v1063
        %1084 = vst [vmem:[#allocation2 + $0x108] sm:$0xff] %v1064
        %1085 = vst.msk [vmem:[#allocation2 + $0x110] sm:$0xff] %vm1058, %v1057
        %1086 = vst.msk [vmem:[#allocation2 + $0xd0] sm:$0xff] %vm1075, 0.0
        %1087 = vst.msk [vmem:[#allocation2 + $0x100] sm:$0xff] %vm1075, 0.0
        %1088 = vst.msk [vmem:[#allocation2 + $0xe0] sm:$0xff] %vm1075, 0.0
        %1089 = vst.msk [vmem:[#allocation2 + $0x110] sm:$0xff] %vm1075, 0.0
        %v1090 = vld [vmem:[#allocation2 + $0x8] sm:$0xff]
        %v1091 = vld [vmem:[#allocation2 + $0x10] sm:$0xff]
        %v1092 = vld [vmem:[#allocation2 + $0x18] sm:$0xff]
        %v1093 = vld [vmem:[#allocation2 + $0x20] sm:$0xff]
        %v1094 = vld [vmem:[#allocation2 + $0x38] sm:$0xff]
        %v1095 = vld [vmem:[#allocation2 + $0x40] sm:$0xff]
        %v1096 = vld [vmem:[#allocation2 + $0x48] sm:$0xff]
        %v1097 = vld [vmem:[#allocation2 + $0x50] sm:$0xff]
        %v1098 = vld [vmem:[#allocation2 + $0x68] sm:$0xff]
        %v1099 = vld [vmem:[#allocation2 + $0x70] sm:$0xff]
        %v1100 = vld [vmem:[#allocation2 + $0x78] sm:$0xff]
        %v1101 = vld [vmem:[#allocation2 + $0x80] sm:$0xff]
        %v1102 = vld [vmem:[#allocation2 + $0x98] sm:$0xff]
        %v1103 = vld [vmem:[#allocation2 + $0xa0] sm:$0xff]
        %v1104 = vld [vmem:[#allocation2 + $0xa8] sm:$0xff]
        %v1105 = vld [vmem:[#allocation2 + $0xb0] sm:$0xff]
        %v1106 = vld [vmem:[#allocation2 + $0xc8] sm:$0xff]
        %v1107 = vld [vmem:[#allocation2 + $0xd0] sm:$0xff]
        %v1108 = vld [vmem:[#allocation2 + $0xd8] sm:$0xff]
        %v1109 = vld [vmem:[#allocation2 + $0xe0] sm:$0xff]
        %v1110 = vld [vmem:[#allocation2 + $0xf8] sm:$0xff]
        %v1111 = vld [vmem:[#allocation2 + $0x100] sm:$0xff]
        %v1112 = vld [vmem:[#allocation2 + $0x108] sm:$0xff]
        %v1113 = vld [vmem:[#allocation2 + $0x110] sm:$0xff]
        %s1114 = scalar_lea.vmem %s3, 16
        %v1115 = vld [vmem:[%s1114] sm:$0xff]
        %v1116 = vld [vmem:[%s1114 + $0x8] sm:$0xff]
        %s1117 = scalar_lea.vmem %s4, 16
        %v1118 = vld [vmem:[%s1117] sm:$0xff]
        %v1119 = vld [vmem:[%s1117 + $0x8] sm:$0xff]
        %1121 = vset.pattern.permute.xlu0 0
        %1122 = vperm.xlu0 %1121, %v1118
        %v1123 = vpop.permute.xlu0 %1122
        %1126 = vset.pattern.permute.xlu0 0
        %1127 = vperm.xlu0 %1126, %v1119
        %v1128 = vpop.permute.xlu0 %1127
        %v1131 = vsel %vm542, %v1115, 0
        %v1134 = vsel %vm542, %v1116, 0
        %1136 = vmatprep.subr.mxu0 %v1091
        %1137 = vmatpush1.msra.mxu0 %v1090
        %1138 = vmatprep.subr.mxu0 %v1095
        %1139 = vmatpush1.msra.mxu0 %v1094
        %1140 = vmatprep.subr.mxu0 %v1099
        %1141 = vmatpush1.msra.mxu0 %v1098
        %1142 = vmatprep.subr.mxu0 %v1103
        %1143 = vmatpush1.msra.mxu0 %v1102
        %1144 = vmatprep.subr.mxu0 %v1107
        %1145 = vmatpush1.msra.mxu0 %v1106
        %1146 = vmatprep.subr.mxu0 %v1111
        %1147 = vmatpush1.msra.mxu0 %v1110
        %1148 = vmatprep.subr.mxu0 0.0
        %1149 = vmatpush1.msra.mxu0 0.0
        %1150 = vmatprep.subr.mxu0 0.0
        %1151 = vmatpush1.msra.mxu0 0.0
        %1152 = vmatprep.subr.mxu0 0.0
        %1153 = vmatpush1.msra.mxu0 0.0
        %1154 = vmatprep.subr.mxu0 0.0
        %1155 = vmatpush1.msra.mxu0 0.0
        %1156 = vmatprep.subr.mxu0 0.0
        %1157 = vmatpush1.msra.mxu0 0.0
        %1158 = vmatprep.subr.mxu0 0.0
        %1159 = vmatpush1.msra.mxu0 0.0
        %1160 = vmatprep.subr.mxu0 0.0
        %1161 = vmatpush1.msra.mxu0 0.0
        %1162 = vmatprep.subr.mxu0 0.0
        %1163 = vmatpush1.msra.mxu0 0.0
        %1164 = vmatprep.subr.mxu0 0.0
        %1165 = vmatpush1.msra.mxu0 0.0
        %1166 = vmatprep.subr.mxu0 0.0
        %1167 = vmatpush1.msra.mxu0 0.0
        %1168 = vmatprep.subr.mxu0 0.0
        %1169 = vmatpush1.msra.mxu0 0.0
        %1170 = vmatprep.subr.mxu0 0.0
        %1171 = vmatpush1.msra.mxu0 0.0
        %1172 = vmatprep.subr.mxu0 0.0
        %1173 = vmatpush1.msra.mxu0 0.0
        %1174 = vmatprep.subr.mxu0 0.0
        %1175 = vmatpush1.msra.mxu0 0.0
        %1176 = vmatprep.subr.mxu0 0.0
        %1177 = vmatpush1.msra.mxu0 0.0
        %1178 = vmatprep.subr.mxu0 0.0
        %1179 = vmatpush1.msra.mxu0 0.0
        %1180 = vmatprep.subr.mxu0 0.0
        %1181 = vmatpush1.msra.mxu0 0.0
        %1182 = vmatprep.subr.mxu0 0.0
        %1183 = vmatpush1.msra.mxu0 0.0
        %1184 = vmatprep.subr.mxu0 0.0
        %1185 = vmatpush1.msra.mxu0 0.0
        %1186 = vmatprep.subr.mxu0 0.0
        %1187 = vmatpush1.msra.mxu0 0.0
        %1188 = vmatprep.subr.mxu0 0.0
        %1189 = vmatpush1.msra.mxu0 0.0
        %1190 = vmatprep.subr.mxu0 0.0
        %1191 = vmatpush1.msra.mxu0 0.0
        %1192 = vmatprep.subr.mxu0 0.0
        %1193 = vmatpush1.msra.mxu0 0.0
        %1194 = vmatprep.subr.mxu0 0.0
        %1195 = vmatpush1.msra.mxu0 0.0
        %1196 = vmatprep.subr.mxu0 0.0
        %1197 = vmatpush1.msra.mxu0 0.0
        %1198 = vmatprep.subr.mxu0 0.0
        %1199 = vmatpush1.msra.mxu0 0.0
        %1200 = vmatprep.mubr.f32.mxu0 0.0
        %1201 = vmatmul.mubr.f32.gmra.mrb[0].mxu0 %v1131
        %v1202 = vpop.f32.mrb[0].mxu0
        %v1203 = vadd.f32 %v1123, %v1202
        %v1204 = vpop.f32.mrb[0].mxu0
        %v1205 = vadd.f32 %v1123, %v1204
        %1206 = vmatprep.mubr.f32.mxu0 0.0
        %1207 = vmatmul.mubr.f32.gmra.mrb[0].mxu0 %v1134
        %v1208 = vpop.f32.mrb[0].mxu0
        %v1209 = vadd.f32 %v1128, %v1208
        %v1210 = vpop.f32.mrb[0].mxu0
        %v1211 = vadd.f32 %v1128, %v1210
        %1212 = vdwg.mxu0
        %1213 = vmatprep.subr.mxu0 %v1093
        %1214 = vmatpush1.msra.mxu0 %v1092
        %1215 = vmatprep.subr.mxu0 %v1097
        %1216 = vmatpush1.msra.mxu0 %v1096
        %1217 = vmatprep.subr.mxu0 %v1101
        %1218 = vmatpush1.msra.mxu0 %v1100
        %1219 = vmatprep.subr.mxu0 %v1105
        %1220 = vmatpush1.msra.mxu0 %v1104
        %1221 = vmatprep.subr.mxu0 %v1109
        %1222 = vmatpush1.msra.mxu0 %v1108
        %1223 = vmatprep.subr.mxu0 %v1113
        %1224 = vmatpush1.msra.mxu0 %v1112
        %1225 = vmatprep.subr.mxu0 0.0
        %1226 = vmatpush1.msra.mxu0 0.0
        %1227 = vmatprep.subr.mxu0 0.0
        %1228 = vmatpush1.msra.mxu0 0.0
        %1229 = vmatprep.subr.mxu0 0.0
        %1230 = vmatpush1.msra.mxu0 0.0
        %1231 = vmatprep.subr.mxu0 0.0
        %1232 = vmatpush1.msra.mxu0 0.0
        %1233 = vmatprep.subr.mxu0 0.0
        %1234 = vmatpush1.msra.mxu0 0.0
        %1235 = vmatprep.subr.mxu0 0.0
        %1236 = vmatpush1.msra.mxu0 0.0
        %1237 = vmatprep.subr.mxu0 0.0
        %1238 = vmatpush1.msra.mxu0 0.0
        %1239 = vmatprep.subr.mxu0 0.0
        %1240 = vmatpush1.msra.mxu0 0.0
        %1241 = vmatprep.subr.mxu0 0.0
        %1242 = vmatpush1.msra.mxu0 0.0
        %1243 = vmatprep.subr.mxu0 0.0
        %1244 = vmatpush1.msra.mxu0 0.0
        %1245 = vmatprep.subr.mxu0 0.0
        %1246 = vmatpush1.msra.mxu0 0.0
        %1247 = vmatprep.subr.mxu0 0.0
        %1248 = vmatpush1.msra.mxu0 0.0
        %1249 = vmatprep.subr.mxu0 0.0
        %1250 = vmatpush1.msra.mxu0 0.0
        %1251 = vmatprep.subr.mxu0 0.0
        %1252 = vmatpush1.msra.mxu0 0.0
        %1253 = vmatprep.subr.mxu0 0.0
        %1254 = vmatpush1.msra.mxu0 0.0
        %1255 = vmatprep.subr.mxu0 0.0
        %1256 = vmatpush1.msra.mxu0 0.0
        %1257 = vmatprep.subr.mxu0 0.0
        %1258 = vmatpush1.msra.mxu0 0.0
        %1259 = vmatprep.subr.mxu0 0.0
        %1260 = vmatpush1.msra.mxu0 0.0
        %1261 = vmatprep.subr.mxu0 0.0
        %1262 = vmatpush1.msra.mxu0 0.0
        %1263 = vmatprep.subr.mxu0 0.0
        %1264 = vmatpush1.msra.mxu0 0.0
        %1265 = vmatprep.subr.mxu0 0.0
        %1266 = vmatpush1.msra.mxu0 0.0
        %1267 = vmatprep.subr.mxu0 0.0
        %1268 = vmatpush1.msra.mxu0 0.0
        %1269 = vmatprep.subr.mxu0 0.0
        %1270 = vmatpush1.msra.mxu0 0.0
        %1271 = vmatprep.subr.mxu0 0.0
        %1272 = vmatpush1.msra.mxu0 0.0
        %1273 = vmatprep.subr.mxu0 0.0
        %1274 = vmatpush1.msra.mxu0 0.0
        %1275 = vmatprep.subr.mxu0 0.0
        %1276 = vmatpush1.msra.mxu0 0.0
        %1277 = vmatprep.mubr.f32.mxu0 0.0
        %1278 = vmatmul.mubr.f32.gmra.mrb[0].mxu0 %v1131
        %v1279 = vpop.f32.mrb[0].mxu0
        %v1280 = vadd.f32 %v1123, %v1279
        %v1281 = vpop.f32.mrb[0].mxu0
        %v1282 = vadd.f32 %v1123, %v1281
        %1283 = vmatprep.mubr.f32.mxu0 0.0
        %1284 = vmatmul.mubr.f32.gmra.mrb[0].mxu0 %v1134
        %v1285 = vpop.f32.mrb[0].mxu0
        %v1286 = vadd.f32 %v1128, %v1285
        %v1287 = vpop.f32.mrb[0].mxu0
        %v1288 = vadd.f32 %v1128, %v1287
        %1289 = vdwg.mxu0
        %v1290 = vtanh.pop %v1203
        %v1291 = vtanh.pop %v1205
        %v1292 = vtanh.pop %v1280
        %v1293 = vtanh.pop %v1282
        %v1294 = vxor.u32 %v1209, 2147483648
        %v1295 = vxor.u32 %v1211, 2147483648
        %v1296 = vxor.u32 %v1286, 2147483648
        %v1297 = vxor.u32 %v1288, 2147483648
        %v1298 = vmul.f32 %v1294, 1.442695
        %v1299 = vpow.pop %v1298
        %v1300 = vmul.f32 %v1295, 1.442695
        %v1301 = vpow.pop %v1300
        %v1302 = vmul.f32 %v1296, 1.442695
        %v1303 = vpow.pop %v1302
        %v1304 = vmul.f32 %v1297, 1.442695
        %v1305 = vpow.pop %v1304
        %v1306 = vadd.f32 %v1299, 1.0
        %v1307 = vadd.f32 %v1301, 1.0
        %v1308 = vadd.f32 %v1303, 1.0
        %v1309 = vadd.f32 %v1305, 1.0
        %v1310 = vrcp.pop %v1306
        %v1311 = vmul.f32 1.0, %v1310
        %v1312 = vrcp.pop %v1307
        %v1313 = vmul.f32 1.0, %v1312
        %v1314 = vrcp.pop %v1308
        %v1315 = vmul.f32 1.0, %v1314
        %v1316 = vrcp.pop %v1309
        %v1317 = vmul.f32 1.0, %v1316
        %v1318 = vmul.f32 %v1290, %v1311
        %v1319 = vmul.f32 %v1291, %v1313
        %v1320 = vmul.f32 %v1292, %v1315
        %v1321 = vmul.f32 %v1293, %v1317
        %s1322 = scalar_lea.vmem %s5, 32
        %v1323 = vld [vmem:[%s1322] sm:$0xff]
        %v1324 = vld [vmem:[%s1322 + $0x8] sm:$0xff]
        %v1325 = vld [vmem:[%s1322 + $0x10] sm:$0xff]
        %v1326 = vld [vmem:[%s1322 + $0x18] sm:$0xff]
        %s1327 = scalar_lea.vmem %s6, 32
        %v1328 = vld [vmem:[%s1327] sm:$0xff]
        %v1329 = vld [vmem:[%s1327 + $0x8] sm:$0xff]
        %v1330 = vld [vmem:[%s1327 + $0x10] sm:$0xff]
        %v1331 = vld [vmem:[%s1327 + $0x18] sm:$0xff]
        %1333 = vset.pattern.permute.xlu0 0
        %1334 = vperm.xlu0 %1333, %v1328
        %v1335 = vpop.permute.xlu0 %1334
        %1338 = vset.pattern.permute.xlu0 0
        %1339 = vperm.xlu0 %1338, %v1329
        %v1340 = vpop.permute.xlu0 %1339
        %1343 = vset.pattern.permute.xlu0 0
        %1344 = vperm.xlu0 %1343, %v1330
        %v1345 = vpop.permute.xlu0 %1344
        %1348 = vset.pattern.permute.xlu0 0
        %1349 = vperm.xlu0 %1348, %v1331
        %v1350 = vpop.permute.xlu0 %1349
        %v1353 = vsel %vm763, %v1323, 0
        %v1356 = vsel %vm763, %v1324, 0
        %v1359 = vsel %vm763, %v1325, 0
        %v1362 = vsel %vm763, %v1326, 0
        %1364 = vmatprep.subr.mxu0 %v1319
        %1365 = vmatpush1.msra.mxu0 %v1318
        %1366 = vmatprep.subr.mxu0 0.0
        %1367 = vmatpush1.msra.mxu0 0.0
        %1368 = vmatprep.subr.mxu0 0.0
        %1369 = vmatpush1.msra.mxu0 0.0
        %1370 = vmatprep.subr.mxu0 0.0
        %1371 = vmatpush1.msra.mxu0 0.0
        %1372 = vmatprep.subr.mxu0 0.0
        %1373 = vmatpush1.msra.mxu0 0.0
        %1374 = vmatprep.subr.mxu0 0.0
        %1375 = vmatpush1.msra.mxu0 0.0
        %1376 = vmatprep.subr.mxu0 0.0
        %1377 = vmatpush1.msra.mxu0 0.0
        %1378 = vmatprep.subr.mxu0 0.0
        %1379 = vmatpush1.msra.mxu0 0.0
        %1380 = vmatprep.subr.mxu0 0.0
        %1381 = vmatpush1.msra.mxu0 0.0
        %1382 = vmatprep.subr.mxu0 0.0
        %1383 = vmatpush1.msra.mxu0 0.0
        %1384 = vmatprep.subr.mxu0 0.0
        %1385 = vmatpush1.msra.mxu0 0.0
        %1386 = vmatprep.subr.mxu0 0.0
        %1387 = vmatpush1.msra.mxu0 0.0
        %1388 = vmatprep.subr.mxu0 0.0
        %1389 = vmatpush1.msra.mxu0 0.0
        %1390 = vmatprep.subr.mxu0 0.0
        %1391 = vmatpush1.msra.mxu0 0.0
        %1392 = vmatprep.subr.mxu0 0.0
        %1393 = vmatpush1.msra.mxu0 0.0
        %1394 = vmatprep.subr.mxu0 0.0
        %1395 = vmatpush1.msra.mxu0 0.0
        %1396 = vmatprep.subr.mxu0 0.0
        %1397 = vmatpush1.msra.mxu0 0.0
        %1398 = vmatprep.subr.mxu0 0.0
        %1399 = vmatpush1.msra.mxu0 0.0
        %1400 = vmatprep.subr.mxu0 0.0
        %1401 = vmatpush1.msra.mxu0 0.0
        %1402 = vmatprep.subr.mxu0 0.0
        %1403 = vmatpush1.msra.mxu0 0.0
        %1404 = vmatprep.subr.mxu0 0.0
        %1405 = vmatpush1.msra.mxu0 0.0
        %1406 = vmatprep.subr.mxu0 0.0
        %1407 = vmatpush1.msra.mxu0 0.0
        %1408 = vmatprep.subr.mxu0 0.0
        %1409 = vmatpush1.msra.mxu0 0.0
        %1410 = vmatprep.subr.mxu0 0.0
        %1411 = vmatpush1.msra.mxu0 0.0
        %1412 = vmatprep.subr.mxu0 0.0
        %1413 = vmatpush1.msra.mxu0 0.0
        %1414 = vmatprep.subr.mxu0 0.0
        %1415 = vmatpush1.msra.mxu0 0.0
        %1416 = vmatprep.subr.mxu0 0.0
        %1417 = vmatpush1.msra.mxu0 0.0
        %1418 = vmatprep.subr.mxu0 0.0
        %1419 = vmatpush1.msra.mxu0 0.0
        %1420 = vmatprep.subr.mxu0 0.0
        %1421 = vmatpush1.msra.mxu0 0.0
        %1422 = vmatprep.subr.mxu0 0.0
        %1423 = vmatpush1.msra.mxu0 0.0
        %1424 = vmatprep.subr.mxu0 0.0
        %1425 = vmatpush1.msra.mxu0 0.0
        %1426 = vmatprep.subr.mxu0 0.0
        %1427 = vmatpush1.msra.mxu0 0.0
        %1428 = vmatprep.mubr.f32.mxu0 0.0
        %1429 = vmatmul.mubr.f32.gmra.mrb[0].mxu0 %v1353
        %v1430 = vpop.f32.mrb[0].mxu0
        %v1431 = vadd.f32 %v1335, %v1430
        %v1432 = vpop.f32.mrb[0].mxu0
        %v1433 = vadd.f32 %v1335, %v1432
        %1434 = vmatprep.mubr.f32.mxu0 0.0
        %1435 = vmatmul.mubr.f32.gmra.mrb[0].mxu0 %v1356
        %v1436 = vpop.f32.mrb[0].mxu0
        %v1437 = vadd.f32 %v1340, %v1436
        %v1438 = vpop.f32.mrb[0].mxu0
        %v1439 = vadd.f32 %v1340, %v1438
        %1440 = vmatprep.mubr.f32.mxu0 0.0
        %1441 = vmatmul.mubr.f32.gmra.mrb[0].mxu0 %v1359
        %v1442 = vpop.f32.mrb[0].mxu0
        %v1443 = vadd.f32 %v1345, %v1442
        %v1444 = vpop.f32.mrb[0].mxu0
        %v1445 = vadd.f32 %v1345, %v1444
        %1446 = vmatprep.mubr.f32.mxu0 0.0
        %1447 = vmatmul.mubr.f32.gmra.mrb[0].mxu0 %v1362
        %v1448 = vpop.f32.mrb[0].mxu0
        %v1449 = vadd.f32 %v1350, %v1448
        %v1450 = vpop.f32.mrb[0].mxu0
        %v1451 = vadd.f32 %v1350, %v1450
        %1452 = vdwg.mxu0
        %1453 = vmatprep.subr.mxu0 %v1321
        %1454 = vmatpush1.msra.mxu0 %v1320
        %1455 = vmatprep.subr.mxu0 0.0
        %1456 = vmatpush1.msra.mxu0 0.0
        %1457 = vmatprep.subr.mxu0 0.0
        %1458 = vmatpush1.msra.mxu0 0.0
        %1459 = vmatprep.subr.mxu0 0.0
        %1460 = vmatpush1.msra.mxu0 0.0
        %1461 = vmatprep.subr.mxu0 0.0
        %1462 = vmatpush1.msra.mxu0 0.0
        %1463 = vmatprep.subr.mxu0 0.0
        %1464 = vmatpush1.msra.mxu0 0.0
        %1465 = vmatprep.subr.mxu0 0.0
        %1466 = vmatpush1.msra.mxu0 0.0
        %1467 = vmatprep.subr.mxu0 0.0
        %1468 = vmatpush1.msra.mxu0 0.0
        %1469 = vmatprep.subr.mxu0 0.0
        %1470 = vmatpush1.msra.mxu0 0.0
        %1471 = vmatprep.subr.mxu0 0.0
        %1472 = vmatpush1.msra.mxu0 0.0
        %1473 = vmatprep.subr.mxu0 0.0
        %1474 = vmatpush1.msra.mxu0 0.0
        %1475 = vmatprep.subr.mxu0 0.0
        %1476 = vmatpush1.msra.mxu0 0.0
        %1477 = vmatprep.subr.mxu0 0.0
        %1478 = vmatpush1.msra.mxu0 0.0
        %1479 = vmatprep.subr.mxu0 0.0
        %1480 = vmatpush1.msra.mxu0 0.0
        %1481 = vmatprep.subr.mxu0 0.0
        %1482 = vmatpush1.msra.mxu0 0.0
        %1483 = vmatprep.subr.mxu0 0.0
        %1484 = vmatpush1.msra.mxu0 0.0
        %1485 = vmatprep.subr.mxu0 0.0
        %1486 = vmatpush1.msra.mxu0 0.0
        %1487 = vmatprep.subr.mxu0 0.0
        %1488 = vmatpush1.msra.mxu0 0.0
        %1489 = vmatprep.subr.mxu0 0.0
        %1490 = vmatpush1.msra.mxu0 0.0
        %1491 = vmatprep.subr.mxu0 0.0
        %1492 = vmatpush1.msra.mxu0 0.0
        %1493 = vmatprep.subr.mxu0 0.0
        %1494 = vmatpush1.msra.mxu0 0.0
        %1495 = vmatprep.subr.mxu0 0.0
        %1496 = vmatpush1.msra.mxu0 0.0
        %1497 = vmatprep.subr.mxu0 0.0
        %1498 = vmatpush1.msra.mxu0 0.0
        %1499 = vmatprep.subr.mxu0 0.0
        %1500 = vmatpush1.msra.mxu0 0.0
        %1501 = vmatprep.subr.mxu0 0.0
        %1502 = vmatpush1.msra.mxu0 0.0
        %1503 = vmatprep.subr.mxu0 0.0
        %1504 = vmatpush1.msra.mxu0 0.0
        %1505 = vmatprep.subr.mxu0 0.0
        %1506 = vmatpush1.msra.mxu0 0.0
        %1507 = vmatprep.subr.mxu0 0.0
        %1508 = vmatpush1.msra.mxu0 0.0
        %1509 = vmatprep.subr.mxu0 0.0
        %1510 = vmatpush1.msra.mxu0 0.0
        %1511 = vmatprep.subr.mxu0 0.0
        %1512 = vmatpush1.msra.mxu0 0.0
        %1513 = vmatprep.subr.mxu0 0.0
        %1514 = vmatpush1.msra.mxu0 0.0
        %1515 = vmatprep.subr.mxu0 0.0
        %1516 = vmatpush1.msra.mxu0 0.0
        %1517 = vmatprep.mubr.f32.mxu0 0.0
        %1518 = vmatmul.mubr.f32.gmra.mrb[0].mxu0 %v1353
        %v1519 = vpop.f32.mrb[0].mxu0
        %v1520 = vadd.f32 %v1335, %v1519
        %v1521 = vpop.f32.mrb[0].mxu0
        %v1522 = vadd.f32 %v1335, %v1521
        %1523 = vmatprep.mubr.f32.mxu0 0.0
        %1524 = vmatmul.mubr.f32.gmra.mrb[0].mxu0 %v1356
        %v1525 = vpop.f32.mrb[0].mxu0
        %v1526 = vadd.f32 %v1340, %v1525
        %v1527 = vpop.f32.mrb[0].mxu0
        %v1528 = vadd.f32 %v1340, %v1527
        %1529 = vmatprep.mubr.f32.mxu0 0.0
        %1530 = vmatmul.mubr.f32.gmra.mrb[0].mxu0 %v1359
        %v1531 = vpop.f32.mrb[0].mxu0
        %v1532 = vadd.f32 %v1345, %v1531
        %v1533 = vpop.f32.mrb[0].mxu0
        %v1534 = vadd.f32 %v1345, %v1533
        %1535 = vmatprep.mubr.f32.mxu0 0.0
        %1536 = vmatmul.mubr.f32.gmra.mrb[0].mxu0 %v1362
        %v1537 = vpop.f32.mrb[0].mxu0
        %v1538 = vadd.f32 %v1350, %v1537
        %v1539 = vpop.f32.mrb[0].mxu0
        %v1540 = vadd.f32 %v1350, %v1539
        %1541 = vdwg.mxu0
        %v1542 = vadd.f32 %v954, %v1431
        %v1543 = vadd.f32 %v955, %v1433
        %v1544 = vadd.f32 %v956, %v1520
        %v1545 = vadd.f32 %v957, %v1522
        %v1546 = vadd.f32 %v958, %v1437
        %v1547 = vadd.f32 %v959, %v1439
        %v1548 = vadd.f32 %v960, %v1526
        %v1549 = vadd.f32 %v961, %v1528
        %v1550 = vadd.f32 %v1443, %v970
        %v1551 = vadd.f32 %v1445, %v971
        %v1552 = vadd.f32 %v1532, %v972
        %v1553 = vadd.f32 %v1534, %v973
        %v1554 = vadd.f32 %v1449, %v974
        %v1555 = vadd.f32 %v1451, %v975
        %v1556 = vadd.f32 %v1538, %v976
        %v1557 = vadd.f32 %v1540, %v977
        %v1558 = vmul.f32 %v1550, 0.70710677
        %v1559 = vmul.f32 %v1551, 0.70710677
        %v1560 = vmul.f32 %v1552, 0.70710677
        %v1561 = vmul.f32 %v1553, 0.70710677
        %v1562 = vmul.f32 %v1554, 0.70710677
        %v1563 = vmul.f32 %v1555, 0.70710677
        %v1564 = vmul.f32 %v1556, 0.70710677
        %v1565 = vmul.f32 %v1557, 0.70710677
        %1574 = vrot.lane.b32.xlu0 %v1558, 4
        %v1575 = vpop.permute.xlu0 %1574
        %1576 = vrot.lane.b32.xlu0 %v1559, 4
        %v1577 = vpop.permute.xlu0 %1576
        %1578 = vrot.lane.b32.xlu0 %v1560, 4
        %v1579 = vpop.permute.xlu0 %1578
        %1580 = vrot.lane.b32.xlu0 %v1561, 4
        %v1581 = vpop.permute.xlu0 %1580
        %1582 = vrot.lane.b32.xlu0 %v1562, 4
        %v1583 = vpop.permute.xlu0 %1582
        %1584 = vrot.lane.b32.xlu0 %v1563, 4
        %v1585 = vpop.permute.xlu0 %1584
        %1586 = vrot.lane.b32.xlu0 %v1564, 4
        %v1587 = vpop.permute.xlu0 %1586
        %1588 = vrot.lane.b32.xlu0 %v1565, 4
        %v1589 = vpop.permute.xlu0 %1588
        %vm1590 = vcmask 31744
        %v1591 = vsel %vm1590, %v1575, %v1577
        %v1592 = vsel %vm1590, %v1577, %v1579
        %v1593 = vsel %vm1590, %v1579, %v1581
        %v1594 = vsel %vm1590, %v1583, %v1585
        %v1595 = vsel %vm1590, %v1585, %v1587
        %v1596 = vsel %vm1590, %v1587, %v1589
        %vm1607 = vcmask 1047584
        %1608 = vst.msk [vmem:[#allocation2 + $0x8] sm:$0xff] %vm1607, %v1575
        %1609 = vst [vmem:[#allocation2 + $0x10] sm:$0xff] %v1591
        %1610 = vst [vmem:[#allocation2 + $0x18] sm:$0xff] %v1592
        %1611 = vst [vmem:[#allocation2 + $0x20] sm:$0xff] %v1593
        %1612 = vst.msk [vmem:[#allocation2 + $0x28] sm:$0xff] %vm1590, %v1581
        %1613 = vst.msk [vmem:[#allocation2 + $0x38] sm:$0xff] %vm1607, %v1583
        %1614 = vst [vmem:[#allocation2 + $0x40] sm:$0xff] %v1594
        %1615 = vst [vmem:[#allocation2 + $0x48] sm:$0xff] %v1595
        %1616 = vst [vmem:[#allocation2 + $0x50] sm:$0xff] %v1596
        %1617 = vst.msk [vmem:[#allocation2 + $0x58] sm:$0xff] %vm1590, %v1589
        %1618 = vst.msk [vmem:[#allocation2 + $0x8] sm:$0xff] %vm1590, 0.0
        %1619 = vst.msk [vmem:[#allocation2 + $0x38] sm:$0xff] %vm1590, 0.0
        %1620 = vst.msk [vmem:[#allocation2 + $0x18] sm:$0xff] %vm1590, 0.0
        %1621 = vst.msk [vmem:[#allocation2 + $0x48] sm:$0xff] %vm1590, 0.0
        %1622 = vst [vmem:[#allocation2 + $0x68] sm:$0xff] %v1558
        %1623 = vst [vmem:[#allocation2 + $0x70] sm:$0xff] %v1559
        %1624 = vst [vmem:[#allocation2 + $0x78] sm:$0xff] %v1560
        %1625 = vst [vmem:[#allocation2 + $0x80] sm:$0xff] %v1561
        %1626 = vst [vmem:[#allocation2 + $0x98] sm:$0xff] %v1562
        %1627 = vst [vmem:[#allocation2 + $0xa0] sm:$0xff] %v1563
        %1628 = vst [vmem:[#allocation2 + $0xa8] sm:$0xff] %v1564
        %1629 = vst [vmem:[#allocation2 + $0xb0] sm:$0xff] %v1565
        %1630 = vrot.lane.b32.xlu0 %v1558, 124
        %v1631 = vpop.permute.xlu0 %1630
        %1632 = vrot.lane.b32.xlu0 %v1559, 124
        %v1633 = vpop.permute.xlu0 %1632
        %1634 = vrot.lane.b32.xlu0 %v1560, 124
        %v1635 = vpop.permute.xlu0 %1634
        %1636 = vrot.lane.b32.xlu0 %v1561, 124
        %v1637 = vpop.permute.xlu0 %1636
        %1638 = vrot.lane.b32.xlu0 %v1562, 124
        %v1639 = vpop.permute.xlu0 %1638
        %1640 = vrot.lane.b32.xlu0 %v1563, 124
        %v1641 = vpop.permute.xlu0 %1640
        %1642 = vrot.lane.b32.xlu0 %v1564, 124
        %v1643 = vpop.permute.xlu0 %1642
        %1644 = vrot.lane.b32.xlu0 %v1565, 124
        %v1645 = vpop.permute.xlu0 %1644
        %vm1646 = vcmask 1014784
        %v1647 = vsel %vm1646, %v1631, %v1633
        %v1648 = vsel %vm1646, %v1633, %v1635
        %v1649 = vsel %vm1646, %v1635, %v1637
        %v1650 = vsel %vm1646, %v1639, %v1641
        %v1651 = vsel %vm1646, %v1641, %v1643
        %v1652 = vsel %vm1646, %v1643, %v1645
        %vm1663 = vcmask 1048544
        %1664 = vst.msk [vmem:[#allocation2 + $0xc0] sm:$0xff] %vm1663, %v1631
        %1665 = vst [vmem:[#allocation2 + $0xc8] sm:$0xff] %v1647
        %1666 = vst [vmem:[#allocation2 + $0xd0] sm:$0xff] %v1648
        %1667 = vst [vmem:[#allocation2 + $0xd8] sm:$0xff] %v1649
        %1668 = vst.msk [vmem:[#allocation2 + $0xe0] sm:$0xff] %vm1646, %v1637
        %1669 = vst.msk [vmem:[#allocation2 + $0xf0] sm:$0xff] %vm1663, %v1639
        %1670 = vst [vmem:[#allocation2 + $0xf8] sm:$0xff] %v1650
        %1671 = vst [vmem:[#allocation2 + $0x100] sm:$0xff] %v1651
        %1672 = vst [vmem:[#allocation2 + $0x108] sm:$0xff] %v1652
        %1673 = vst.msk [vmem:[#allocation2 + $0x110] sm:$0xff] %vm1646, %v1645
        %1674 = vst.msk [vmem:[#allocation2 + $0xd0] sm:$0xff] %vm1663, 0.0
        %1675 = vst.msk [vmem:[#allocation2 + $0x100] sm:$0xff] %vm1663, 0.0
        %1676 = vst.msk [vmem:[#allocation2 + $0xe0] sm:$0xff] %vm1663, 0.0
        %1677 = vst.msk [vmem:[#allocation2 + $0x110] sm:$0xff] %vm1663, 0.0
        %v1678 = vld [vmem:[#allocation2 + $0x8] sm:$0xff]
        %v1679 = vld [vmem:[#allocation2 + $0x10] sm:$0xff]
        %v1680 = vld [vmem:[#allocation2 + $0x18] sm:$0xff]
        %v1681 = vld [vmem:[#allocation2 + $0x20] sm:$0xff]
        %v1682 = vld [vmem:[#allocation2 + $0x38] sm:$0xff]
        %v1683 = vld [vmem:[#allocation2 + $0x40] sm:$0xff]
        %v1684 = vld [vmem:[#allocation2 + $0x48] sm:$0xff]
        %v1685 = vld [vmem:[#allocation2 + $0x50] sm:$0xff]
        %v1686 = vld [vmem:[#allocation2 + $0x68] sm:$0xff]
        %v1687 = vld [vmem:[#allocation2 + $0x70] sm:$0xff]
        %v1688 = vld [vmem:[#allocation2 + $0x78] sm:$0xff]
        %v1689 = vld [vmem:[#allocation2 + $0x80] sm:$0xff]
        %v1690 = vld [vmem:[#allocation2 + $0x98] sm:$0xff]
        %v1691 = vld [vmem:[#allocation2 + $0xa0] sm:$0xff]
        %v1692 = vld [vmem:[#allocation2 + $0xa8] sm:$0xff]
        %v1693 = vld [vmem:[#allocation2 + $0xb0] sm:$0xff]
        %v1694 = vld [vmem:[#allocation2 + $0xc8] sm:$0xff]
        %v1695 = vld [vmem:[#allocation2 + $0xd0] sm:$0xff]
        %v1696 = vld [vmem:[#allocation2 + $0xd8] sm:$0xff]
        %v1697 = vld [vmem:[#allocation2 + $0xe0] sm:$0xff]
        %v1698 = vld [vmem:[#allocation2 + $0xf8] sm:$0xff]
        %v1699 = vld [vmem:[#allocation2 + $0x100] sm:$0xff]
        %v1700 = vld [vmem:[#allocation2 + $0x108] sm:$0xff]
        %v1701 = vld [vmem:[#allocation2 + $0x110] sm:$0xff]
        %s1702 = scalar_lea.vmem %s3, 32
        %v1703 = vld [vmem:[%s1702] sm:$0xff]
        %v1704 = vld [vmem:[%s1702 + $0x8] sm:$0xff]
        %s1705 = scalar_lea.vmem %s4, 32
        %v1706 = vld [vmem:[%s1705] sm:$0xff]
        %v1707 = vld [vmem:[%s1705 + $0x8] sm:$0xff]
        %1709 = vset.pattern.permute.xlu0 0
        %1710 = vperm.xlu0 %1709, %v1706
        %v1711 = vpop.permute.xlu0 %1710
        %1714 = vset.pattern.permute.xlu0 0
        %1715 = vperm.xlu0 %1714, %v1707
        %v1716 = vpop.permute.xlu0 %1715
        %v1719 = vsel %vm542, %v1703, 0
        %v1722 = vsel %vm542, %v1704, 0
        %1724 = vmatprep.subr.mxu0 %v1679
        %1725 = vmatpush1.msra.mxu0 %v1678
        %1726 = vmatprep.subr.mxu0 %v1683
        %1727 = vmatpush1.msra.mxu0 %v1682
        %1728 = vmatprep.subr.mxu0 %v1687
        %1729 = vmatpush1.msra.mxu0 %v1686
        %1730 = vmatprep.subr.mxu0 %v1691
        %1731 = vmatpush1.msra.mxu0 %v1690
        %1732 = vmatprep.subr.mxu0 %v1695
        %1733 = vmatpush1.msra.mxu0 %v1694
        %1734 = vmatprep.subr.mxu0 %v1699
        %1735 = vmatpush1.msra.mxu0 %v1698
        %1736 = vmatprep.subr.mxu0 0.0
        %1737 = vmatpush1.msra.mxu0 0.0
        %1738 = vmatprep.subr.mxu0 0.0
        %1739 = vmatpush1.msra.mxu0 0.0
        %1740 = vmatprep.subr.mxu0 0.0
        %1741 = vmatpush1.msra.mxu0 0.0
        %1742 = vmatprep.subr.mxu0 0.0
        %1743 = vmatpush1.msra.mxu0 0.0
        %1744 = vmatprep.subr.mxu0 0.0
        %1745 = vmatpush1.msra.mxu0 0.0
        %1746 = vmatprep.subr.mxu0 0.0
        %1747 = vmatpush1.msra.mxu0 0.0
        %1748 = vmatprep.subr.mxu0 0.0
        %1749 = vmatpush1.msra.mxu0 0.0
        %1750 = vmatprep.subr.mxu0 0.0
        %1751 = vmatpush1.msra.mxu0 0.0
        %1752 = vmatprep.subr.mxu0 0.0
        %1753 = vmatpush1.msra.mxu0 0.0
        %1754 = vmatprep.subr.mxu0 0.0
        %1755 = vmatpush1.msra.mxu0 0.0
        %1756 = vmatprep.subr.mxu0 0.0
        %1757 = vmatpush1.msra.mxu0 0.0
        %1758 = vmatprep.subr.mxu0 0.0
        %1759 = vmatpush1.msra.mxu0 0.0
        %1760 = vmatprep.subr.mxu0 0.0
        %1761 = vmatpush1.msra.mxu0 0.0
        %1762 = vmatprep.subr.mxu0 0.0
        %1763 = vmatpush1.msra.mxu0 0.0
        %1764 = vmatprep.subr.mxu0 0.0
        %1765 = vmatpush1.msra.mxu0 0.0
        %1766 = vmatprep.subr.mxu0 0.0
        %1767 = vmatpush1.msra.mxu0 0.0
        %1768 = vmatprep.subr.mxu0 0.0
        %1769 = vmatpush1.msra.mxu0 0.0
        %1770 = vmatprep.subr.mxu0 0.0
        %1771 = vmatpush1.msra.mxu0 0.0
        %1772 = vmatprep.subr.mxu0 0.0
        %1773 = vmatpush1.msra.mxu0 0.0
        %1774 = vmatprep.subr.mxu0 0.0
        %1775 = vmatpush1.msra.mxu0 0.0
        %1776 = vmatprep.subr.mxu0 0.0
        %1777 = vmatpush1.msra.mxu0 0.0
        %1778 = vmatprep.subr.mxu0 0.0
        %1779 = vmatpush1.msra.mxu0 0.0
        %1780 = vmatprep.subr.mxu0 0.0
        %1781 = vmatpush1.msra.mxu0 0.0
        %1782 = vmatprep.subr.mxu0 0.0
        %1783 = vmatpush1.msra.mxu0 0.0
        %1784 = vmatprep.subr.mxu0 0.0
        %1785 = vmatpush1.msra.mxu0 0.0
        %1786 = vmatprep.subr.mxu0 0.0
        %1787 = vmatpush1.msra.mxu0 0.0
        %1788 = vmatprep.mubr.f32.mxu0 0.0
        %1789 = vmatmul.mubr.f32.gmra.mrb[0].mxu0 %v1719
        %v1790 = vpop.f32.mrb[0].mxu0
        %v1791 = vadd.f32 %v1711, %v1790
        %v1792 = vpop.f32.mrb[0].mxu0
        %v1793 = vadd.f32 %v1711, %v1792
        %1794 = vmatprep.mubr.f32.mxu0 0.0
        %1795 = vmatmul.mubr.f32.gmra.mrb[0].mxu0 %v1722
        %v1796 = vpop.f32.mrb[0].mxu0
        %v1797 = vadd.f32 %v1716, %v1796
        %v1798 = vpop.f32.mrb[0].mxu0
        %v1799 = vadd.f32 %v1716, %v1798
        %1800 = vdwg.mxu0
        %1801 = vmatprep.subr.mxu0 %v1681
        %1802 = vmatpush1.msra.mxu0 %v1680
        %1803 = vmatprep.subr.mxu0 %v1685
        %1804 = vmatpush1.msra.mxu0 %v1684
        %1805 = vmatprep.subr.mxu0 %v1689
        %1806 = vmatpush1.msra.mxu0 %v1688
        %1807 = vmatprep.subr.mxu0 %v1693
        %1808 = vmatpush1.msra.mxu0 %v1692
        %1809 = vmatprep.subr.mxu0 %v1697
        %1810 = vmatpush1.msra.mxu0 %v1696
        %1811 = vmatprep.subr.mxu0 %v1701
        %1812 = vmatpush1.msra.mxu0 %v1700
        %1813 = vmatprep.subr.mxu0 0.0
        %1814 = vmatpush1.msra.mxu0 0.0
        %1815 = vmatprep.subr.mxu0 0.0
        %1816 = vmatpush1.msra.mxu0 0.0
        %1817 = vmatprep.subr.mxu0 0.0
        %1818 = vmatpush1.msra.mxu0 0.0
        %1819 = vmatprep.subr.mxu0 0.0
        %1820 = vmatpush1.msra.mxu0 0.0
        %1821 = vmatprep.subr.mxu0 0.0
        %1822 = vmatpush1.msra.mxu0 0.0
        %1823 = vmatprep.subr.mxu0 0.0
        %1824 = vmatpush1.msra.mxu0 0.0
        %1825 = vmatprep.subr.mxu0 0.0
        %1826 = vmatpush1.msra.mxu0 0.0
        %1827 = vmatprep.subr.mxu0 0.0
        %1828 = vmatpush1.msra.mxu0 0.0
        %1829 = vmatprep.subr.mxu0 0.0
        %1830 = vmatpush1.msra.mxu0 0.0
        %1831 = vmatprep.subr.mxu0 0.0
        %1832 = vmatpush1.msra.mxu0 0.0
        %1833 = vmatprep.subr.mxu0 0.0
        %1834 = vmatpush1.msra.mxu0 0.0
        %1835 = vmatprep.subr.mxu0 0.0
        %1836 = vmatpush1.msra.mxu0 0.0
        %1837 = vmatprep.subr.mxu0 0.0
        %1838 = vmatpush1.msra.mxu0 0.0
        %1839 = vmatprep.subr.mxu0 0.0
        %1840 = vmatpush1.msra.mxu0 0.0
        %1841 = vmatprep.subr.mxu0 0.0
        %1842 = vmatpush1.msra.mxu0 0.0
        %1843 = vmatprep.subr.mxu0 0.0
        %1844 = vmatpush1.msra.mxu0 0.0
        %1845 = vmatprep.subr.mxu0 0.0
        %1846 = vmatpush1.msra.mxu0 0.0
        %1847 = vmatprep.subr.mxu0 0.0
        %1848 = vmatpush1.msra.mxu0 0.0
        %1849 = vmatprep.subr.mxu0 0.0
        %1850 = vmatpush1.msra.mxu0 0.0
        %1851 = vmatprep.subr.mxu0 0.0
        %1852 = vmatpush1.msra.mxu0 0.0
        %1853 = vmatprep.subr.mxu0 0.0
        %1854 = vmatpush1.msra.mxu0 0.0
        %1855 = vmatprep.subr.mxu0 0.0
        %1856 = vmatpush1.msra.mxu0 0.0
        %1857 = vmatprep.subr.mxu0 0.0
        %1858 = vmatpush1.msra.mxu0 0.0
        %1859 = vmatprep.subr.mxu0 0.0
        %1860 = vmatpush1.msra.mxu0 0.0
        %1861 = vmatprep.subr.mxu0 0.0
        %1862 = vmatpush1.msra.mxu0 0.0
        %1863 = vmatprep.subr.mxu0 0.0
        %1864 = vmatpush1.msra.mxu0 0.0
        %1865 = vmatprep.mubr.f32.mxu0 0.0
        %1866 = vmatmul.mubr.f32.gmra.mrb[0].mxu0 %v1719
        %v1867 = vpop.f32.mrb[0].mxu0
        %v1868 = vadd.f32 %v1711, %v1867
        %v1869 = vpop.f32.mrb[0].mxu0
        %v1870 = vadd.f32 %v1711, %v1869
        %1871 = vmatprep.mubr.f32.mxu0 0.0
        %1872 = vmatmul.mubr.f32.gmra.mrb[0].mxu0 %v1722
        %v1873 = vpop.f32.mrb[0].mxu0
        %v1874 = vadd.f32 %v1716, %v1873
        %v1875 = vpop.f32.mrb[0].mxu0
        %v1876 = vadd.f32 %v1716, %v1875
        %1877 = vdwg.mxu0
        %v1878 = vtanh.pop %v1791
        %v1879 = vtanh.pop %v1793
        %v1880 = vtanh.pop %v1868
        %v1881 = vtanh.pop %v1870
        %v1882 = vxor.u32 %v1797, 2147483648
        %v1883 = vxor.u32 %v1799, 2147483648
        %v1884 = vxor.u32 %v1874, 2147483648
        %v1885 = vxor.u32 %v1876, 2147483648
        %v1886 = vmul.f32 %v1882, 1.442695
        %v1887 = vpow.pop %v1886
        %v1888 = vmul.f32 %v1883, 1.442695
        %v1889 = vpow.pop %v1888
        %v1890 = vmul.f32 %v1884, 1.442695
        %v1891 = vpow.pop %v1890
        %v1892 = vmul.f32 %v1885, 1.442695
        %v1893 = vpow.pop %v1892
        %v1894 = vadd.f32 %v1887, 1.0
        %v1895 = vadd.f32 %v1889, 1.0
        %v1896 = vadd.f32 %v1891, 1.0
        %v1897 = vadd.f32 %v1893, 1.0
        %v1898 = vrcp.pop %v1894
        %v1899 = vmul.f32 1.0, %v1898
        %v1900 = vrcp.pop %v1895
        %v1901 = vmul.f32 1.0, %v1900
        %v1902 = vrcp.pop %v1896
        %v1903 = vmul.f32 1.0, %v1902
        %v1904 = vrcp.pop %v1897
        %v1905 = vmul.f32 1.0, %v1904
        %v1906 = vmul.f32 %v1878, %v1899
        %v1907 = vmul.f32 %v1879, %v1901
        %v1908 = vmul.f32 %v1880, %v1903
        %v1909 = vmul.f32 %v1881, %v1905
        %s1910 = scalar_lea.vmem %s5, 64
        %v1911 = vld [vmem:[%s1910] sm:$0xff]
        %v1912 = vld [vmem:[%s1910 + $0x8] sm:$0xff]
        %v1913 = vld [vmem:[%s1910 + $0x10] sm:$0xff]
        %v1914 = vld [vmem:[%s1910 + $0x18] sm:$0xff]
        %s1915 = scalar_lea.vmem %s6, 64
        %v1916 = vld [vmem:[%s1915] sm:$0xff]
        %v1917 = vld [vmem:[%s1915 + $0x8] sm:$0xff]
        %v1918 = vld [vmem:[%s1915 + $0x10] sm:$0xff]
        %v1919 = vld [vmem:[%s1915 + $0x18] sm:$0xff]
        %1921 = vset.pattern.permute.xlu0 0
        %1922 = vperm.xlu0 %1921, %v1916
        %v1923 = vpop.permute.xlu0 %1922
        %1926 = vset.pattern.permute.xlu0 0
        %1927 = vperm.xlu0 %1926, %v1917
        %v1928 = vpop.permute.xlu0 %1927
        %1931 = vset.pattern.permute.xlu0 0
        %1932 = vperm.xlu0 %1931, %v1918
        %v1933 = vpop.permute.xlu0 %1932
        %1936 = vset.pattern.permute.xlu0 0
        %1937 = vperm.xlu0 %1936, %v1919
        %v1938 = vpop.permute.xlu0 %1937
        %v1941 = vsel %vm763, %v1911, 0
        %v1944 = vsel %vm763, %v1912, 0
        %v1947 = vsel %vm763, %v1913, 0
        %v1950 = vsel %vm763, %v1914, 0
        %1952 = vmatprep.subr.mxu0 %v1907
        %1953 = vmatpush1.msra.mxu0 %v1906
        %1954 = vmatprep.subr.mxu0 0.0
        %1955 = vmatpush1.msra.mxu0 0.0
        %1956 = vmatprep.subr.mxu0 0.0
        %1957 = vmatpush1.msra.mxu0 0.0
        %1958 = vmatprep.subr.mxu0 0.0
        %1959 = vmatpush1.msra.mxu0 0.0
        %1960 = vmatprep.subr.mxu0 0.0
        %1961 = vmatpush1.msra.mxu0 0.0
        %1962 = vmatprep.subr.mxu0 0.0
        %1963 = vmatpush1.msra.mxu0 0.0
        %1964 = vmatprep.subr.mxu0 0.0
        %1965 = vmatpush1.msra.mxu0 0.0
        %1966 = vmatprep.subr.mxu0 0.0
        %1967 = vmatpush1.msra.mxu0 0.0
        %1968 = vmatprep.subr.mxu0 0.0
        %1969 = vmatpush1.msra.mxu0 0.0
        %1970 = vmatprep.subr.mxu0 0.0
        %1971 = vmatpush1.msra.mxu0 0.0
        %1972 = vmatprep.subr.mxu0 0.0
        %1973 = vmatpush1.msra.mxu0 0.0
        %1974 = vmatprep.subr.mxu0 0.0
        %1975 = vmatpush1.msra.mxu0 0.0
        %1976 = vmatprep.subr.mxu0 0.0
        %1977 = vmatpush1.msra.mxu0 0.0
        %1978 = vmatprep.subr.mxu0 0.0
        %1979 = vmatpush1.msra.mxu0 0.0
        %1980 = vmatprep.subr.mxu0 0.0
        %1981 = vmatpush1.msra.mxu0 0.0
        %1982 = vmatprep.subr.mxu0 0.0
        %1983 = vmatpush1.msra.mxu0 0.0
        %1984 = vmatprep.subr.mxu0 0.0
        %1985 = vmatpush1.msra.mxu0 0.0
        %1986 = vmatprep.subr.mxu0 0.0
        %1987 = vmatpush1.msra.mxu0 0.0
        %1988 = vmatprep.subr.mxu0 0.0
        %1989 = vmatpush1.msra.mxu0 0.0
        %1990 = vmatprep.subr.mxu0 0.0
        %1991 = vmatpush1.msra.mxu0 0.0
        %1992 = vmatprep.subr.mxu0 0.0
        %1993 = vmatpush1.msra.mxu0 0.0
        %1994 = vmatprep.subr.mxu0 0.0
        %1995 = vmatpush1.msra.mxu0 0.0
        %1996 = vmatprep.subr.mxu0 0.0
        %1997 = vmatpush1.msra.mxu0 0.0
        %1998 = vmatprep.subr.mxu0 0.0
        %1999 = vmatpush1.msra.mxu0 0.0
        %2000 = vmatprep.subr.mxu0 0.0
        %2001 = vmatpush1.msra.mxu0 0.0
        %2002 = vmatprep.subr.mxu0 0.0
        %2003 = vmatpush1.msra.mxu0 0.0
        %2004 = vmatprep.subr.mxu0 0.0
        %2005 = vmatpush1.msra.mxu0 0.0
        %2006 = vmatprep.subr.mxu0 0.0
        %2007 = vmatpush1.msra.mxu0 0.0
        %2008 = vmatprep.subr.mxu0 0.0
        %2009 = vmatpush1.msra.mxu0 0.0
        %2010 = vmatprep.subr.mxu0 0.0
        %2011 = vmatpush1.msra.mxu0 0.0
        %2012 = vmatprep.subr.mxu0 0.0
        %2013 = vmatpush1.msra.mxu0 0.0
        %2014 = vmatprep.subr.mxu0 0.0
        %2015 = vmatpush1.msra.mxu0 0.0
        %2016 = vmatprep.mubr.f32.mxu0 0.0
        %2017 = vmatmul.mubr.f32.gmra.mrb[0].mxu0 %v1941
        %v2018 = vpop.f32.mrb[0].mxu0
        %v2019 = vadd.f32 %v1923, %v2018
        %v2020 = vpop.f32.mrb[0].mxu0
        %v2021 = vadd.f32 %v1923, %v2020
        %2022 = vmatprep.mubr.f32.mxu0 0.0
        %2023 = vmatmul.mubr.f32.gmra.mrb[0].mxu0 %v1944
        %v2024 = vpop.f32.mrb[0].mxu0
        %v2025 = vadd.f32 %v1928, %v2024
        %v2026 = vpop.f32.mrb[0].mxu0
        %v2027 = vadd.f32 %v1928, %v2026
        %2028 = vmatprep.mubr.f32.mxu0 0.0
        %2029 = vmatmul.mubr.f32.gmra.mrb[0].mxu0 %v1947
        %v2030 = vpop.f32.mrb[0].mxu0
        %v2031 = vadd.f32 %v1933, %v2030
        %v2032 = vpop.f32.mrb[0].mxu0
        %v2033 = vadd.f32 %v1933, %v2032
        %2034 = vmatprep.mubr.f32.mxu0 0.0
        %2035 = vmatmul.mubr.f32.gmra.mrb[0].mxu0 %v1950
        %v2036 = vpop.f32.mrb[0].mxu0
        %v2037 = vadd.f32 %v1938, %v2036
        %v2038 = vpop.f32.mrb[0].mxu0
        %v2039 = vadd.f32 %v1938, %v2038
        %2040 = vdwg.mxu0
        %2041 = vmatprep.subr.mxu0 %v1909
        %2042 = vmatpush1.msra.mxu0 %v1908
        %2043 = vmatprep.subr.mxu0 0.0
        %2044 = vmatpush1.msra.mxu0 0.0
        %2045 = vmatprep.subr.mxu0 0.0
        %2046 = vmatpush1.msra.mxu0 0.0
        %2047 = vmatprep.subr.mxu0 0.0
        %2048 = vmatpush1.msra.mxu0 0.0
        %2049 = vmatprep.subr.mxu0 0.0
        %2050 = vmatpush1.msra.mxu0 0.0
        %2051 = vmatprep.subr.mxu0 0.0
        %2052 = vmatpush1.msra.mxu0 0.0
        %2053 = vmatprep.subr.mxu0 0.0
        %2054 = vmatpush1.msra.mxu0 0.0
        %2055 = vmatprep.subr.mxu0 0.0
        %2056 = vmatpush1.msra.mxu0 0.0
        %2057 = vmatprep.subr.mxu0 0.0
        %2058 = vmatpush1.msra.mxu0 0.0
        %2059 = vmatprep.subr.mxu0 0.0
        %2060 = vmatpush1.msra.mxu0 0.0
        %2061 = vmatprep.subr.mxu0 0.0
        %2062 = vmatpush1.msra.mxu0 0.0
        %2063 = vmatprep.subr.mxu0 0.0
        %2064 = vmatpush1.msra.mxu0 0.0
        %2065 = vmatprep.subr.mxu0 0.0
        %2066 = vmatpush1.msra.mxu0 0.0
        %2067 = vmatprep.subr.mxu0 0.0
        %2068 = vmatpush1.msra.mxu0 0.0
        %2069 = vmatprep.subr.mxu0 0.0
        %2070 = vmatpush1.msra.mxu0 0.0
        %2071 = vmatprep.subr.mxu0 0.0
        %2072 = vmatpush1.msra.mxu0 0.0
        %2073 = vmatprep.subr.mxu0 0.0
        %2074 = vmatpush1.msra.mxu0 0.0
        %2075 = vmatprep.subr.mxu0 0.0
        %2076 = vmatpush1.msra.mxu0 0.0
        %2077 = vmatprep.subr.mxu0 0.0
        %2078 = vmatpush1.msra.mxu0 0.0
        %2079 = vmatprep.subr.mxu0 0.0
        %2080 = vmatpush1.msra.mxu0 0.0
        %2081 = vmatprep.subr.mxu0 0.0
        %2082 = vmatpush1.msra.mxu0 0.0
        %2083 = vmatprep.subr.mxu0 0.0
        %2084 = vmatpush1.msra.mxu0 0.0
        %2085 = vmatprep.subr.mxu0 0.0
        %2086 = vmatpush1.msra.mxu0 0.0
        %2087 = vmatprep.subr.mxu0 0.0
        %2088 = vmatpush1.msra.mxu0 0.0
        %2089 = vmatprep.subr.mxu0 0.0
        %2090 = vmatpush1.msra.mxu0 0.0
        %2091 = vmatprep.subr.mxu0 0.0
        %2092 = vmatpush1.msra.mxu0 0.0
        %2093 = vmatprep.subr.mxu0 0.0
        %2094 = vmatpush1.msra.mxu0 0.0
        %2095 = vmatprep.subr.mxu0 0.0
        %2096 = vmatpush1.msra.mxu0 0.0
        %2097 = vmatprep.subr.mxu0 0.0
        %2098 = vmatpush1.msra.mxu0 0.0
        %2099 = vmatprep.subr.mxu0 0.0
        %2100 = vmatpush1.msra.mxu0 0.0
        %2101 = vmatprep.subr.mxu0 0.0
        %2102 = vmatpush1.msra.mxu0 0.0
        %2103 = vmatprep.subr.mxu0 0.0
        %2104 = vmatpush1.msra.mxu0 0.0
        %2105 = vmatprep.mubr.f32.mxu0 0.0
        %2106 = vmatmul.mubr.f32.gmra.mrb[0].mxu0 %v1941
        %v2107 = vpop.f32.mrb[0].mxu0
        %v2108 = vadd.f32 %v1923, %v2107
        %v2109 = vpop.f32.mrb[0].mxu0
        %v2110 = vadd.f32 %v1923, %v2109
        %2111 = vmatprep.mubr.f32.mxu0 0.0
        %2112 = vmatmul.mubr.f32.gmra.mrb[0].mxu0 %v1944
        %v2113 = vpop.f32.mrb[0].mxu0
        %v2114 = vadd.f32 %v1928, %v2113
        %v2115 = vpop.f32.mrb[0].mxu0
        %v2116 = vadd.f32 %v1928, %v2115
        %2117 = vmatprep.mubr.f32.mxu0 0.0
        %2118 = vmatmul.mubr.f32.gmra.mrb[0].mxu0 %v1947
        %v2119 = vpop.f32.mrb[0].mxu0
        %v2120 = vadd.f32 %v1933, %v2119
        %v2121 = vpop.f32.mrb[0].mxu0
        %v2122 = vadd.f32 %v1933, %v2121
        %2123 = vmatprep.mubr.f32.mxu0 0.0
        %2124 = vmatmul.mubr.f32.gmra.mrb[0].mxu0 %v1950
        %v2125 = vpop.f32.mrb[0].mxu0
        %v2126 = vadd.f32 %v1938, %v2125
        %v2127 = vpop.f32.mrb[0].mxu0
        %v2128 = vadd.f32 %v1938, %v2127
        %2129 = vdwg.mxu0
        %v2130 = vadd.f32 %v1542, %v2019
        %v2131 = vadd.f32 %v1543, %v2021
        %v2132 = vadd.f32 %v1544, %v2108
        %v2133 = vadd.f32 %v1545, %v2110
        %v2134 = vadd.f32 %v1546, %v2025
        %v2135 = vadd.f32 %v1547, %v2027
        %v2136 = vadd.f32 %v1548, %v2114
        %v2137 = vadd.f32 %v1549, %v2116
        %v2138 = vadd.f32 %v2031, %v1558
        %v2139 = vadd.f32 %v2033, %v1559
        %v2140 = vadd.f32 %v2120, %v1560
        %v2141 = vadd.f32 %v2122, %v1561
        %v2142 = vadd.f32 %v2037, %v1562
        %v2143 = vadd.f32 %v2039, %v1563
        %v2144 = vadd.f32 %v2126, %v1564
        %v2145 = vadd.f32 %v2128, %v1565
        %v2146 = vmul.f32 %v2138, 0.70710677
        %v2147 = vmul.f32 %v2139, 0.70710677
        %v2148 = vmul.f32 %v2140, 0.70710677
        %v2149 = vmul.f32 %v2141, 0.70710677
        %v2150 = vmul.f32 %v2142, 0.70710677
        %v2151 = vmul.f32 %v2143, 0.70710677
        %v2152 = vmul.f32 %v2144, 0.70710677
        %v2153 = vmul.f32 %v2145, 0.70710677
        %2162 = vrot.lane.b32.xlu0 %v2146, 1
        %v2163 = vpop.permute.xlu0 %2162
        %2164 = vrot.lane.b32.xlu0 %v2147, 1
        %v2165 = vpop.permute.xlu0 %2164
        %2166 = vrot.lane.b32.xlu0 %v2148, 1
        %v2167 = vpop.permute.xlu0 %2166
        %2168 = vrot.lane.b32.xlu0 %v2149, 1
        %v2169 = vpop.permute.xlu0 %2168
        %2170 = vrot.lane.b32.xlu0 %v2150, 1
        %v2171 = vpop.permute.xlu0 %2170
        %2172 = vrot.lane.b32.xlu0 %v2151, 1
        %v2173 = vpop.permute.xlu0 %2172
        %2174 = vrot.lane.b32.xlu0 %v2152, 1
        %v2175 = vpop.permute.xlu0 %2174
        %2176 = vrot.lane.b32.xlu0 %v2153, 1
        %v2177 = vpop.permute.xlu0 %2176
        %v2178 = vsel %vm416, %v2163, %v2165
        %v2179 = vsel %vm416, %v2165, %v2167
        %v2180 = vsel %vm416, %v2167, %v2169
        %v2181 = vsel %vm416, %v2171, %v2173
        %v2182 = vsel %vm416, %v2173, %v2175
        %v2183 = vsel %vm416, %v2175, %v2177
        %2194 = vst.msk [vmem:[#allocation2 + $0x8] sm:$0xff] %vm433, %v2163
        %2195 = vst [vmem:[#allocation2 + $0x10] sm:$0xff] %v2178
        %2196 = vst [vmem:[#allocation2 + $0x18] sm:$0xff] %v2179
        %2197 = vst [vmem:[#allocation2 + $0x20] sm:$0xff] %v2180
        %2198 = vst.msk [vmem:[#allocation2 + $0x28] sm:$0xff] %vm416, %v2169
        %2199 = vst.msk [vmem:[#allocation2 + $0x38] sm:$0xff] %vm433, %v2171
        %2200 = vst [vmem:[#allocation2 + $0x40] sm:$0xff] %v2181
        %2201 = vst [vmem:[#allocation2 + $0x48] sm:$0xff] %v2182
        %2202 = vst [vmem:[#allocation2 + $0x50] sm:$0xff] %v2183
        %2203 = vst.msk [vmem:[#allocation2 + $0x58] sm:$0xff] %vm416, %v2177
        %2204 = vst.msk [vmem:[#allocation2 + $0x8] sm:$0xff] %vm416, 0.0
        %2205 = vst.msk [vmem:[#allocation2 + $0x38] sm:$0xff] %vm416, 0.0
        %2206 = vst.msk [vmem:[#allocation2 + $0x18] sm:$0xff] %vm416, 0.0
        %2207 = vst.msk [vmem:[#allocation2 + $0x48] sm:$0xff] %vm416, 0.0
        %2208 = vst [vmem:[#allocation2 + $0x68] sm:$0xff] %v2146
        %2209 = vst [vmem:[#allocation2 + $0x70] sm:$0xff] %v2147
        %2210 = vst [vmem:[#allocation2 + $0x78] sm:$0xff] %v2148
        %2211 = vst [vmem:[#allocation2 + $0x80] sm:$0xff] %v2149
        %2212 = vst [vmem:[#allocation2 + $0x98] sm:$0xff] %v2150
        %2213 = vst [vmem:[#allocation2 + $0xa0] sm:$0xff] %v2151
        %2214 = vst [vmem:[#allocation2 + $0xa8] sm:$0xff] %v2152
        %2215 = vst [vmem:[#allocation2 + $0xb0] sm:$0xff] %v2153
        %2216 = vrot.lane.b32.xlu0 %v2146, 127
        %v2217 = vpop.permute.xlu0 %2216
        %2218 = vrot.lane.b32.xlu0 %v2147, 127
        %v2219 = vpop.permute.xlu0 %2218
        %2220 = vrot.lane.b32.xlu0 %v2148, 127
        %v2221 = vpop.permute.xlu0 %2220
        %2222 = vrot.lane.b32.xlu0 %v2149, 127
        %v2223 = vpop.permute.xlu0 %2222
        %2224 = vrot.lane.b32.xlu0 %v2150, 127
        %v2225 = vpop.permute.xlu0 %2224
        %2226 = vrot.lane.b32.xlu0 %v2151, 127
        %v2227 = vpop.permute.xlu0 %2226
        %2228 = vrot.lane.b32.xlu0 %v2152, 127
        %v2229 = vpop.permute.xlu0 %2228
        %2230 = vrot.lane.b32.xlu0 %v2153, 127
        %v2231 = vpop.permute.xlu0 %2230
        %v2232 = vsel %vm472, %v2217, %v2219
        %v2233 = vsel %vm472, %v2219, %v2221
        %v2234 = vsel %vm472, %v2221, %v2223
        %v2235 = vsel %vm472, %v2225, %v2227
        %v2236 = vsel %vm472, %v2227, %v2229
        %v2237 = vsel %vm472, %v2229, %v2231
        %2248 = vst.msk [vmem:[#allocation2 + $0xc0] sm:$0xff] %vm489, %v2217
        %2249 = vst [vmem:[#allocation2 + $0xc8] sm:$0xff] %v2232
        %2250 = vst [vmem:[#allocation2 + $0xd0] sm:$0xff] %v2233
        %2251 = vst [vmem:[#allocation2 + $0xd8] sm:$0xff] %v2234
        %2252 = vst.msk [vmem:[#allocation2 + $0xe0] sm:$0xff] %vm472, %v2223
        %2253 = vst.msk [vmem:[#allocation2 + $0xf0] sm:$0xff] %vm489, %v2225
        %2254 = vst [vmem:[#allocation2 + $0xf8] sm:$0xff] %v2235
        %2255 = vst [vmem:[#allocation2 + $0x100] sm:$0xff] %v2236
        %2256 = vst [vmem:[#allocation2 + $0x108] sm:$0xff] %v2237
        %2257 = vst.msk [vmem:[#allocation2 + $0x110] sm:$0xff] %vm472, %v2231
        %2258 = vst.msk [vmem:[#allocation2 + $0xd0] sm:$0xff] %vm489, 0.0
        %2259 = vst.msk [vmem:[#allocation2 + $0x100] sm:$0xff] %vm489, 0.0
        %2260 = vst.msk [vmem:[#allocation2 + $0xe0] sm:$0xff] %vm489, 0.0
        %2261 = vst.msk [vmem:[#allocation2 + $0x110] sm:$0xff] %vm489, 0.0
        %v2262 = vld [vmem:[#allocation2 + $0x8] sm:$0xff]
        %v2263 = vld [vmem:[#allocation2 + $0x10] sm:$0xff]
        %v2264 = vld [vmem:[#allocation2 + $0x18] sm:$0xff]
        %v2265 = vld [vmem:[#allocation2 + $0x20] sm:$0xff]
        %v2266 = vld [vmem:[#allocation2 + $0x38] sm:$0xff]
        %v2267 = vld [vmem:[#allocation2 + $0x40] sm:$0xff]
        %v2268 = vld [vmem:[#allocation2 + $0x48] sm:$0xff]
        %v2269 = vld [vmem:[#allocation2 + $0x50] sm:$0xff]
        %v2270 = vld [vmem:[#allocation2 + $0x68] sm:$0xff]
        %v2271 = vld [vmem:[#allocation2 + $0x70] sm:$0xff]
        %v2272 = vld [vmem:[#allocation2 + $0x78] sm:$0xff]
        %v2273 = vld [vmem:[#allocation2 + $0x80] sm:$0xff]
        %v2274 = vld [vmem:[#allocation2 + $0x98] sm:$0xff]
        %v2275 = vld [vmem:[#allocation2 + $0xa0] sm:$0xff]
        %v2276 = vld [vmem:[#allocation2 + $0xa8] sm:$0xff]
        %v2277 = vld [vmem:[#allocation2 + $0xb0] sm:$0xff]
        %v2278 = vld [vmem:[#allocation2 + $0xc8] sm:$0xff]
        %v2279 = vld [vmem:[#allocation2 + $0xd0] sm:$0xff]
        %v2280 = vld [vmem:[#allocation2 + $0xd8] sm:$0xff]
        %v2281 = vld [vmem:[#allocation2 + $0xe0] sm:$0xff]
        %v2282 = vld [vmem:[#allocation2 + $0xf8] sm:$0xff]
        %v2283 = vld [vmem:[#allocation2 + $0x100] sm:$0xff]
        %v2284 = vld [vmem:[#allocation2 + $0x108] sm:$0xff]
        %v2285 = vld [vmem:[#allocation2 + $0x110] sm:$0xff]
        %s2286 = scalar_lea.vmem %s3, 48
        %v2287 = vld [vmem:[%s2286] sm:$0xff]
        %v2288 = vld [vmem:[%s2286 + $0x8] sm:$0xff]
        %s2289 = scalar_lea.vmem %s4, 48
        %v2290 = vld [vmem:[%s2289] sm:$0xff]
        %v2291 = vld [vmem:[%s2289 + $0x8] sm:$0xff]
        %2293 = vset.pattern.permute.xlu0 0
        %2294 = vperm.xlu0 %2293, %v2290
        %v2295 = vpop.permute.xlu0 %2294
        %2298 = vset.pattern.permute.xlu0 0
        %2299 = vperm.xlu0 %2298, %v2291
        %v2300 = vpop.permute.xlu0 %2299
        %v2303 = vsel %vm542, %v2287, 0
        %v2306 = vsel %vm542, %v2288, 0
        %2308 = vmatprep.subr.mxu0 %v2263
        %2309 = vmatpush1.msra.mxu0 %v2262
        %2310 = vmatprep.subr.mxu0 %v2267
        %2311 = vmatpush1.msra.mxu0 %v2266
        %2312 = vmatprep.subr.mxu0 %v2271
        %2313 = vmatpush1.msra.mxu0 %v2270
        %2314 = vmatprep.subr.mxu0 %v2275
        %2315 = vmatpush1.msra.mxu0 %v2274
        %2316 = vmatprep.subr.mxu0 %v2279
        %2317 = vmatpush1.msra.mxu0 %v2278
        %2318 = vmatprep.subr.mxu0 %v2283
        %2319 = vmatpush1.msra.mxu0 %v2282
        %2320 = vmatprep.subr.mxu0 0.0
        %2321 = vmatpush1.msra.mxu0 0.0
        %2322 = vmatprep.subr.mxu0 0.0
        %2323 = vmatpush1.msra.mxu0 0.0
        %2324 = vmatprep.subr.mxu0 0.0
        %2325 = vmatpush1.msra.mxu0 0.0
        %2326 = vmatprep.subr.mxu0 0.0
        %2327 = vmatpush1.msra.mxu0 0.0
        %2328 = vmatprep.subr.mxu0 0.0
        %2329 = vmatpush1.msra.mxu0 0.0
        %2330 = vmatprep.subr.mxu0 0.0
        %2331 = vmatpush1.msra.mxu0 0.0
        %2332 = vmatprep.subr.mxu0 0.0
        %2333 = vmatpush1.msra.mxu0 0.0
        %2334 = vmatprep.subr.mxu0 0.0
        %2335 = vmatpush1.msra.mxu0 0.0
        %2336 = vmatprep.subr.mxu0 0.0
        %2337 = vmatpush1.msra.mxu0 0.0
        %2338 = vmatprep.subr.mxu0 0.0
        %2339 = vmatpush1.msra.mxu0 0.0
        %2340 = vmatprep.subr.mxu0 0.0
        %2341 = vmatpush1.msra.mxu0 0.0
        %2342 = vmatprep.subr.mxu0 0.0
        %2343 = vmatpush1.msra.mxu0 0.0
        %2344 = vmatprep.subr.mxu0 0.0
        %2345 = vmatpush1.msra.mxu0 0.0
        %2346 = vmatprep.subr.mxu0 0.0
        %2347 = vmatpush1.msra.mxu0 0.0
        %2348 = vmatprep.subr.mxu0 0.0
        %2349 = vmatpush1.msra.mxu0 0.0
        %2350 = vmatprep.subr.mxu0 0.0
        %2351 = vmatpush1.msra.mxu0 0.0
        %2352 = vmatprep.subr.mxu0 0.0
        %2353 = vmatpush1.msra.mxu0 0.0
        %2354 = vmatprep.subr.mxu0 0.0
        %2355 = vmatpush1.msra.mxu0 0.0
        %2356 = vmatprep.subr.mxu0 0.0
        %2357 = vmatpush1.msra.mxu0 0.0
        %2358 = vmatprep.subr.mxu0 0.0
        %2359 = vmatpush1.msra.mxu0 0.0
        %2360 = vmatprep.subr.mxu0 0.0
        %2361 = vmatpush1.msra.mxu0 0.0
        %2362 = vmatprep.subr.mxu0 0.0
        %2363 = vmatpush1.msra.mxu0 0.0
        %2364 = vmatprep.subr.mxu0 0.0
        %2365 = vmatpush1.msra.mxu0 0.0
        %2366 = vmatprep.subr.mxu0 0.0
        %2367 = vmatpush1.msra.mxu0 0.0
        %2368 = vmatprep.subr.mxu0 0.0
        %2369 = vmatpush1.msra.mxu0 0.0
        %2370 = vmatprep.subr.mxu0 0.0
        %2371 = vmatpush1.msra.mxu0 0.0
        %2372 = vmatprep.mubr.f32.mxu0 0.0
        %2373 = vmatmul.mubr.f32.gmra.mrb[0].mxu0 %v2303
        %v2374 = vpop.f32.mrb[0].mxu0
        %v2375 = vadd.f32 %v2295, %v2374
        %v2376 = vpop.f32.mrb[0].mxu0
        %v2377 = vadd.f32 %v2295, %v2376
        %2378 = vmatprep.mubr.f32.mxu0 0.0
        %2379 = vmatmul.mubr.f32.gmra.mrb[0].mxu0 %v2306
        %v2380 = vpop.f32.mrb[0].mxu0
        %v2381 = vadd.f32 %v2300, %v2380
        %v2382 = vpop.f32.mrb[0].mxu0
        %v2383 = vadd.f32 %v2300, %v2382
        %2384 = vdwg.mxu0
        %2385 = vmatprep.subr.mxu0 %v2265
        %2386 = vmatpush1.msra.mxu0 %v2264
        %2387 = vmatprep.subr.mxu0 %v2269
        %2388 = vmatpush1.msra.mxu0 %v2268
        %2389 = vmatprep.subr.mxu0 %v2273
        %2390 = vmatpush1.msra.mxu0 %v2272
        %2391 = vmatprep.subr.mxu0 %v2277
        %2392 = vmatpush1.msra.mxu0 %v2276
        %2393 = vmatprep.subr.mxu0 %v2281
        %2394 = vmatpush1.msra.mxu0 %v2280
        %2395 = vmatprep.subr.mxu0 %v2285
        %2396 = vmatpush1.msra.mxu0 %v2284
        %2397 = vmatprep.subr.mxu0 0.0
        %2398 = vmatpush1.msra.mxu0 0.0
        %2399 = vmatprep.subr.mxu0 0.0
        %2400 = vmatpush1.msra.mxu0 0.0
        %2401 = vmatprep.subr.mxu0 0.0
        %2402 = vmatpush1.msra.mxu0 0.0
        %2403 = vmatprep.subr.mxu0 0.0
        %2404 = vmatpush1.msra.mxu0 0.0
        %2405 = vmatprep.subr.mxu0 0.0
        %2406 = vmatpush1.msra.mxu0 0.0
        %2407 = vmatprep.subr.mxu0 0.0
        %2408 = vmatpush1.msra.mxu0 0.0
        %2409 = vmatprep.subr.mxu0 0.0
        %2410 = vmatpush1.msra.mxu0 0.0
        %2411 = vmatprep.subr.mxu0 0.0
        %2412 = vmatpush1.msra.mxu0 0.0
        %2413 = vmatprep.subr.mxu0 0.0
        %2414 = vmatpush1.msra.mxu0 0.0
        %2415 = vmatprep.subr.mxu0 0.0
        %2416 = vmatpush1.msra.mxu0 0.0
        %2417 = vmatprep.subr.mxu0 0.0
        %2418 = vmatpush1.msra.mxu0 0.0
        %2419 = vmatprep.subr.mxu0 0.0
        %2420 = vmatpush1.msra.mxu0 0.0
        %2421 = vmatprep.subr.mxu0 0.0
        %2422 = vmatpush1.msra.mxu0 0.0
        %2423 = vmatprep.subr.mxu0 0.0
        %2424 = vmatpush1.msra.mxu0 0.0
        %2425 = vmatprep.subr.mxu0 0.0
        %2426 = vmatpush1.msra.mxu0 0.0
        %2427 = vmatprep.subr.mxu0 0.0
        %2428 = vmatpush1.msra.mxu0 0.0
        %2429 = vmatprep.subr.mxu0 0.0
        %2430 = vmatpush1.msra.mxu0 0.0
        %2431 = vmatprep.subr.mxu0 0.0
        %2432 = vmatpush1.msra.mxu0 0.0
        %2433 = vmatprep.subr.mxu0 0.0
        %2434 = vmatpush1.msra.mxu0 0.0
        %2435 = vmatprep.subr.mxu0 0.0
        %2436 = vmatpush1.msra.mxu0 0.0
        %2437 = vmatprep.subr.mxu0 0.0
        %2438 = vmatpush1.msra.mxu0 0.0
        %2439 = vmatprep.subr.mxu0 0.0
        %2440 = vmatpush1.msra.mxu0 0.0
        %2441 = vmatprep.subr.mxu0 0.0
        %2442 = vmatpush1.msra.mxu0 0.0
        %2443 = vmatprep.subr.mxu0 0.0
        %2444 = vmatpush1.msra.mxu0 0.0
        %2445 = vmatprep.subr.mxu0 0.0
        %2446 = vmatpush1.msra.mxu0 0.0
        %2447 = vmatprep.subr.mxu0 0.0
        %2448 = vmatpush1.msra.mxu0 0.0
        %2449 = vmatprep.mubr.f32.mxu0 0.0
        %2450 = vmatmul.mubr.f32.gmra.mrb[0].mxu0 %v2303
        %v2451 = vpop.f32.mrb[0].mxu0
        %v2452 = vadd.f32 %v2295, %v2451
        %v2453 = vpop.f32.mrb[0].mxu0
        %v2454 = vadd.f32 %v2295, %v2453
        %2455 = vmatprep.mubr.f32.mxu0 0.0
        %2456 = vmatmul.mubr.f32.gmra.mrb[0].mxu0 %v2306
        %v2457 = vpop.f32.mrb[0].mxu0
        %v2458 = vadd.f32 %v2300, %v2457
        %v2459 = vpop.f32.mrb[0].mxu0
        %v2460 = vadd.f32 %v2300, %v2459
        %2461 = vdwg.mxu0
        %v2462 = vtanh.pop %v2375
        %v2463 = vtanh.pop %v2377
        %v2464 = vtanh.pop %v2452
        %v2465 = vtanh.pop %v2454
        %v2466 = vxor.u32 %v2381, 2147483648
        %v2467 = vxor.u32 %v2383, 2147483648
        %v2468 = vxor.u32 %v2458, 2147483648
        %v2469 = vxor.u32 %v2460, 2147483648
        %v2470 = vmul.f32 %v2466, 1.442695
        %v2471 = vpow.pop %v2470
        %v2472 = vmul.f32 %v2467, 1.442695
        %v2473 = vpow.pop %v2472
        %v2474 = vmul.f32 %v2468, 1.442695
        %v2475 = vpow.pop %v2474
        %v2476 = vmul.f32 %v2469, 1.442695
        %v2477 = vpow.pop %v2476
        %v2478 = vadd.f32 %v2471, 1.0
        %v2479 = vadd.f32 %v2473, 1.0
        %v2480 = vadd.f32 %v2475, 1.0
        %v2481 = vadd.f32 %v2477, 1.0
        %v2482 = vrcp.pop %v2478
        %v2483 = vmul.f32 1.0, %v2482
        %v2484 = vrcp.pop %v2479
        %v2485 = vmul.f32 1.0, %v2484
        %v2486 = vrcp.pop %v2480
        %v2487 = vmul.f32 1.0, %v2486
        %v2488 = vrcp.pop %v2481
        %v2489 = vmul.f32 1.0, %v2488
        %v2490 = vmul.f32 %v2462, %v2483
        %v2491 = vmul.f32 %v2463, %v2485
        %v2492 = vmul.f32 %v2464, %v2487
        %v2493 = vmul.f32 %v2465, %v2489
        %s2494 = scalar_lea.vmem %s5, 96
        %v2495 = vld [vmem:[%s2494] sm:$0xff]
        %v2496 = vld [vmem:[%s2494 + $0x8] sm:$0xff]
        %v2497 = vld [vmem:[%s2494 + $0x10] sm:$0xff]
        %v2498 = vld [vmem:[%s2494 + $0x18] sm:$0xff]
        %s2499 = scalar_lea.vmem %s6, 96
        %v2500 = vld [vmem:[%s2499] sm:$0xff]
        %v2501 = vld [vmem:[%s2499 + $0x8] sm:$0xff]
        %v2502 = vld [vmem:[%s2499 + $0x10] sm:$0xff]
        %v2503 = vld [vmem:[%s2499 + $0x18] sm:$0xff]
        %2505 = vset.pattern.permute.xlu0 0
        %2506 = vperm.xlu0 %2505, %v2500
        %v2507 = vpop.permute.xlu0 %2506
        %2510 = vset.pattern.permute.xlu0 0
        %2511 = vperm.xlu0 %2510, %v2501
        %v2512 = vpop.permute.xlu0 %2511
        %2515 = vset.pattern.permute.xlu0 0
        %2516 = vperm.xlu0 %2515, %v2502
        %v2517 = vpop.permute.xlu0 %2516
        %2520 = vset.pattern.permute.xlu0 0
        %2521 = vperm.xlu0 %2520, %v2503
        %v2522 = vpop.permute.xlu0 %2521
        %v2525 = vsel %vm763, %v2495, 0
        %v2528 = vsel %vm763, %v2496, 0
        %v2531 = vsel %vm763, %v2497, 0
        %v2534 = vsel %vm763, %v2498, 0
        %2536 = vmatprep.subr.mxu0 %v2491
        %2537 = vmatpush1.msra.mxu0 %v2490
        %2538 = vmatprep.subr.mxu0 0.0
        %2539 = vmatpush1.msra.mxu0 0.0
        %2540 = vmatprep.subr.mxu0 0.0
        %2541 = vmatpush1.msra.mxu0 0.0
        %2542 = vmatprep.subr.mxu0 0.0
        %2543 = vmatpush1.msra.mxu0 0.0
        %2544 = vmatprep.subr.mxu0 0.0
        %2545 = vmatpush1.msra.mxu0 0.0
        %2546 = vmatprep.subr.mxu0 0.0
        %2547 = vmatpush1.msra.mxu0 0.0
        %2548 = vmatprep.subr.mxu0 0.0
        %2549 = vmatpush1.msra.mxu0 0.0
        %2550 = vmatprep.subr.mxu0 0.0
        %2551 = vmatpush1.msra.mxu0 0.0
        %2552 = vmatprep.subr.mxu0 0.0
        %2553 = vmatpush1.msra.mxu0 0.0
        %2554 = vmatprep.subr.mxu0 0.0
        %2555 = vmatpush1.msra.mxu0 0.0
        %2556 = vmatprep.subr.mxu0 0.0
        %2557 = vmatpush1.msra.mxu0 0.0
        %2558 = vmatprep.subr.mxu0 0.0
        %2559 = vmatpush1.msra.mxu0 0.0
        %2560 = vmatprep.subr.mxu0 0.0
        %2561 = vmatpush1.msra.mxu0 0.0
        %2562 = vmatprep.subr.mxu0 0.0
        %2563 = vmatpush1.msra.mxu0 0.0
        %2564 = vmatprep.subr.mxu0 0.0
        %2565 = vmatpush1.msra.mxu0 0.0
        %2566 = vmatprep.subr.mxu0 0.0
        %2567 = vmatpush1.msra.mxu0 0.0
        %2568 = vmatprep.subr.mxu0 0.0
        %2569 = vmatpush1.msra.mxu0 0.0
        %2570 = vmatprep.subr.mxu0 0.0
        %2571 = vmatpush1.msra.mxu0 0.0
        %2572 = vmatprep.subr.mxu0 0.0
        %2573 = vmatpush1.msra.mxu0 0.0
        %2574 = vmatprep.subr.mxu0 0.0
        %2575 = vmatpush1.msra.mxu0 0.0
        %2576 = vmatprep.subr.mxu0 0.0
        %2577 = vmatpush1.msra.mxu0 0.0
        %2578 = vmatprep.subr.mxu0 0.0
        %2579 = vmatpush1.msra.mxu0 0.0
        %2580 = vmatprep.subr.mxu0 0.0
        %2581 = vmatpush1.msra.mxu0 0.0
        %2582 = vmatprep.subr.mxu0 0.0
        %2583 = vmatpush1.msra.mxu0 0.0
        %2584 = vmatprep.subr.mxu0 0.0
        %2585 = vmatpush1.msra.mxu0 0.0
        %2586 = vmatprep.subr.mxu0 0.0
        %2587 = vmatpush1.msra.mxu0 0.0
        %2588 = vmatprep.subr.mxu0 0.0
        %2589 = vmatpush1.msra.mxu0 0.0
        %2590 = vmatprep.subr.mxu0 0.0
        %2591 = vmatpush1.msra.mxu0 0.0
        %2592 = vmatprep.subr.mxu0 0.0
        %2593 = vmatpush1.msra.mxu0 0.0
        %2594 = vmatprep.subr.mxu0 0.0
        %2595 = vmatpush1.msra.mxu0 0.0
        %2596 = vmatprep.subr.mxu0 0.0
        %2597 = vmatpush1.msra.mxu0 0.0
        %2598 = vmatprep.subr.mxu0 0.0
        %2599 = vmatpush1.msra.mxu0 0.0
        %2600 = vmatprep.mubr.f32.mxu0 0.0
        %2601 = vmatmul.mubr.f32.gmra.mrb[0].mxu0 %v2525
        %v2602 = vpop.f32.mrb[0].mxu0
        %v2603 = vadd.f32 %v2507, %v2602
        %v2604 = vpop.f32.mrb[0].mxu0
        %v2605 = vadd.f32 %v2507, %v2604
        %2606 = vmatprep.mubr.f32.mxu0 0.0
        %2607 = vmatmul.mubr.f32.gmra.mrb[0].mxu0 %v2528
        %v2608 = vpop.f32.mrb[0].mxu0
        %v2609 = vadd.f32 %v2512, %v2608
        %v2610 = vpop.f32.mrb[0].mxu0
        %v2611 = vadd.f32 %v2512, %v2610
        %2612 = vmatprep.mubr.f32.mxu0 0.0
        %2613 = vmatmul.mubr.f32.gmra.mrb[0].mxu0 %v2531
        %v2614 = vpop.f32.mrb[0].mxu0
        %v2615 = vadd.f32 %v2517, %v2614
        %v2616 = vpop.f32.mrb[0].mxu0
        %v2617 = vadd.f32 %v2517, %v2616
        %2618 = vmatprep.mubr.f32.mxu0 0.0
        %2619 = vmatmul.mubr.f32.gmra.mrb[0].mxu0 %v2534
        %v2620 = vpop.f32.mrb[0].mxu0
        %v2621 = vadd.f32 %v2522, %v2620
        %v2622 = vpop.f32.mrb[0].mxu0
        %v2623 = vadd.f32 %v2522, %v2622
        %2624 = vdwg.mxu0
        %2625 = vmatprep.subr.mxu0 %v2493
        %2626 = vmatpush1.msra.mxu0 %v2492
        %2627 = vmatprep.subr.mxu0 0.0
        %2628 = vmatpush1.msra.mxu0 0.0
        %2629 = vmatprep.subr.mxu0 0.0
        %2630 = vmatpush1.msra.mxu0 0.0
        %2631 = vmatprep.subr.mxu0 0.0
        %2632 = vmatpush1.msra.mxu0 0.0
        %2633 = vmatprep.subr.mxu0 0.0
        %2634 = vmatpush1.msra.mxu0 0.0
        %2635 = vmatprep.subr.mxu0 0.0
        %2636 = vmatpush1.msra.mxu0 0.0
        %2637 = vmatprep.subr.mxu0 0.0
        %2638 = vmatpush1.msra.mxu0 0.0
        %2639 = vmatprep.subr.mxu0 0.0
        %2640 = vmatpush1.msra.mxu0 0.0
        %2641 = vmatprep.subr.mxu0 0.0
        %2642 = vmatpush1.msra.mxu0 0.0
        %2643 = vmatprep.subr.mxu0 0.0
        %2644 = vmatpush1.msra.mxu0 0.0
        %2645 = vmatprep.subr.mxu0 0.0
        %2646 = vmatpush1.msra.mxu0 0.0
        %2647 = vmatprep.subr.mxu0 0.0
        %2648 = vmatpush1.msra.mxu0 0.0
        %2649 = vmatprep.subr.mxu0 0.0
        %2650 = vmatpush1.msra.mxu0 0.0
        %2651 = vmatprep.subr.mxu0 0.0
        %2652 = vmatpush1.msra.mxu0 0.0
        %2653 = vmatprep.subr.mxu0 0.0
        %2654 = vmatpush1.msra.mxu0 0.0
        %2655 = vmatprep.subr.mxu0 0.0
        %2656 = vmatpush1.msra.mxu0 0.0
        %2657 = vmatprep.subr.mxu0 0.0
        %2658 = vmatpush1.msra.mxu0 0.0
        %2659 = vmatprep.subr.mxu0 0.0
        %2660 = vmatpush1.msra.mxu0 0.0
        %2661 = vmatprep.subr.mxu0 0.0
        %2662 = vmatpush1.msra.mxu0 0.0
        %2663 = vmatprep.subr.mxu0 0.0
        %2664 = vmatpush1.msra.mxu0 0.0
        %2665 = vmatprep.subr.mxu0 0.0
        %2666 = vmatpush1.msra.mxu0 0.0
        %2667 = vmatprep.subr.mxu0 0.0
        %2668 = vmatpush1.msra.mxu0 0.0
        %2669 = vmatprep.subr.mxu0 0.0
        %2670 = vmatpush1.msra.mxu0 0.0
        %2671 = vmatprep.subr.mxu0 0.0
        %2672 = vmatpush1.msra.mxu0 0.0
        %2673 = vmatprep.subr.mxu0 0.0
        %2674 = vmatpush1.msra.mxu0 0.0
        %2675 = vmatprep.subr.mxu0 0.0
        %2676 = vmatpush1.msra.mxu0 0.0
        %2677 = vmatprep.subr.mxu0 0.0
        %2678 = vmatpush1.msra.mxu0 0.0
        %2679 = vmatprep.subr.mxu0 0.0
        %2680 = vmatpush1.msra.mxu0 0.0
        %2681 = vmatprep.subr.mxu0 0.0
        %2682 = vmatpush1.msra.mxu0 0.0
        %2683 = vmatprep.subr.mxu0 0.0
        %2684 = vmatpush1.msra.mxu0 0.0
        %2685 = vmatprep.subr.mxu0 0.0
        %2686 = vmatpush1.msra.mxu0 0.0
        %2687 = vmatprep.subr.mxu0 0.0
        %2688 = vmatpush1.msra.mxu0 0.0
        %2689 = vmatprep.mubr.f32.mxu0 0.0
        %2690 = vmatmul.mubr.f32.gmra.mrb[0].mxu0 %v2525
        %v2691 = vpop.f32.mrb[0].mxu0
        %v2692 = vadd.f32 %v2507, %v2691
        %v2693 = vpop.f32.mrb[0].mxu0
        %v2694 = vadd.f32 %v2507, %v2693
        %2695 = vmatprep.mubr.f32.mxu0 0.0
        %2696 = vmatmul.mubr.f32.gmra.mrb[0].mxu0 %v2528
        %v2697 = vpop.f32.mrb[0].mxu0
        %v2698 = vadd.f32 %v2512, %v2697
        %v2699 = vpop.f32.mrb[0].mxu0
        %v2700 = vadd.f32 %v2512, %v2699
        %2701 = vmatprep.mubr.f32.mxu0 0.0
        %2702 = vmatmul.mubr.f32.gmra.mrb[0].mxu0 %v2531
        %v2703 = vpop.f32.mrb[0].mxu0
        %v2704 = vadd.f32 %v2517, %v2703
        %v2705 = vpop.f32.mrb[0].mxu0
        %v2706 = vadd.f32 %v2517, %v2705
        %2707 = vmatprep.mubr.f32.mxu0 0.0
        %2708 = vmatmul.mubr.f32.gmra.mrb[0].mxu0 %v2534
        %v2709 = vpop.f32.mrb[0].mxu0
        %v2710 = vadd.f32 %v2522, %v2709
        %v2711 = vpop.f32.mrb[0].mxu0
        %v2712 = vadd.f32 %v2522, %v2711
        %2713 = vdwg.mxu0
        %v2714 = vadd.f32 %v2130, %v2603
        %v2715 = vadd.f32 %v2131, %v2605
        %v2716 = vadd.f32 %v2132, %v2692
        %v2717 = vadd.f32 %v2133, %v2694
        %v2718 = vadd.f32 %v2134, %v2609
        %v2719 = vadd.f32 %v2135, %v2611
        %v2720 = vadd.f32 %v2136, %v2698
        %v2721 = vadd.f32 %v2137, %v2700
        %v2722 = vadd.f32 %v2615, %v2146
        %v2723 = vadd.f32 %v2617, %v2147
        %v2724 = vadd.f32 %v2704, %v2148
        %v2725 = vadd.f32 %v2706, %v2149
        %v2726 = vadd.f32 %v2621, %v2150
        %v2727 = vadd.f32 %v2623, %v2151
        %v2728 = vadd.f32 %v2710, %v2152
        %v2729 = vadd.f32 %v2712, %v2153
        %v2730 = vmul.f32 %v2722, 0.70710677
        %v2731 = vmul.f32 %v2723, 0.70710677
        %v2732 = vmul.f32 %v2724, 0.70710677
        %v2733 = vmul.f32 %v2725, 0.70710677
        %v2734 = vmul.f32 %v2726, 0.70710677
        %v2735 = vmul.f32 %v2727, 0.70710677
        %v2736 = vmul.f32 %v2728, 0.70710677
        %v2737 = vmul.f32 %v2729, 0.70710677
        %2746 = vrot.lane.b32.xlu0 %v2730, 2
        %v2747 = vpop.permute.xlu0 %2746
        %2748 = vrot.lane.b32.xlu0 %v2731, 2
        %v2749 = vpop.permute.xlu0 %2748
        %2750 = vrot.lane.b32.xlu0 %v2732, 2
        %v2751 = vpop.permute.xlu0 %2750
        %2752 = vrot.lane.b32.xlu0 %v2733, 2
        %v2753 = vpop.permute.xlu0 %2752
        %2754 = vrot.lane.b32.xlu0 %v2734, 2
        %v2755 = vpop.permute.xlu0 %2754
        %2756 = vrot.lane.b32.xlu0 %v2735, 2
        %v2757 = vpop.permute.xlu0 %2756
        %2758 = vrot.lane.b32.xlu0 %v2736, 2
        %v2759 = vpop.permute.xlu0 %2758
        %2760 = vrot.lane.b32.xlu0 %v2737, 2
        %v2761 = vpop.permute.xlu0 %2760
        %v2762 = vsel %vm1002, %v2747, %v2749
        %v2763 = vsel %vm1002, %v2749, %v2751
        %v2764 = vsel %vm1002, %v2751, %v2753
        %v2765 = vsel %vm1002, %v2755, %v2757
        %v2766 = vsel %vm1002, %v2757, %v2759
        %v2767 = vsel %vm1002, %v2759, %v2761
        %2778 = vst.msk [vmem:[#allocation2 + $0x8] sm:$0xff] %vm1019, %v2747
        %2779 = vst [vmem:[#allocation2 + $0x10] sm:$0xff] %v2762
        %2780 = vst [vmem:[#allocation2 + $0x18] sm:$0xff] %v2763
        %2781 = vst [vmem:[#allocation2 + $0x20] sm:$0xff] %v2764
        %2782 = vst.msk [vmem:[#allocation2 + $0x28] sm:$0xff] %vm1002, %v2753
        %2783 = vst.msk [vmem:[#allocation2 + $0x38] sm:$0xff] %vm1019, %v2755
        %2784 = vst [vmem:[#allocation2 + $0x40] sm:$0xff] %v2765
        %2785 = vst [vmem:[#allocation2 + $0x48] sm:$0xff] %v2766
        %2786 = vst [vmem:[#allocation2 + $0x50] sm:$0xff] %v2767
        %2787 = vst.msk [vmem:[#allocation2 + $0x58] sm:$0xff] %vm1002, %v2761
        %2788 = vst.msk [vmem:[#allocation2 + $0x8] sm:$0xff] %vm1002, 0.0
        %2789 = vst.msk [vmem:[#allocation2 + $0x38] sm:$0xff] %vm1002, 0.0
        %2790 = vst.msk [vmem:[#allocation2 + $0x18] sm:$0xff] %vm1002, 0.0
        %2791 = vst.msk [vmem:[#allocation2 + $0x48] sm:$0xff] %vm1002, 0.0
        %2792 = vst [vmem:[#allocation2 + $0x68] sm:$0xff] %v2730
        %2793 = vst [vmem:[#allocation2 + $0x70] sm:$0xff] %v2731
        %2794 = vst [vmem:[#allocation2 + $0x78] sm:$0xff] %v2732
        %2795 = vst [vmem:[#allocation2 + $0x80] sm:$0xff] %v2733
        %2796 = vst [vmem:[#allocation2 + $0x98] sm:$0xff] %v2734
        %2797 = vst [vmem:[#allocation2 + $0xa0] sm:$0xff] %v2735
        %2798 = vst [vmem:[#allocation2 + $0xa8] sm:$0xff] %v2736
        %2799 = vst [vmem:[#allocation2 + $0xb0] sm:$0xff] %v2737
        %2800 = vrot.lane.b32.xlu0 %v2730, 126
        %v2801 = vpop.permute.xlu0 %2800
        %2802 = vrot.lane.b32.xlu0 %v2731, 126
        %v2803 = vpop.permute.xlu0 %2802
        %2804 = vrot.lane.b32.xlu0 %v2732, 126
        %v2805 = vpop.permute.xlu0 %2804
        %2806 = vrot.lane.b32.xlu0 %v2733, 126
        %v2807 = vpop.permute.xlu0 %2806
        %2808 = vrot.lane.b32.xlu0 %v2734, 126
        %v2809 = vpop.permute.xlu0 %2808
        %2810 = vrot.lane.b32.xlu0 %v2735, 126
        %v2811 = vpop.permute.xlu0 %2810
        %2812 = vrot.lane.b32.xlu0 %v2736, 126
        %v2813 = vpop.permute.xlu0 %2812
        %2814 = vrot.lane.b32.xlu0 %v2737, 126
        %v2815 = vpop.permute.xlu0 %2814
        %v2816 = vsel %vm1058, %v2801, %v2803
        %v2817 = vsel %vm1058, %v2803, %v2805
        %v2818 = vsel %vm1058, %v2805, %v2807
        %v2819 = vsel %vm1058, %v2809, %v2811
        %v2820 = vsel %vm1058, %v2811, %v2813
        %v2821 = vsel %vm1058, %v2813, %v2815
        %2832 = vst.msk [vmem:[#allocation2 + $0xc0] sm:$0xff] %vm1075, %v2801
        %2833 = vst [vmem:[#allocation2 + $0xc8] sm:$0xff] %v2816
        %2834 = vst [vmem:[#allocation2 + $0xd0] sm:$0xff] %v2817
        %2835 = vst [vmem:[#allocation2 + $0xd8] sm:$0xff] %v2818
        %2836 = vst.msk [vmem:[#allocation2 + $0xe0] sm:$0xff] %vm1058, %v2807
        %2837 = vst.msk [vmem:[#allocation2 + $0xf0] sm:$0xff] %vm1075, %v2809
        %2838 = vst [vmem:[#allocation2 + $0xf8] sm:$0xff] %v2819
        %2839 = vst [vmem:[#allocation2 + $0x100] sm:$0xff] %v2820
        %2840 = vst [vmem:[#allocation2 + $0x108] sm:$0xff] %v2821
        %2841 = vst.msk [vmem:[#allocation2 + $0x110] sm:$0xff] %vm1058, %v2815
        %2842 = vst.msk [vmem:[#allocation2 + $0xd0] sm:$0xff] %vm1075, 0.0
        %2843 = vst.msk [vmem:[#allocation2 + $0x100] sm:$0xff] %vm1075, 0.0
        %2844 = vst.msk [vmem:[#allocation2 + $0xe0] sm:$0xff] %vm1075, 0.0
        %2845 = vst.msk [vmem:[#allocation2 + $0x110] sm:$0xff] %vm1075, 0.0
        %v2846 = vld [vmem:[#allocation2 + $0x8] sm:$0xff]
        %v2847 = vld [vmem:[#allocation2 + $0x10] sm:$0xff]
        %v2848 = vld [vmem:[#allocation2 + $0x18] sm:$0xff]
        %v2849 = vld [vmem:[#allocation2 + $0x20] sm:$0xff]
        %v2850 = vld [vmem:[#allocation2 + $0x38] sm:$0xff]
        %v2851 = vld [vmem:[#allocation2 + $0x40] sm:$0xff]
        %v2852 = vld [vmem:[#allocation2 + $0x48] sm:$0xff]
        %v2853 = vld [vmem:[#allocation2 + $0x50] sm:$0xff]
        %v2854 = vld [vmem:[#allocation2 + $0x68] sm:$0xff]
        %v2855 = vld [vmem:[#allocation2 + $0x70] sm:$0xff]
        %v2856 = vld [vmem:[#allocation2 + $0x78] sm:$0xff]
        %v2857 = vld [vmem:[#allocation2 + $0x80] sm:$0xff]
        %v2858 = vld [vmem:[#allocation2 + $0x98] sm:$0xff]
        %v2859 = vld [vmem:[#allocation2 + $0xa0] sm:$0xff]
        %v2860 = vld [vmem:[#allocation2 + $0xa8] sm:$0xff]
        %v2861 = vld [vmem:[#allocation2 + $0xb0] sm:$0xff]
        %v2862 = vld [vmem:[#allocation2 + $0xc8] sm:$0xff]
        %v2863 = vld [vmem:[#allocation2 + $0xd0] sm:$0xff]
        %v2864 = vld [vmem:[#allocation2 + $0xd8] sm:$0xff]
        %v2865 = vld [vmem:[#allocation2 + $0xe0] sm:$0xff]
        %v2866 = vld [vmem:[#allocation2 + $0xf8] sm:$0xff]
        %v2867 = vld [vmem:[#allocation2 + $0x100] sm:$0xff]
        %v2868 = vld [vmem:[#allocation2 + $0x108] sm:$0xff]
        %v2869 = vld [vmem:[#allocation2 + $0x110] sm:$0xff]
        %s2870 = scalar_lea.vmem %s3, 64
        %v2871 = vld [vmem:[%s2870] sm:$0xff]
        %v2872 = vld [vmem:[%s2870 + $0x8] sm:$0xff]
        %s2873 = scalar_lea.vmem %s4, 64
        %v2874 = vld [vmem:[%s2873] sm:$0xff]
        %v2875 = vld [vmem:[%s2873 + $0x8] sm:$0xff]
        %2877 = vset.pattern.permute.xlu0 0
        %2878 = vperm.xlu0 %2877, %v2874
        %v2879 = vpop.permute.xlu0 %2878
        %2882 = vset.pattern.permute.xlu0 0
        %2883 = vperm.xlu0 %2882, %v2875
        %v2884 = vpop.permute.xlu0 %2883
        %v2887 = vsel %vm542, %v2871, 0
        %v2890 = vsel %vm542, %v2872, 0
        %2892 = vmatprep.subr.mxu0 %v2847
        %2893 = vmatpush1.msra.mxu0 %v2846
        %2894 = vmatprep.subr.mxu0 %v2851
        %2895 = vmatpush1.msra.mxu0 %v2850
        %2896 = vmatprep.subr.mxu0 %v2855
        %2897 = vmatpush1.msra.mxu0 %v2854
        %2898 = vmatprep.subr.mxu0 %v2859
        %2899 = vmatpush1.msra.mxu0 %v2858
        %2900 = vmatprep.subr.mxu0 %v2863
        %2901 = vmatpush1.msra.mxu0 %v2862
        %2902 = vmatprep.subr.mxu0 %v2867
        %2903 = vmatpush1.msra.mxu0 %v2866
        %2904 = vmatprep.subr.mxu0 0.0
        %2905 = vmatpush1.msra.mxu0 0.0
        %2906 = vmatprep.subr.mxu0 0.0
        %2907 = vmatpush1.msra.mxu0 0.0
        %2908 = vmatprep.subr.mxu0 0.0
        %2909 = vmatpush1.msra.mxu0 0.0
        %2910 = vmatprep.subr.mxu0 0.0
        %2911 = vmatpush1.msra.mxu0 0.0
        %2912 = vmatprep.subr.mxu0 0.0
        %2913 = vmatpush1.msra.mxu0 0.0
        %2914 = vmatprep.subr.mxu0 0.0
        %2915 = vmatpush1.msra.mxu0 0.0
        %2916 = vmatprep.subr.mxu0 0.0
        %2917 = vmatpush1.msra.mxu0 0.0
        %2918 = vmatprep.subr.mxu0 0.0
        %2919 = vmatpush1.msra.mxu0 0.0
        %2920 = vmatprep.subr.mxu0 0.0
        %2921 = vmatpush1.msra.mxu0 0.0
        %2922 = vmatprep.subr.mxu0 0.0
        %2923 = vmatpush1.msra.mxu0 0.0
        %2924 = vmatprep.subr.mxu0 0.0
        %2925 = vmatpush1.msra.mxu0 0.0
        %2926 = vmatprep.subr.mxu0 0.0
        %2927 = vmatpush1.msra.mxu0 0.0
        %2928 = vmatprep.subr.mxu0 0.0
        %2929 = vmatpush1.msra.mxu0 0.0
        %2930 = vmatprep.subr.mxu0 0.0
        %2931 = vmatpush1.msra.mxu0 0.0
        %2932 = vmatprep.subr.mxu0 0.0
        %2933 = vmatpush1.msra.mxu0 0.0
        %2934 = vmatprep.subr.mxu0 0.0
        %2935 = vmatpush1.msra.mxu0 0.0
        %2936 = vmatprep.subr.mxu0 0.0
        %2937 = vmatpush1.msra.mxu0 0.0
        %2938 = vmatprep.subr.mxu0 0.0
        %2939 = vmatpush1.msra.mxu0 0.0
        %2940 = vmatprep.subr.mxu0 0.0
        %2941 = vmatpush1.msra.mxu0 0.0
        %2942 = vmatprep.subr.mxu0 0.0
        %2943 = vmatpush1.msra.mxu0 0.0
        %2944 = vmatprep.subr.mxu0 0.0
        %2945 = vmatpush1.msra.mxu0 0.0
        %2946 = vmatprep.subr.mxu0 0.0
        %2947 = vmatpush1.msra.mxu0 0.0
        %2948 = vmatprep.subr.mxu0 0.0
        %2949 = vmatpush1.msra.mxu0 0.0
        %2950 = vmatprep.subr.mxu0 0.0
        %2951 = vmatpush1.msra.mxu0 0.0
        %2952 = vmatprep.subr.mxu0 0.0
        %2953 = vmatpush1.msra.mxu0 0.0
        %2954 = vmatprep.subr.mxu0 0.0
        %2955 = vmatpush1.msra.mxu0 0.0
        %2956 = vmatprep.mubr.f32.mxu0 0.0
        %2957 = vmatmul.mubr.f32.gmra.mrb[0].mxu0 %v2887
        %v2958 = vpop.f32.mrb[0].mxu0
        %v2959 = vadd.f32 %v2879, %v2958
        %v2960 = vpop.f32.mrb[0].mxu0
        %v2961 = vadd.f32 %v2879, %v2960
        %2962 = vmatprep.mubr.f32.mxu0 0.0
        %2963 = vmatmul.mubr.f32.gmra.mrb[0].mxu0 %v2890
        %v2964 = vpop.f32.mrb[0].mxu0
        %v2965 = vadd.f32 %v2884, %v2964
        %v2966 = vpop.f32.mrb[0].mxu0
        %v2967 = vadd.f32 %v2884, %v2966
        %2968 = vdwg.mxu0
        %2969 = vmatprep.subr.mxu0 %v2849
        %2970 = vmatpush1.msra.mxu0 %v2848
        %2971 = vmatprep.subr.mxu0 %v2853
        %2972 = vmatpush1.msra.mxu0 %v2852
        %2973 = vmatprep.subr.mxu0 %v2857
        %2974 = vmatpush1.msra.mxu0 %v2856
        %2975 = vmatprep.subr.mxu0 %v2861
        %2976 = vmatpush1.msra.mxu0 %v2860
        %2977 = vmatprep.subr.mxu0 %v2865
        %2978 = vmatpush1.msra.mxu0 %v2864
        %2979 = vmatprep.subr.mxu0 %v2869
        %2980 = vmatpush1.msra.mxu0 %v2868
        %2981 = vmatprep.subr.mxu0 0.0
        %2982 = vmatpush1.msra.mxu0 0.0
        %2983 = vmatprep.subr.mxu0 0.0
        %2984 = vmatpush1.msra.mxu0 0.0
        %2985 = vmatprep.subr.mxu0 0.0
        %2986 = vmatpush1.msra.mxu0 0.0
        %2987 = vmatprep.subr.mxu0 0.0
        %2988 = vmatpush1.msra.mxu0 0.0
        %2989 = vmatprep.subr.mxu0 0.0
        %2990 = vmatpush1.msra.mxu0 0.0
        %2991 = vmatprep.subr.mxu0 0.0
        %2992 = vmatpush1.msra.mxu0 0.0
        %2993 = vmatprep.subr.mxu0 0.0
        %2994 = vmatpush1.msra.mxu0 0.0
        %2995 = vmatprep.subr.mxu0 0.0
        %2996 = vmatpush1.msra.mxu0 0.0
        %2997 = vmatprep.subr.mxu0 0.0
        %2998 = vmatpush1.msra.mxu0 0.0
        %2999 = vmatprep.subr.mxu0 0.0
        %3000 = vmatpush1.msra.mxu0 0.0
        %3001 = vmatprep.subr.mxu0 0.0
        %3002 = vmatpush1.msra.mxu0 0.0
        %3003 = vmatprep.subr.mxu0 0.0
        %3004 = vmatpush1.msra.mxu0 0.0
        %3005 = vmatprep.subr.mxu0 0.0
        %3006 = vmatpush1.msra.mxu0 0.0
        %3007 = vmatprep.subr.mxu0 0.0
        %3008 = vmatpush1.msra.mxu0 0.0
        %3009 = vmatprep.subr.mxu0 0.0
        %3010 = vmatpush1.msra.mxu0 0.0
        %3011 = vmatprep.subr.mxu0 0.0
        %3012 = vmatpush1.msra.mxu0 0.0
        %3013 = vmatprep.subr.mxu0 0.0
        %3014 = vmatpush1.msra.mxu0 0.0
        %3015 = vmatprep.subr.mxu0 0.0
        %3016 = vmatpush1.msra.mxu0 0.0
        %3017 = vmatprep.subr.mxu0 0.0
        %3018 = vmatpush1.msra.mxu0 0.0
        %3019 = vmatprep.subr.mxu0 0.0
        %3020 = vmatpush1.msra.mxu0 0.0
        %3021 = vmatprep.subr.mxu0 0.0
        %3022 = vmatpush1.msra.mxu0 0.0
        %3023 = vmatprep.subr.mxu0 0.0
        %3024 = vmatpush1.msra.mxu0 0.0
        %3025 = vmatprep.subr.mxu0 0.0
        %3026 = vmatpush1.msra.mxu0 0.0
        %3027 = vmatprep.subr.mxu0 0.0
        %3028 = vmatpush1.msra.mxu0 0.0
        %3029 = vmatprep.subr.mxu0 0.0
        %3030 = vmatpush1.msra.mxu0 0.0
        %3031 = vmatprep.subr.mxu0 0.0
        %3032 = vmatpush1.msra.mxu0 0.0
        %3033 = vmatprep.mubr.f32.mxu0 0.0
        %3034 = vmatmul.mubr.f32.gmra.mrb[0].mxu0 %v2887
        %v3035 = vpop.f32.mrb[0].mxu0
        %v3036 = vadd.f32 %v2879, %v3035
        %v3037 = vpop.f32.mrb[0].mxu0
        %v3038 = vadd.f32 %v2879, %v3037
        %3039 = vmatprep.mubr.f32.mxu0 0.0
        %3040 = vmatmul.mubr.f32.gmra.mrb[0].mxu0 %v2890
        %v3041 = vpop.f32.mrb[0].mxu0
        %v3042 = vadd.f32 %v2884, %v3041
        %v3043 = vpop.f32.mrb[0].mxu0
        %v3044 = vadd.f32 %v2884, %v3043
        %3045 = vdwg.mxu0
        %v3046 = vtanh.pop %v2959
        %v3047 = vtanh.pop %v2961
        %v3048 = vtanh.pop %v3036
        %v3049 = vtanh.pop %v3038
        %v3050 = vxor.u32 %v2965, 2147483648
        %v3051 = vxor.u32 %v2967, 2147483648
        %v3052 = vxor.u32 %v3042, 2147483648
        %v3053 = vxor.u32 %v3044, 2147483648
        %v3054 = vmul.f32 %v3050, 1.442695
        %v3055 = vpow.pop %v3054
        %v3056 = vmul.f32 %v3051, 1.442695
        %v3057 = vpow.pop %v3056
        %v3058 = vmul.f32 %v3052, 1.442695
        %v3059 = vpow.pop %v3058
        %v3060 = vmul.f32 %v3053, 1.442695
        %v3061 = vpow.pop %v3060
        %v3062 = vadd.f32 %v3055, 1.0
        %v3063 = vadd.f32 %v3057, 1.0
        %v3064 = vadd.f32 %v3059, 1.0
        %v3065 = vadd.f32 %v3061, 1.0
        %v3066 = vrcp.pop %v3062
        %v3067 = vmul.f32 1.0, %v3066
        %v3068 = vrcp.pop %v3063
        %v3069 = vmul.f32 1.0, %v3068
        %v3070 = vrcp.pop %v3064
        %v3071 = vmul.f32 1.0, %v3070
        %v3072 = vrcp.pop %v3065
        %v3073 = vmul.f32 1.0, %v3072
        %v3074 = vmul.f32 %v3046, %v3067
        %v3075 = vmul.f32 %v3047, %v3069
        %v3076 = vmul.f32 %v3048, %v3071
        %v3077 = vmul.f32 %v3049, %v3073
        %s3078 = scalar_lea.vmem %s5, 128
        %v3079 = vld [vmem:[%s3078] sm:$0xff]
        %v3080 = vld [vmem:[%s3078 + $0x8] sm:$0xff]
        %v3081 = vld [vmem:[%s3078 + $0x10] sm:$0xff]
        %v3082 = vld [vmem:[%s3078 + $0x18] sm:$0xff]
        %s3083 = scalar_lea.vmem %s6, 128
        %v3084 = vld [vmem:[%s3083] sm:$0xff]
        %v3085 = vld [vmem:[%s3083 + $0x8] sm:$0xff]
        %v3086 = vld [vmem:[%s3083 + $0x10] sm:$0xff]
        %v3087 = vld [vmem:[%s3083 + $0x18] sm:$0xff]
        %3089 = vset.pattern.permute.xlu0 0
        %3090 = vperm.xlu0 %3089, %v3084
        %v3091 = vpop.permute.xlu0 %3090
        %3094 = vset.pattern.permute.xlu0 0
        %3095 = vperm.xlu0 %3094, %v3085
        %v3096 = vpop.permute.xlu0 %3095
        %3099 = vset.pattern.permute.xlu0 0
        %3100 = vperm.xlu0 %3099, %v3086
        %v3101 = vpop.permute.xlu0 %3100
        %3104 = vset.pattern.permute.xlu0 0
        %3105 = vperm.xlu0 %3104, %v3087
        %v3106 = vpop.permute.xlu0 %3105
        %v3109 = vsel %vm763, %v3079, 0
        %v3112 = vsel %vm763, %v3080, 0
        %v3115 = vsel %vm763, %v3081, 0
        %v3118 = vsel %vm763, %v3082, 0
        %3120 = vmatprep.subr.mxu0 %v3075
        %3121 = vmatpush1.msra.mxu0 %v3074
        %3122 = vmatprep.subr.mxu0 0.0
        %3123 = vmatpush1.msra.mxu0 0.0
        %3124 = vmatprep.subr.mxu0 0.0
        %3125 = vmatpush1.msra.mxu0 0.0
        %3126 = vmatprep.subr.mxu0 0.0
        %3127 = vmatpush1.msra.mxu0 0.0
        %3128 = vmatprep.subr.mxu0 0.0
        %3129 = vmatpush1.msra.mxu0 0.0
        %3130 = vmatprep.subr.mxu0 0.0
        %3131 = vmatpush1.msra.mxu0 0.0
        %3132 = vmatprep.subr.mxu0 0.0
        %3133 = vmatpush1.msra.mxu0 0.0
        %3134 = vmatprep.subr.mxu0 0.0
        %3135 = vmatpush1.msra.mxu0 0.0
        %3136 = vmatprep.subr.mxu0 0.0
        %3137 = vmatpush1.msra.mxu0 0.0
        %3138 = vmatprep.subr.mxu0 0.0
        %3139 = vmatpush1.msra.mxu0 0.0
        %3140 = vmatprep.subr.mxu0 0.0
        %3141 = vmatpush1.msra.mxu0 0.0
        %3142 = vmatprep.subr.mxu0 0.0
        %3143 = vmatpush1.msra.mxu0 0.0
        %3144 = vmatprep.subr.mxu0 0.0
        %3145 = vmatpush1.msra.mxu0 0.0
        %3146 = vmatprep.subr.mxu0 0.0
        %3147 = vmatpush1.msra.mxu0 0.0
        %3148 = vmatprep.subr.mxu0 0.0
        %3149 = vmatpush1.msra.mxu0 0.0
        %3150 = vmatprep.subr.mxu0 0.0
        %3151 = vmatpush1.msra.mxu0 0.0
        %3152 = vmatprep.subr.mxu0 0.0
        %3153 = vmatpush1.msra.mxu0 0.0
        %3154 = vmatprep.subr.mxu0 0.0
        %3155 = vmatpush1.msra.mxu0 0.0
        %3156 = vmatprep.subr.mxu0 0.0
        %3157 = vmatpush1.msra.mxu0 0.0
        %3158 = vmatprep.subr.mxu0 0.0
        %3159 = vmatpush1.msra.mxu0 0.0
        %3160 = vmatprep.subr.mxu0 0.0
        %3161 = vmatpush1.msra.mxu0 0.0
        %3162 = vmatprep.subr.mxu0 0.0
        %3163 = vmatpush1.msra.mxu0 0.0
        %3164 = vmatprep.subr.mxu0 0.0
        %3165 = vmatpush1.msra.mxu0 0.0
        %3166 = vmatprep.subr.mxu0 0.0
        %3167 = vmatpush1.msra.mxu0 0.0
        %3168 = vmatprep.subr.mxu0 0.0
        %3169 = vmatpush1.msra.mxu0 0.0
        %3170 = vmatprep.subr.mxu0 0.0
        %3171 = vmatpush1.msra.mxu0 0.0
        %3172 = vmatprep.subr.mxu0 0.0
        %3173 = vmatpush1.msra.mxu0 0.0
        %3174 = vmatprep.subr.mxu0 0.0
        %3175 = vmatpush1.msra.mxu0 0.0
        %3176 = vmatprep.subr.mxu0 0.0
        %3177 = vmatpush1.msra.mxu0 0.0
        %3178 = vmatprep.subr.mxu0 0.0
        %3179 = vmatpush1.msra.mxu0 0.0
        %3180 = vmatprep.subr.mxu0 0.0
        %3181 = vmatpush1.msra.mxu0 0.0
        %3182 = vmatprep.subr.mxu0 0.0
        %3183 = vmatpush1.msra.mxu0 0.0
        %3184 = vmatprep.mubr.f32.mxu0 0.0
        %3185 = vmatmul.mubr.f32.gmra.mrb[0].mxu0 %v3109
        %v3186 = vpop.f32.mrb[0].mxu0
        %v3187 = vadd.f32 %v3091, %v3186
        %v3188 = vpop.f32.mrb[0].mxu0
        %v3189 = vadd.f32 %v3091, %v3188
        %3190 = vmatprep.mubr.f32.mxu0 0.0
        %3191 = vmatmul.mubr.f32.gmra.mrb[0].mxu0 %v3112
        %v3192 = vpop.f32.mrb[0].mxu0
        %v3193 = vadd.f32 %v3096, %v3192
        %v3194 = vpop.f32.mrb[0].mxu0
        %v3195 = vadd.f32 %v3096, %v3194
        %3196 = vmatprep.mubr.f32.mxu0 0.0
        %3197 = vmatmul.mubr.f32.gmra.mrb[0].mxu0 %v3115
        %v3198 = vpop.f32.mrb[0].mxu0
        %v3199 = vadd.f32 %v3101, %v3198
        %v3200 = vpop.f32.mrb[0].mxu0
        %v3201 = vadd.f32 %v3101, %v3200
        %3202 = vmatprep.mubr.f32.mxu0 0.0
        %3203 = vmatmul.mubr.f32.gmra.mrb[0].mxu0 %v3118
        %v3204 = vpop.f32.mrb[0].mxu0
        %v3205 = vadd.f32 %v3106, %v3204
        %v3206 = vpop.f32.mrb[0].mxu0
        %v3207 = vadd.f32 %v3106, %v3206
        %3208 = vdwg.mxu0
        %3209 = vmatprep.subr.mxu0 %v3077
        %3210 = vmatpush1.msra.mxu0 %v3076
        %3211 = vmatprep.subr.mxu0 0.0
        %3212 = vmatpush1.msra.mxu0 0.0
        %3213 = vmatprep.subr.mxu0 0.0
        %3214 = vmatpush1.msra.mxu0 0.0
        %3215 = vmatprep.subr.mxu0 0.0
        %3216 = vmatpush1.msra.mxu0 0.0
        %3217 = vmatprep.subr.mxu0 0.0
        %3218 = vmatpush1.msra.mxu0 0.0
        %3219 = vmatprep.subr.mxu0 0.0
        %3220 = vmatpush1.msra.mxu0 0.0
        %3221 = vmatprep.subr.mxu0 0.0
        %3222 = vmatpush1.msra.mxu0 0.0
        %3223 = vmatprep.subr.mxu0 0.0
        %3224 = vmatpush1.msra.mxu0 0.0
        %3225 = vmatprep.subr.mxu0 0.0
        %3226 = vmatpush1.msra.mxu0 0.0
        %3227 = vmatprep.subr.mxu0 0.0
        %3228 = vmatpush1.msra.mxu0 0.0
        %3229 = vmatprep.subr.mxu0 0.0
        %3230 = vmatpush1.msra.mxu0 0.0
        %3231 = vmatprep.subr.mxu0 0.0
        %3232 = vmatpush1.msra.mxu0 0.0
        %3233 = vmatprep.subr.mxu0 0.0
        %3234 = vmatpush1.msra.mxu0 0.0
        %3235 = vmatprep.subr.mxu0 0.0
        %3236 = vmatpush1.msra.mxu0 0.0
        %3237 = vmatprep.subr.mxu0 0.0
        %3238 = vmatpush1.msra.mxu0 0.0
        %3239 = vmatprep.subr.mxu0 0.0
        %3240 = vmatpush1.msra.mxu0 0.0
        %3241 = vmatprep.subr.mxu0 0.0
        %3242 = vmatpush1.msra.mxu0 0.0
        %3243 = vmatprep.subr.mxu0 0.0
        %3244 = vmatpush1.msra.mxu0 0.0
        %3245 = vmatprep.subr.mxu0 0.0
        %3246 = vmatpush1.msra.mxu0 0.0
        %3247 = vmatprep.subr.mxu0 0.0
        %3248 = vmatpush1.msra.mxu0 0.0
        %3249 = vmatprep.subr.mxu0 0.0
        %3250 = vmatpush1.msra.mxu0 0.0
        %3251 = vmatprep.subr.mxu0 0.0
        %3252 = vmatpush1.msra.mxu0 0.0
        %3253 = vmatprep.subr.mxu0 0.0
        %3254 = vmatpush1.msra.mxu0 0.0
        %3255 = vmatprep.subr.mxu0 0.0
        %3256 = vmatpush1.msra.mxu0 0.0
        %3257 = vmatprep.subr.mxu0 0.0
        %3258 = vmatpush1.msra.mxu0 0.0
        %3259 = vmatprep.subr.mxu0 0.0
        %3260 = vmatpush1.msra.mxu0 0.0
        %3261 = vmatprep.subr.mxu0 0.0
        %3262 = vmatpush1.msra.mxu0 0.0
        %3263 = vmatprep.subr.mxu0 0.0
        %3264 = vmatpush1.msra.mxu0 0.0
        %3265 = vmatprep.subr.mxu0 0.0
        %3266 = vmatpush1.msra.mxu0 0.0
        %3267 = vmatprep.subr.mxu0 0.0
        %3268 = vmatpush1.msra.mxu0 0.0
        %3269 = vmatprep.subr.mxu0 0.0
        %3270 = vmatpush1.msra.mxu0 0.0
        %3271 = vmatprep.subr.mxu0 0.0
        %3272 = vmatpush1.msra.mxu0 0.0
        %3273 = vmatprep.mubr.f32.mxu0 0.0
        %3274 = vmatmul.mubr.f32.gmra.mrb[0].mxu0 %v3109
        %v3275 = vpop.f32.mrb[0].mxu0
        %v3276 = vadd.f32 %v3091, %v3275
        %v3277 = vpop.f32.mrb[0].mxu0
        %v3278 = vadd.f32 %v3091, %v3277
        %3279 = vmatprep.mubr.f32.mxu0 0.0
        %3280 = vmatmul.mubr.f32.gmra.mrb[0].mxu0 %v3112
        %v3281 = vpop.f32.mrb[0].mxu0
        %v3282 = vadd.f32 %v3096, %v3281
        %v3283 = vpop.f32.mrb[0].mxu0
        %v3284 = vadd.f32 %v3096, %v3283
        %3285 = vmatprep.mubr.f32.mxu0 0.0
        %3286 = vmatmul.mubr.f32.gmra.mrb[0].mxu0 %v3115
        %v3287 = vpop.f32.mrb[0].mxu0
        %v3288 = vadd.f32 %v3101, %v3287
        %v3289 = vpop.f32.mrb[0].mxu0
        %v3290 = vadd.f32 %v3101, %v3289
        %3291 = vmatprep.mubr.f32.mxu0 0.0
        %3292 = vmatmul.mubr.f32.gmra.mrb[0].mxu0 %v3118
        %v3293 = vpop.f32.mrb[0].mxu0
        %v3294 = vadd.f32 %v3106, %v3293
        %v3295 = vpop.f32.mrb[0].mxu0
        %v3296 = vadd.f32 %v3106, %v3295
        %3297 = vdwg.mxu0
        %v3298 = vadd.f32 %v2714, %v3187
        %v3299 = vadd.f32 %v2715, %v3189
        %v3300 = vadd.f32 %v2716, %v3276
        %v3301 = vadd.f32 %v2717, %v3278
        %v3302 = vadd.f32 %v2718, %v3193
        %v3303 = vadd.f32 %v2719, %v3195
        %v3304 = vadd.f32 %v2720, %v3282
        %v3305 = vadd.f32 %v2721, %v3284
        %v3306 = vadd.f32 %v3199, %v2730
        %v3307 = vadd.f32 %v3201, %v2731
        %v3308 = vadd.f32 %v3288, %v2732
        %v3309 = vadd.f32 %v3290, %v2733
        %v3310 = vadd.f32 %v3205, %v2734
        %v3311 = vadd.f32 %v3207, %v2735
        %v3312 = vadd.f32 %v3294, %v2736
        %v3313 = vadd.f32 %v3296, %v2737
        %v3314 = vmul.f32 %v3306, 0.70710677
        %v3315 = vmul.f32 %v3307, 0.70710677
        %v3316 = vmul.f32 %v3308, 0.70710677
        %v3317 = vmul.f32 %v3309, 0.70710677
        %v3318 = vmul.f32 %v3310, 0.70710677
        %v3319 = vmul.f32 %v3311, 0.70710677
        %v3320 = vmul.f32 %v3312, 0.70710677
        %v3321 = vmul.f32 %v3313, 0.70710677
        %3330 = vrot.lane.b32.xlu0 %v3314, 4
        %v3331 = vpop.permute.xlu0 %3330
        %3332 = vrot.lane.b32.xlu0 %v3315, 4
        %v3333 = vpop.permute.xlu0 %3332
        %3334 = vrot.lane.b32.xlu0 %v3316, 4
        %v3335 = vpop.permute.xlu0 %3334
        %3336 = vrot.lane.b32.xlu0 %v3317, 4
        %v3337 = vpop.permute.xlu0 %3336
        %3338 = vrot.lane.b32.xlu0 %v3318, 4
        %v3339 = vpop.permute.xlu0 %3338
        %3340 = vrot.lane.b32.xlu0 %v3319, 4
        %v3341 = vpop.permute.xlu0 %3340
        %3342 = vrot.lane.b32.xlu0 %v3320, 4
        %v3343 = vpop.permute.xlu0 %3342
        %3344 = vrot.lane.b32.xlu0 %v3321, 4
        %v3345 = vpop.permute.xlu0 %3344
        %v3346 = vsel %vm1590, %v3331, %v3333
        %v3347 = vsel %vm1590, %v3333, %v3335
        %v3348 = vsel %vm1590, %v3335, %v3337
        %v3349 = vsel %vm1590, %v3339, %v3341
        %v3350 = vsel %vm1590, %v3341, %v3343
        %v3351 = vsel %vm1590, %v3343, %v3345
        %3362 = vst.msk [vmem:[#allocation2 + $0x8] sm:$0xff] %vm1607, %v3331
        %3363 = vst [vmem:[#allocation2 + $0x10] sm:$0xff] %v3346
        %3364 = vst [vmem:[#allocation2 + $0x18] sm:$0xff] %v3347
        %3365 = vst [vmem:[#allocation2 + $0x20] sm:$0xff] %v3348
        %3366 = vst.msk [vmem:[#allocation2 + $0x28] sm:$0xff] %vm1590, %v3337
        %3367 = vst.msk [vmem:[#allocation2 + $0x38] sm:$0xff] %vm1607, %v3339
        %3368 = vst [vmem:[#allocation2 + $0x40] sm:$0xff] %v3349
        %3369 = vst [vmem:[#allocation2 + $0x48] sm:$0xff] %v3350
        %3370 = vst [vmem:[#allocation2 + $0x50] sm:$0xff] %v3351
        %3371 = vst.msk [vmem:[#allocation2 + $0x58] sm:$0xff] %vm1590, %v3345
        %3372 = vst.msk [vmem:[#allocation2 + $0x8] sm:$0xff] %vm1590, 0.0
        %3373 = vst.msk [vmem:[#allocation2 + $0x38] sm:$0xff] %vm1590, 0.0
        %3374 = vst.msk [vmem:[#allocation2 + $0x18] sm:$0xff] %vm1590, 0.0
        %3375 = vst.msk [vmem:[#allocation2 + $0x48] sm:$0xff] %vm1590, 0.0
        %3376 = vst [vmem:[#allocation2 + $0x68] sm:$0xff] %v3314
        %3377 = vst [vmem:[#allocation2 + $0x70] sm:$0xff] %v3315
        %3378 = vst [vmem:[#allocation2 + $0x78] sm:$0xff] %v3316
        %3379 = vst [vmem:[#allocation2 + $0x80] sm:$0xff] %v3317
        %3380 = vst [vmem:[#allocation2 + $0x98] sm:$0xff] %v3318
        %3381 = vst [vmem:[#allocation2 + $0xa0] sm:$0xff] %v3319
        %3382 = vst [vmem:[#allocation2 + $0xa8] sm:$0xff] %v3320
        %3383 = vst [vmem:[#allocation2 + $0xb0] sm:$0xff] %v3321
        %3384 = vrot.lane.b32.xlu0 %v3314, 124
        %v3385 = vpop.permute.xlu0 %3384
        %3386 = vrot.lane.b32.xlu0 %v3315, 124
        %v3387 = vpop.permute.xlu0 %3386
        %3388 = vrot.lane.b32.xlu0 %v3316, 124
        %v3389 = vpop.permute.xlu0 %3388
        %3390 = vrot.lane.b32.xlu0 %v3317, 124
        %v3391 = vpop.permute.xlu0 %3390
        %3392 = vrot.lane.b32.xlu0 %v3318, 124
        %v3393 = vpop.permute.xlu0 %3392
        %3394 = vrot.lane.b32.xlu0 %v3319, 124
        %v3395 = vpop.permute.xlu0 %3394
        %3396 = vrot.lane.b32.xlu0 %v3320, 124
        %v3397 = vpop.permute.xlu0 %3396
        %3398 = vrot.lane.b32.xlu0 %v3321, 124
        %v3399 = vpop.permute.xlu0 %3398
        %v3400 = vsel %vm1646, %v3385, %v3387
        %v3401 = vsel %vm1646, %v3387, %v3389
        %v3402 = vsel %vm1646, %v3389, %v3391
        %v3403 = vsel %vm1646, %v3393, %v3395
        %v3404 = vsel %vm1646, %v3395, %v3397
        %v3405 = vsel %vm1646, %v3397, %v3399
        %3416 = vst.msk [vmem:[#allocation2 + $0xc0] sm:$0xff] %vm1663, %v3385
        %3417 = vst [vmem:[#allocation2 + $0xc8] sm:$0xff] %v3400
        %3418 = vst [vmem:[#allocation2 + $0xd0] sm:$0xff] %v3401
        %3419 = vst [vmem:[#allocation2 + $0xd8] sm:$0xff] %v3402
        %3420 = vst.msk [vmem:[#allocation2 + $0xe0] sm:$0xff] %vm1646, %v3391
        %3421 = vst.msk [vmem:[#allocation2 + $0xf0] sm:$0xff] %vm1663, %v3393
        %3422 = vst [vmem:[#allocation2 + $0xf8] sm:$0xff] %v3403
        %3423 = vst [vmem:[#allocation2 + $0x100] sm:$0xff] %v3404
        %3424 = vst [vmem:[#allocation2 + $0x108] sm:$0xff] %v3405
        %3425 = vst.msk [vmem:[#allocation2 + $0x110] sm:$0xff] %vm1646, %v3399
        %3426 = vst.msk [vmem:[#allocation2 + $0xd0] sm:$0xff] %vm1663, 0.0
        %3427 = vst.msk [vmem:[#allocation2 + $0x100] sm:$0xff] %vm1663, 0.0
        %3428 = vst.msk [vmem:[#allocation2 + $0xe0] sm:$0xff] %vm1663, 0.0
        %3429 = vst.msk [vmem:[#allocation2 + $0x110] sm:$0xff] %vm1663, 0.0
        %v3430 = vld [vmem:[#allocation2 + $0x8] sm:$0xff]
        %v3431 = vld [vmem:[#allocation2 + $0x10] sm:$0xff]
        %v3432 = vld [vmem:[#allocation2 + $0x18] sm:$0xff]
        %v3433 = vld [vmem:[#allocation2 + $0x20] sm:$0xff]
        %v3434 = vld [vmem:[#allocation2 + $0x38] sm:$0xff]
        %v3435 = vld [vmem:[#allocation2 + $0x40] sm:$0xff]
        %v3436 = vld [vmem:[#allocation2 + $0x48] sm:$0xff]
        %v3437 = vld [vmem:[#allocation2 + $0x50] sm:$0xff]
        %v3438 = vld [vmem:[#allocation2 + $0x68] sm:$0xff]
        %v3439 = vld [vmem:[#allocation2 + $0x70] sm:$0xff]
        %v3440 = vld [vmem:[#allocation2 + $0x78] sm:$0xff]
        %v3441 = vld [vmem:[#allocation2 + $0x80] sm:$0xff]
        %v3442 = vld [vmem:[#allocation2 + $0x98] sm:$0xff]
        %v3443 = vld [vmem:[#allocation2 + $0xa0] sm:$0xff]
        %v3444 = vld [vmem:[#allocation2 + $0xa8] sm:$0xff]
        %v3445 = vld [vmem:[#allocation2 + $0xb0] sm:$0xff]
        %v3446 = vld [vmem:[#allocation2 + $0xc8] sm:$0xff]
        %v3447 = vld [vmem:[#allocation2 + $0xd0] sm:$0xff]
        %v3448 = vld [vmem:[#allocation2 + $0xd8] sm:$0xff]
        %v3449 = vld [vmem:[#allocation2 + $0xe0] sm:$0xff]
        %v3450 = vld [vmem:[#allocation2 + $0xf8] sm:$0xff]
        %v3451 = vld [vmem:[#allocation2 + $0x100] sm:$0xff]
        %v3452 = vld [vmem:[#allocation2 + $0x108] sm:$0xff]
        %v3453 = vld [vmem:[#allocation2 + $0x110] sm:$0xff]
        %s3454 = scalar_lea.vmem %s3, 80
        %v3455 = vld [vmem:[%s3454] sm:$0xff]
        %v3456 = vld [vmem:[%s3454 + $0x8] sm:$0xff]
        %s3457 = scalar_lea.vmem %s4, 80
        %v3458 = vld [vmem:[%s3457] sm:$0xff]
        %v3459 = vld [vmem:[%s3457 + $0x8] sm:$0xff]
        %3461 = vset.pattern.permute.xlu0 0
        %3462 = vperm.xlu0 %3461, %v3458
        %v3463 = vpop.permute.xlu0 %3462
        %3466 = vset.pattern.permute.xlu0 0
        %3467 = vperm.xlu0 %3466, %v3459
        %v3468 = vpop.permute.xlu0 %3467
        %v3471 = vsel %vm542, %v3455, 0
        %v3474 = vsel %vm542, %v3456, 0
        %3476 = vmatprep.subr.mxu0 %v3431
        %3477 = vmatpush1.msra.mxu0 %v3430
        %3478 = vmatprep.subr.mxu0 %v3435
        %3479 = vmatpush1.msra.mxu0 %v3434
        %3480 = vmatprep.subr.mxu0 %v3439
        %3481 = vmatpush1.msra.mxu0 %v3438
        %3482 = vmatprep.subr.mxu0 %v3443
        %3483 = vmatpush1.msra.mxu0 %v3442
        %3484 = vmatprep.subr.mxu0 %v3447
        %3485 = vmatpush1.msra.mxu0 %v3446
        %3486 = vmatprep.subr.mxu0 %v3451
        %3487 = vmatpush1.msra.mxu0 %v3450
        %3488 = vmatprep.subr.mxu0 0.0
        %3489 = vmatpush1.msra.mxu0 0.0
        %3490 = vmatprep.subr.mxu0 0.0
        %3491 = vmatpush1.msra.mxu0 0.0
        %3492 = vmatprep.subr.mxu0 0.0
        %3493 = vmatpush1.msra.mxu0 0.0
        %3494 = vmatprep.subr.mxu0 0.0
        %3495 = vmatpush1.msra.mxu0 0.0
        %3496 = vmatprep.subr.mxu0 0.0
        %3497 = vmatpush1.msra.mxu0 0.0
        %3498 = vmatprep.subr.mxu0 0.0
        %3499 = vmatpush1.msra.mxu0 0.0
        %3500 = vmatprep.subr.mxu0 0.0
        %3501 = vmatpush1.msra.mxu0 0.0
        %3502 = vmatprep.subr.mxu0 0.0
        %3503 = vmatpush1.msra.mxu0 0.0
        %3504 = vmatprep.subr.mxu0 0.0
        %3505 = vmatpush1.msra.mxu0 0.0
        %3506 = vmatprep.subr.mxu0 0.0
        %3507 = vmatpush1.msra.mxu0 0.0
        %3508 = vmatprep.subr.mxu0 0.0
        %3509 = vmatpush1.msra.mxu0 0.0
        %3510 = vmatprep.subr.mxu0 0.0
        %3511 = vmatpush1.msra.mxu0 0.0
        %3512 = vmatprep.subr.mxu0 0.0
        %3513 = vmatpush1.msra.mxu0 0.0
        %3514 = vmatprep.subr.mxu0 0.0
        %3515 = vmatpush1.msra.mxu0 0.0
        %3516 = vmatprep.subr.mxu0 0.0
        %3517 = vmatpush1.msra.mxu0 0.0
        %3518 = vmatprep.subr.mxu0 0.0
        %3519 = vmatpush1.msra.mxu0 0.0
        %3520 = vmatprep.subr.mxu0 0.0
        %3521 = vmatpush1.msra.mxu0 0.0
        %3522 = vmatprep.subr.mxu0 0.0
        %3523 = vmatpush1.msra.mxu0 0.0
        %3524 = vmatprep.subr.mxu0 0.0
        %3525 = vmatpush1.msra.mxu0 0.0
        %3526 = vmatprep.subr.mxu0 0.0
        %3527 = vmatpush1.msra.mxu0 0.0
        %3528 = vmatprep.subr.mxu0 0.0
        %3529 = vmatpush1.msra.mxu0 0.0
        %3530 = vmatprep.subr.mxu0 0.0
        %3531 = vmatpush1.msra.mxu0 0.0
        %3532 = vmatprep.subr.mxu0 0.0
        %3533 = vmatpush1.msra.mxu0 0.0
        %3534 = vmatprep.subr.mxu0 0.0
        %3535 = vmatpush1.msra.mxu0 0.0
        %3536 = vmatprep.subr.mxu0 0.0
        %3537 = vmatpush1.msra.mxu0 0.0
        %3538 = vmatprep.subr.mxu0 0.0
        %3539 = vmatpush1.msra.mxu0 0.0
        %3540 = vmatprep.mubr.f32.mxu0 0.0
        %3541 = vmatmul.mubr.f32.gmra.mrb[0].mxu0 %v3471
        %v3542 = vpop.f32.mrb[0].mxu0
        %v3543 = vadd.f32 %v3463, %v3542
        %v3544 = vpop.f32.mrb[0].mxu0
        %v3545 = vadd.f32 %v3463, %v3544
        %3546 = vmatprep.mubr.f32.mxu0 0.0
        %3547 = vmatmul.mubr.f32.gmra.mrb[0].mxu0 %v3474
        %v3548 = vpop.f32.mrb[0].mxu0
        %v3549 = vadd.f32 %v3468, %v3548
        %v3550 = vpop.f32.mrb[0].mxu0
        %v3551 = vadd.f32 %v3468, %v3550
        %3552 = vdwg.mxu0
        %3553 = vmatprep.subr.mxu0 %v3433
        %3554 = vmatpush1.msra.mxu0 %v3432
        %3555 = vmatprep.subr.mxu0 %v3437
        %3556 = vmatpush1.msra.mxu0 %v3436
        %3557 = vmatprep.subr.mxu0 %v3441
        %3558 = vmatpush1.msra.mxu0 %v3440
        %3559 = vmatprep.subr.mxu0 %v3445
        %3560 = vmatpush1.msra.mxu0 %v3444
        %3561 = vmatprep.subr.mxu0 %v3449
        %3562 = vmatpush1.msra.mxu0 %v3448
        %3563 = vmatprep.subr.mxu0 %v3453
        %3564 = vmatpush1.msra.mxu0 %v3452
        %3565 = vmatprep.subr.mxu0 0.0
        %3566 = vmatpush1.msra.mxu0 0.0
        %3567 = vmatprep.subr.mxu0 0.0
        %3568 = vmatpush1.msra.mxu0 0.0
        %3569 = vmatprep.subr.mxu0 0.0
        %3570 = vmatpush1.msra.mxu0 0.0
        %3571 = vmatprep.subr.mxu0 0.0
        %3572 = vmatpush1.msra.mxu0 0.0
        %3573 = vmatprep.subr.mxu0 0.0
        %3574 = vmatpush1.msra.mxu0 0.0
        %3575 = vmatprep.subr.mxu0 0.0
        %3576 = vmatpush1.msra.mxu0 0.0
        %3577 = vmatprep.subr.mxu0 0.0
        %3578 = vmatpush1.msra.mxu0 0.0
        %3579 = vmatprep.subr.mxu0 0.0
        %3580 = vmatpush1.msra.mxu0 0.0
        %3581 = vmatprep.subr.mxu0 0.0
        %3582 = vmatpush1.msra.mxu0 0.0
        %3583 = vmatprep.subr.mxu0 0.0
        %3584 = vmatpush1.msra.mxu0 0.0
        %3585 = vmatprep.subr.mxu0 0.0
        %3586 = vmatpush1.msra.mxu0 0.0
        %3587 = vmatprep.subr.mxu0 0.0
        %3588 = vmatpush1.msra.mxu0 0.0
        %3589 = vmatprep.subr.mxu0 0.0
        %3590 = vmatpush1.msra.mxu0 0.0
        %3591 = vmatprep.subr.mxu0 0.0
        %3592 = vmatpush1.msra.mxu0 0.0
        %3593 = vmatprep.subr.mxu0 0.0
        %3594 = vmatpush1.msra.mxu0 0.0
        %3595 = vmatprep.subr.mxu0 0.0
        %3596 = vmatpush1.msra.mxu0 0.0
        %3597 = vmatprep.subr.mxu0 0.0
        %3598 = vmatpush1.msra.mxu0 0.0
        %3599 = vmatprep.subr.mxu0 0.0
        %3600 = vmatpush1.msra.mxu0 0.0
        %3601 = vmatprep.subr.mxu0 0.0
        %3602 = vmatpush1.msra.mxu0 0.0
        %3603 = vmatprep.subr.mxu0 0.0
        %3604 = vmatpush1.msra.mxu0 0.0
        %3605 = vmatprep.subr.mxu0 0.0
        %3606 = vmatpush1.msra.mxu0 0.0
        %3607 = vmatprep.subr.mxu0 0.0
        %3608 = vmatpush1.msra.mxu0 0.0
        %3609 = vmatprep.subr.mxu0 0.0
        %3610 = vmatpush1.msra.mxu0 0.0
        %3611 = vmatprep.subr.mxu0 0.0
        %3612 = vmatpush1.msra.mxu0 0.0
        %3613 = vmatprep.subr.mxu0 0.0
        %3614 = vmatpush1.msra.mxu0 0.0
        %3615 = vmatprep.subr.mxu0 0.0
        %3616 = vmatpush1.msra.mxu0 0.0
        %3617 = vmatprep.mubr.f32.mxu0 0.0
        %3618 = vmatmul.mubr.f32.gmra.mrb[0].mxu0 %v3471
        %v3619 = vpop.f32.mrb[0].mxu0
        %v3620 = vadd.f32 %v3463, %v3619
        %v3621 = vpop.f32.mrb[0].mxu0
        %v3622 = vadd.f32 %v3463, %v3621
        %3623 = vmatprep.mubr.f32.mxu0 0.0
        %3624 = vmatmul.mubr.f32.gmra.mrb[0].mxu0 %v3474
        %v3625 = vpop.f32.mrb[0].mxu0
        %v3626 = vadd.f32 %v3468, %v3625
        %v3627 = vpop.f32.mrb[0].mxu0
        %v3628 = vadd.f32 %v3468, %v3627
        %3629 = vdwg.mxu0
        %v3630 = vtanh.pop %v3543
        %v3631 = vtanh.pop %v3545
        %v3632 = vtanh.pop %v3620
        %v3633 = vtanh.pop %v3622
        %v3634 = vxor.u32 %v3549, 2147483648
        %v3635 = vxor.u32 %v3551, 2147483648
        %v3636 = vxor.u32 %v3626, 2147483648
        %v3637 = vxor.u32 %v3628, 2147483648
        %v3638 = vmul.f32 %v3634, 1.442695
        %v3639 = vpow.pop %v3638
        %v3640 = vmul.f32 %v3635, 1.442695
        %v3641 = vpow.pop %v3640
        %v3642 = vmul.f32 %v3636, 1.442695
        %v3643 = vpow.pop %v3642
        %v3644 = vmul.f32 %v3637, 1.442695
        %v3645 = vpow.pop %v3644
        %v3646 = vadd.f32 %v3639, 1.0
        %v3647 = vadd.f32 %v3641, 1.0
        %v3648 = vadd.f32 %v3643, 1.0
        %v3649 = vadd.f32 %v3645, 1.0
        %v3650 = vrcp.pop %v3646
        %v3651 = vmul.f32 1.0, %v3650
        %v3652 = vrcp.pop %v3647
        %v3653 = vmul.f32 1.0, %v3652
        %v3654 = vrcp.pop %v3648
        %v3655 = vmul.f32 1.0, %v3654
        %v3656 = vrcp.pop %v3649
        %v3657 = vmul.f32 1.0, %v3656
        %v3658 = vmul.f32 %v3630, %v3651
        %v3659 = vmul.f32 %v3631, %v3653
        %v3660 = vmul.f32 %v3632, %v3655
        %v3661 = vmul.f32 %v3633, %v3657
        %s3662 = scalar_lea.vmem %s5, 160
        %v3663 = vld [vmem:[%s3662] sm:$0xff]
        %v3664 = vld [vmem:[%s3662 + $0x8] sm:$0xff]
        %v3665 = vld [vmem:[%s3662 + $0x10] sm:$0xff]
        %v3666 = vld [vmem:[%s3662 + $0x18] sm:$0xff]
        %s3667 = scalar_lea.vmem %s6, 160
        %v3668 = vld [vmem:[%s3667] sm:$0xff]
        %v3669 = vld [vmem:[%s3667 + $0x8] sm:$0xff]
        %v3670 = vld [vmem:[%s3667 + $0x10] sm:$0xff]
        %v3671 = vld [vmem:[%s3667 + $0x18] sm:$0xff]
        %3673 = vset.pattern.permute.xlu0 0
        %3674 = vperm.xlu0 %3673, %v3668
        %v3675 = vpop.permute.xlu0 %3674
        %3678 = vset.pattern.permute.xlu0 0
        %3679 = vperm.xlu0 %3678, %v3669
        %v3680 = vpop.permute.xlu0 %3679
        %3683 = vset.pattern.permute.xlu0 0
        %3684 = vperm.xlu0 %3683, %v3670
        %v3685 = vpop.permute.xlu0 %3684
        %3687 = vset.pattern.permute.xlu0 0
        %3688 = vperm.xlu0 %3687, %v3671
        %v3689 = vpop.permute.xlu0 %3688
        %v3691 = vsel %vm763, %v3663, 0
        %v3694 = vsel %vm763, %v3664, 0
        %v3697 = vsel %vm763, %v3665, 0
        %v3700 = vsel %vm763, %v3666, 0
        %3702 = vmatprep.subr.mxu0 %v3659
        %3703 = vmatpush1.msra.mxu0 %v3658
        %3704 = vmatprep.subr.mxu0 0.0
        %3705 = vmatpush1.msra.mxu0 0.0
        %3706 = vmatprep.subr.mxu0 0.0
        %3707 = vmatpush1.msra.mxu0 0.0
        %3708 = vmatprep.subr.mxu0 0.0
        %3709 = vmatpush1.msra.mxu0 0.0
        %3710 = vmatprep.subr.mxu0 0.0
        %3711 = vmatpush1.msra.mxu0 0.0
        %3712 = vmatprep.subr.mxu0 0.0
        %3713 = vmatpush1.msra.mxu0 0.0
        %3714 = vmatprep.subr.mxu0 0.0
        %3715 = vmatpush1.msra.mxu0 0.0
        %3716 = vmatprep.subr.mxu0 0.0
        %3717 = vmatpush1.msra.mxu0 0.0
        %3718 = vmatprep.subr.mxu0 0.0
        %3719 = vmatpush1.msra.mxu0 0.0
        %3720 = vmatprep.subr.mxu0 0.0
        %3721 = vmatpush1.msra.mxu0 0.0
        %3722 = vmatprep.subr.mxu0 0.0
        %3723 = vmatpush1.msra.mxu0 0.0
        %3724 = vmatprep.subr.mxu0 0.0
        %3725 = vmatpush1.msra.mxu0 0.0
        %3726 = vmatprep.subr.mxu0 0.0
        %3727 = vmatpush1.msra.mxu0 0.0
        %3728 = vmatprep.subr.mxu0 0.0
        %3729 = vmatpush1.msra.mxu0 0.0
        %3730 = vmatprep.subr.mxu0 0.0
        %3731 = vmatpush1.msra.mxu0 0.0
        %3732 = vmatprep.subr.mxu0 0.0
        %3733 = vmatpush1.msra.mxu0 0.0
        %3734 = vmatprep.subr.mxu0 0.0
        %3735 = vmatpush1.msra.mxu0 0.0
        %3736 = vmatprep.subr.mxu0 0.0
        %3737 = vmatpush1.msra.mxu0 0.0
        %3738 = vmatprep.subr.mxu0 0.0
        %3739 = vmatpush1.msra.mxu0 0.0
        %3740 = vmatprep.subr.mxu0 0.0
        %3741 = vmatpush1.msra.mxu0 0.0
        %3742 = vmatprep.subr.mxu0 0.0
        %3743 = vmatpush1.msra.mxu0 0.0
        %3744 = vmatprep.subr.mxu0 0.0
        %3745 = vmatpush1.msra.mxu0 0.0
        %3746 = vmatprep.subr.mxu0 0.0
        %3747 = vmatpush1.msra.mxu0 0.0
        %3748 = vmatprep.subr.mxu0 0.0
        %3749 = vmatpush1.msra.mxu0 0.0
        %3750 = vmatprep.subr.mxu0 0.0
        %3751 = vmatpush1.msra.mxu0 0.0
        %3752 = vmatprep.subr.mxu0 0.0
        %3753 = vmatpush1.msra.mxu0 0.0
        %3754 = vmatprep.subr.mxu0 0.0
        %3755 = vmatpush1.msra.mxu0 0.0
        %3756 = vmatprep.subr.mxu0 0.0
        %3757 = vmatpush1.msra.mxu0 0.0
        %3758 = vmatprep.subr.mxu0 0.0
        %3759 = vmatpush1.msra.mxu0 0.0
        %3760 = vmatprep.subr.mxu0 0.0
        %3761 = vmatpush1.msra.mxu0 0.0
        %3762 = vmatprep.subr.mxu0 0.0
        %3763 = vmatpush1.msra.mxu0 0.0
        %3764 = vmatprep.subr.mxu0 0.0
        %3765 = vmatpush1.msra.mxu0 0.0
        %3766 = vmatprep.mubr.f32.mxu0 0.0
        %3767 = vmatmul.mubr.f32.gmra.mrb[0].mxu0 %v3691
        %v3768 = vpop.f32.mrb[0].mxu0
        %v3769 = vadd.f32 %v3675, %v3768
        %v3770 = vpop.f32.mrb[0].mxu0
        %v3771 = vadd.f32 %v3675, %v3770
        %3772 = vmatprep.mubr.f32.mxu0 0.0
        %3773 = vmatmul.mubr.f32.gmra.mrb[0].mxu0 %v3694
        %v3774 = vpop.f32.mrb[0].mxu0
        %v3775 = vadd.f32 %v3680, %v3774
        %v3776 = vpop.f32.mrb[0].mxu0
        %v3777 = vadd.f32 %v3680, %v3776
        %3778 = vmatprep.mubr.f32.mxu0 0.0
        %3779 = vmatmul.mubr.f32.gmra.mrb[0].mxu0 %v3697
        %v3780 = vpop.f32.mrb[0].mxu0
        %v3781 = vpop.f32.mrb[0].mxu0
        %3782 = vmatprep.mubr.f32.mxu0 0.0
        %3783 = vmatmul.mubr.f32.gmra.mrb[0].mxu0 %v3700
        %v3784 = vpop.f32.mrb[0].mxu0
        %v3785 = vpop.f32.mrb[0].mxu0
        %3786 = vdwg.mxu0
        %3787 = vmatprep.subr.mxu0 %v3661
        %3788 = vmatpush1.msra.mxu0 %v3660
        %3789 = vmatprep.subr.mxu0 0.0
        %3790 = vmatpush1.msra.mxu0 0.0
        %3791 = vmatprep.subr.mxu0 0.0
        %3792 = vmatpush1.msra.mxu0 0.0
        %3793 = vmatprep.subr.mxu0 0.0
        %3794 = vmatpush1.msra.mxu0 0.0
        %3795 = vmatprep.subr.mxu0 0.0
        %3796 = vmatpush1.msra.mxu0 0.0
        %3797 = vmatprep.subr.mxu0 0.0
        %3798 = vmatpush1.msra.mxu0 0.0
        %3799 = vmatprep.subr.mxu0 0.0
        %3800 = vmatpush1.msra.mxu0 0.0
        %3801 = vmatprep.subr.mxu0 0.0
        %3802 = vmatpush1.msra.mxu0 0.0
        %3803 = vmatprep.subr.mxu0 0.0
        %3804 = vmatpush1.msra.mxu0 0.0
        %3805 = vmatprep.subr.mxu0 0.0
        %3806 = vmatpush1.msra.mxu0 0.0
        %3807 = vmatprep.subr.mxu0 0.0
        %3808 = vmatpush1.msra.mxu0 0.0
        %3809 = vmatprep.subr.mxu0 0.0
        %3810 = vmatpush1.msra.mxu0 0.0
        %3811 = vmatprep.subr.mxu0 0.0
        %3812 = vmatpush1.msra.mxu0 0.0
        %3813 = vmatprep.subr.mxu0 0.0
        %3814 = vmatpush1.msra.mxu0 0.0
        %3815 = vmatprep.subr.mxu0 0.0
        %3816 = vmatpush1.msra.mxu0 0.0
        %3817 = vmatprep.subr.mxu0 0.0
        %3818 = vmatpush1.msra.mxu0 0.0
        %3819 = vmatprep.subr.mxu0 0.0
        %3820 = vmatpush1.msra.mxu0 0.0
        %3821 = vmatprep.subr.mxu0 0.0
        %3822 = vmatpush1.msra.mxu0 0.0
        %3823 = vmatprep.subr.mxu0 0.0
        %3824 = vmatpush1.msra.mxu0 0.0
        %3825 = vmatprep.subr.mxu0 0.0
        %3826 = vmatpush1.msra.mxu0 0.0
        %3827 = vmatprep.subr.mxu0 0.0
        %3828 = vmatpush1.msra.mxu0 0.0
        %3829 = vmatprep.subr.mxu0 0.0
        %3830 = vmatpush1.msra.mxu0 0.0
        %3831 = vmatprep.subr.mxu0 0.0
        %3832 = vmatpush1.msra.mxu0 0.0
        %3833 = vmatprep.subr.mxu0 0.0
        %3834 = vmatpush1.msra.mxu0 0.0
        %3835 = vmatprep.subr.mxu0 0.0
        %3836 = vmatpush1.msra.mxu0 0.0
        %3837 = vmatprep.subr.mxu0 0.0
        %3838 = vmatpush1.msra.mxu0 0.0
        %3839 = vmatprep.subr.mxu0 0.0
        %3840 = vmatpush1.msra.mxu0 0.0
        %3841 = vmatprep.subr.mxu0 0.0
        %3842 = vmatpush1.msra.mxu0 0.0
        %3843 = vmatprep.subr.mxu0 0.0
        %3844 = vmatpush1.msra.mxu0 0.0
        %3845 = vmatprep.subr.mxu0 0.0
        %3846 = vmatpush1.msra.mxu0 0.0
        %3847 = vmatprep.subr.mxu0 0.0
        %3848 = vmatpush1.msra.mxu0 0.0
        %3849 = vmatprep.subr.mxu0 0.0
        %3850 = vmatpush1.msra.mxu0 0.0
        %3851 = vmatprep.mubr.f32.mxu0 0.0
        %3852 = vmatmul.mubr.f32.gmra.mrb[0].mxu0 %v3691
        %v3853 = vpop.f32.mrb[0].mxu0
        %v3854 = vadd.f32 %v3675, %v3853
        %v3855 = vpop.f32.mrb[0].mxu0
        %v3856 = vadd.f32 %v3675, %v3855
        %3857 = vmatprep.mubr.f32.mxu0 0.0
        %3858 = vmatmul.mubr.f32.gmra.mrb[0].mxu0 %v3694
        %v3859 = vpop.f32.mrb[0].mxu0
        %v3860 = vadd.f32 %v3680, %v3859
        %v3861 = vpop.f32.mrb[0].mxu0
        %v3862 = vadd.f32 %v3680, %v3861
        %3863 = vmatprep.mubr.f32.mxu0 0.0
        %3864 = vmatmul.mubr.f32.gmra.mrb[0].mxu0 %v3697
        %v3865 = vpop.f32.mrb[0].mxu0
        %v3866 = vpop.f32.mrb[0].mxu0
        %3867 = vmatprep.mubr.f32.mxu0 0.0
        %3868 = vmatmul.mubr.f32.gmra.mrb[0].mxu0 %v3700
        %v3869 = vpop.f32.mrb[0].mxu0
        %v3870 = vpop.f32.mrb[0].mxu0
        %3871 = vdwg.mxu0
        %v3872 = vadd.f32 %v3298, %v3769
        %v3873 = vadd.f32 %v3299, %v3771
        %v3874 = vadd.f32 %v3300, %v3854
        %v3875 = vadd.f32 %v3301, %v3856
        %v3876 = vadd.f32 %v3302, %v3775
        %v3877 = vadd.f32 %v3303, %v3777
        %v3878 = vadd.f32 %v3304, %v3860
        %v3879 = vadd.f32 %v3305, %v3862
        %v3880 = vmul.f32 %v3872, 0.4082483
        %v3881 = vmul.f32 %v3873, 0.4082483
        %v3882 = vmul.f32 %v3874, 0.4082483
        %v3883 = vmul.f32 %v3875, 0.4082483
        %v3884 = vmul.f32 %v3876, 0.4082483
        %v3885 = vmul.f32 %v3877, 0.4082483
        %v3886 = vmul.f32 %v3878, 0.4082483
        %v3887 = vmul.f32 %v3879, 0.4082483
        %v3888 = vld [vmem:[%s7] sm:$0xff]
        %v3889 = vld [vmem:[%s7 + $0x8] sm:$0xff]
        %3891 = vset.pattern.permute.xlu0 0
        %3892 = vperm.xlu0 %3891, %v3888
        %v3893 = vpop.permute.xlu0 %3892
        %3896 = vset.pattern.permute.xlu0 0
        %3897 = vperm.xlu0 %3896, %v3889
        %v3898 = vpop.permute.xlu0 %3897
        %v3900 = vmul.f32 %v3893, %v3880
        %v3901 = vmul.f32 %v3893, %v3881
        %v3902 = vmul.f32 %v3893, %v3882
        %v3903 = vmul.f32 %v3893, %v3883
        %v3904 = vmul.f32 %v3898, %v3884
        %v3905 = vmul.f32 %v3898, %v3885
        %v3906 = vmul.f32 %v3898, %v3886
        %v3907 = vmul.f32 %v3898, %v3887
        %v3908 = vadd.f32 %v3900, %v3904
        %v3909 = vrot.slane %v3908, 4
        %v3910 = vadd.f32 %v3908, %v3909
        %v3911 = vrot.slane %v3910, 2
        %v3912 = vadd.f32 %v3910, %v3911
        %v3913 = vrot.slane %v3912, 1
        %v3914 = vadd.f32 %v3912, %v3913
        %v3915 = vadd.f32 %v3901, %v3905
        %v3916 = vrot.slane %v3915, 4
        %v3917 = vadd.f32 %v3915, %v3916
        %v3918 = vrot.slane %v3917, 2
        %v3919 = vadd.f32 %v3917, %v3918
        %v3920 = vrot.slane %v3919, 1
        %v3921 = vadd.f32 %v3919, %v3920
        %v3922 = vadd.f32 %v3902, %v3906
        %v3923 = vrot.slane %v3922, 4
        %v3924 = vadd.f32 %v3922, %v3923
        %v3925 = vrot.slane %v3924, 2
        %v3926 = vadd.f32 %v3924, %v3925
        %v3927 = vrot.slane %v3926, 1
        %v3928 = vadd.f32 %v3926, %v3927
        %v3929 = vadd.f32 %v3903, %v3907
        %v3930 = vrot.slane %v3929, 4
        %v3931 = vadd.f32 %v3929, %v3930
        %v3932 = vrot.slane %v3931, 2
        %v3933 = vadd.f32 %v3931, %v3932
        %v3934 = vrot.slane %v3933, 1
        %v3935 = vadd.f32 %v3933, %v3934
        %v3936 = vld [vmem:[#allocation3] sm:$0x1]
        %3938 = vset.pattern.permute.xlu0 0
        %3939 = vperm.xlu0 %3938, %v3936
        %v3940 = vpop.permute.xlu0 %3939
        %v3942 = vlaneseq
        %v3943 = vshrl.u32 %v3942, 7
        %v3944 = vsub.s32 0, %v3943
        %v3945 = vrot.slane %v3940, %v3944
        %v3946 = vadd.f32 %v3914, %v3945
        %v3947 = vadd.f32 %v3921, %v3945
        %v3948 = vadd.f32 %v3928, %v3945
        %v3949 = vadd.f32 %v3935, %v3945
        %v3954 = vcombine.low %v3946, %v3947
        %v3955 = vcombine.low %v3948, %v3949
        %v3957 = vunpack.c.l.s4 1966171168
        %v3958 = vunpack.c.0.s8 %v3957
        %v3959 = vlaneseq
        %v3960 = vshrl.u32 %v3959, 7
        %v3961 = vsub.s32 %v3958, %v3960
        %v3962 = vrot.slane %v3954, %v3961
        %v3964 = vunpack.c.l.s4 1966171168
        %v3965 = vunpack.c.0.s8 %v3964
        %v3966 = vlaneseq
        %v3967 = vshrl.u32 %v3966, 7
        %v3968 = vsub.s32 %v3965, %v3967
        %v3969 = vrot.slane %v3955, %v3968
        %v3970 = vcombine.low %v3962, %v3969
        %v3972 = vunpack.c.l.s4 1966171168
        %v3973 = vunpack.c.0.s8 %v3972
        %v3974 = vlaneseq
        %v3975 = vshrl.u32 %v3974, 7
        %v3976 = vsub.s32 %v3973, %v3975
        %v3977 = vrot.slane %v3970, %v3976
        %v3979 = vlaneseq
        %vm3980 = vcmp.ge.s32.totalorder %v3979, 0
        %vm3981 = vcmp.lt.s32.totalorder %v3979, 512
        %vm3982 = vmand %vm3980, %vm3981
        %3983 = vst.msk [vmem:[%s325] sm:$0xf] %vm3982, %v3977
        %s3984 = sand.u32 %s227, 1
        %s3985 = scalar_lea.sflag [#allocation5], %s3984
        %s3986 = sand.u32 %s227, 1
        %s3987 = smul.addr %s3986, 4
        %s3988 = scalar_lea.vmem [#allocation4], %s3987
        // Predicated region
        $region57: #{tpu_custom_call.1} parent=55 // pred_check
          %p3989 = pneg %p237
        $region58: #{tpu_custom_call.1} parent=55 // pred_check_branch
          %3991 = sbr.rel (%p3989) target = $region60
        $region59: #{tpu_custom_call.1} parent=55 // pred_region
          %s3993 = ssub.s32 64, 64
          %3994 = vsyncadd %s3985, %s3993
          %s3995 = smul.addr %s25, 4
          %s3996 = smul.addr %s3995, 16
          %s3997 = scalar_lea.hbm %s9, %s3996
          %s3999 = sshll.u32 %s3988, 4
          %s4000 = int_to_ptr.vmem [resolvable:$true] %s3999
          %4002 = dma.vmem_to_hbm [thread:$0]  %s4000, 64, %s3997, %s3985
        $region60: #{tpu_custom_call.1} parent=55 // pred_fallthru
          _
      $region56: #{tpu_custom_call.1} parent=5 // pred_fallthru
        _
      %p4003 = scmp.le.s32.totalorder 2, %s20
      // Predicated region
      $region61: #{tpu_custom_call.1} parent=5 // pred_check
        %p4004 = pneg %p4003
      $region62: #{tpu_custom_call.1} parent=5 // pred_check_branch
        %4006 = sbr.rel (%p4004) target = $region64
      $region63: #{tpu_custom_call.1} parent=5 // pred_region
        %s4007 = ssub.s32 %s20, 2
        // Predicated region
        $region65: #{tpu_custom_call.1} parent=63 // pred_check
          %p4008 = pneg %p243
        $region66: #{tpu_custom_call.1} parent=63 // pred_check_branch
          %4010 = sbr.rel (%p4008) target = $region68
        $region67: #{tpu_custom_call.1} parent=63 // pred_region
          %s4011 = sand.u32 %s228, 1
          %s4012 = scalar_lea.sflag [#allocation5], %s4011
          %s4013 = sand.u32 %s228, 1
          %s4014 = smul.addr %s4013, 4
          %s4015 = scalar_lea.vmem [#allocation4], %s4014
          %4016 = dma.done %s4012, 64
        $region68: #{tpu_custom_call.1} parent=63 // pred_fallthru
          _
      $region64: #{tpu_custom_call.1} parent=5 // pred_fallthru
        _
    $region6: #{tpu_custom_call.1} parent=1 // loop_footer
      %s24 = sadd.s32 1, %s20
    $region7: #{tpu_custom_call.1} parent=1 // loop_footer_branch
      %19 = sbr.rel target = $region3
    $region8: #{tpu_custom_call.1} parent=1 // loop_exit
      _
    %4017 = vsyncpa [#allocation5], 1
    %s4018 = scalar_lea.sflag [#allocation5], 1
    %4019 = vsyncpa %s4018, 1

// kernel: tpu_custom_call.1
$region0: #{tpu_custom_call.1}
  #allocation0 [shape = 'u32[]', space=smem, size = 0x4, offset = 0x4, fixed_abs, tag = 'smem constant byte address 0x4 - core index']
  #allocation1 [shape = 'u32[144,128]{1,0:T(1,128)}', space=vmem, size = 0x12000, scoped, tag = 'internal scratch']
  #allocation2 [shape = 'f32[48,768]{1,0:T(8,128)}', space=vmem, size = 0x24000, scoped, tag = 'scratch operand']
  #allocation3 [shape = 'f32[1,1]{1,0:T(1,128)S(1)}', space=vmem, size = 0x200, scoped, tag = 'scoped memory for tpu_custom_call.1']
  %s0 = inlined_call_operand.vmem [shape: f32[4,1,512], index: 0, kind: input, shape index: {}]
  %s1 = inlined_call_operand.vmem [shape: f32[16,1], index: 1, kind: input, shape index: {}]
  %s2 = inlined_call_operand.vmem [shape: f32[16,1], index: 2, kind: input, shape index: {}]
  %s3 = inlined_call_operand.vmem [shape: f32[6,16,48], index: 3, kind: input, shape index: {}]
  %s4 = inlined_call_operand.vmem [shape: f32[6,16,1], index: 4, kind: input, shape index: {}]
  %s5 = inlined_call_operand.vmem [shape: f32[6,32,8], index: 5, kind: input, shape index: {}]
  %s6 = inlined_call_operand.vmem [shape: f32[6,32,1], index: 6, kind: input, shape index: {}]
  %s7 = inlined_call_operand.vmem [shape: f32[16,1], index: 7, kind: input, shape index: {}]
  %s8 = inlined_call_operand.<no memory space> [shape: f32[1,1], index: 8, kind: input, shape index: {}]
  %s9 = inlined_call_operand.hbm [shape: f32[4,1,512], index: 9, kind: output, shape index: {}]
  %s10 = sld [smem:[#allocation0]]
  $region69: #{tpu_custom_call.1} parent=0
    _
  %s12 = ssub.s32 1, %s10
  %s13 = scalar_select 0, %s12, %s10
  %v14 = vstv %s8
  %15 = vst [vmem:[#allocation3] sm:$0x1] %v14
  $region1: #{tpu_custom_call.1} parent=0
    #allocation4 [shape = 'u8[4096]{0}', space=vmem, size = 0x1000, scoped, tag = 'output window, operand 0']
    #allocation5 [shape = 's32[2]{0}', space=sflag, size = 0x8, scoped, tag = 'scoped memory for tpu_custom_call.1']
    %16 = vsyncpa [#allocation5], 0
    %s17 = scalar_lea.sflag [#allocation5], 1
    %18 = vsyncpa %s17, 0
    loop: start=0, step=1, limit=6
    $region2: #{tpu_custom_call.1} parent=1 // loop_pre_header
      _
    $region3: #{tpu_custom_call.1} parent=1 // loop_header
      %s20 = sphi 0, %s24
      %p21 = scmp.ge.s32.totalorder %s20, 6
      %s30 = sphi 0, %s32
      %s33 = sphi 0, %s30
      %s34 = sphi 0, %s33
      %s50 = sphi 0, %s34
      %s54 = sphi 0, %s54
      %s56 = sphi 0, %s54
      %s57 = sphi 0, %s56
      %s71 = sphi 0, %s57
      %s75 = sphi 0, %s75
      %s77 = sphi 0, %s75
      %s78 = sphi 0, %s77
      %s92 = sphi 0, %s78
      %s96 = sphi 0, %s96
      %s98 = sphi 0, %s96
      %s99 = sphi 0, %s98
      %s113 = sphi 0, %s99
      %s117 = sphi 0, %s117
      %s119 = sphi 0, %s117
      %s120 = sphi 0, %s119
      %s134 = sphi 0, %s120
      %s138 = sphi 0, %s138
      %s140 = sphi 0, %s138
      %s141 = sphi 0, %s140
      %s155 = sphi 0, %s141
      %s159 = sphi 0, %s159
      %s161 = sphi 0, %s159
      %s162 = sphi 0, %s161
      %s176 = sphi 0, %s162
      %s180 = sphi 0, %s180
      %s182 = sphi 0, %s180
      %s183 = sphi 0, %s182
      %s197 = sphi 0, %s183
      %s201 = sphi 0, %s201
      %s203 = sphi 0, %s201
      %s204 = sphi 0, %s203
      %s218 = sphi 0, %s204
      %s224 = sphi 0, %s226
      %s227 = sphi 0, %s224
      %s228 = sphi 0, %s227
      %s244 = sphi 0, %s228
    $region4: #{tpu_custom_call.1} parent=1 // loop_header_branch
      %23 = sbr.rel (%p21) target = $region8
    $region5: #{tpu_custom_call.1} parent=1 // loop_body
      %s25 = ssub.s32 %s20, 1
      %s26 = ssub.s32 %s20, 2
      %s27 = sadd.s32 %s20, 1
      %s28 = ssub.s32 %s20, %s27
      %p29 = scmp.eq.s32.totalorder %s28, 0
      %s31 = sadd.s32 %s30, 1
      %s32 = scalar_select %p29, %s30, %s31
      %p35 = pneg %p29
      %p36 = scmp.eq.s32.totalorder %s20, 3
      %p37 = por %p35, %p36
      %p38 = scmp.ne.s32.totalorder %s30, %s33
      %p39 = scmp.eq.s32.totalorder %s20, 0
      %p40 = por %p38, %p39
      %p41 = scmp.ne.s32.totalorder %s30, %s33
      %p42 = scmp.eq.s32.totalorder %s25, 3
      %p43 = por %p41, %p42
      %p44 = scmp.ne.s32.totalorder %s33, %s34
      %p45 = scmp.eq.s32.totalorder %s25, 0
      %p46 = por %p44, %p45
      %p47 = scmp.ne.s32.totalorder %s33, %s34
      %p48 = scmp.eq.s32.totalorder %s26, 3
      %p49 = por %p47, %p48
      %p51 = scmp.ne.s32.totalorder %s34, %s50
      %p52 = scmp.eq.s32.totalorder %s26, 0
      %p53 = por %p51, %p52
      %s55 = sadd.s32 %s54, 1
      %p58 = scmp.eq.s32.totalorder %s20, 3
      %p59 = scmp.ne.s32.totalorder %s54, %s56
      %p60 = scmp.eq.s32.totalorder %s20, 0
      %p61 = por %p59, %p60
      %p62 = scmp.ne.s32.totalorder %s54, %s56
      %p63 = scmp.eq.s32.totalorder %s25, 3
      %p64 = por %p62, %p63
      %p65 = scmp.ne.s32.totalorder %s56, %s57
      %p66 = scmp.eq.s32.totalorder %s25, 0
      %p67 = por %p65, %p66
      %p68 = scmp.ne.s32.totalorder %s56, %s57
      %p69 = scmp.eq.s32.totalorder %s26, 3
      %p70 = por %p68, %p69
      %p72 = scmp.ne.s32.totalorder %s57, %s71
      %p73 = scmp.eq.s32.totalorder %s26, 0
      %p74 = por %p72, %p73
      %s76 = sadd.s32 %s75, 1
      %p79 = scmp.eq.s32.totalorder %s20, 3
      %p80 = scmp.ne.s32.totalorder %s75, %s77
      %p81 = scmp.eq.s32.totalorder %s20, 0
      %p82 = por %p80, %p81
      %p83 = scmp.ne.s32.totalorder %s75, %s77
      %p84 = scmp.eq.s32.totalorder %s25, 3
      %p85 = por %p83, %p84
      %p86 = scmp.ne.s32.totalorder %s77, %s78
      %p87 = scmp.eq.s32.totalorder %s25, 0
      %p88 = por %p86, %p87
      %p89 = scmp.ne.s32.totalorder %s77, %s78
      %p90 = scmp.eq.s32.totalorder %s26, 3
      %p91 = por %p89, %p90
      %p93 = scmp.ne.s32.totalorder %s78, %s92
      %p94 = scmp.eq.s32.totalorder %s26, 0
      %p95 = por %p93, %p94
      %s97 = sadd.s32 %s96, 1
      %p100 = scmp.eq.s32.totalorder %s20, 3
      %p101 = scmp.ne.s32.totalorder %s96, %s98
      %p102 = scmp.eq.s32.totalorder %s20, 0
      %p103 = por %p101, %p102
      %p104 = scmp.ne.s32.totalorder %s96, %s98
      %p105 = scmp.eq.s32.totalorder %s25, 3
      %p106 = por %p104, %p105
      %p107 = scmp.ne.s32.totalorder %s98, %s99
      %p108 = scmp.eq.s32.totalorder %s25, 0
      %p109 = por %p107, %p108
      %p110 = scmp.ne.s32.totalorder %s98, %s99
      %p111 = scmp.eq.s32.totalorder %s26, 3
      %p112 = por %p110, %p111
      %p114 = scmp.ne.s32.totalorder %s99, %s113
      %p115 = scmp.eq.s32.totalorder %s26, 0
      %p116 = por %p114, %p115
      %s118 = sadd.s32 %s117, 1
      %p121 = scmp.eq.s32.totalorder %s20, 3
      %p122 = scmp.ne.s32.totalorder %s117, %s119
      %p123 = scmp.eq.s32.totalorder %s20, 0
      %p124 = por %p122, %p123
      %p125 = scmp.ne.s32.totalorder %s117, %s119
      %p126 = scmp.eq.s32.totalorder %s25, 3
      %p127 = por %p125, %p126
      %p128 = scmp.ne.s32.totalorder %s119, %s120
      %p129 = scmp.eq.s32.totalorder %s25, 0
      %p130 = por %p128, %p129
      %p131 = scmp.ne.s32.totalorder %s119, %s120
      %p132 = scmp.eq.s32.totalorder %s26, 3
      %p133 = por %p131, %p132
      %p135 = scmp.ne.s32.totalorder %s120, %s134
      %p136 = scmp.eq.s32.totalorder %s26, 0
      %p137 = por %p135, %p136
      %s139 = sadd.s32 %s138, 1
      %p142 = scmp.eq.s32.totalorder %s20, 3
      %p143 = scmp.ne.s32.totalorder %s138, %s140
      %p144 = scmp.eq.s32.totalorder %s20, 0
      %p145 = por %p143, %p144
      %p146 = scmp.ne.s32.totalorder %s138, %s140
      %p147 = scmp.eq.s32.totalorder %s25, 3
      %p148 = por %p146, %p147
      %p149 = scmp.ne.s32.totalorder %s140, %s141
      %p150 = scmp.eq.s32.totalorder %s25, 0
      %p151 = por %p149, %p150
      %p152 = scmp.ne.s32.totalorder %s140, %s141
      %p153 = scmp.eq.s32.totalorder %s26, 3
      %p154 = por %p152, %p153
      %p156 = scmp.ne.s32.totalorder %s141, %s155
      %p157 = scmp.eq.s32.totalorder %s26, 0
      %p158 = por %p156, %p157
      %s160 = sadd.s32 %s159, 1
      %p163 = scmp.eq.s32.totalorder %s20, 3
      %p164 = scmp.ne.s32.totalorder %s159, %s161
      %p165 = scmp.eq.s32.totalorder %s20, 0
      %p166 = por %p164, %p165
      %p167 = scmp.ne.s32.totalorder %s159, %s161
      %p168 = scmp.eq.s32.totalorder %s25, 3
      %p169 = por %p167, %p168
      %p170 = scmp.ne.s32.totalorder %s161, %s162
      %p171 = scmp.eq.s32.totalorder %s25, 0
      %p172 = por %p170, %p171
      %p173 = scmp.ne.s32.totalorder %s161, %s162
      %p174 = scmp.eq.s32.totalorder %s26, 3
      %p175 = por %p173, %p174
      %p177 = scmp.ne.s32.totalorder %s162, %s176
      %p178 = scmp.eq.s32.totalorder %s26, 0
      %p179 = por %p177, %p178
      %s181 = sadd.s32 %s180, 1
      %p184 = scmp.eq.s32.totalorder %s20, 3
      %p185 = scmp.ne.s32.totalorder %s180, %s182
      %p186 = scmp.eq.s32.totalorder %s20, 0
      %p187 = por %p185, %p186
      %p188 = scmp.ne.s32.totalorder %s180, %s182
      %p189 = scmp.eq.s32.totalorder %s25, 3
      %p190 = por %p188, %p189
      %p191 = scmp.ne.s32.totalorder %s182, %s183
      %p192 = scmp.eq.s32.totalorder %s25, 0
      %p193 = por %p191, %p192
      %p194 = scmp.ne.s32.totalorder %s182, %s183
      %p195 = scmp.eq.s32.totalorder %s26, 3
      %p196 = por %p194, %p195
      %p198 = scmp.ne.s32.totalorder %s183, %s197
      %p199 = scmp.eq.s32.totalorder %s26, 0
      %p200 = por %p198, %p199
      %s202 = sadd.s32 %s201, 1
      %p205 = scmp.eq.s32.totalorder %s20, 3
      %p206 = scmp.ne.s32.totalorder %s201, %s203
      %p207 = scmp.eq.s32.totalorder %s20, 0
      %p208 = por %p206, %p207
      %p209 = scmp.ne.s32.totalorder %s201, %s203
      %p210 = scmp.eq.s32.totalorder %s25, 3
      %p211 = por %p209, %p210
      %p212 = scmp.ne.s32.totalorder %s203, %s204
      %p213 = scmp.eq.s32.totalorder %s25, 0
      %p214 = por %p212, %p213
      %p215 = scmp.ne.s32.totalorder %s203, %s204
      %p216 = scmp.eq.s32.totalorder %s26, 3
      %p217 = por %p215, %p216
      %p219 = scmp.ne.s32.totalorder %s204, %s218
      %p220 = scmp.eq.s32.totalorder %s26, 0
      %p221 = por %p219, %p220
      %s222 = ssub.s32 %s20, %s27
      %p223 = scmp.eq.s32.totalorder %s222, 0
      %s225 = sadd.s32 %s224, 1
      %s226 = scalar_select %p223, %s224, %s225
      %p229 = pneg %p223
      %p230 = scmp.eq.s32.totalorder %s20, 3
      %p231 = por %p229, %p230
      %p232 = scmp.ne.s32.totalorder %s224, %s227
      %p233 = scmp.eq.s32.totalorder %s20, 0
      %p234 = por %p232, %p233
      %p235 = scmp.ne.s32.totalorder %s224, %s227
      %p236 = scmp.eq.s32.totalorder %s25, 3
      %p237 = por %p235, %p236
      %p238 = scmp.ne.s32.totalorder %s227, %s228
      %p239 = scmp.eq.s32.totalorder %s25, 0
      %p240 = por %p238, %p239
      %p241 = scmp.ne.s32.totalorder %s227, %s228
      %p242 = scmp.eq.s32.totalorder %s26, 3
      %p243 = por %p241, %p242
      %p245 = scmp.ne.s32.totalorder %s228, %s244
      %p246 = scmp.eq.s32.totalorder %s26, 0
      %p247 = por %p245, %p246
      %p248 = scmp.le.s32.totalorder 1, %s20
      %p249 = scmp.lt.s32.totalorder %s20, 5
      %p250 = pnand %p248, %p249
      %p251 = pneg %p250
      // Predicated region
      $region9: #{tpu_custom_call.1} parent=5 // pred_check
        _
      $region10: #{tpu_custom_call.1} parent=5 // pred_check_branch
        %253 = sbr.rel (%p250) target = $region12
      $region11: #{tpu_custom_call.1} parent=5 // pred_region
        %s254 = ssub.s32 %s20, 1
        // Predicated region
        $region13: #{tpu_custom_call.1} parent=11 // pred_check
          %p255 = pneg %p67
        $region14: #{tpu_custom_call.1} parent=11 // pred_check_branch
          %257 = sbr.rel (%p255) target = $region16
        $region15: #{tpu_custom_call.1} parent=11 // pred_region
          _
        $region16: #{tpu_custom_call.1} parent=11 // pred_fallthru
          _
        // Predicated region
        $region17: #{tpu_custom_call.1} parent=11 // pred_check
          %p258 = pneg %p88
        $region18: #{tpu_custom_call.1} parent=11 // pred_check_branch
          %260 = sbr.rel (%p258) target = $region20
        $region19: #{tpu_custom_call.1} parent=11 // pred_region
          _
        $region20: #{tpu_custom_call.1} parent=11 // pred_fallthru
          _
        // Predicated region
        $region21: #{tpu_custom_call.1} parent=11 // pred_check
          %p261 = pneg %p109
        $region22: #{tpu_custom_call.1} parent=11 // pred_check_branch
          %263 = sbr.rel (%p261) target = $region24
        $region23: #{tpu_custom_call.1} parent=11 // pred_region
          _
        $region24: #{tpu_custom_call.1} parent=11 // pred_fallthru
          _
        // Predicated region
        $region25: #{tpu_custom_call.1} parent=11 // pred_check
          %p264 = pneg %p130
        $region26: #{tpu_custom_call.1} parent=11 // pred_check_branch
          %266 = sbr.rel (%p264) target = $region28
        $region27: #{tpu_custom_call.1} parent=11 // pred_region
          _
        $region28: #{tpu_custom_call.1} parent=11 // pred_fallthru
          _
        // Predicated region
        $region29: #{tpu_custom_call.1} parent=11 // pred_check
          %p267 = pneg %p151
        $region30: #{tpu_custom_call.1} parent=11 // pred_check_branch
          %269 = sbr.rel (%p267) target = $region32
        $region31: #{tpu_custom_call.1} parent=11 // pred_region
          _
        $region32: #{tpu_custom_call.1} parent=11 // pred_fallthru
          _
        // Predicated region
        $region33: #{tpu_custom_call.1} parent=11 // pred_check
          %p270 = pneg %p172
        $region34: #{tpu_custom_call.1} parent=11 // pred_check_branch
          %272 = sbr.rel (%p270) target = $region36
        $region35: #{tpu_custom_call.1} parent=11 // pred_region
          _
        $region36: #{tpu_custom_call.1} parent=11 // pred_fallthru
          _
        // Predicated region
        $region37: #{tpu_custom_call.1} parent=11 // pred_check
          %p273 = pneg %p193
        $region38: #{tpu_custom_call.1} parent=11 // pred_check_branch
          %275 = sbr.rel (%p273) target = $region40
        $region39: #{tpu_custom_call.1} parent=11 // pred_region
          _
        $region40: #{tpu_custom_call.1} parent=11 // pred_fallthru
          _
        // Predicated region
        $region41: #{tpu_custom_call.1} parent=11 // pred_check
          %p276 = pneg %p214
        $region42: #{tpu_custom_call.1} parent=11 // pred_check_branch
          %278 = sbr.rel (%p276) target = $region44
        $region43: #{tpu_custom_call.1} parent=11 // pred_region
          _
        $region44: #{tpu_custom_call.1} parent=11 // pred_fallthru
          _
      $region12: #{tpu_custom_call.1} parent=5 // pred_fallthru
        _
      %p279 = scmp.lt.s32.totalorder %s20, 4
      // Predicated region
      $region45: #{tpu_custom_call.1} parent=5 // pred_check
        %p280 = pneg %p279
      $region46: #{tpu_custom_call.1} parent=5 // pred_check_branch
        %282 = sbr.rel (%p280) target = $region48
      $region47: #{tpu_custom_call.1} parent=5 // pred_region
        // Predicated region
        $region49: #{tpu_custom_call.1} parent=47 // pred_check
          %p283 = pneg %p40
        $region50: #{tpu_custom_call.1} parent=47 // pred_check_branch
          %285 = sbr.rel (%p283) target = $region52
        $region51: #{tpu_custom_call.1} parent=47 // pred_region
          %p286 = scmp.lt.s32.totalorder %s20, 3
          %s287 = scalar_select %p286, %s20, 3
          %s288 = smul.addr %s287, 4
          %s289 = scalar_lea.vmem %s0, %s288
        $region52: #{tpu_custom_call.1} parent=47 // pred_fallthru
          _
      $region48: #{tpu_custom_call.1} parent=5 // pred_fallthru
        _
      %p290 = scmp.le.s32.totalorder 1, %s20
      %p291 = scmp.lt.s32.totalorder %s20, 5
      %p292 = pnand %p290, %p291
      %p293 = pneg %p292
      // Predicated region
      $region53: #{tpu_custom_call.1} parent=5 // pred_check
        _
      $region54: #{tpu_custom_call.1} parent=5 // pred_check_branch
        %295 = sbr.rel (%p292) target = $region56
      $region55: #{tpu_custom_call.1} parent=5 // pred_region
        %s296 = ssub.s32 %s20, 1
        %p297 = scmp.lt.s32.totalorder %s25, 3
        %s298 = scalar_select %p297, %s25, 3
        %s299 = smul.addr %s298, 4
        %s300 = scalar_lea.vmem %s0, %s299
        %p301 = pneg %p46
        %p302 = pneg %p43
        %p303 = pneg %p67
        %p304 = pneg %p64
        %p305 = pneg %p88
        %p306 = pneg %p85
        %p307 = pneg %p109
        %p308 = pneg %p106
        %p309 = pneg %p130
        %p310 = pneg %p127
        %p311 = pneg %p151
        %p312 = pneg %p148
        %p313 = pneg %p172
        %p314 = pneg %p169
        %p315 = pneg %p193
        %p316 = pneg %p190
        %p317 = pneg %p214
        %p318 = pneg %p211
        %p319 = pneg %p240
        %p320 = pneg %p237
        %s321 = sand.u32 %s227, 1
        %s322 = scalar_lea.sflag [#allocation5], %s321
        %s323 = sand.u32 %s227, 1
        %s324 = smul.addr %s323, 4
        %s325 = scalar_lea.vmem [#allocation4], %s324
        %p326 = scmp.lt.s32.totalorder %s25, 3
        %s327 = scalar_select %p326, %s25, 3
        %s328 = smul.addr %s327, 4
        %s329 = scalar_lea.vmem %s0, %s328
        %v330 = vld [vmem:[%s329] sm:$0xf]
        %v331 = vld [vmem:[%s1] sm:$0xff]
        %v332 = vld [vmem:[%s1 + $0x8] sm:$0xff]
        %334 = vset.pattern.permute.xlu0 0
        %335 = vperm.xlu0 %334, %v331
        %v336 = vpop.permute.xlu0 %335
        %339 = vset.pattern.permute.xlu0 0
        %340 = vperm.xlu0 %339, %v332
        %v341 = vpop.permute.xlu0 %340
        %v344 = vlaneseq
        %v345 = vshrl.u32 %v344, 7
        %v346 = vsub.s32 0, %v345
        %v347 = vrot.slane %v330, %v346
        %v348 = vlaneseq
        %v349 = vshrl.u32 %v348, 7
        %v350 = vsub.s32 1, %v349
        %v351 = vrot.slane %v330, %v350
        %v352 = vlaneseq
        %v353 = vshrl.u32 %v352, 7
        %v354 = vsub.s32 2, %v353
        %v355 = vrot.slane %v330, %v354
        %v356 = vlaneseq
        %v357 = vshrl.u32 %v356, 7
        %v358 = vsub.s32 3, %v357
        %v359 = vrot.slane %v330, %v358
        %v364 = vmul.f32 %v336, %v347
        %v365 = vmul.f32 %v336, %v351
        %v366 = vmul.f32 %v336, %v355
        %v367 = vmul.f32 %v336, %v359
        %v368 = vmul.f32 %v341, %v347
        %v369 = vmul.f32 %v341, %v351
        %v370 = vmul.f32 %v341, %v355
        %v371 = vmul.f32 %v341, %v359
        %v372 = vld [vmem:[%s2] sm:$0xff]
        %v373 = vld [vmem:[%s2 + $0x8] sm:$0xff]
        %375 = vset.pattern.permute.xlu0 0
        %376 = vperm.xlu0 %375, %v372
        %v377 = vpop.permute.xlu0 %376
        %380 = vset.pattern.permute.xlu0 0
        %381 = vperm.xlu0 %380, %v373
        %v382 = vpop.permute.xlu0 %381
        %v384 = vadd.f32 %v364, %v377
        %v385 = vadd.f32 %v365, %v377
        %v386 = vadd.f32 %v366, %v377
        %v387 = vadd.f32 %v367, %v377
        %v388 = vadd.f32 %v368, %v382
        %v389 = vadd.f32 %v369, %v382
        %v390 = vadd.f32 %v370, %v382
        %v391 = vadd.f32 %v371, %v382
        %400 = vrot.lane.b32.xlu0 %v384, 1
        %v401 = vpop.permute.xlu0 %400
        %402 = vrot.lane.b32.xlu0 %v385, 1
        %v403 = vpop.permute.xlu0 %402
        %404 = vrot.lane.b32.xlu0 %v386, 1
        %v405 = vpop.permute.xlu0 %404
        %406 = vrot.lane.b32.xlu0 %v387, 1
        %v407 = vpop.permute.xlu0 %406
        %408 = vrot.lane.b32.xlu0 %v388, 1
        %v409 = vpop.permute.xlu0 %408
        %410 = vrot.lane.b32.xlu0 %v389, 1
        %v411 = vpop.permute.xlu0 %410
        %412 = vrot.lane.b32.xlu0 %v390, 1
        %v413 = vpop.permute.xlu0 %412
        %414 = vrot.lane.b32.xlu0 %v391, 1
        %v415 = vpop.permute.xlu0 %414
        %vm416 = vcmask 7168
        %v417 = vsel %vm416, %v401, %v403
        %v418 = vsel %vm416, %v403, %v405
        %v419 = vsel %vm416, %v405, %v407
        %v420 = vsel %vm416, %v409, %v411
        %v421 = vsel %vm416, %v411, %v413
        %v422 = vsel %vm416, %v413, %v415
        %vm433 = vcmask 1047560
        %434 = vst.msk [vmem:[#allocation2 + $0x8] sm:$0xff] %vm433, %v401
        %435 = vst [vmem:[#allocation2 + $0x10] sm:$0xff] %v417
        %436 = vst [vmem:[#allocation2 + $0x18] sm:$0xff] %v418
        %437 = vst [vmem:[#allocation2 + $0x20] sm:$0xff] %v419
        %438 = vst.msk [vmem:[#allocation2 + $0x28] sm:$0xff] %vm416, %v407
        %439 = vst.msk [vmem:[#allocation2 + $0x38] sm:$0xff] %vm433, %v409
        %440 = vst [vmem:[#allocation2 + $0x40] sm:$0xff] %v420
        %441 = vst [vmem:[#allocation2 + $0x48] sm:$0xff] %v421
        %442 = vst [vmem:[#allocation2 + $0x50] sm:$0xff] %v422
        %443 = vst.msk [vmem:[#allocation2 + $0x58] sm:$0xff] %vm416, %v415
        %444 = vst.msk [vmem:[#allocation2 + $0x8] sm:$0xff] %vm416, 0.0
        %445 = vst.msk [vmem:[#allocation2 + $0x38] sm:$0xff] %vm416, 0.0
        %446 = vst.msk [vmem:[#allocation2 + $0x18] sm:$0xff] %vm416, 0.0
        %447 = vst.msk [vmem:[#allocation2 + $0x48] sm:$0xff] %vm416, 0.0
        %448 = vst [vmem:[#allocation2 + $0x68] sm:$0xff] %v384
        %449 = vst [vmem:[#allocation2 + $0x70] sm:$0xff] %v385
        %450 = vst [vmem:[#allocation2 + $0x78] sm:$0xff] %v386
        %451 = vst [vmem:[#allocation2 + $0x80] sm:$0xff] %v387
        %452 = vst [vmem:[#allocation2 + $0x98] sm:$0xff] %v388
        %453 = vst [vmem:[#allocation2 + $0xa0] sm:$0xff] %v389
        %454 = vst [vmem:[#allocation2 + $0xa8] sm:$0xff] %v390
        %455 = vst [vmem:[#allocation2 + $0xb0] sm:$0xff] %v391
        %456 = vrot.lane.b32.xlu0 %v384, 127
        %v457 = vpop.permute.xlu0 %456
        %458 = vrot.lane.b32.xlu0 %v385, 127
        %v459 = vpop.permute.xlu0 %458
        %460 = vrot.lane.b32.xlu0 %v386, 127
        %v461 = vpop.permute.xlu0 %460
        %462 = vrot.lane.b32.xlu0 %v387, 127
        %v463 = vpop.permute.xlu0 %462
        %464 = vrot.lane.b32.xlu0 %v388, 127
        %v465 = vpop.permute.xlu0 %464
        %466 = vrot.lane.b32.xlu0 %v389, 127
        %v467 = vpop.permute.xlu0 %466
        %468 = vrot.lane.b32.xlu0 %v390, 127
        %v469 = vpop.permute.xlu0 %468
        %470 = vrot.lane.b32.xlu0 %v391, 127
        %v471 = vpop.permute.xlu0 %470
        %vm472 = vcmask 1039360
        %v473 = vsel %vm472, %v457, %v459
        %v474 = vsel %vm472, %v459, %v461
        %v475 = vsel %vm472, %v461, %v463
        %v476 = vsel %vm472, %v465, %v467
        %v477 = vsel %vm472, %v467, %v469
        %v478 = vsel %vm472, %v469, %v471
        %vm489 = vcmask 1048568
        %490 = vst.msk [vmem:[#allocation2 + $0xc0] sm:$0xff] %vm489, %v457
        %491 = vst [vmem:[#allocation2 + $0xc8] sm:$0xff] %v473
        %492 = vst [vmem:[#allocation2 + $0xd0] sm:$0xff] %v474
        %493 = vst [vmem:[#allocation2 + $0xd8] sm:$0xff] %v475
        %494 = vst.msk [vmem:[#allocation2 + $0xe0] sm:$0xff] %vm472, %v463
        %495 = vst.msk [vmem:[#allocation2 + $0xf0] sm:$0xff] %vm489, %v465
        %496 = vst [vmem:[#allocation2 + $0xf8] sm:$0xff] %v476
        %497 = vst [vmem:[#allocation2 + $0x100] sm:$0xff] %v477
        %498 = vst [vmem:[#allocation2 + $0x108] sm:$0xff] %v478
        %499 = vst.msk [vmem:[#allocation2 + $0x110] sm:$0xff] %vm472, %v471
        %500 = vst.msk [vmem:[#allocation2 + $0xd0] sm:$0xff] %vm489, 0.0
        %501 = vst.msk [vmem:[#allocation2 + $0x100] sm:$0xff] %vm489, 0.0
        %502 = vst.msk [vmem:[#allocation2 + $0xe0] sm:$0xff] %vm489, 0.0
        %503 = vst.msk [vmem:[#allocation2 + $0x110] sm:$0xff] %vm489, 0.0
        %v504 = vld [vmem:[#allocation2 + $0x8] sm:$0xff]
        %v505 = vld [vmem:[#allocation2 + $0x10] sm:$0xff]
        %v506 = vld [vmem:[#allocation2 + $0x18] sm:$0xff]
        %v507 = vld [vmem:[#allocation2 + $0x20] sm:$0xff]
        %v508 = vld [vmem:[#allocation2 + $0x38] sm:$0xff]
        %v509 = vld [vmem:[#allocation2 + $0x40] sm:$0xff]
        %v510 = vld [vmem:[#allocation2 + $0x48] sm:$0xff]
        %v511 = vld [vmem:[#allocation2 + $0x50] sm:$0xff]
        %v512 = vld [vmem:[#allocation2 + $0x68] sm:$0xff]
        %v513 = vld [vmem:[#allocation2 + $0x70] sm:$0xff]
        %v514 = vld [vmem:[#allocation2 + $0x78] sm:$0xff]
        %v515 = vld [vmem:[#allocation2 + $0x80] sm:$0xff]
        %v516 = vld [vmem:[#allocation2 + $0x98] sm:$0xff]
        %v517 = vld [vmem:[#allocation2 + $0xa0] sm:$0xff]
        %v518 = vld [vmem:[#allocation2 + $0xa8] sm:$0xff]
        %v519 = vld [vmem:[#allocation2 + $0xb0] sm:$0xff]
        %v520 = vld [vmem:[#allocation2 + $0xc8] sm:$0xff]
        %v521 = vld [vmem:[#allocation2 + $0xd0] sm:$0xff]
        %v522 = vld [vmem:[#allocation2 + $0xd8] sm:$0xff]
        %v523 = vld [vmem:[#allocation2 + $0xe0] sm:$0xff]
        %v524 = vld [vmem:[#allocation2 + $0xf8] sm:$0xff]
        %v525 = vld [vmem:[#allocation2 + $0x100] sm:$0xff]
        %v526 = vld [vmem:[#allocation2 + $0x108] sm:$0xff]
        %v527 = vld [vmem:[#allocation2 + $0x110] sm:$0xff]
        %v528 = vld [vmem:[%s3] sm:$0xff]
        %v529 = vld [vmem:[%s3 + $0x8] sm:$0xff]
        %v530 = vld [vmem:[%s4] sm:$0xff]
        %v531 = vld [vmem:[%s4 + $0x8] sm:$0xff]
        %533 = vset.pattern.permute.xlu0 0
        %534 = vperm.xlu0 %533, %v530
        %v535 = vpop.permute.xlu0 %534
        %538 = vset.pattern.permute.xlu0 0
        %539 = vperm.xlu0 %538, %v531
        %v540 = vpop.permute.xlu0 %539
        %vm542 = vcmask 392192
        %v544 = vsel %vm542, %v528, 0
        %v547 = vsel %vm542, %v529, 0
        %549 = vmatprep.subr.mxu0 %v505
        %550 = vmatpush1.msra.mxu0 %v504
        %551 = vmatprep.subr.mxu0 %v509
        %552 = vmatpush1.msra.mxu0 %v508
        %553 = vmatprep.subr.mxu0 %v513
        %554 = vmatpush1.msra.mxu0 %v512
        %555 = vmatprep.subr.mxu0 %v517
        %556 = vmatpush1.msra.mxu0 %v516
        %557 = vmatprep.subr.mxu0 %v521
        %558 = vmatpush1.msra.mxu0 %v520
        %559 = vmatprep.subr.mxu0 %v525
        %560 = vmatpush1.msra.mxu0 %v524
        %561 = vmatprep.subr.mxu0 0.0
        %562 = vmatpush1.msra.mxu0 0.0
        %563 = vmatprep.subr.mxu0 0.0
        %564 = vmatpush1.msra.mxu0 0.0
        %565 = vmatprep.subr.mxu0 0.0
        %566 = vmatpush1.msra.mxu0 0.0
        %567 = vmatprep.subr.mxu0 0.0
        %568 = vmatpush1.msra.mxu0 0.0
        %569 = vmatprep.subr.mxu0 0.0
        %570 = vmatpush1.msra.mxu0 0.0
        %571 = vmatprep.subr.mxu0 0.0
        %572 = vmatpush1.msra.mxu0 0.0
        %573 = vmatprep.subr.mxu0 0.0
        %574 = vmatpush1.msra.mxu0 0.0
        %575 = vmatprep.subr.mxu0 0.0
        %576 = vmatpush1.msra.mxu0 0.0
        %577 = vmatprep.subr.mxu0 0.0
        %578 = vmatpush1.msra.mxu0 0.0
        %579 = vmatprep.subr.mxu0 0.0
        %580 = vmatpush1.msra.mxu0 0.0
        %581 = vmatprep.subr.mxu0 0.0
        %582 = vmatpush1.msra.mxu0 0.0
        %583 = vmatprep.subr.mxu0 0.0
        %584 = vmatpush1.msra.mxu0 0.0
        %585 = vmatprep.subr.mxu0 0.0
        %586 = vmatpush1.msra.mxu0 0.0
        %587 = vmatprep.subr.mxu0 0.0
        %588 = vmatpush1.msra.mxu0 0.0
        %589 = vmatprep.subr.mxu0 0.0
        %590 = vmatpush1.msra.mxu0 0.0
        %591 = vmatprep.subr.mxu0 0.0
        %592 = vmatpush1.msra.mxu0 0.0
        %593 = vmatprep.subr.mxu0 0.0
        %594 = vmatpush1.msra.mxu0 0.0
        %595 = vmatprep.subr.mxu0 0.0
        %596 = vmatpush1.msra.mxu0 0.0
        %597 = vmatprep.subr.mxu0 0.0
        %598 = vmatpush1.msra.mxu0 0.0
        %599 = vmatprep.subr.mxu0 0.0
        %600 = vmatpush1.msra.mxu0 0.0
        %601 = vmatprep.subr.mxu0 0.0
        %602 = vmatpush1.msra.mxu0 0.0
        %603 = vmatprep.subr.mxu0 0.0
        %604 = vmatpush1.msra.mxu0 0.0
        %605 = vmatprep.subr.mxu0 0.0
        %606 = vmatpush1.msra.mxu0 0.0
        %607 = vmatprep.subr.mxu0 0.0
        %608 = vmatpush1.msra.mxu0 0.0
        %609 = vmatprep.subr.mxu0 0.0
        %610 = vmatpush1.msra.mxu0 0.0
        %611 = vmatprep.subr.mxu0 0.0
        %612 = vmatpush1.msra.mxu0 0.0
        %613 = vmatprep.mubr.f32.mxu0 0.0
        %614 = vmatmul.mubr.f32.gmra.mrb[0].mxu0 %v544
        %v615 = vpop.f32.mrb[0].mxu0
        %v616 = vadd.f32 %v535, %v615
        %v617 = vpop.f32.mrb[0].mxu0
        %v618 = vadd.f32 %v535, %v617
        %619 = vmatprep.mubr.f32.mxu0 0.0
        %620 = vmatmul.mubr.f32.gmra.mrb[0].mxu0 %v547
        %v621 = vpop.f32.mrb[0].mxu0
        %v622 = vadd.f32 %v540, %v621
        %v623 = vpop.f32.mrb[0].mxu0
        %v624 = vadd.f32 %v540, %v623
        %625 = vdwg.mxu0
        %626 = vmatprep.subr.mxu0 %v507
        %627 = vmatpush1.msra.mxu0 %v506
        %628 = vmatprep.subr.mxu0 %v511
        %629 = vmatpush1.msra.mxu0 %v510
        %630 = vmatprep.subr.mxu0 %v515
        %631 = vmatpush1.msra.mxu0 %v514
        %632 = vmatprep.subr.mxu0 %v519
        %633 = vmatpush1.msra.mxu0 %v518
        %634 = vmatprep.subr.mxu0 %v523
        %635 = vmatpush1.msra.mxu0 %v522
        %636 = vmatprep.subr.mxu0 %v527
        %637 = vmatpush1.msra.mxu0 %v526
        %638 = vmatprep.subr.mxu0 0.0
        %639 = vmatpush1.msra.mxu0 0.0
        %640 = vmatprep.subr.mxu0 0.0
        %641 = vmatpush1.msra.mxu0 0.0
        %642 = vmatprep.subr.mxu0 0.0
        %643 = vmatpush1.msra.mxu0 0.0
        %644 = vmatprep.subr.mxu0 0.0
        %645 = vmatpush1.msra.mxu0 0.0
        %646 = vmatprep.subr.mxu0 0.0
        %647 = vmatpush1.msra.mxu0 0.0
        %648 = vmatprep.subr.mxu0 0.0
        %649 = vmatpush1.msra.mxu0 0.0
        %650 = vmatprep.subr.mxu0 0.0
        %651 = vmatpush1.msra.mxu0 0.0
        %652 = vmatprep.subr.mxu0 0.0
        %653 = vmatpush1.msra.mxu0 0.0
        %654 = vmatprep.subr.mxu0 0.0
        %655 = vmatpush1.msra.mxu0 0.0
        %656 = vmatprep.subr.mxu0 0.0
        %657 = vmatpush1.msra.mxu0 0.0
        %658 = vmatprep.subr.mxu0 0.0
        %659 = vmatpush1.msra.mxu0 0.0
        %660 = vmatprep.subr.mxu0 0.0
        %661 = vmatpush1.msra.mxu0 0.0
        %662 = vmatprep.subr.mxu0 0.0
        %663 = vmatpush1.msra.mxu0 0.0
        %664 = vmatprep.subr.mxu0 0.0
        %665 = vmatpush1.msra.mxu0 0.0
        %666 = vmatprep.subr.mxu0 0.0
        %667 = vmatpush1.msra.mxu0 0.0
        %668 = vmatprep.subr.mxu0 0.0
        %669 = vmatpush1.msra.mxu0 0.0
        %670 = vmatprep.subr.mxu0 0.0
        %671 = vmatpush1.msra.mxu0 0.0
        %672 = vmatprep.subr.mxu0 0.0
        %673 = vmatpush1.msra.mxu0 0.0
        %674 = vmatprep.subr.mxu0 0.0
        %675 = vmatpush1.msra.mxu0 0.0
        %676 = vmatprep.subr.mxu0 0.0
        %677 = vmatpush1.msra.mxu0 0.0
        %678 = vmatprep.subr.mxu0 0.0
        %679 = vmatpush1.msra.mxu0 0.0
        %680 = vmatprep.subr.mxu0 0.0
        %681 = vmatpush1.msra.mxu0 0.0
        %682 = vmatprep.subr.mxu0 0.0
        %683 = vmatpush1.msra.mxu0 0.0
        %684 = vmatprep.subr.mxu0 0.0
        %685 = vmatpush1.msra.mxu0 0.0
        %686 = vmatprep.subr.mxu0 0.0
        %687 = vmatpush1.msra.mxu0 0.0
        %688 = vmatprep.subr.mxu0 0.0
        %689 = vmatpush1.msra.mxu0 0.0
        %690 = vmatprep.mubr.f32.mxu0 0.0
        %691 = vmatmul.mubr.f32.gmra.mrb[0].mxu0 %v544
        %v692 = vpop.f32.mrb[0].mxu0
        %v693 = vadd.f32 %v535, %v692
        %v694 = vpop.f32.mrb[0].mxu0
        %v695 = vadd.f32 %v535, %v694
        %696 = vmatprep.mubr.f32.mxu0 0.0
        %697 = vmatmul.mubr.f32.gmra.mrb[0].mxu0 %v547
        %v698 = vpop.f32.mrb[0].mxu0
        %v699 = vadd.f32 %v540, %v698
        %v700 = vpop.f32.mrb[0].mxu0
        %v701 = vadd.f32 %v540, %v700
        %702 = vdwg.mxu0
        %v703 = vtanh.pop %v616
        %v704 = vtanh.pop %v618
        %v705 = vtanh.pop %v693
        %v706 = vtanh.pop %v695
        %v707 = vxor.u32 %v622, 2147483648
        %v708 = vxor.u32 %v624, 2147483648
        %v709 = vxor.u32 %v699, 2147483648
        %v710 = vxor.u32 %v701, 2147483648
        %v711 = vmul.f32 %v707, 1.442695
        %v712 = vpow.pop %v711
        %v713 = vmul.f32 %v708, 1.442695
        %v714 = vpow.pop %v713
        %v715 = vmul.f32 %v709, 1.442695
        %v716 = vpow.pop %v715
        %v717 = vmul.f32 %v710, 1.442695
        %v718 = vpow.pop %v717
        %v719 = vadd.f32 %v712, 1.0
        %v720 = vadd.f32 %v714, 1.0
        %v721 = vadd.f32 %v716, 1.0
        %v722 = vadd.f32 %v718, 1.0
        %v723 = vrcp.pop %v719
        %v724 = vmul.f32 1.0, %v723
        %v725 = vrcp.pop %v720
        %v726 = vmul.f32 1.0, %v725
        %v727 = vrcp.pop %v721
        %v728 = vmul.f32 1.0, %v727
        %v729 = vrcp.pop %v722
        %v730 = vmul.f32 1.0, %v729
        %v731 = vmul.f32 %v703, %v724
        %v732 = vmul.f32 %v704, %v726
        %v733 = vmul.f32 %v705, %v728
        %v734 = vmul.f32 %v706, %v730
        %v735 = vld [vmem:[%s5] sm:$0xff]
        %v736 = vld [vmem:[%s5 + $0x8] sm:$0xff]
        %v737 = vld [vmem:[%s5 + $0x10] sm:$0xff]
        %v738 = vld [vmem:[%s5 + $0x18] sm:$0xff]
        %v739 = vld [vmem:[%s6] sm:$0xff]
        %v740 = vld [vmem:[%s6 + $0x8] sm:$0xff]
        %v741 = vld [vmem:[%s6 + $0x10] sm:$0xff]
        %v742 = vld [vmem:[%s6 + $0x18] sm:$0xff]
        %744 = vset.pattern.permute.xlu0 0
        %745 = vperm.xlu0 %744, %v739
        %v746 = vpop.permute.xlu0 %745
        %749 = vset.pattern.permute.xlu0 0
        %750 = vperm.xlu0 %749, %v740
        %v751 = vpop.permute.xlu0 %750
        %754 = vset.pattern.permute.xlu0 0
        %755 = vperm.xlu0 %754, %v741
        %v756 = vpop.permute.xlu0 %755
        %759 = vset.pattern.permute.xlu0 0
        %760 = vperm.xlu0 %759, %v742
        %v761 = vpop.permute.xlu0 %760
        %vm763 = vcmask 64512
        %v765 = vsel %vm763, %v735, 0
        %v768 = vsel %vm763, %v736, 0
        %v771 = vsel %vm763, %v737, 0
        %v774 = vsel %vm763, %v738, 0
        %776 = vmatprep.subr.mxu0 %v732
        %777 = vmatpush1.msra.mxu0 %v731
        %778 = vmatprep.subr.mxu0 0.0
        %779 = vmatpush1.msra.mxu0 0.0
        %780 = vmatprep.subr.mxu0 0.0
        %781 = vmatpush1.msra.mxu0 0.0
        %782 = vmatprep.subr.mxu0 0.0
        %783 = vmatpush1.msra.mxu0 0.0
        %784 = vmatprep.subr.mxu0 0.0
        %785 = vmatpush1.msra.mxu0 0.0
        %786 = vmatprep.subr.mxu0 0.0
        %787 = vmatpush1.msra.mxu0 0.0
        %788 = vmatprep.subr.mxu0 0.0
        %789 = vmatpush1.msra.mxu0 0.0
        %790 = vmatprep.subr.mxu0 0.0
        %791 = vmatpush1.msra.mxu0 0.0
        %792 = vmatprep.subr.mxu0 0.0
        %793 = vmatpush1.msra.mxu0 0.0
        %794 = vmatprep.subr.mxu0 0.0
        %795 = vmatpush1.msra.mxu0 0.0
        %796 = vmatprep.subr.mxu0 0.0
        %797 = vmatpush1.msra.mxu0 0.0
        %798 = vmatprep.subr.mxu0 0.0
        %799 = vmatpush1.msra.mxu0 0.0
        %800 = vmatprep.subr.mxu0 0.0
        %801 = vmatpush1.msra.mxu0 0.0
        %802 = vmatprep.subr.mxu0 0.0
        %803 = vmatpush1.msra.mxu0 0.0
        %804 = vmatprep.subr.mxu0 0.0
        %805 = vmatpush1.msra.mxu0 0.0
        %806 = vmatprep.subr.mxu0 0.0
        %807 = vmatpush1.msra.mxu0 0.0
        %808 = vmatprep.subr.mxu0 0.0
        %809 = vmatpush1.msra.mxu0 0.0
        %810 = vmatprep.subr.mxu0 0.0
        %811 = vmatpush1.msra.mxu0 0.0
        %812 = vmatprep.subr.mxu0 0.0
        %813 = vmatpush1.msra.mxu0 0.0
        %814 = vmatprep.subr.mxu0 0.0
        %815 = vmatpush1.msra.mxu0 0.0
        %816 = vmatprep.subr.mxu0 0.0
        %817 = vmatpush1.msra.mxu0 0.0
        %818 = vmatprep.subr.mxu0 0.0
        %819 = vmatpush1.msra.mxu0 0.0
        %820 = vmatprep.subr.mxu0 0.0
        %821 = vmatpush1.msra.mxu0 0.0
        %822 = vmatprep.subr.mxu0 0.0
        %823 = vmatpush1.msra.mxu0 0.0
        %824 = vmatprep.subr.mxu0 0.0
        %825 = vmatpush1.msra.mxu0 0.0
        %826 = vmatprep.subr.mxu0 0.0
        %827 = vmatpush1.msra.mxu0 0.0
        %828 = vmatprep.subr.mxu0 0.0
        %829 = vmatpush1.msra.mxu0 0.0
        %830 = vmatprep.subr.mxu0 0.0
        %831 = vmatpush1.msra.mxu0 0.0
        %832 = vmatprep.subr.mxu0 0.0
        %833 = vmatpush1.msra.mxu0 0.0
        %834 = vmatprep.subr.mxu0 0.0
        %835 = vmatpush1.msra.mxu0 0.0
        %836 = vmatprep.subr.mxu0 0.0
        %837 = vmatpush1.msra.mxu0 0.0
        %838 = vmatprep.subr.mxu0 0.0
        %839 = vmatpush1.msra.mxu0 0.0
        %840 = vmatprep.mubr.f32.mxu0 0.0
        %841 = vmatmul.mubr.f32.gmra.mrb[0].mxu0 %v765
        %v842 = vpop.f32.mrb[0].mxu0
        %v843 = vadd.f32 %v746, %v842
        %v844 = vpop.f32.mrb[0].mxu0
        %v845 = vadd.f32 %v746, %v844
        %846 = vmatprep.mubr.f32.mxu0 0.0
        %847 = vmatmul.mubr.f32.gmra.mrb[0].mxu0 %v768
        %v848 = vpop.f32.mrb[0].mxu0
        %v849 = vadd.f32 %v751, %v848
        %v850 = vpop.f32.mrb[0].mxu0
        %v851 = vadd.f32 %v751, %v850
        %852 = vmatprep.mubr.f32.mxu0 0.0
        %853 = vmatmul.mubr.f32.gmra.mrb[0].mxu0 %v771
        %v854 = vpop.f32.mrb[0].mxu0
        %v855 = vadd.f32 %v756, %v854
        %v856 = vpop.f32.mrb[0].mxu0
        %v857 = vadd.f32 %v756, %v856
        %858 = vmatprep.mubr.f32.mxu0 0.0
        %859 = vmatmul.mubr.f32.gmra.mrb[0].mxu0 %v774
        %v860 = vpop.f32.mrb[0].mxu0
        %v861 = vadd.f32 %v761, %v860
        %v862 = vpop.f32.mrb[0].mxu0
        %v863 = vadd.f32 %v761, %v862
        %864 = vdwg.mxu0
        %865 = vmatprep.subr.mxu0 %v734
        %866 = vmatpush1.msra.mxu0 %v733
        %867 = vmatprep.subr.mxu0 0.0
        %868 = vmatpush1.msra.mxu0 0.0
        %869 = vmatprep.subr.mxu0 0.0
        %870 = vmatpush1.msra.mxu0 0.0
        %871 = vmatprep.subr.mxu0 0.0
        %872 = vmatpush1.msra.mxu0 0.0
        %873 = vmatprep.subr.mxu0 0.0
        %874 = vmatpush1.msra.mxu0 0.0
        %875 = vmatprep.subr.mxu0 0.0
        %876 = vmatpush1.msra.mxu0 0.0
        %877 = vmatprep.subr.mxu0 0.0
        %878 = vmatpush1.msra.mxu0 0.0
        %879 = vmatprep.subr.mxu0 0.0
        %880 = vmatpush1.msra.mxu0 0.0
        %881 = vmatprep.subr.mxu0 0.0
        %882 = vmatpush1.msra.mxu0 0.0
        %883 = vmatprep.subr.mxu0 0.0
        %884 = vmatpush1.msra.mxu0 0.0
        %885 = vmatprep.subr.mxu0 0.0
        %886 = vmatpush1.msra.mxu0 0.0
        %887 = vmatprep.subr.mxu0 0.0
        %888 = vmatpush1.msra.mxu0 0.0
        %889 = vmatprep.subr.mxu0 0.0
        %890 = vmatpush1.msra.mxu0 0.0
        %891 = vmatprep.subr.mxu0 0.0
        %892 = vmatpush1.msra.mxu0 0.0
        %893 = vmatprep.subr.mxu0 0.0
        %894 = vmatpush1.msra.mxu0 0.0
        %895 = vmatprep.subr.mxu0 0.0
        %896 = vmatpush1.msra.mxu0 0.0
        %897 = vmatprep.subr.mxu0 0.0
        %898 = vmatpush1.msra.mxu0 0.0
        %899 = vmatprep.subr.mxu0 0.0
        %900 = vmatpush1.msra.mxu0 0.0
        %901 = vmatprep.subr.mxu0 0.0
        %902 = vmatpush1.msra.mxu0 0.0
        %903 = vmatprep.subr.mxu0 0.0
        %904 = vmatpush1.msra.mxu0 0.0
        %905 = vmatprep.subr.mxu0 0.0
        %906 = vmatpush1.msra.mxu0 0.0
        %907 = vmatprep.subr.mxu0 0.0
        %908 = vmatpush1.msra.mxu0 0.0
        %909 = vmatprep.subr.mxu0 0.0
        %910 = vmatpush1.msra.mxu0 0.0
        %911 = vmatprep.subr.mxu0 0.0
        %912 = vmatpush1.msra.mxu0 0.0
        %913 = vmatprep.subr.mxu0 0.0
        %914 = vmatpush1.msra.mxu0 0.0
        %915 = vmatprep.subr.mxu0 0.0
        %916 = vmatpush1.msra.mxu0 0.0
        %917 = vmatprep.subr.mxu0 0.0
        %918 = vmatpush1.msra.mxu0 0.0
        %919 = vmatprep.subr.mxu0 0.0
        %920 = vmatpush1.msra.mxu0 0.0
        %921 = vmatprep.subr.mxu0 0.0
        %922 = vmatpush1.msra.mxu0 0.0
        %923 = vmatprep.subr.mxu0 0.0
        %924 = vmatpush1.msra.mxu0 0.0
        %925 = vmatprep.subr.mxu0 0.0
        %926 = vmatpush1.msra.mxu0 0.0
        %927 = vmatprep.subr.mxu0 0.0
        %928 = vmatpush1.msra.mxu0 0.0
        %929 = vmatprep.mubr.f32.mxu0 0.0
        %930 = vmatmul.mubr.f32.gmra.mrb[0].mxu0 %v765
        %v931 = vpop.f32.mrb[0].mxu0
        %v932 = vadd.f32 %v746, %v931
        %v933 = vpop.f32.mrb[0].mxu0
        %v934 = vadd.f32 %v746, %v933
        %935 = vmatprep.mubr.f32.mxu0 0.0
        %936 = vmatmul.mubr.f32.gmra.mrb[0].mxu0 %v768
        %v937 = vpop.f32.mrb[0].mxu0
        %v938 = vadd.f32 %v751, %v937
        %v939 = vpop.f32.mrb[0].mxu0
        %v940 = vadd.f32 %v751, %v939
        %941 = vmatprep.mubr.f32.mxu0 0.0
        %942 = vmatmul.mubr.f32.gmra.mrb[0].mxu0 %v771
        %v943 = vpop.f32.mrb[0].mxu0
        %v944 = vadd.f32 %v756, %v943
        %v945 = vpop.f32.mrb[0].mxu0
        %v946 = vadd.f32 %v756, %v945
        %947 = vmatprep.mubr.f32.mxu0 0.0
        %948 = vmatmul.mubr.f32.gmra.mrb[0].mxu0 %v774
        %v949 = vpop.f32.mrb[0].mxu0
        %v950 = vadd.f32 %v761, %v949
        %v951 = vpop.f32.mrb[0].mxu0
        %v952 = vadd.f32 %v761, %v951
        %953 = vdwg.mxu0
        %v954 = vadd.f32 %v843, 0.0
        %v955 = vadd.f32 %v845, 0.0
        %v956 = vadd.f32 %v932, 0.0
        %v957 = vadd.f32 %v934, 0.0
        %v958 = vadd.f32 %v849, 0.0
        %v959 = vadd.f32 %v851, 0.0
        %v960 = vadd.f32 %v938, 0.0
        %v961 = vadd.f32 %v940, 0.0
        %v962 = vadd.f32 %v855, %v384
        %v963 = vadd.f32 %v857, %v385
        %v964 = vadd.f32 %v944, %v386
        %v965 = vadd.f32 %v946, %v387
        %v966 = vadd.f32 %v861, %v388
        %v967 = vadd.f32 %v863, %v389
        %v968 = vadd.f32 %v950, %v390
        %v969 = vadd.f32 %v952, %v391
        %v970 = vmul.f32 %v962, 0.70710677
        %v971 = vmul.f32 %v963, 0.70710677
        %v972 = vmul.f32 %v964, 0.70710677
        %v973 = vmul.f32 %v965, 0.70710677
        %v974 = vmul.f32 %v966, 0.70710677
        %v975 = vmul.f32 %v967, 0.70710677
        %v976 = vmul.f32 %v968, 0.70710677
        %v977 = vmul.f32 %v969, 0.70710677
        %986 = vrot.lane.b32.xlu0 %v970, 2
        %v987 = vpop.permute.xlu0 %986
        %988 = vrot.lane.b32.xlu0 %v971, 2
        %v989 = vpop.permute.xlu0 %988
        %990 = vrot.lane.b32.xlu0 %v972, 2
        %v991 = vpop.permute.xlu0 %990
        %992 = vrot.lane.b32.xlu0 %v973, 2
        %v993 = vpop.permute.xlu0 %992
        %994 = vrot.lane.b32.xlu0 %v974, 2
        %v995 = vpop.permute.xlu0 %994
        %996 = vrot.lane.b32.xlu0 %v975, 2
        %v997 = vpop.permute.xlu0 %996
        %998 = vrot.lane.b32.xlu0 %v976, 2
        %v999 = vpop.permute.xlu0 %998
        %1000 = vrot.lane.b32.xlu0 %v977, 2
        %v1001 = vpop.permute.xlu0 %1000
        %vm1002 = vcmask 15360
        %v1003 = vsel %vm1002, %v987, %v989
        %v1004 = vsel %vm1002, %v989, %v991
        %v1005 = vsel %vm1002, %v991, %v993
        %v1006 = vsel %vm1002, %v995, %v997
        %v1007 = vsel %vm1002, %v997, %v999
        %v1008 = vsel %vm1002, %v999, %v1001
        %vm1019 = vcmask 1047568
        %1020 = vst.msk [vmem:[#allocation2 + $0x8] sm:$0xff] %vm1019, %v987
        %1021 = vst [vmem:[#allocation2 + $0x10] sm:$0xff] %v1003
        %1022 = vst [vmem:[#allocation2 + $0x18] sm:$0xff] %v1004
        %1023 = vst [vmem:[#allocation2 + $0x20] sm:$0xff] %v1005
        %1024 = vst.msk [vmem:[#allocation2 + $0x28] sm:$0xff] %vm1002, %v993
        %1025 = vst.msk [vmem:[#allocation2 + $0x38] sm:$0xff] %vm1019, %v995
        %1026 = vst [vmem:[#allocation2 + $0x40] sm:$0xff] %v1006
        %1027 = vst [vmem:[#allocation2 + $0x48] sm:$0xff] %v1007
        %1028 = vst [vmem:[#allocation2 + $0x50] sm:$0xff] %v1008
        %1029 = vst.msk [vmem:[#allocation2 + $0x58] sm:$0xff] %vm1002, %v1001
        %1030 = vst.msk [vmem:[#allocation2 + $0x8] sm:$0xff] %vm1002, 0.0
        %1031 = vst.msk [vmem:[#allocation2 + $0x38] sm:$0xff] %vm1002, 0.0
        %1032 = vst.msk [vmem:[#allocation2 + $0x18] sm:$0xff] %vm1002, 0.0
        %1033 = vst.msk [vmem:[#allocation2 + $0x48] sm:$0xff] %vm1002, 0.0
        %1034 = vst [vmem:[#allocation2 + $0x68] sm:$0xff] %v970
        %1035 = vst [vmem:[#allocation2 + $0x70] sm:$0xff] %v971
        %1036 = vst [vmem:[#allocation2 + $0x78] sm:$0xff] %v972
        %1037 = vst [vmem:[#allocation2 + $0x80] sm:$0xff] %v973
        %1038 = vst [vmem:[#allocation2 + $0x98] sm:$0xff] %v974
        %1039 = vst [vmem:[#allocation2 + $0xa0] sm:$0xff] %v975
        %1040 = vst [vmem:[#allocation2 + $0xa8] sm:$0xff] %v976
        %1041 = vst [vmem:[#allocation2 + $0xb0] sm:$0xff] %v977
        %1042 = vrot.lane.b32.xlu0 %v970, 126
        %v1043 = vpop.permute.xlu0 %1042
        %1044 = vrot.lane.b32.xlu0 %v971, 126
        %v1045 = vpop.permute.xlu0 %1044
        %1046 = vrot.lane.b32.xlu0 %v972, 126
        %v1047 = vpop.permute.xlu0 %1046
        %1048 = vrot.lane.b32.xlu0 %v973, 126
        %v1049 = vpop.permute.xlu0 %1048
        %1050 = vrot.lane.b32.xlu0 %v974, 126
        %v1051 = vpop.permute.xlu0 %1050
        %1052 = vrot.lane.b32.xlu0 %v975, 126
        %v1053 = vpop.permute.xlu0 %1052
        %1054 = vrot.lane.b32.xlu0 %v976, 126
        %v1055 = vpop.permute.xlu0 %1054
        %1056 = vrot.lane.b32.xlu0 %v977, 126
        %v1057 = vpop.permute.xlu0 %1056
        %vm1058 = vcmask 1031168
        %v1059 = vsel %vm1058, %v1043, %v1045
        %v1060 = vsel %vm1058, %v1045, %v1047
        %v1061 = vsel %vm1058, %v1047, %v1049
        %v1062 = vsel %vm1058, %v1051, %v1053
        %v1063 = vsel %vm1058, %v1053, %v1055
        %v1064 = vsel %vm1058, %v1055, %v1057
        %vm1075 = vcmask 1048560
        %1076 = vst.msk [vmem:[#allocation2 + $0xc0] sm:$0xff] %vm1075, %v1043
        %1077 = vst [vmem:[#allocation2 + $0xc8] sm:$0xff] %v1059
        %1078 = vst [vmem:[#allocation2 + $0xd0] sm:$0xff] %v1060
        %1079 = vst [vmem:[#allocation2 + $0xd8] sm:$0xff] %v1061
        %1080 = vst.msk [vmem:[#allocation2 + $0xe0] sm:$0xff] %vm1058, %v1049
        %1081 = vst.msk [vmem:[#allocation2 + $0xf0] sm:$0xff] %vm1075, %v1051
        %1082 = vst [vmem:[#allocation2 + $0xf8] sm:$0xff] %v1062
        %1083 = vst [vmem:[#allocation2 + $0x100] sm:$0xff] %v1063
        %1084 = vst [vmem:[#allocation2 + $0x108] sm:$0xff] %v1064
        %1085 = vst.msk [vmem:[#allocation2 + $0x110] sm:$0xff] %vm1058, %v1057
        %1086 = vst.msk [vmem:[#allocation2 + $0xd0] sm:$0xff] %vm1075, 0.0
        %1087 = vst.msk [vmem:[#allocation2 + $0x100] sm:$0xff] %vm1075, 0.0
        %1088 = vst.msk [vmem:[#allocation2 + $0xe0] sm:$0xff] %vm1075, 0.0
        %1089 = vst.msk [vmem:[#allocation2 + $0x110] sm:$0xff] %vm1075, 0.0
        %v1090 = vld [vmem:[#allocation2 + $0x8] sm:$0xff]
        %v1091 = vld [vmem:[#allocation2 + $0x10] sm:$0xff]
        %v1092 = vld [vmem:[#allocation2 + $0x18] sm:$0xff]
        %v1093 = vld [vmem:[#allocation2 + $0x20] sm:$0xff]
        %v1094 = vld [vmem:[#allocation2 + $0x38] sm:$0xff]
        %v1095 = vld [vmem:[#allocation2 + $0x40] sm:$0xff]
        %v1096 = vld [vmem:[#allocation2 + $0x48] sm:$0xff]
        %v1097 = vld [vmem:[#allocation2 + $0x50] sm:$0xff]
        %v1098 = vld [vmem:[#allocation2 + $0x68] sm:$0xff]
        %v1099 = vld [vmem:[#allocation2 + $0x70] sm:$0xff]
        %v1100 = vld [vmem:[#allocation2 + $0x78] sm:$0xff]
        %v1101 = vld [vmem:[#allocation2 + $0x80] sm:$0xff]
        %v1102 = vld [vmem:[#allocation2 + $0x98] sm:$0xff]
        %v1103 = vld [vmem:[#allocation2 + $0xa0] sm:$0xff]
        %v1104 = vld [vmem:[#allocation2 + $0xa8] sm:$0xff]
        %v1105 = vld [vmem:[#allocation2 + $0xb0] sm:$0xff]
        %v1106 = vld [vmem:[#allocation2 + $0xc8] sm:$0xff]
        %v1107 = vld [vmem:[#allocation2 + $0xd0] sm:$0xff]
        %v1108 = vld [vmem:[#allocation2 + $0xd8] sm:$0xff]
        %v1109 = vld [vmem:[#allocation2 + $0xe0] sm:$0xff]
        %v1110 = vld [vmem:[#allocation2 + $0xf8] sm:$0xff]
        %v1111 = vld [vmem:[#allocation2 + $0x100] sm:$0xff]
        %v1112 = vld [vmem:[#allocation2 + $0x108] sm:$0xff]
        %v1113 = vld [vmem:[#allocation2 + $0x110] sm:$0xff]
        %s1114 = scalar_lea.vmem %s3, 16
        %v1115 = vld [vmem:[%s1114] sm:$0xff]
        %v1116 = vld [vmem:[%s1114 + $0x8] sm:$0xff]
        %s1117 = scalar_lea.vmem %s4, 16
        %v1118 = vld [vmem:[%s1117] sm:$0xff]
        %v1119 = vld [vmem:[%s1117 + $0x8] sm:$0xff]
        %1121 = vset.pattern.permute.xlu0 0
        %1122 = vperm.xlu0 %1121, %v1118
        %v1123 = vpop.permute.xlu0 %1122
        %1126 = vset.pattern.permute.xlu0 0
        %1127 = vperm.xlu0 %1126, %v1119
        %v1128 = vpop.permute.xlu0 %1127
        %v1131 = vsel %vm542, %v1115, 0
        %v1134 = vsel %vm542, %v1116, 0
        %1136 = vmatprep.subr.mxu0 %v1091
        %1137 = vmatpush1.msra.mxu0 %v1090
        %1138 = vmatprep.subr.mxu0 %v1095
        %1139 = vmatpush1.msra.mxu0 %v1094
        %1140 = vmatprep.subr.mxu0 %v1099
        %1141 = vmatpush1.msra.mxu0 %v1098
        %1142 = vmatprep.subr.mxu0 %v1103
        %1143 = vmatpush1.msra.mxu0 %v1102
        %1144 = vmatprep.subr.mxu0 %v1107
        %1145 = vmatpush1.msra.mxu0 %v1106
        %1146 = vmatprep.subr.mxu0 %v1111
        %1147 = vmatpush1.msra.mxu0 %v1110
        %1148 = vmatprep.subr.mxu0 0.0
        %1149 = vmatpush1.msra.mxu0 0.0
        %1150 = vmatprep.subr.mxu0 0.0
        %1151 = vmatpush1.msra.mxu0 0.0
        %1152 = vmatprep.subr.mxu0 0.0
        %1153 = vmatpush1.msra.mxu0 0.0
        %1154 = vmatprep.subr.mxu0 0.0
        %1155 = vmatpush1.msra.mxu0 0.0
        %1156 = vmatprep.subr.mxu0 0.0
        %1157 = vmatpush1.msra.mxu0 0.0
        %1158 = vmatprep.subr.mxu0 0.0
        %1159 = vmatpush1.msra.mxu0 0.0
        %1160 = vmatprep.subr.mxu0 0.0
        %1161 = vmatpush1.msra.mxu0 0.0
        %1162 = vmatprep.subr.mxu0 0.0
        %1163 = vmatpush1.msra.mxu0 0.0
        %1164 = vmatprep.subr.mxu0 0.0
        %1165 = vmatpush1.msra.mxu0 0.0
        %1166 = vmatprep.subr.mxu0 0.0
        %1167 = vmatpush1.msra.mxu0 0.0
        %1168 = vmatprep.subr.mxu0 0.0
        %1169 = vmatpush1.msra.mxu0 0.0
        %1170 = vmatprep.subr.mxu0 0.0
        %1171 = vmatpush1.msra.mxu0 0.0
        %1172 = vmatprep.subr.mxu0 0.0
        %1173 = vmatpush1.msra.mxu0 0.0
        %1174 = vmatprep.subr.mxu0 0.0
        %1175 = vmatpush1.msra.mxu0 0.0
        %1176 = vmatprep.subr.mxu0 0.0
        %1177 = vmatpush1.msra.mxu0 0.0
        %1178 = vmatprep.subr.mxu0 0.0
        %1179 = vmatpush1.msra.mxu0 0.0
        %1180 = vmatprep.subr.mxu0 0.0
        %1181 = vmatpush1.msra.mxu0 0.0
        %1182 = vmatprep.subr.mxu0 0.0
        %1183 = vmatpush1.msra.mxu0 0.0
        %1184 = vmatprep.subr.mxu0 0.0
        %1185 = vmatpush1.msra.mxu0 0.0
        %1186 = vmatprep.subr.mxu0 0.0
        %1187 = vmatpush1.msra.mxu0 0.0
        %1188 = vmatprep.subr.mxu0 0.0
        %1189 = vmatpush1.msra.mxu0 0.0
        %1190 = vmatprep.subr.mxu0 0.0
        %1191 = vmatpush1.msra.mxu0 0.0
        %1192 = vmatprep.subr.mxu0 0.0
        %1193 = vmatpush1.msra.mxu0 0.0
        %1194 = vmatprep.subr.mxu0 0.0
        %1195 = vmatpush1.msra.mxu0 0.0
        %1196 = vmatprep.subr.mxu0 0.0
        %1197 = vmatpush1.msra.mxu0 0.0
        %1198 = vmatprep.subr.mxu0 0.0
        %1199 = vmatpush1.msra.mxu0 0.0
        %1200 = vmatprep.mubr.f32.mxu0 0.0
        %1201 = vmatmul.mubr.f32.gmra.mrb[0].mxu0 %v1131
        %v1202 = vpop.f32.mrb[0].mxu0
        %v1203 = vadd.f32 %v1123, %v1202
        %v1204 = vpop.f32.mrb[0].mxu0
        %v1205 = vadd.f32 %v1123, %v1204
        %1206 = vmatprep.mubr.f32.mxu0 0.0
        %1207 = vmatmul.mubr.f32.gmra.mrb[0].mxu0 %v1134
        %v1208 = vpop.f32.mrb[0].mxu0
        %v1209 = vadd.f32 %v1128, %v1208
        %v1210 = vpop.f32.mrb[0].mxu0
        %v1211 = vadd.f32 %v1128, %v1210
        %1212 = vdwg.mxu0
        %1213 = vmatprep.subr.mxu0 %v1093
        %1214 = vmatpush1.msra.mxu0 %v1092
        %1215 = vmatprep.subr.mxu0 %v1097
        %1216 = vmatpush1.msra.mxu0 %v1096
        %1217 = vmatprep.subr.mxu0 %v1101
        %1218 = vmatpush1.msra.mxu0 %v1100
        %1219 = vmatprep.subr.mxu0 %v1105
        %1220 = vmatpush1.msra.mxu0 %v1104
        %1221 = vmatprep.subr.mxu0 %v1109
        %1222 = vmatpush1.msra.mxu0 %v1108
        %1223 = vmatprep.subr.mxu0 %v1113
        %1224 = vmatpush1.msra.mxu0 %v1112
        %1225 = vmatprep.subr.mxu0 0.0
        %1226 = vmatpush1.msra.mxu0 0.0
        %1227 = vmatprep.subr.mxu0 0.0
        %1228 = vmatpush1.msra.mxu0 0.0
        %1229 = vmatprep.subr.mxu0 0.0
        %1230 = vmatpush1.msra.mxu0 0.0
        %1231 = vmatprep.subr.mxu0 0.0
        %1232 = vmatpush1.msra.mxu0 0.0
        %1233 = vmatprep.subr.mxu0 0.0
        %1234 = vmatpush1.msra.mxu0 0.0
        %1235 = vmatprep.subr.mxu0 0.0
        %1236 = vmatpush1.msra.mxu0 0.0
        %1237 = vmatprep.subr.mxu0 0.0
        %1238 = vmatpush1.msra.mxu0 0.0
        %1239 = vmatprep.subr.mxu0 0.0
        %1240 = vmatpush1.msra.mxu0 0.0
        %1241 = vmatprep.subr.mxu0 0.0
        %1242 = vmatpush1.msra.mxu0 0.0
        %1243 = vmatprep.subr.mxu0 0.0
        %1244 = vmatpush1.msra.mxu0 0.0
        %1245 = vmatprep.subr.mxu0 0.0
        %1246 = vmatpush1.msra.mxu0 0.0
        %1247 = vmatprep.subr.mxu0 0.0
        %1248 = vmatpush1.msra.mxu0 0.0
        %1249 = vmatprep.subr.mxu0 0.0
        %1250 = vmatpush1.msra.mxu0 0.0
        %1251 = vmatprep.subr.mxu0 0.0
        %1252 = vmatpush1.msra.mxu0 0.0
        %1253 = vmatprep.subr.mxu0 0.0
        %1254 = vmatpush1.msra.mxu0 0.0
        %1255 = vmatprep.subr.mxu0 0.0
        %1256 = vmatpush1.msra.mxu0 0.0
        %1257 = vmatprep.subr.mxu0 0.0
        %1258 = vmatpush1.msra.mxu0 0.0
        %1259 = vmatprep.subr.mxu0 0.0
        %1260 = vmatpush1.msra.mxu0 0.0
        %1261 = vmatprep.subr.mxu0 0.0
        %1262 = vmatpush1.msra.mxu0 0.0
        %1263 = vmatprep.subr.mxu0 0.0
        %1264 = vmatpush1.msra.mxu0 0.0
        %1265 = vmatprep.subr.mxu0 0.0
        %1266 = vmatpush1.msra.mxu0 0.0
        %1267 = vmatprep.subr.mxu0 0.0
        %1268 = vmatpush1.msra.mxu0 0.0
        %1269 = vmatprep.subr.mxu0 0.0
        %1270 = vmatpush1.msra.mxu0 0.0
        %1271 = vmatprep.subr.mxu0 0.0
        %1272 = vmatpush1.msra.mxu0 0.0
        %1273 = vmatprep.subr.mxu0 0.0
        %1274 = vmatpush1.msra.mxu0 0.0
        %1275 = vmatprep.subr.mxu0 0.0
        %1276 = vmatpush1.msra.mxu0 0.0
        %1277 = vmatprep.mubr.f32.mxu0 0.0
        %1278 = vmatmul.mubr.f32.gmra.mrb[0].mxu0 %v1131
        %v1279 = vpop.f32.mrb[0].mxu0
        %v1280 = vadd.f32 %v1123, %v1279
        %v1281 = vpop.f32.mrb[0].mxu0
        %v1282 = vadd.f32 %v1123, %v1281
        %1283 = vmatprep.mubr.f32.mxu0 0.0
        %1284 = vmatmul.mubr.f32.gmra.mrb[0].mxu0 %v1134
        %v1285 = vpop.f32.mrb[0].mxu0
        %v1286 = vadd.f32 %v1128, %v1285
        %v1287 = vpop.f32.mrb[0].mxu0
        %v1288 = vadd.f32 %v1128, %v1287
        %1289 = vdwg.mxu0
        %v1290 = vtanh.pop %v1203
        %v1291 = vtanh.pop %v1205
        %v1292 = vtanh.pop %v1280
        %v1293 = vtanh.pop %v1282
        %v1294 = vxor.u32 %v1209, 2147483648
        %v1295 = vxor.u32 %v1211, 2147483648
        %v1296 = vxor.u32 %v1286, 2147483648
        %v1297 = vxor.u32 %v1288, 2147483648
        %v1298 = vmul.f32 %v1294, 1.442695
        %v1299 = vpow.pop %v1298
        %v1300 = vmul.f32 %v1295, 1.442695
        %v1301 = vpow.pop %v1300
        %v1302 = vmul.f32 %v1296, 1.442695
        %v1303 = vpow.pop %v1302
        %v1304 = vmul.f32 %v1297, 1.442695
        %v1305 = vpow.pop %v1304
        %v1306 = vadd.f32 %v1299, 1.0
        %v1307 = vadd.f32 %v1301, 1.0
        %v1308 = vadd.f32 %v1303, 1.0
        %v1309 = vadd.f32 %v1305, 1.0
        %v1310 = vrcp.pop %v1306
        %v1311 = vmul.f32 1.0, %v1310
        %v1312 = vrcp.pop %v1307
        %v1313 = vmul.f32 1.0, %v1312
        %v1314 = vrcp.pop %v1308
        %v1315 = vmul.f32 1.0, %v1314
        %v1316 = vrcp.pop %v1309
        %v1317 = vmul.f32 1.0, %v1316
        %v1318 = vmul.f32 %v1290, %v1311
        %v1319 = vmul.f32 %v1291, %v1313
        %v1320 = vmul.f32 %v1292, %v1315
        %v1321 = vmul.f32 %v1293, %v1317
        %s1322 = scalar_lea.vmem %s5, 32
        %v1323 = vld [vmem:[%s1322] sm:$0xff]
        %v1324 = vld [vmem:[%s1322 + $0x8] sm:$0xff]
        %v1325 = vld [vmem:[%s1322 + $0x10] sm:$0xff]
        %v1326 = vld [vmem:[%s1322 + $0x18] sm:$0xff]
        %s1327 = scalar_lea.vmem %s6, 32
        %v1328 = vld [vmem:[%s1327] sm:$0xff]
        %v1329 = vld [vmem:[%s1327 + $0x8] sm:$0xff]
        %v1330 = vld [vmem:[%s1327 + $0x10] sm:$0xff]
        %v1331 = vld [vmem:[%s1327 + $0x18] sm:$0xff]
        %1333 = vset.pattern.permute.xlu0 0
        %1334 = vperm.xlu0 %1333, %v1328
        %v1335 = vpop.permute.xlu0 %1334
        %1338 = vset.pattern.permute.xlu0 0
        %1339 = vperm.xlu0 %1338, %v1329
        %v1340 = vpop.permute.xlu0 %1339
        %1343 = vset.pattern.permute.xlu0 0
        %1344 = vperm.xlu0 %1343, %v1330
        %v1345 = vpop.permute.xlu0 %1344
        %1348 = vset.pattern.permute.xlu0 0
        %1349 = vperm.xlu0 %1348, %v1331
        %v1350 = vpop.permute.xlu0 %1349
        %v1353 = vsel %vm763, %v1323, 0
        %v1356 = vsel %vm763, %v1324, 0
        %v1359 = vsel %vm763, %v1325, 0
        %v1362 = vsel %vm763, %v1326, 0
        %1364 = vmatprep.subr.mxu0 %v1319
        %1365 = vmatpush1.msra.mxu0 %v1318
        %1366 = vmatprep.subr.mxu0 0.0
        %1367 = vmatpush1.msra.mxu0 0.0
        %1368 = vmatprep.subr.mxu0 0.0
        %1369 = vmatpush1.msra.mxu0 0.0
        %1370 = vmatprep.subr.mxu0 0.0
        %1371 = vmatpush1.msra.mxu0 0.0
        %1372 = vmatprep.subr.mxu0 0.0
        %1373 = vmatpush1.msra.mxu0 0.0
        %1374 = vmatprep.subr.mxu0 0.0
        %1375 = vmatpush1.msra.mxu0 0.0
        %1376 = vmatprep.subr.mxu0 0.0
        %1377 = vmatpush1.msra.mxu0 0.0
        %1378 = vmatprep.subr.mxu0 0.0
        %1379 = vmatpush1.msra.mxu0 0.0
        %1380 = vmatprep.subr.mxu0 0.0
        %1381 = vmatpush1.msra.mxu0 0.0
        %1382 = vmatprep.subr.mxu0 0.0
        %1383 = vmatpush1.msra.mxu0 0.0
        %1384 = vmatprep.subr.mxu0 0.0
        %1385 = vmatpush1.msra.mxu0 0.0
        %1386 = vmatprep.subr.mxu0 0.0
        %1387 = vmatpush1.msra.mxu0 0.0
        %1388 = vmatprep.subr.mxu0 0.0
        %1389 = vmatpush1.msra.mxu0 0.0
        %1390 = vmatprep.subr.mxu0 0.0
        %1391 = vmatpush1.msra.mxu0 0.0
        %1392 = vmatprep.subr.mxu0 0.0
        %1393 = vmatpush1.msra.mxu0 0.0
        %1394 = vmatprep.subr.mxu0 0.0
        %1395 = vmatpush1.msra.mxu0 0.0
        %1396 = vmatprep.subr.mxu0 0.0
        %1397 = vmatpush1.msra.mxu0 0.0
        %1398 = vmatprep.subr.mxu0 0.0
        %1399 = vmatpush1.msra.mxu0 0.0
        %1400 = vmatprep.subr.mxu0 0.0
        %1401 = vmatpush1.msra.mxu0 0.0
        %1402 = vmatprep.subr.mxu0 0.0
        %1403 = vmatpush1.msra.mxu0 0.0
        %1404 = vmatprep.subr.mxu0 0.0
        %1405 = vmatpush1.msra.mxu0 0.0
        %1406 = vmatprep.subr.mxu0 0.0
        %1407 = vmatpush1.msra.mxu0 0.0
        %1408 = vmatprep.subr.mxu0 0.0
        %1409 = vmatpush1.msra.mxu0 0.0
        %1410 = vmatprep.subr.mxu0 0.0
        %1411 = vmatpush1.msra.mxu0 0.0
        %1412 = vmatprep.subr.mxu0 0.0
        %1413 = vmatpush1.msra.mxu0 0.0
        %1414 = vmatprep.subr.mxu0 0.0
        %1415 = vmatpush1.msra.mxu0 0.0
        %1416 = vmatprep.subr.mxu0 0.0
        %1417 = vmatpush1.msra.mxu0 0.0
        %1418 = vmatprep.subr.mxu0 0.0
        %1419 = vmatpush1.msra.mxu0 0.0
        %1420 = vmatprep.subr.mxu0 0.0
        %1421 = vmatpush1.msra.mxu0 0.0
        %1422 = vmatprep.subr.mxu0 0.0
        %1423 = vmatpush1.msra.mxu0 0.0
        %1424 = vmatprep.subr.mxu0 0.0
        %1425 = vmatpush1.msra.mxu0 0.0
        %1426 = vmatprep.subr.mxu0 0.0
        %1427 = vmatpush1.msra.mxu0 0.0
        %1428 = vmatprep.mubr.f32.mxu0 0.0
        %1429 = vmatmul.mubr.f32.gmra.mrb[0].mxu0 %v1353
        %v1430 = vpop.f32.mrb[0].mxu0
        %v1431 = vadd.f32 %v1335, %v1430
        %v1432 = vpop.f32.mrb[0].mxu0
        %v1433 = vadd.f32 %v1335, %v1432
        %1434 = vmatprep.mubr.f32.mxu0 0.0
        %1435 = vmatmul.mubr.f32.gmra.mrb[0].mxu0 %v1356
        %v1436 = vpop.f32.mrb[0].mxu0
        %v1437 = vadd.f32 %v1340, %v1436
        %v1438 = vpop.f32.mrb[0].mxu0
        %v1439 = vadd.f32 %v1340, %v1438
        %1440 = vmatprep.mubr.f32.mxu0 0.0
        %1441 = vmatmul.mubr.f32.gmra.mrb[0].mxu0 %v1359
        %v1442 = vpop.f32.mrb[0].mxu0
        %v1443 = vadd.f32 %v1345, %v1442
        %v1444 = vpop.f32.mrb[0].mxu0
        %v1445 = vadd.f32 %v1345, %v1444
        %1446 = vmatprep.mubr.f32.mxu0 0.0
        %1447 = vmatmul.mubr.f32.gmra.mrb[0].mxu0 %v1362
        %v1448 = vpop.f32.mrb[0].mxu0
        %v1449 = vadd.f32 %v1350, %v1448
        %v1450 = vpop.f32.mrb[0].mxu0
        %v1451 = vadd.f32 %v1350, %v1450
        %1452 = vdwg.mxu0
        %1453 = vmatprep.subr.mxu0 %v1321
        %1454 = vmatpush1.msra.mxu0 %v1320
        %1455 = vmatprep.subr.mxu0 0.0
        %1456 = vmatpush1.msra.mxu0 0.0
        %1457 = vmatprep.subr.mxu0 0.0
        %1458 = vmatpush1.msra.mxu0 0.0
        %1459 = vmatprep.subr.mxu0 0.0
        %1460 = vmatpush1.msra.mxu0 0.0
        %1461 = vmatprep.subr.mxu0 0.0
        %1462 = vmatpush1.msra.mxu0 0.0
        %1463 = vmatprep.subr.mxu0 0.0
        %1464 = vmatpush1.msra.mxu0 0.0
        %1465 = vmatprep.subr.mxu0 0.0
        %1466 = vmatpush1.msra.mxu0 0.0
        %1467 = vmatprep.subr.mxu0 0.0
        %1468 = vmatpush1.msra.mxu0 0.0
        %1469 = vmatprep.subr.mxu0 0.0
        %1470 = vmatpush1.msra.mxu0 0.0
        %1471 = vmatprep.subr.mxu0 0.0
        %1472 = vmatpush1.msra.mxu0 0.0
        %1473 = vmatprep.subr.mxu0 0.0
        %1474 = vmatpush1.msra.mxu0 0.0
        %1475 = vmatprep.subr.mxu0 0.0
        %1476 = vmatpush1.msra.mxu0 0.0
        %1477 = vmatprep.subr.mxu0 0.0
        %1478 = vmatpush1.msra.mxu0 0.0
        %1479 = vmatprep.subr.mxu0 0.0
        %1480 = vmatpush1.msra.mxu0 0.0
        %1481 = vmatprep.subr.mxu0 0.0
        %1482 = vmatpush1.msra.mxu0 0.0
        %1483 = vmatprep.subr.mxu0 0.0
        %1484 = vmatpush1.msra.mxu0 0.0
        %1485 = vmatprep.subr.mxu0 0.0
        %1486 = vmatpush1.msra.mxu0 0.0
        %1487 = vmatprep.subr.mxu0 0.0
        %1488 = vmatpush1.msra.mxu0 0.0
        %1489 = vmatprep.subr.mxu0 0.0
        %1490 = vmatpush1.msra.mxu0 0.0
        %1491 = vmatprep.subr.mxu0 0.0
        %1492 = vmatpush1.msra.mxu0 0.0
        %1493 = vmatprep.subr.mxu0 0.0
        %1494 = vmatpush1.msra.mxu0 0.0
        %1495 = vmatprep.subr.mxu0 0.0
        %1496 = vmatpush1.msra.mxu0 0.0
        %1497 = vmatprep.subr.mxu0 0.0
        %1498 = vmatpush1.msra.mxu0 0.0
        %1499 = vmatprep.subr.mxu0 0.0
        %1500 = vmatpush1.msra.mxu0 0.0
        %1501 = vmatprep.subr.mxu0 0.0
        %1502 = vmatpush1.msra.mxu0 0.0
        %1503 = vmatprep.subr.mxu0 0.0
        %1504 = vmatpush1.msra.mxu0 0.0
        %1505 = vmatprep.subr.mxu0 0.0
        %1506 = vmatpush1.msra.mxu0 0.0
        %1507 = vmatprep.subr.mxu0 0.0
        %1508 = vmatpush1.msra.mxu0 0.0
        %1509 = vmatprep.subr.mxu0 0.0
        %1510 = vmatpush1.msra.mxu0 0.0
        %1511 = vmatprep.subr.mxu0 0.0
        %1512 = vmatpush1.msra.mxu0 0.0
        %1513 = vmatprep.subr.mxu0 0.0
        %1514 = vmatpush1.msra.mxu0 0.0
        %1515 = vmatprep.subr.mxu0 0.0
        %1516 = vmatpush1.msra.mxu0 0.0
        %1517 = vmatprep.mubr.f32.mxu0 0.0
        %1518 = vmatmul.mubr.f32.gmra.mrb[0].mxu0 %v1353
        %v1519 = vpop.f32.mrb[0].mxu0
        %v1520 = vadd.f32 %v1335, %v1519
        %v1521 = vpop.f32.mrb[0].mxu0
        %v1522 = vadd.f32 %v1335, %v1521
        %1523 = vmatprep.mubr.f32.mxu0 0.0
        %1524 = vmatmul.mubr.f32.gmra.mrb[0].mxu0 %v1356
        %v1525 = vpop.f32.mrb[0].mxu0
        %v1526 = vadd.f32 %v1340, %v1525
        %v1527 = vpop.f32.mrb[0].mxu0
        %v1528 = vadd.f32 %v1340, %v1527
        %1529 = vmatprep.mubr.f32.mxu0 0.0
        %1530 = vmatmul.mubr.f32.gmra.mrb[0].mxu0 %v1359
        %v1531 = vpop.f32.mrb[0].mxu0
        %v1532 = vadd.f32 %v1345, %v1531
        %v1533 = vpop.f32.mrb[0].mxu0
        %v1534 = vadd.f32 %v1345, %v1533
        %1535 = vmatprep.mubr.f32.mxu0 0.0
        %1536 = vmatmul.mubr.f32.gmra.mrb[0].mxu0 %v1362
        %v1537 = vpop.f32.mrb[0].mxu0
        %v1538 = vadd.f32 %v1350, %v1537
        %v1539 = vpop.f32.mrb[0].mxu0
        %v1540 = vadd.f32 %v1350, %v1539
        %1541 = vdwg.mxu0
        %v1542 = vadd.f32 %v954, %v1431
        %v1543 = vadd.f32 %v955, %v1433
        %v1544 = vadd.f32 %v956, %v1520
        %v1545 = vadd.f32 %v957, %v1522
        %v1546 = vadd.f32 %v958, %v1437
        %v1547 = vadd.f32 %v959, %v1439
        %v1548 = vadd.f32 %v960, %v1526
        %v1549 = vadd.f32 %v961, %v1528
        %v1550 = vadd.f32 %v1443, %v970
        %v1551 = vadd.f32 %v1445, %v971
        %v1552 = vadd.f32 %v1532, %v972
        %v1553 = vadd.f32 %v1534, %v973
        %v1554 = vadd.f32 %v1449, %v974
        %v1555 = vadd.f32 %v1451, %v975
        %v1556 = vadd.f32 %v1538, %v976
        %v1557 = vadd.f32 %v1540, %v977
        %v1558 = vmul.f32 %v1550, 0.70710677
        %v1559 = vmul.f32 %v1551, 0.70710677
        %v1560 = vmul.f32 %v1552, 0.70710677
        %v1561 = vmul.f32 %v1553, 0.70710677
        %v1562 = vmul.f32 %v1554, 0.70710677
        %v1563 = vmul.f32 %v1555, 0.70710677
        %v1564 = vmul.f32 %v1556, 0.70710677
        %v1565 = vmul.f32 %v1557, 0.70710677
        %1574 = vrot.lane.b32.xlu0 %v1558, 4
        %v1575 = vpop.permute.xlu0 %1574
        %1576 = vrot.lane.b32.xlu0 %v1559, 4
        %v1577 = vpop.permute.xlu0 %1576
        %1578 = vrot.lane.b32.xlu0 %v1560, 4
        %v1579 = vpop.permute.xlu0 %1578
        %1580 = vrot.lane.b32.xlu0 %v1561, 4
        %v1581 = vpop.permute.xlu0 %1580
        %1582 = vrot.lane.b32.xlu0 %v1562, 4
        %v1583 = vpop.permute.xlu0 %1582
        %1584 = vrot.lane.b32.xlu0 %v1563, 4
        %v1585 = vpop.permute.xlu0 %1584
        %1586 = vrot.lane.b32.xlu0 %v1564, 4
        %v1587 = vpop.permute.xlu0 %1586
        %1588 = vrot.lane.b32.xlu0 %v1565, 4
        %v1589 = vpop.permute.xlu0 %1588
        %vm1590 = vcmask 31744
        %v1591 = vsel %vm1590, %v1575, %v1577
        %v1592 = vsel %vm1590, %v1577, %v1579
        %v1593 = vsel %vm1590, %v1579, %v1581
        %v1594 = vsel %vm1590, %v1583, %v1585
        %v1595 = vsel %vm1590, %v1585, %v1587
        %v1596 = vsel %vm1590, %v1587, %v1589
        %vm1607 = vcmask 1047584
        %1608 = vst.msk [vmem:[#allocation2 + $0x8] sm:$0xff] %vm1607, %v1575
        %1609 = vst [vmem:[#allocation2 + $0x10] sm:$0xff] %v1591
        %1610 = vst [vmem:[#allocation2 + $0x18] sm:$0xff] %v1592
        %1611 = vst [vmem:[#allocation2 + $0x20] sm:$0xff] %v1593
        %1612 = vst.msk [vmem:[#allocation2 + $0x28] sm:$0xff] %vm1590, %v1581
        %1613 = vst.msk [vmem:[#allocation2 + $0x38] sm:$0xff] %vm1607, %v1583
        %1614 = vst [vmem:[#allocation2 + $0x40] sm:$0xff] %v1594
        %1615 = vst [vmem:[#allocation2 + $0x48] sm:$0xff] %v1595
        %1616 = vst [vmem:[#allocation2 + $0x50] sm:$0xff] %v1596
        %1617 = vst.msk [vmem:[#allocation2 + $0x58] sm:$0xff] %vm1590, %v1589
        %1618 = vst.msk [vmem:[#allocation2 + $0x8] sm:$0xff] %vm1590, 0.0
        %1619 = vst.msk [vmem:[#allocation2 + $0x38] sm:$0xff] %vm1590, 0.0
        %1620 = vst.msk [vmem:[#allocation2 + $0x18] sm:$0xff] %vm1590, 0.0
        %1621 = vst.msk [vmem:[#allocation2 + $0x48] sm:$0xff] %vm1590, 0.0
        %1622 = vst [vmem:[#allocation2 + $0x68] sm:$0xff] %v1558
        %1623 = vst [vmem:[#allocation2 + $0x70] sm:$0xff] %v1559
        %1624 = vst [vmem:[#allocation2 + $0x78] sm:$0xff] %v1560
        %1625 = vst [vmem:[#allocation2 + $0x80] sm:$0xff] %v1561
        %1626 = vst [vmem:[#allocation2 + $0x98] sm:$0xff] %v1562
        %1627 = vst [vmem:[#allocation2 + $0xa0] sm:$0xff] %v1563
        %1628 = vst [vmem:[#allocation2 + $0xa8] sm:$0xff] %v1564
        %1629 = vst [vmem:[#allocation2 + $0xb0] sm:$0xff] %v1565
        %1630 = vrot.lane.b32.xlu0 %v1558, 124
        %v1631 = vpop.permute.xlu0 %1630
        %1632 = vrot.lane.b32.xlu0 %v1559, 124
        %v1633 = vpop.permute.xlu0 %1632
        %1634 = vrot.lane.b32.xlu0 %v1560, 124
        %v1635 = vpop.permute.xlu0 %1634
        %1636 = vrot.lane.b32.xlu0 %v1561, 124
        %v1637 = vpop.permute.xlu0 %1636
        %1638 = vrot.lane.b32.xlu0 %v1562, 124
        %v1639 = vpop.permute.xlu0 %1638
        %1640 = vrot.lane.b32.xlu0 %v1563, 124
        %v1641 = vpop.permute.xlu0 %1640
        %1642 = vrot.lane.b32.xlu0 %v1564, 124
        %v1643 = vpop.permute.xlu0 %1642
        %1644 = vrot.lane.b32.xlu0 %v1565, 124
        %v1645 = vpop.permute.xlu0 %1644
        %vm1646 = vcmask 1014784
        %v1647 = vsel %vm1646, %v1631, %v1633
        %v1648 = vsel %vm1646, %v1633, %v1635
        %v1649 = vsel %vm1646, %v1635, %v1637
        %v1650 = vsel %vm1646, %v1639, %v1641
        %v1651 = vsel %vm1646, %v1641, %v1643
        %v1652 = vsel %vm1646, %v1643, %v1645
        %vm1663 = vcmask 1048544
        %1664 = vst.msk [vmem:[#allocation2 + $0xc0] sm:$0xff] %vm1663, %v1631
        %1665 = vst [vmem:[#allocation2 + $0xc8] sm:$0xff] %v1647
        %1666 = vst [vmem:[#allocation2 + $0xd0] sm:$0xff] %v1648
        %1667 = vst [vmem:[#allocation2 + $0xd8] sm:$0xff] %v1649
        %1668 = vst.msk [vmem:[#allocation2 + $0xe0] sm:$0xff] %vm1646, %v1637
        %1669 = vst.msk [vmem:[#allocation2 + $0xf0] sm:$0xff] %vm1663, %v1639
        %1670 = vst [vmem:[#allocation2 + $0xf8] sm:$0xff] %v1650
        %1671 = vst [vmem:[#allocation2 + $0x100] sm:$0xff] %v1651
        %1672 = vst [vmem:[#allocation2 + $0x108] sm:$0xff] %v1652
        %1673 = vst.msk [vmem:[#allocation2 + $0x110] sm:$0xff] %vm1646, %v1645
        %1674 = vst.msk [vmem:[#allocation2 + $0xd0] sm:$0xff] %vm1663, 0.0
        %1675 = vst.msk [vmem:[#allocation2 + $0x100] sm:$0xff] %vm1663, 0.0
        %1676 = vst.msk [vmem:[#allocation2 + $0xe0] sm:$0xff] %vm1663, 0.0
        %1677 = vst.msk [vmem:[#allocation2 + $0x110] sm:$0xff] %vm1663, 0.0
        %v1678 = vld [vmem:[#allocation2 + $0x8] sm:$0xff]
        %v1679 = vld [vmem:[#allocation2 + $0x10] sm:$0xff]
        %v1680 = vld [vmem:[#allocation2 + $0x18] sm:$0xff]
        %v1681 = vld [vmem:[#allocation2 + $0x20] sm:$0xff]
        %v1682 = vld [vmem:[#allocation2 + $0x38] sm:$0xff]
        %v1683 = vld [vmem:[#allocation2 + $0x40] sm:$0xff]
        %v1684 = vld [vmem:[#allocation2 + $0x48] sm:$0xff]
        %v1685 = vld [vmem:[#allocation2 + $0x50] sm:$0xff]
        %v1686 = vld [vmem:[#allocation2 + $0x68] sm:$0xff]
        %v1687 = vld [vmem:[#allocation2 + $0x70] sm:$0xff]
        %v1688 = vld [vmem:[#allocation2 + $0x78] sm:$0xff]
        %v1689 = vld [vmem:[#allocation2 + $0x80] sm:$0xff]
        %v1690 = vld [vmem:[#allocation2 + $0x98] sm:$0xff]
        %v1691 = vld [vmem:[#allocation2 + $0xa0] sm:$0xff]
        %v1692 = vld [vmem:[#allocation2 + $0xa8] sm:$0xff]
        %v1693 = vld [vmem:[#allocation2 + $0xb0] sm:$0xff]
        %v1694 = vld [vmem:[#allocation2 + $0xc8] sm:$0xff]
        %v1695 = vld [vmem:[#allocation2 + $0xd0] sm:$0xff]
        %v1696 = vld [vmem:[#allocation2 + $0xd8] sm:$0xff]
        %v1697 = vld [vmem:[#allocation2 + $0xe0] sm:$0xff]
        %v1698 = vld [vmem:[#allocation2 + $0xf8] sm:$0xff]
        %v1699 = vld [vmem:[#allocation2 + $0x100] sm:$0xff]
        %v1700 = vld [vmem:[#allocation2 + $0x108] sm:$0xff]
        %v1701 = vld [vmem:[#allocation2 + $0x110] sm:$0xff]
        %s1702 = scalar_lea.vmem %s3, 32
        %v1703 = vld [vmem:[%s1702] sm:$0xff]
        %v1704 = vld [vmem:[%s1702 + $0x8] sm:$0xff]
        %s1705 = scalar_lea.vmem %s4, 32
        %v1706 = vld [vmem:[%s1705] sm:$0xff]
        %v1707 = vld [vmem:[%s1705 + $0x8] sm:$0xff]
        %1709 = vset.pattern.permute.xlu0 0
        %1710 = vperm.xlu0 %1709, %v1706
        %v1711 = vpop.permute.xlu0 %1710
        %1714 = vset.pattern.permute.xlu0 0
        %1715 = vperm.xlu0 %1714, %v1707
        %v1716 = vpop.permute.xlu0 %1715
        %v1719 = vsel %vm542, %v1703, 0
        %v1722 = vsel %vm542, %v1704, 0
        %1724 = vmatprep.subr.mxu0 %v1679
        %1725 = vmatpush1.msra.mxu0 %v1678
        %1726 = vmatprep.subr.mxu0 %v1683
        %1727 = vmatpush1.msra.mxu0 %v1682
        %1728 = vmatprep.subr.mxu0 %v1687
        %1729 = vmatpush1.msra.mxu0 %v1686
        %1730 = vmatprep.subr.mxu0 %v1691
        %1731 = vmatpush1.msra.mxu0 %v1690
        %1732 = vmatprep.subr.mxu0 %v1695
        %1733 = vmatpush1.msra.mxu0 %v1694
        %1734 = vmatprep.subr.mxu0 %v1699
        %1735 = vmatpush1.msra.mxu0 %v1698
        %1736 = vmatprep.subr.mxu0 0.0
        %1737 = vmatpush1.msra.mxu0 0.0
        %1738 = vmatprep.subr.mxu0 0.0
        %1739 = vmatpush1.msra.mxu0 0.0
        %1740 = vmatprep.subr.mxu0 0.0
        %1741 = vmatpush1.msra.mxu0 0.0
        %1742 = vmatprep.subr.mxu0 0.0
        %1743 = vmatpush1.msra.mxu0 0.0
        %1744 = vmatprep.subr.mxu0 0.0
        %1745 = vmatpush1.msra.mxu0 0.0
        %1746 = vmatprep.subr.mxu0 0.0
        %1747 = vmatpush1.msra.mxu0 0.0
        %1748 = vmatprep.subr.mxu0 0.0
        %1749 = vmatpush1.msra.mxu0 0.0
        %1750 = vmatprep.subr.mxu0 0.0
        %1751 = vmatpush1.msra.mxu0 0.0
        %1752 = vmatprep.subr.mxu0 0.0
        %1753 = vmatpush1.msra.mxu0 0.0
        %1754 = vmatprep.subr.mxu0 0.0
        %1755 = vmatpush1.msra.mxu0 0.0
        %1756 = vmatprep.subr.mxu0 0.0
        %1757 = vmatpush1.msra.mxu0 0.0
        %1758 = vmatprep.subr.mxu0 0.0
        %1759 = vmatpush1.msra.mxu0 0.0
        %1760 = vmatprep.subr.mxu0 0.0
        %1761 = vmatpush1.msra.mxu0 0.0
        %1762 = vmatprep.subr.mxu0 0.0
        %1763 = vmatpush1.msra.mxu0 0.0
        %1764 = vmatprep.subr.mxu0 0.0
        %1765 = vmatpush1.msra.mxu0 0.0
        %1766 = vmatprep.subr.mxu0 0.0
        %1767 = vmatpush1.msra.mxu0 0.0
        %1768 = vmatprep.subr.mxu0 0.0
        %1769 = vmatpush1.msra.mxu0 0.0
        %1770 = vmatprep.subr.mxu0 0.0
        %1771 = vmatpush1.msra.mxu0 0.0
        %1772 = vmatprep.subr.mxu0 0.0
        %1773 = vmatpush1.msra.mxu0 0.0
        %1774 = vmatprep.subr.mxu0 0.0
        %1775 = vmatpush1.msra.mxu0 0.0
        %1776 = vmatprep.subr.mxu0 0.0
        %1777 = vmatpush1.msra.mxu0 0.0
        %1778 = vmatprep.subr.mxu0 0.0
        %1779 = vmatpush1.msra.mxu0 0.0
        %1780 = vmatprep.subr.mxu0 0.0
        %1781 = vmatpush1.msra.mxu0 0.0
        %1782 = vmatprep.subr.mxu0 0.0
        %1783 = vmatpush1.msra.mxu0 0.0
        %1784 = vmatprep.subr.mxu0 0.0
        %1785 = vmatpush1.msra.mxu0 0.0
        %1786 = vmatprep.subr.mxu0 0.0
        %1787 = vmatpush1.msra.mxu0 0.0
        %1788 = vmatprep.mubr.f32.mxu0 0.0
        %1789 = vmatmul.mubr.f32.gmra.mrb[0].mxu0 %v1719
        %v1790 = vpop.f32.mrb[0].mxu0
        %v1791 = vadd.f32 %v1711, %v1790
        %v1792 = vpop.f32.mrb[0].mxu0
        %v1793 = vadd.f32 %v1711, %v1792
        %1794 = vmatprep.mubr.f32.mxu0 0.0
        %1795 = vmatmul.mubr.f32.gmra.mrb[0].mxu0 %v1722
        %v1796 = vpop.f32.mrb[0].mxu0
        %v1797 = vadd.f32 %v1716, %v1796
        %v1798 = vpop.f32.mrb[0].mxu0
        %v1799 = vadd.f32 %v1716, %v1798
        %1800 = vdwg.mxu0
        %1801 = vmatprep.subr.mxu0 %v1681
        %1802 = vmatpush1.msra.mxu0 %v1680
        %1803 = vmatprep.subr.mxu0 %v1685
        %1804 = vmatpush1.msra.mxu0 %v1684
        %1805 = vmatprep.subr.mxu0 %v1689
        %1806 = vmatpush1.msra.mxu0 %v1688
        %1807 = vmatprep.subr.mxu0 %v1693
        %1808 = vmatpush1.msra.mxu0 %v1692
        %1809 = vmatprep.subr.mxu0 %v1697
        %1810 = vmatpush1.msra.mxu0 %v1696
        %1811 = vmatprep.subr.mxu0 %v1701
        %1812 = vmatpush1.msra.mxu0 %v1700
        %1813 = vmatprep.subr.mxu0 0.0
        %1814 = vmatpush1.msra.mxu0 0.0
        %1815 = vmatprep.subr.mxu0 0.0
        %1816 = vmatpush1.msra.mxu0 0.0
        %1817 = vmatprep.subr.mxu0 0.0
        %1818 = vmatpush1.msra.mxu0 0.0
        %1819 = vmatprep.subr.mxu0 0.0
        %1820 = vmatpush1.msra.mxu0 0.0
        %1821 = vmatprep.subr.mxu0 0.0
        %1822 = vmatpush1.msra.mxu0 0.0
        %1823 = vmatprep.subr.mxu0 0.0
        %1824 = vmatpush1.msra.mxu0 0.0
        %1825 = vmatprep.subr.mxu0 0.0
        %1826 = vmatpush1.msra.mxu0 0.0
        %1827 = vmatprep.subr.mxu0 0.0
        %1828 = vmatpush1.msra.mxu0 0.0
        %1829 = vmatprep.subr.mxu0 0.0
        %1830 = vmatpush1.msra.mxu0 0.0
        %1831 = vmatprep.subr.mxu0 0.0
        %1832 = vmatpush1.msra.mxu0 0.0
        %1833 = vmatprep.subr.mxu0 0.0
        %1834 = vmatpush1.msra.mxu0 0.0
        %1835 = vmatprep.subr.mxu0 0.0
        %1836 = vmatpush1.msra.mxu0 0.0
        %1837 = vmatprep.subr.mxu0 0.0
        %1838 = vmatpush1.msra.mxu0 0.0
        %1839 = vmatprep.subr.mxu0 0.0
        %1840 = vmatpush1.msra.mxu0 0.0
        %1841 = vmatprep.subr.mxu0 0.0
        %1842 = vmatpush1.msra.mxu0 0.0
        %1843 = vmatprep.subr.mxu0 0.0
        %1844 = vmatpush1.msra.mxu0 0.0
        %1845 = vmatprep.subr.mxu0 0.0
        %1846 = vmatpush1.msra.mxu0 0.0
        %1847 = vmatprep.subr.mxu0 0.0
        %1848 = vmatpush1.msra.mxu0 0.0
        %1849 = vmatprep.subr.mxu0 0.0
        %1850 = vmatpush1.msra.mxu0 0.0
        %1851 = vmatprep.subr.mxu0 0.0
        %1852 = vmatpush1.msra.mxu0 0.0
        %1853 = vmatprep.subr.mxu0 0.0
        %1854 = vmatpush1.msra.mxu0 0.0
        %1855 = vmatprep.subr.mxu0 0.0
        %1856 = vmatpush1.msra.mxu0 0.0
        %1857 = vmatprep.subr.mxu0 0.0
        %1858 = vmatpush1.msra.mxu0 0.0
        %1859 = vmatprep.subr.mxu0 0.0
        %1860 = vmatpush1.msra.mxu0 0.0
        %1861 = vmatprep.subr.mxu0 0.0
        %1862 = vmatpush1.msra.mxu0 0.0
        %1863 = vmatprep.subr.mxu0 0.0
        %1864 = vmatpush1.msra.mxu0 0.0
        %1865 = vmatprep.mubr.f32.mxu0 0.0
        %1866 = vmatmul.mubr.f32.gmra.mrb[0].mxu0 %v1719
        %v1867 = vpop.f32.mrb[0].mxu0
        %v1868 = vadd.f32 %v1711, %v1867
        %v1869 = vpop.f32.mrb[0].mxu0
        %v1870 = vadd.f32 %v1711, %v1869
        %1871 = vmatprep.mubr.f32.mxu0 0.0
        %1872 = vmatmul.mubr.f32.gmra.mrb[0].mxu0 %v1722
        %v1873 = vpop.f32.mrb[0].mxu0
        %v1874 = vadd.f32 %v1716, %v1873
        %v1875 = vpop.f32.mrb[0].mxu0
        %v1876 = vadd.f32 %v1716, %v1875
        %1877 = vdwg.mxu0
        %v1878 = vtanh.pop %v1791
        %v1879 = vtanh.pop %v1793
        %v1880 = vtanh.pop %v1868
        %v1881 = vtanh.pop %v1870
        %v1882 = vxor.u32 %v1797, 2147483648
        %v1883 = vxor.u32 %v1799, 2147483648
        %v1884 = vxor.u32 %v1874, 2147483648
        %v1885 = vxor.u32 %v1876, 2147483648
        %v1886 = vmul.f32 %v1882, 1.442695
        %v1887 = vpow.pop %v1886
        %v1888 = vmul.f32 %v1883, 1.442695
        %v1889 = vpow.pop %v1888
        %v1890 = vmul.f32 %v1884, 1.442695
        %v1891 = vpow.pop %v1890
        %v1892 = vmul.f32 %v1885, 1.442695
        %v1893 = vpow.pop %v1892
        %v1894 = vadd.f32 %v1887, 1.0
        %v1895 = vadd.f32 %v1889, 1.0
        %v1896 = vadd.f32 %v1891, 1.0
        %v1897 = vadd.f32 %v1893, 1.0
        %v1898 = vrcp.pop %v1894
        %v1899 = vmul.f32 1.0, %v1898
        %v1900 = vrcp.pop %v1895
        %v1901 = vmul.f32 1.0, %v1900
        %v1902 = vrcp.pop %v1896
        %v1903 = vmul.f32 1.0, %v1902
        %v1904 = vrcp.pop %v1897
        %v1905 = vmul.f32 1.0, %v1904
        %v1906 = vmul.f32 %v1878, %v1899
        %v1907 = vmul.f32 %v1879, %v1901
        %v1908 = vmul.f32 %v1880, %v1903
        %v1909 = vmul.f32 %v1881, %v1905
        %s1910 = scalar_lea.vmem %s5, 64
        %v1911 = vld [vmem:[%s1910] sm:$0xff]
        %v1912 = vld [vmem:[%s1910 + $0x8] sm:$0xff]
        %v1913 = vld [vmem:[%s1910 + $0x10] sm:$0xff]
        %v1914 = vld [vmem:[%s1910 + $0x18] sm:$0xff]
        %s1915 = scalar_lea.vmem %s6, 64
        %v1916 = vld [vmem:[%s1915] sm:$0xff]
        %v1917 = vld [vmem:[%s1915 + $0x8] sm:$0xff]
        %v1918 = vld [vmem:[%s1915 + $0x10] sm:$0xff]
        %v1919 = vld [vmem:[%s1915 + $0x18] sm:$0xff]
        %1921 = vset.pattern.permute.xlu0 0
        %1922 = vperm.xlu0 %1921, %v1916
        %v1923 = vpop.permute.xlu0 %1922
        %1926 = vset.pattern.permute.xlu0 0
        %1927 = vperm.xlu0 %1926, %v1917
        %v1928 = vpop.permute.xlu0 %1927
        %1931 = vset.pattern.permute.xlu0 0
        %1932 = vperm.xlu0 %1931, %v1918
        %v1933 = vpop.permute.xlu0 %1932
        %1936 = vset.pattern.permute.xlu0 0
        %1937 = vperm.xlu0 %1936, %v1919
        %v1938 = vpop.permute.xlu0 %1937
        %v1941 = vsel %vm763, %v1911, 0
        %v1944 = vsel %vm763, %v1912, 0
        %v1947 = vsel %vm763, %v1913, 0
        %v1950 = vsel %vm763, %v1914, 0
        %1952 = vmatprep.subr.mxu0 %v1907
        %1953 = vmatpush1.msra.mxu0 %v1906
        %1954 = vmatprep.subr.mxu0 0.0
        %1955 = vmatpush1.msra.mxu0 0.0
        %1956 = vmatprep.subr.mxu0 0.0
        %1957 = vmatpush1.msra.mxu0 0.0
        %1958 = vmatprep.subr.mxu0 0.0
        %1959 = vmatpush1.msra.mxu0 0.0
        %1960 = vmatprep.subr.mxu0 0.0
        %1961 = vmatpush1.msra.mxu0 0.0
        %1962 = vmatprep.subr.mxu0 0.0
        %1963 = vmatpush1.msra.mxu0 0.0
        %1964 = vmatprep.subr.mxu0 0.0
        %1965 = vmatpush1.msra.mxu0 0.0
        %1966 = vmatprep.subr.mxu0 0.0
        %1967 = vmatpush1.msra.mxu0 0.0
        %1968 = vmatprep.subr.mxu0 0.0
        %1969 = vmatpush1.msra.mxu0 0.0
        %1970 = vmatprep.subr.mxu0 0.0
        %1971 = vmatpush1.msra.mxu0 0.0
        %1972 = vmatprep.subr.mxu0 0.0
        %1973 = vmatpush1.msra.mxu0 0.0
        %1974 = vmatprep.subr.mxu0 0.0
        %1975 = vmatpush1.msra.mxu0 0.0
        %1976 = vmatprep.subr.mxu0 0.0
        %1977 = vmatpush1.msra.mxu0 0.0
        %1978 = vmatprep.subr.mxu0 0.0
        %1979 = vmatpush1.msra.mxu0 0.0
        %1980 = vmatprep.subr.mxu0 0.0
        %1981 = vmatpush1.msra.mxu0 0.0
        %1982 = vmatprep.subr.mxu0 0.0
        %1983 = vmatpush1.msra.mxu0 0.0
        %1984 = vmatprep.subr.mxu0 0.0
        %1985 = vmatpush1.msra.mxu0 0.0
        %1986 = vmatprep.subr.mxu0 0.0
        %1987 = vmatpush1.msra.mxu0 0.0
        %1988 = vmatprep.subr.mxu0 0.0
        %1989 = vmatpush1.msra.mxu0 0.0
        %1990 = vmatprep.subr.mxu0 0.0
        %1991 = vmatpush1.msra.mxu0 0.0
        %1992 = vmatprep.subr.mxu0 0.0
        %1993 = vmatpush1.msra.mxu0 0.0
        %1994 = vmatprep.subr.mxu0 0.0
        %1995 = vmatpush1.msra.mxu0 0.0
        %1996 = vmatprep.subr.mxu0 0.0
        %1997 = vmatpush1.msra.mxu0 0.0
        %1998 = vmatprep.subr.mxu0 0.0
        %1999 = vmatpush1.msra.mxu0 0.0
        %2000 = vmatprep.subr.mxu0 0.0
        %2001 = vmatpush1.msra.mxu0 0.0
        %2002 = vmatprep.subr.mxu0 0.0
        %2003 = vmatpush1.msra.mxu0 0.0
        %2004 = vmatprep.subr.mxu0 0.0
        %2005 = vmatpush1.msra.mxu0 0.0
        %2006 = vmatprep.subr.mxu0 0.0
        %2007 = vmatpush1.msra.mxu0 0.0
        %2008 = vmatprep.subr.mxu0 0.0
        %2009 = vmatpush1.msra.mxu0 0.0
        %2010 = vmatprep.subr.mxu0 0.0
        %2011 = vmatpush1.msra.mxu0 0.0
        %2012 = vmatprep.subr.mxu0 0.0
        %2013 = vmatpush1.msra.mxu0 0.0
        %2014 = vmatprep.subr.mxu0 0.0
        %2015 = vmatpush1.msra.mxu0 0.0
        %2016 = vmatprep.mubr.f32.mxu0 0.0
        %2017 = vmatmul.mubr.f32.gmra.mrb[0].mxu0 %v1941
        %v2018 = vpop.f32.mrb[0].mxu0
        %v2019 = vadd.f32 %v1923, %v2018
        %v2020 = vpop.f32.mrb[0].mxu0
        %v2021 = vadd.f32 %v1923, %v2020
        %2022 = vmatprep.mubr.f32.mxu0 0.0
        %2023 = vmatmul.mubr.f32.gmra.mrb[0].mxu0 %v1944
        %v2024 = vpop.f32.mrb[0].mxu0
        %v2025 = vadd.f32 %v1928, %v2024
        %v2026 = vpop.f32.mrb[0].mxu0
        %v2027 = vadd.f32 %v1928, %v2026
        %2028 = vmatprep.mubr.f32.mxu0 0.0
        %2029 = vmatmul.mubr.f32.gmra.mrb[0].mxu0 %v1947
        %v2030 = vpop.f32.mrb[0].mxu0
        %v2031 = vadd.f32 %v1933, %v2030
        %v2032 = vpop.f32.mrb[0].mxu0
        %v2033 = vadd.f32 %v1933, %v2032
        %2034 = vmatprep.mubr.f32.mxu0 0.0
        %2035 = vmatmul.mubr.f32.gmra.mrb[0].mxu0 %v1950
        %v2036 = vpop.f32.mrb[0].mxu0
        %v2037 = vadd.f32 %v1938, %v2036
        %v2038 = vpop.f32.mrb[0].mxu0
        %v2039 = vadd.f32 %v1938, %v2038
        %2040 = vdwg.mxu0
        %2041 = vmatprep.subr.mxu0 %v1909
        %2042 = vmatpush1.msra.mxu0 %v1908
        %2043 = vmatprep.subr.mxu0 0.0
        %2044 = vmatpush1.msra.mxu0 0.0
        %2045 = vmatprep.subr.mxu0 0.0
        %2046 = vmatpush1.msra.mxu0 0.0
        %2047 = vmatprep.subr.mxu0 0.0
        %2048 = vmatpush1.msra.mxu0 0.0
        %2049 = vmatprep.subr.mxu0 0.0
        %2050 = vmatpush1.msra.mxu0 0.0
        %2051 = vmatprep.subr.mxu0 0.0
        %2052 = vmatpush1.msra.mxu0 0.0
        %2053 = vmatprep.subr.mxu0 0.0
        %2054 = vmatpush1.msra.mxu0 0.0
        %2055 = vmatprep.subr.mxu0 0.0
        %2056 = vmatpush1.msra.mxu0 0.0
        %2057 = vmatprep.subr.mxu0 0.0
        %2058 = vmatpush1.msra.mxu0 0.0
        %2059 = vmatprep.subr.mxu0 0.0
        %2060 = vmatpush1.msra.mxu0 0.0
        %2061 = vmatprep.subr.mxu0 0.0
        %2062 = vmatpush1.msra.mxu0 0.0
        %2063 = vmatprep.subr.mxu0 0.0
        %2064 = vmatpush1.msra.mxu0 0.0
        %2065 = vmatprep.subr.mxu0 0.0
        %2066 = vmatpush1.msra.mxu0 0.0
        %2067 = vmatprep.subr.mxu0 0.0
        %2068 = vmatpush1.msra.mxu0 0.0
        %2069 = vmatprep.subr.mxu0 0.0
        %2070 = vmatpush1.msra.mxu0 0.0
        %2071 = vmatprep.subr.mxu0 0.0
        %2072 = vmatpush1.msra.mxu0 0.0
        %2073 = vmatprep.subr.mxu0 0.0
        %2074 = vmatpush1.msra.mxu0 0.0
        %2075 = vmatprep.subr.mxu0 0.0
        %2076 = vmatpush1.msra.mxu0 0.0
        %2077 = vmatprep.subr.mxu0 0.0
        %2078 = vmatpush1.msra.mxu0 0.0
        %2079 = vmatprep.subr.mxu0 0.0
        %2080 = vmatpush1.msra.mxu0 0.0
        %2081 = vmatprep.subr.mxu0 0.0
        %2082 = vmatpush1.msra.mxu0 0.0
        %2083 = vmatprep.subr.mxu0 0.0
        %2084 = vmatpush1.msra.mxu0 0.0
        %2085 = vmatprep.subr.mxu0 0.0
        %2086 = vmatpush1.msra.mxu0 0.0
        %2087 = vmatprep.subr.mxu0 0.0
        %2088 = vmatpush1.msra.mxu0 0.0
        %2089 = vmatprep.subr.mxu0 0.0
        %2090 = vmatpush1.msra.mxu0 0.0
        %2091 = vmatprep.subr.mxu0 0.0
        %2092 = vmatpush1.msra.mxu0 0.0
        %2093 = vmatprep.subr.mxu0 0.0
        %2094 = vmatpush1.msra.mxu0 0.0
        %2095 = vmatprep.subr.mxu0 0.0
        %2096 = vmatpush1.msra.mxu0 0.0
        %2097 = vmatprep.subr.mxu0 0.0
        %2098 = vmatpush1.msra.mxu0 0.0
        %2099 = vmatprep.subr.mxu0 0.0
        %2100 = vmatpush1.msra.mxu0 0.0
        %2101 = vmatprep.subr.mxu0 0.0
        %2102 = vmatpush1.msra.mxu0 0.0
        %2103 = vmatprep.subr.mxu0 0.0
        %2104 = vmatpush1.msra.mxu0 0.0
        %2105 = vmatprep.mubr.f32.mxu0 0.0
        %2106 = vmatmul.mubr.f32.gmra.mrb[0].mxu0 %v1941
        %v2107 = vpop.f32.mrb[0].mxu0
        %v2108 = vadd.f32 %v1923, %v2107
        %v2109 = vpop.f32.mrb[0].mxu0
        %v2110 = vadd.f32 %v1923, %v2109
        %2111 = vmatprep.mubr.f32.mxu0 0.0
        %2112 = vmatmul.mubr.f32.gmra.mrb[0].mxu0 %v1944
        %v2113 = vpop.f32.mrb[0].mxu0
        %v2114 = vadd.f32 %v1928, %v2113
        %v2115 = vpop.f32.mrb[0].mxu0
        %v2116 = vadd.f32 %v1928, %v2115
        %2117 = vmatprep.mubr.f32.mxu0 0.0
        %2118 = vmatmul.mubr.f32.gmra.mrb[0].mxu0 %v1947
        %v2119 = vpop.f32.mrb[0].mxu0
        %v2120 = vadd.f32 %v1933, %v2119
        %v2121 = vpop.f32.mrb[0].mxu0
        %v2122 = vadd.f32 %v1933, %v2121
        %2123 = vmatprep.mubr.f32.mxu0 0.0
        %2124 = vmatmul.mubr.f32.gmra.mrb[0].mxu0 %v1950
        %v2125 = vpop.f32.mrb[0].mxu0
        %v2126 = vadd.f32 %v1938, %v2125
        %v2127 = vpop.f32.mrb[0].mxu0
        %v2128 = vadd.f32 %v1938, %v2127
        %2129 = vdwg.mxu0
        %v2130 = vadd.f32 %v1542, %v2019
        %v2131 = vadd.f32 %v1543, %v2021
        %v2132 = vadd.f32 %v1544, %v2108
        %v2133 = vadd.f32 %v1545, %v2110
        %v2134 = vadd.f32 %v1546, %v2025
        %v2135 = vadd.f32 %v1547, %v2027
        %v2136 = vadd.f32 %v1548, %v2114
        %v2137 = vadd.f32 %v1549, %v2116
        %v2138 = vadd.f32 %v2031, %v1558
        %v2139 = vadd.f32 %v2033, %v1559
        %v2140 = vadd.f32 %v2120, %v1560
        %v2141 = vadd.f32 %v2122, %v1561
        %v2142 = vadd.f32 %v2037, %v1562
        %v2143 = vadd.f32 %v2039, %v1563
        %v2144 = vadd.f32 %v2126, %v1564
        %v2145 = vadd.f32 %v2128, %v1565
        %v2146 = vmul.f32 %v2138, 0.70710677
        %v2147 = vmul.f32 %v2139, 0.70710677
        %v2148 = vmul.f32 %v2140, 0.70710677
        %v2149 = vmul.f32 %v2141, 0.70710677
        %v2150 = vmul.f32 %v2142, 0.70710677
        %v2151 = vmul.f32 %v2143, 0.70710677
        %v2152 = vmul.f32 %v2144, 0.70710677
        %v2153 = vmul.f32 %v2145, 0.70710677
        %2162 = vrot.lane.b32.xlu0 %v2146, 1
        %v2163 = vpop.permute.xlu0 %2162
        %2164 = vrot.lane.b32.xlu0 %v2147, 1
        %v2165 = vpop.permute.xlu0 %2164
        %2166 = vrot.lane.b32.xlu0 %v2148, 1
        %v2167 = vpop.permute.xlu0 %2166
        %2168 = vrot.lane.b32.xlu0 %v2149, 1
        %v2169 = vpop.permute.xlu0 %2168
        %2170 = vrot.lane.b32.xlu0 %v2150, 1
        %v2171 = vpop.permute.xlu0 %2170
        %2172 = vrot.lane.b32.xlu0 %v2151, 1
        %v2173 = vpop.permute.xlu0 %2172
        %2174 = vrot.lane.b32.xlu0 %v2152, 1
        %v2175 = vpop.permute.xlu0 %2174
        %2176 = vrot.lane.b32.xlu0 %v2153, 1
        %v2177 = vpop.permute.xlu0 %2176
        %v2178 = vsel %vm416, %v2163, %v2165
        %v2179 = vsel %vm416, %v2165, %v2167
        %v2180 = vsel %vm416, %v2167, %v2169
        %v2181 = vsel %vm416, %v2171, %v2173
        %v2182 = vsel %vm416, %v2173, %v2175
        %v2183 = vsel %vm416, %v2175, %v2177
        %2194 = vst.msk [vmem:[#allocation2 + $0x8] sm:$0xff] %vm433, %v2163
        %2195 = vst [vmem:[#allocation2 + $0x10] sm:$0xff] %v2178
        %2196 = vst [vmem:[#allocation2 + $0x18] sm:$0xff] %v2179
        %2197 = vst [vmem:[#allocation2 + $0x20] sm:$0xff] %v2180
        %2198 = vst.msk [vmem:[#allocation2 + $0x28] sm:$0xff] %vm416, %v2169
        %2199 = vst.msk [vmem:[#allocation2 + $0x38] sm:$0xff] %vm433, %v2171
        %2200 = vst [vmem:[#allocation2 + $0x40] sm:$0xff] %v2181
        %2201 = vst [vmem:[#allocation2 + $0x48] sm:$0xff] %v2182
        %2202 = vst [vmem:[#allocation2 + $0x50] sm:$0xff] %v2183
        %2203 = vst.msk [vmem:[#allocation2 + $0x58] sm:$0xff] %vm416, %v2177
        %2204 = vst.msk [vmem:[#allocation2 + $0x8] sm:$0xff] %vm416, 0.0
        %2205 = vst.msk [vmem:[#allocation2 + $0x38] sm:$0xff] %vm416, 0.0
        %2206 = vst.msk [vmem:[#allocation2 + $0x18] sm:$0xff] %vm416, 0.0
        %2207 = vst.msk [vmem:[#allocation2 + $0x48] sm:$0xff] %vm416, 0.0
        %2208 = vst [vmem:[#allocation2 + $0x68] sm:$0xff] %v2146
        %2209 = vst [vmem:[#allocation2 + $0x70] sm:$0xff] %v2147
        %2210 = vst [vmem:[#allocation2 + $0x78] sm:$0xff] %v2148
        %2211 = vst [vmem:[#allocation2 + $0x80] sm:$0xff] %v2149
        %2212 = vst [vmem:[#allocation2 + $0x98] sm:$0xff] %v2150
        %2213 = vst [vmem:[#allocation2 + $0xa0] sm:$0xff] %v2151
        %2214 = vst [vmem:[#allocation2 + $0xa8] sm:$0xff] %v2152
        %2215 = vst [vmem:[#allocation2 + $0xb0] sm:$0xff] %v2153
        %2216 = vrot.lane.b32.xlu0 %v2146, 127
        %v2217 = vpop.permute.xlu0 %2216
        %2218 = vrot.lane.b32.xlu0 %v2147, 127
        %v2219 = vpop.permute.xlu0 %2218
        %2220 = vrot.lane.b32.xlu0 %v2148, 127
        %v2221 = vpop.permute.xlu0 %2220
        %2222 = vrot.lane.b32.xlu0 %v2149, 127
        %v2223 = vpop.permute.xlu0 %2222
        %2224 = vrot.lane.b32.xlu0 %v2150, 127
        %v2225 = vpop.permute.xlu0 %2224
        %2226 = vrot.lane.b32.xlu0 %v2151, 127
        %v2227 = vpop.permute.xlu0 %2226
        %2228 = vrot.lane.b32.xlu0 %v2152, 127
        %v2229 = vpop.permute.xlu0 %2228
        %2230 = vrot.lane.b32.xlu0 %v2153, 127
        %v2231 = vpop.permute.xlu0 %2230
        %v2232 = vsel %vm472, %v2217, %v2219
        %v2233 = vsel %vm472, %v2219, %v2221
        %v2234 = vsel %vm472, %v2221, %v2223
        %v2235 = vsel %vm472, %v2225, %v2227
        %v2236 = vsel %vm472, %v2227, %v2229
        %v2237 = vsel %vm472, %v2229, %v2231
        %2248 = vst.msk [vmem:[#allocation2 + $0xc0] sm:$0xff] %vm489, %v2217
        %2249 = vst [vmem:[#allocation2 + $0xc8] sm:$0xff] %v2232
        %2250 = vst [vmem:[#allocation2 + $0xd0] sm:$0xff] %v2233
        %2251 = vst [vmem:[#allocation2 + $0xd8] sm:$0xff] %v2234
        %2252 = vst.msk [vmem:[#allocation2 + $0xe0] sm:$0xff] %vm472, %v2223
        %2253 = vst.msk [vmem:[#allocation2 + $0xf0] sm:$0xff] %vm489, %v2225
        %2254 = vst [vmem:[#allocation2 + $0xf8] sm:$0xff] %v2235
        %2255 = vst [vmem:[#allocation2 + $0x100] sm:$0xff] %v2236
        %2256 = vst [vmem:[#allocation2 + $0x108] sm:$0xff] %v2237
        %2257 = vst.msk [vmem:[#allocation2 + $0x110] sm:$0xff] %vm472, %v2231
        %2258 = vst.msk [vmem:[#allocation2 + $0xd0] sm:$0xff] %vm489, 0.0
        %2259 = vst.msk [vmem:[#allocation2 + $0x100] sm:$0xff] %vm489, 0.0
        %2260 = vst.msk [vmem:[#allocation2 + $0xe0] sm:$0xff] %vm489, 0.0
        %2261 = vst.msk [vmem:[#allocation2 + $0x110] sm:$0xff] %vm489, 0.0
        %v2262 = vld [vmem:[#allocation2 + $0x8] sm:$0xff]
        %v2263 = vld [vmem:[#allocation2 + $0x10] sm:$0xff]
        %v2264 = vld [vmem:[#allocation2 + $0x18] sm:$0xff]
        %v2265 = vld [vmem:[#allocation2 + $0x20] sm:$0xff]
        %v2266 = vld [vmem:[#allocation2 + $0x38] sm:$0xff]
        %v2267 = vld [vmem:[#allocation2 + $0x40] sm:$0xff]
        %v2268 = vld [vmem:[#allocation2 + $0x48] sm:$0xff]
        %v2269 = vld [vmem:[#allocation2 + $0x50] sm:$0xff]
        %v2270 = vld [vmem:[#allocation2 + $0x68] sm:$0xff]
        %v2271 = vld [vmem:[#allocation2 + $0x70] sm:$0xff]
        %v2272 = vld [vmem:[#allocation2 + $0x78] sm:$0xff]
        %v2273 = vld [vmem:[#allocation2 + $0x80] sm:$0xff]
        %v2274 = vld [vmem:[#allocation2 + $0x98] sm:$0xff]
        %v2275 = vld [vmem:[#allocation2 + $0xa0] sm:$0xff]
        %v2276 = vld [vmem:[#allocation2 + $0xa8] sm:$0xff]
        %v2277 = vld [vmem:[#allocation2 + $0xb0] sm:$0xff]
        %v2278 = vld [vmem:[#allocation2 + $0xc8] sm:$0xff]
        %v2279 = vld [vmem:[#allocation2 + $0xd0] sm:$0xff]
        %v2280 = vld [vmem:[#allocation2 + $0xd8] sm:$0xff]
        %v2281 = vld [vmem:[#allocation2 + $0xe0] sm:$0xff]
        %v2282 = vld [vmem:[#allocation2 + $0xf8] sm:$0xff]
        %v2283 = vld [vmem:[#allocation2 + $0x100] sm:$0xff]
        %v2284 = vld [vmem:[#allocation2 + $0x108] sm:$0xff]
        %v2285 = vld [vmem:[#allocation2 + $0x110] sm:$0xff]
        %s2286 = scalar_lea.vmem %s3, 48
        %v2287 = vld [vmem:[%s2286] sm:$0xff]
        %v2288 = vld [vmem:[%s2286 + $0x8] sm:$0xff]
        %s2289 = scalar_lea.vmem %s4, 48
        %v2290 = vld [vmem:[%s2289] sm:$0xff]
        %v2291 = vld [vmem:[%s2289 + $0x8] sm:$0xff]
        %2293 = vset.pattern.permute.xlu0 0
        %2294 = vperm.xlu0 %2293, %v2290
        %v2295 = vpop.permute.xlu0 %2294
        %2298 = vset.pattern.permute.xlu0 0
        %2299 = vperm.xlu0 %2298, %v2291
        %v2300 = vpop.permute.xlu0 %2299
        %v2303 = vsel %vm542, %v2287, 0
        %v2306 = vsel %vm542, %v2288, 0
        %2308 = vmatprep.subr.mxu0 %v2263
        %2309 = vmatpush1.msra.mxu0 %v2262
        %2310 = vmatprep.subr.mxu0 %v2267
        %2311 = vmatpush1.msra.mxu0 %v2266
        %2312 = vmatprep.subr.mxu0 %v2271
        %2313 = vmatpush1.msra.mxu0 %v2270
        %2314 = vmatprep.subr.mxu0 %v2275
        %2315 = vmatpush1.msra.mxu0 %v2274
        %2316 = vmatprep.subr.mxu0 %v2279
        %2317 = vmatpush1.msra.mxu0 %v2278
        %2318 = vmatprep.subr.mxu0 %v2283
        %2319 = vmatpush1.msra.mxu0 %v2282
        %2320 = vmatprep.subr.mxu0 0.0
        %2321 = vmatpush1.msra.mxu0 0.0
        %2322 = vmatprep.subr.mxu0 0.0
        %2323 = vmatpush1.msra.mxu0 0.0
        %2324 = vmatprep.subr.mxu0 0.0
        %2325 = vmatpush1.msra.mxu0 0.0
        %2326 = vmatprep.subr.mxu0 0.0
        %2327 = vmatpush1.msra.mxu0 0.0
        %2328 = vmatprep.subr.mxu0 0.0
        %2329 = vmatpush1.msra.mxu0 0.0
        %2330 = vmatprep.subr.mxu0 0.0
        %2331 = vmatpush1.msra.mxu0 0.0
        %2332 = vmatprep.subr.mxu0 0.0
        %2333 = vmatpush1.msra.mxu0 0.0
        %2334 = vmatprep.subr.mxu0 0.0
        %2335 = vmatpush1.msra.mxu0 0.0
        %2336 = vmatprep.subr.mxu0 0.0
        %2337 = vmatpush1.msra.mxu0 0.0
        %2338 = vmatprep.subr.mxu0 0.0
        %2339 = vmatpush1.msra.mxu0 0.0
        %2340 = vmatprep.subr.mxu0 0.0
        %2341 = vmatpush1.msra.mxu0 0.0
        %2342 = vmatprep.subr.mxu0 0.0
        %2343 = vmatpush1.msra.mxu0 0.0
        %2344 = vmatprep.subr.mxu0 0.0
        %2345 = vmatpush1.msra.mxu0 0.0
        %2346 = vmatprep.subr.mxu0 0.0
        %2347 = vmatpush1.msra.mxu0 0.0
        %2348 = vmatprep.subr.mxu0 0.0
        %2349 = vmatpush1.msra.mxu0 0.0
        %2350 = vmatprep.subr.mxu0 0.0
        %2351 = vmatpush1.msra.mxu0 0.0
        %2352 = vmatprep.subr.mxu0 0.0
        %2353 = vmatpush1.msra.mxu0 0.0
        %2354 = vmatprep.subr.mxu0 0.0
        %2355 = vmatpush1.msra.mxu0 0.0
        %2356 = vmatprep.subr.mxu0 0.0
        %2357 = vmatpush1.msra.mxu0 0.0
        %2358 = vmatprep.subr.mxu0 0.0
        %2359 = vmatpush1.msra.mxu0 0.0
        %2360 = vmatprep.subr.mxu0 0.0
        %2361 = vmatpush1.msra.mxu0 0.0
        %2362 = vmatprep.subr.mxu0 0.0
        %2363 = vmatpush1.msra.mxu0 0.0
        %2364 = vmatprep.subr.mxu0 0.0
        %2365 = vmatpush1.msra.mxu0 0.0
        %2366 = vmatprep.subr.mxu0 0.0
        %2367 = vmatpush1.msra.mxu0 0.0
        %2368 = vmatprep.subr.mxu0 0.0
        %2369 = vmatpush1.msra.mxu0 0.0
        %2370 = vmatprep.subr.mxu0 0.0
        %2371 = vmatpush1.msra.mxu0 0.0
        %2372 = vmatprep.mubr.f32.mxu0 0.0
        %2373 = vmatmul.mubr.f32.gmra.mrb[0].mxu0 %v2303
        %v2374 = vpop.f32.mrb[0].mxu0
        %v2375 = vadd.f32 %v2295, %v2374
        %v2376 = vpop.f32.mrb[0].mxu0
        %v2377 = vadd.f32 %v2295, %v2376
        %2378 = vmatprep.mubr.f32.mxu0 0.0
        %2379 = vmatmul.mubr.f32.gmra.mrb[0].mxu0 %v2306
        %v2380 = vpop.f32.mrb[0].mxu0
        %v2381 = vadd.f32 %v2300, %v2380
        %v2382 = vpop.f32.mrb[0].mxu0
        %v2383 = vadd.f32 %v2300, %v2382
        %2384 = vdwg.mxu0
        %2385 = vmatprep.subr.mxu0 %v2265
        %2386 = vmatpush1.msra.mxu0 %v2264
        %2387 = vmatprep.subr.mxu0 %v2269
        %2388 = vmatpush1.msra.mxu0 %v2268
        %2389 = vmatprep.subr.mxu0 %v2273
        %2390 = vmatpush1.msra.mxu0 %v2272
        %2391 = vmatprep.subr.mxu0 %v2277
        %2392 = vmatpush1.msra.mxu0 %v2276
        %2393 = vmatprep.subr.mxu0 %v2281
        %2394 = vmatpush1.msra.mxu0 %v2280
        %2395 = vmatprep.subr.mxu0 %v2285
        %2396 = vmatpush1.msra.mxu0 %v2284
        %2397 = vmatprep.subr.mxu0 0.0
        %2398 = vmatpush1.msra.mxu0 0.0
        %2399 = vmatprep.subr.mxu0 0.0
        %2400 = vmatpush1.msra.mxu0 0.0
        %2401 = vmatprep.subr.mxu0 0.0
        %2402 = vmatpush1.msra.mxu0 0.0
        %2403 = vmatprep.subr.mxu0 0.0
        %2404 = vmatpush1.msra.mxu0 0.0
        %2405 = vmatprep.subr.mxu0 0.0
        %2406 = vmatpush1.msra.mxu0 0.0
        %2407 = vmatprep.subr.mxu0 0.0
        %2408 = vmatpush1.msra.mxu0 0.0
        %2409 = vmatprep.subr.mxu0 0.0
        %2410 = vmatpush1.msra.mxu0 0.0
        %2411 = vmatprep.subr.mxu0 0.0
        %2412 = vmatpush1.msra.mxu0 0.0
        %2413 = vmatprep.subr.mxu0 0.0
        %2414 = vmatpush1.msra.mxu0 0.0
        %2415 = vmatprep.subr.mxu0 0.0
        %2416 = vmatpush1.msra.mxu0 0.0
        %2417 = vmatprep.subr.mxu0 0.0
        %2418 = vmatpush1.msra.mxu0 0.0
        %2419 = vmatprep.subr.mxu0 0.0
        %2420 = vmatpush1.msra.mxu0 0.0
        %2421 = vmatprep.subr.mxu0 0.0
        %2422 = vmatpush1.msra.mxu0 0.0
        %2423 = vmatprep.subr.mxu0 0.0
        %2424 = vmatpush1.msra.mxu0 0.0
        %2425 = vmatprep.subr.mxu0 0.0
        %2426 = vmatpush1.msra.mxu0 0.0
        %2427 = vmatprep.subr.mxu0 0.0
        %2428 = vmatpush1.msra.mxu0 0.0
        %2429 = vmatprep.subr.mxu0 0.0
        %2430 = vmatpush1.msra.mxu0 0.0
        %2431 = vmatprep.subr.mxu0 0.0
        %2432 = vmatpush1.msra.mxu0 0.0
        %2433 = vmatprep.subr.mxu0 0.0
        %2434 = vmatpush1.msra.mxu0 0.0
        %2435 = vmatprep.subr.mxu0 0.0
        %2436 = vmatpush1.msra.mxu0 0.0
        %2437 = vmatprep.subr.mxu0 0.0
        %2438 = vmatpush1.msra.mxu0 0.0
        %2439 = vmatprep.subr.mxu0 0.0
        %2440 = vmatpush1.msra.mxu0 0.0
        %2441 = vmatprep.subr.mxu0 0.0
        %2442 = vmatpush1.msra.mxu0 0.0
        %2443 = vmatprep.subr.mxu0 0.0
        %2444 = vmatpush1.msra.mxu0 0.0
        %2445 = vmatprep.subr.mxu0 0.0
        %2446 = vmatpush1.msra.mxu0 0.0
        %2447 = vmatprep.subr.mxu0 0.0
        %2448 = vmatpush1.msra.mxu0 0.0
        %2449 = vmatprep.mubr.f32.mxu0 0.0
        %2450 = vmatmul.mubr.f32.gmra.mrb[0].mxu0 %v2303
        %v2451 = vpop.f32.mrb[0].mxu0
        %v2452 = vadd.f32 %v2295, %v2451
        %v2453 = vpop.f32.mrb[0].mxu0
        %v2454 = vadd.f32 %v2295, %v2453
        %2455 = vmatprep.mubr.f32.mxu0 0.0
        %2456 = vmatmul.mubr.f32.gmra.mrb[0].mxu0 %v2306
        %v2457 = vpop.f32.mrb[0].mxu0
        %v2458 = vadd.f32 %v2300, %v2457
        %v2459 = vpop.f32.mrb[0].mxu0
        %v2460 = vadd.f32 %v2300, %v2459
        %2461 = vdwg.mxu0
        %v2462 = vtanh.pop %v2375
        %v2463 = vtanh.pop %v2377
        %v2464 = vtanh.pop %v2452
        %v2465 = vtanh.pop %v2454
        %v2466 = vxor.u32 %v2381, 2147483648
        %v2467 = vxor.u32 %v2383, 2147483648
        %v2468 = vxor.u32 %v2458, 2147483648
        %v2469 = vxor.u32 %v2460, 2147483648
        %v2470 = vmul.f32 %v2466, 1.442695
        %v2471 = vpow.pop %v2470
        %v2472 = vmul.f32 %v2467, 1.442695
        %v2473 = vpow.pop %v2472
        %v2474 = vmul.f32 %v2468, 1.442695
        %v2475 = vpow.pop %v2474
        %v2476 = vmul.f32 %v2469, 1.442695
        %v2477 = vpow.pop %v2476
        %v2478 = vadd.f32 %v2471, 1.0
        %v2479 = vadd.f32 %v2473, 1.0
        %v2480 = vadd.f32 %v2475, 1.0
        %v2481 = vadd.f32 %v2477, 1.0
        %v2482 = vrcp.pop %v2478
        %v2483 = vmul.f32 1.0, %v2482
        %v2484 = vrcp.pop %v2479
        %v2485 = vmul.f32 1.0, %v2484
        %v2486 = vrcp.pop %v2480
        %v2487 = vmul.f32 1.0, %v2486
        %v2488 = vrcp.pop %v2481
        %v2489 = vmul.f32 1.0, %v2488
        %v2490 = vmul.f32 %v2462, %v2483
        %v2491 = vmul.f32 %v2463, %v2485
        %v2492 = vmul.f32 %v2464, %v2487
        %v2493 = vmul.f32 %v2465, %v2489
        %s2494 = scalar_lea.vmem %s5, 96
        %v2495 = vld [vmem:[%s2494] sm:$0xff]
        %v2496 = vld [vmem:[%s2494 + $0x8] sm:$0xff]
        %v2497 = vld [vmem:[%s2494 + $0x10] sm:$0xff]
        %v2498 = vld [vmem:[%s2494 + $0x18] sm:$0xff]
        %s2499 = scalar_lea.vmem %s6, 96
        %v2500 = vld [vmem:[%s2499] sm:$0xff]
        %v2501 = vld [vmem:[%s2499 + $0x8] sm:$0xff]
        %v2502 = vld [vmem:[%s2499 + $0x10] sm:$0xff]
        %v2503 = vld [vmem:[%s2499 + $0x18] sm:$0xff]
        %2505 = vset.pattern.permute.xlu0 0
        %2506 = vperm.xlu0 %2505, %v2500
        %v2507 = vpop.permute.xlu0 %2506
        %2510 = vset.pattern.permute.xlu0 0
        %2511 = vperm.xlu0 %2510, %v2501
        %v2512 = vpop.permute.xlu0 %2511
        %2515 = vset.pattern.permute.xlu0 0
        %2516 = vperm.xlu0 %2515, %v2502
        %v2517 = vpop.permute.xlu0 %2516
        %2520 = vset.pattern.permute.xlu0 0
        %2521 = vperm.xlu0 %2520, %v2503
        %v2522 = vpop.permute.xlu0 %2521
        %v2525 = vsel %vm763, %v2495, 0
        %v2528 = vsel %vm763, %v2496, 0
        %v2531 = vsel %vm763, %v2497, 0
        %v2534 = vsel %vm763, %v2498, 0
        %2536 = vmatprep.subr.mxu0 %v2491
        %2537 = vmatpush1.msra.mxu0 %v2490
        %2538 = vmatprep.subr.mxu0 0.0
        %2539 = vmatpush1.msra.mxu0 0.0
        %2540 = vmatprep.subr.mxu0 0.0
        %2541 = vmatpush1.msra.mxu0 0.0
        %2542 = vmatprep.subr.mxu0 0.0
        %2543 = vmatpush1.msra.mxu0 0.0
        %2544 = vmatprep.subr.mxu0 0.0
        %2545 = vmatpush1.msra.mxu0 0.0
        %2546 = vmatprep.subr.mxu0 0.0
        %2547 = vmatpush1.msra.mxu0 0.0
        %2548 = vmatprep.subr.mxu0 0.0
        %2549 = vmatpush1.msra.mxu0 0.0
        %2550 = vmatprep.subr.mxu0 0.0
        %2551 = vmatpush1.msra.mxu0 0.0
        %2552 = vmatprep.subr.mxu0 0.0
        %2553 = vmatpush1.msra.mxu0 0.0
        %2554 = vmatprep.subr.mxu0 0.0
        %2555 = vmatpush1.msra.mxu0 0.0
        %2556 = vmatprep.subr.mxu0 0.0
        %2557 = vmatpush1.msra.mxu0 0.0
        %2558 = vmatprep.subr.mxu0 0.0
        %2559 = vmatpush1.msra.mxu0 0.0
        %2560 = vmatprep.subr.mxu0 0.0
        %2561 = vmatpush1.msra.mxu0 0.0
        %2562 = vmatprep.subr.mxu0 0.0
        %2563 = vmatpush1.msra.mxu0 0.0
        %2564 = vmatprep.subr.mxu0 0.0
        %2565 = vmatpush1.msra.mxu0 0.0
        %2566 = vmatprep.subr.mxu0 0.0
        %2567 = vmatpush1.msra.mxu0 0.0
        %2568 = vmatprep.subr.mxu0 0.0
        %2569 = vmatpush1.msra.mxu0 0.0
        %2570 = vmatprep.subr.mxu0 0.0
        %2571 = vmatpush1.msra.mxu0 0.0
        %2572 = vmatprep.subr.mxu0 0.0
        %2573 = vmatpush1.msra.mxu0 0.0
        %2574 = vmatprep.subr.mxu0 0.0
        %2575 = vmatpush1.msra.mxu0 0.0
        %2576 = vmatprep.subr.mxu0 0.0
        %2577 = vmatpush1.msra.mxu0 0.0
        %2578 = vmatprep.subr.mxu0 0.0
        %2579 = vmatpush1.msra.mxu0 0.0
        %2580 = vmatprep.subr.mxu0 0.0
        %2581 = vmatpush1.msra.mxu0 0.0
        %2582 = vmatprep.subr.mxu0 0.0
        %2583 = vmatpush1.msra.mxu0 0.0
        %2584 = vmatprep.subr.mxu0 0.0
        %2585 = vmatpush1.msra.mxu0 0.0
        %2586 = vmatprep.subr.mxu0 0.0
        %2587 = vmatpush1.msra.mxu0 0.0
        %2588 = vmatprep.subr.mxu0 0.0
        %2589 = vmatpush1.msra.mxu0 0.0
        %2590 = vmatprep.subr.mxu0 0.0
        %2591 = vmatpush1.msra.mxu0 0.0
        %2592 = vmatprep.subr.mxu0 0.0
        %2593 = vmatpush1.msra.mxu0 0.0
        %2594 = vmatprep.subr.mxu0 0.0
        %2595 = vmatpush1.msra.mxu0 0.0
        %2596 = vmatprep.subr.mxu0 0.0
        %2597 = vmatpush1.msra.mxu0 0.0
        %2598 = vmatprep.subr.mxu0 0.0
        %2599 = vmatpush1.msra.mxu0 0.0
        %2600 = vmatprep.mubr.f32.mxu0 0.0
        %2601 = vmatmul.mubr.f32.gmra.mrb[0].mxu0 %v2525
        %v2602 = vpop.f32.mrb[0].mxu0
        %v2603 = vadd.f32 %v2507, %v2602
        %v2604 = vpop.f32.mrb[0].mxu0
        %v2605 = vadd.f32 %v2507, %v2604
        %2606 = vmatprep.mubr.f32.mxu0 0.0
        %2607 = vmatmul.mubr.f32.gmra.mrb[0].mxu0 %v2528
        %v2608 = vpop.f32.mrb[0].mxu0
        %v2609 = vadd.f32 %v2512, %v2608
        %v2610 = vpop.f32.mrb[0].mxu0
        %v2611 = vadd.f32 %v2512, %v2610
        %2612 = vmatprep.mubr.f32.mxu0 0.0
        %2613 = vmatmul.mubr.f32.gmra.mrb[0].mxu0 %v2531
        %v2614 = vpop.f32.mrb[0].mxu0
        %v2615 = vadd.f32 %v2517, %v2614
        %v2616 = vpop.f32.mrb[0].mxu0
        %v2617 = vadd.f32 %v2517, %v2616
        %2618 = vmatprep.mubr.f32.mxu0 0.0
        %2619 = vmatmul.mubr.f32.gmra.mrb[0].mxu0 %v2534
        %v2620 = vpop.f32.mrb[0].mxu0
        %v2621 = vadd.f32 %v2522, %v2620
        %v2622 = vpop.f32.mrb[0].mxu0
        %v2623 = vadd.f32 %v2522, %v2622
        %2624 = vdwg.mxu0
        %2625 = vmatprep.subr.mxu0 %v2493
        %2626 = vmatpush1.msra.mxu0 %v2492
        %2627 = vmatprep.subr.mxu0 0.0
        %2628 = vmatpush1.msra.mxu0 0.0
        %2629 = vmatprep.subr.mxu0 0.0
        %2630 = vmatpush1.msra.mxu0 0.0
        %2631 = vmatprep.subr.mxu0 0.0
        %2632 = vmatpush1.msra.mxu0 0.0
        %2633 = vmatprep.subr.mxu0 0.0
        %2634 = vmatpush1.msra.mxu0 0.0
        %2635 = vmatprep.subr.mxu0 0.0
        %2636 = vmatpush1.msra.mxu0 0.0
        %2637 = vmatprep.subr.mxu0 0.0
        %2638 = vmatpush1.msra.mxu0 0.0
        %2639 = vmatprep.subr.mxu0 0.0
        %2640 = vmatpush1.msra.mxu0 0.0
        %2641 = vmatprep.subr.mxu0 0.0
        %2642 = vmatpush1.msra.mxu0 0.0
        %2643 = vmatprep.subr.mxu0 0.0
        %2644 = vmatpush1.msra.mxu0 0.0
        %2645 = vmatprep.subr.mxu0 0.0
        %2646 = vmatpush1.msra.mxu0 0.0
        %2647 = vmatprep.subr.mxu0 0.0
        %2648 = vmatpush1.msra.mxu0 0.0
        %2649 = vmatprep.subr.mxu0 0.0
        %2650 = vmatpush1.msra.mxu0 0.0
        %2651 = vmatprep.subr.mxu0 0.0
        %2652 = vmatpush1.msra.mxu0 0.0
        %2653 = vmatprep.subr.mxu0 0.0
        %2654 = vmatpush1.msra.mxu0 0.0
        %2655 = vmatprep.subr.mxu0 0.0
        %2656 = vmatpush1.msra.mxu0 0.0
        %2657 = vmatprep.subr.mxu0 0.0
        %2658 = vmatpush1.msra.mxu0 0.0
        %2659 = vmatprep.subr.mxu0 0.0
        %2660 = vmatpush1.msra.mxu0 0.0
        %2661 = vmatprep.subr.mxu0 0.0
        %2662 = vmatpush1.msra.mxu0 0.0
        %2663 = vmatprep.subr.mxu0 0.0
        %2664 = vmatpush1.msra.mxu0 0.0
        %2665 = vmatprep.subr.mxu0 0.0
        %2666 = vmatpush1.msra.mxu0 0.0
        %2667 = vmatprep.subr.mxu0 0.0
        %2668 = vmatpush1.msra.mxu0 0.0
        %2669 = vmatprep.subr.mxu0 0.0
        %2670 = vmatpush1.msra.mxu0 0.0
        %2671 = vmatprep.subr.mxu0 0.0
        %2672 = vmatpush1.msra.mxu0 0.0
        %2673 = vmatprep.subr.mxu0 0.0
        %2674 = vmatpush1.msra.mxu0 0.0
        %2675 = vmatprep.subr.mxu0 0.0
        %2676 = vmatpush1.msra.mxu0 0.0
        %2677 = vmatprep.subr.mxu0 0.0
        %2678 = vmatpush1.msra.mxu0 0.0
        %2679 = vmatprep.subr.mxu0 0.0
        %2680 = vmatpush1.msra.mxu0 0.0
        %2681 = vmatprep.subr.mxu0 0.0
        %2682 = vmatpush1.msra.mxu0 0.0
        %2683 = vmatprep.subr.mxu0 0.0
        %2684 = vmatpush1.msra.mxu0 0.0
        %2685 = vmatprep.subr.mxu0 0.0
        %2686 = vmatpush1.msra.mxu0 0.0
        %2687 = vmatprep.subr.mxu0 0.0
        %2688 = vmatpush1.msra.mxu0 0.0
        %2689 = vmatprep.mubr.f32.mxu0 0.0
        %2690 = vmatmul.mubr.f32.gmra.mrb[0].mxu0 %v2525
        %v2691 = vpop.f32.mrb[0].mxu0
        %v2692 = vadd.f32 %v2507, %v2691
        %v2693 = vpop.f32.mrb[0].mxu0
        %v2694 = vadd.f32 %v2507, %v2693
        %2695 = vmatprep.mubr.f32.mxu0 0.0
        %2696 = vmatmul.mubr.f32.gmra.mrb[0].mxu0 %v2528
        %v2697 = vpop.f32.mrb[0].mxu0
        %v2698 = vadd.f32 %v2512, %v2697
        %v2699 = vpop.f32.mrb[0].mxu0
        %v2700 = vadd.f32 %v2512, %v2699
        %2701 = vmatprep.mubr.f32.mxu0 0.0
        %2702 = vmatmul.mubr.f32.gmra.mrb[0].mxu0 %v2531
        %v2703 = vpop.f32.mrb[0].mxu0
        %v2704 = vadd.f32 %v2517, %v2703
        %v2705 = vpop.f32.mrb[0].mxu0
        %v2706 = vadd.f32 %v2517, %v2705
        %2707 = vmatprep.mubr.f32.mxu0 0.0
        %2708 = vmatmul.mubr.f32.gmra.mrb[0].mxu0 %v2534
        %v2709 = vpop.f32.mrb[0].mxu0
        %v2710 = vadd.f32 %v2522, %v2709
        %v2711 = vpop.f32.mrb[0].mxu0
        %v2712 = vadd.f32 %v2522, %v2711
        %2713 = vdwg.mxu0
        %v2714 = vadd.f32 %v2130, %v2603
        %v2715 = vadd.f32 %v2131, %v2605
        %v2716 = vadd.f32 %v2132, %v2692
        %v2717 = vadd.f32 %v2133, %v2694
        %v2718 = vadd.f32 %v2134, %v2609
        %v2719 = vadd.f32 %v2135, %v2611
        %v2720 = vadd.f32 %v2136, %v2698
        %v2721 = vadd.f32 %v2137, %v2700
        %v2722 = vadd.f32 %v2615, %v2146
        %v2723 = vadd.f32 %v2617, %v2147
        %v2724 = vadd.f32 %v2704, %v2148
        %v2725 = vadd.f32 %v2706, %v2149
        %v2726 = vadd.f32 %v2621, %v2150
        %v2727 = vadd.f32 %v2623, %v2151
        %v2728 = vadd.f32 %v2710, %v2152
        %v2729 = vadd.f32 %v2712, %v2153
        %v2730 = vmul.f32 %v2722, 0.70710677
        %v2731 = vmul.f32 %v2723, 0.70710677
        %v2732 = vmul.f32 %v2724, 0.70710677
        %v2733 = vmul.f32 %v2725, 0.70710677
        %v2734 = vmul.f32 %v2726, 0.70710677
        %v2735 = vmul.f32 %v2727, 0.70710677
        %v2736 = vmul.f32 %v2728, 0.70710677
        %v2737 = vmul.f32 %v2729, 0.70710677
        %2746 = vrot.lane.b32.xlu0 %v2730, 2
        %v2747 = vpop.permute.xlu0 %2746
        %2748 = vrot.lane.b32.xlu0 %v2731, 2
        %v2749 = vpop.permute.xlu0 %2748
        %2750 = vrot.lane.b32.xlu0 %v2732, 2
        %v2751 = vpop.permute.xlu0 %2750
        %2752 = vrot.lane.b32.xlu0 %v2733, 2
        %v2753 = vpop.permute.xlu0 %2752
        %2754 = vrot.lane.b32.xlu0 %v2734, 2
        %v2755 = vpop.permute.xlu0 %2754
        %2756 = vrot.lane.b32.xlu0 %v2735, 2
        %v2757 = vpop.permute.xlu0 %2756
        %2758 = vrot.lane.b32.xlu0 %v2736, 2
        %v2759 = vpop.permute.xlu0 %2758
        %2760 = vrot.lane.b32.xlu0 %v2737, 2
        %v2761 = vpop.permute.xlu0 %2760
        %v2762 = vsel %vm1002, %v2747, %v2749
        %v2763 = vsel %vm1002, %v2749, %v2751
        %v2764 = vsel %vm1002, %v2751, %v2753
        %v2765 = vsel %vm1002, %v2755, %v2757
        %v2766 = vsel %vm1002, %v2757, %v2759
        %v2767 = vsel %vm1002, %v2759, %v2761
        %2778 = vst.msk [vmem:[#allocation2 + $0x8] sm:$0xff] %vm1019, %v2747
        %2779 = vst [vmem:[#allocation2 + $0x10] sm:$0xff] %v2762
        %2780 = vst [vmem:[#allocation2 + $0x18] sm:$0xff] %v2763
        %2781 = vst [vmem:[#allocation2 + $0x20] sm:$0xff] %v2764
        %2782 = vst.msk [vmem:[#allocation2 + $0x28] sm:$0xff] %vm1002, %v2753
        %2783 = vst.msk [vmem:[#allocation2 + $0x38] sm:$0xff] %vm1019, %v2755
        %2784 = vst [vmem:[#allocation2 + $0x40] sm:$0xff] %v2765
        %2785 = vst [vmem:[#allocation2 + $0x48] sm:$0xff] %v2766
        %2786 = vst [vmem:[#allocation2 + $0x50] sm:$0xff] %v2767
        %2787 = vst.msk [vmem:[#allocation2 + $0x58] sm:$0xff] %vm1002, %v2761
        %2788 = vst.msk [vmem:[#allocation2 + $0x8] sm:$0xff] %vm1002, 0.0
        %2789 = vst.msk [vmem:[#allocation2 + $0x38] sm:$0xff] %vm1002, 0.0
        %2790 = vst.msk [vmem:[#allocation2 + $0x18] sm:$0xff] %vm1002, 0.0
        %2791 = vst.msk [vmem:[#allocation2 + $0x48] sm:$0xff] %vm1002, 0.0
        %2792 = vst [vmem:[#allocation2 + $0x68] sm:$0xff] %v2730
        %2793 = vst [vmem:[#allocation2 + $0x70] sm:$0xff] %v2731
        %2794 = vst [vmem:[#allocation2 + $0x78] sm:$0xff] %v2732
        %2795 = vst [vmem:[#allocation2 + $0x80] sm:$0xff] %v2733
        %2796 = vst [vmem:[#allocation2 + $0x98] sm:$0xff] %v2734
        %2797 = vst [vmem:[#allocation2 + $0xa0] sm:$0xff] %v2735
        %2798 = vst [vmem:[#allocation2 + $0xa8] sm:$0xff] %v2736
        %2799 = vst [vmem:[#allocation2 + $0xb0] sm:$0xff] %v2737
        %2800 = vrot.lane.b32.xlu0 %v2730, 126
        %v2801 = vpop.permute.xlu0 %2800
        %2802 = vrot.lane.b32.xlu0 %v2731, 126
        %v2803 = vpop.permute.xlu0 %2802
        %2804 = vrot.lane.b32.xlu0 %v2732, 126
        %v2805 = vpop.permute.xlu0 %2804
        %2806 = vrot.lane.b32.xlu0 %v2733, 126
        %v2807 = vpop.permute.xlu0 %2806
        %2808 = vrot.lane.b32.xlu0 %v2734, 126
        %v2809 = vpop.permute.xlu0 %2808
        %2810 = vrot.lane.b32.xlu0 %v2735, 126
        %v2811 = vpop.permute.xlu0 %2810
        %2812 = vrot.lane.b32.xlu0 %v2736, 126
        %v2813 = vpop.permute.xlu0 %2812
        %2814 = vrot.lane.b32.xlu0 %v2737, 126
        %v2815 = vpop.permute.xlu0 %2814
        %v2816 = vsel %vm1058, %v2801, %v2803
        %v2817 = vsel %vm1058, %v2803, %v2805
        %v2818 = vsel %vm1058, %v2805, %v2807
        %v2819 = vsel %vm1058, %v2809, %v2811
        %v2820 = vsel %vm1058, %v2811, %v2813
        %v2821 = vsel %vm1058, %v2813, %v2815
        %2832 = vst.msk [vmem:[#allocation2 + $0xc0] sm:$0xff] %vm1075, %v2801
        %2833 = vst [vmem:[#allocation2 + $0xc8] sm:$0xff] %v2816
        %2834 = vst [vmem:[#allocation2 + $0xd0] sm:$0xff] %v2817
        %2835 = vst [vmem:[#allocation2 + $0xd8] sm:$0xff] %v2818
        %2836 = vst.msk [vmem:[#allocation2 + $0xe0] sm:$0xff] %vm1058, %v2807
        %2837 = vst.msk [vmem:[#allocation2 + $0xf0] sm:$0xff] %vm1075, %v2809
        %2838 = vst [vmem:[#allocation2 + $0xf8] sm:$0xff] %v2819
        %2839 = vst [vmem:[#allocation2 + $0x100] sm:$0xff] %v2820
        %2840 = vst [vmem:[#allocation2 + $0x108] sm:$0xff] %v2821
        %2841 = vst.msk [vmem:[#allocation2 + $0x110] sm:$0xff] %vm1058, %v2815
        %2842 = vst.msk [vmem:[#allocation2 + $0xd0] sm:$0xff] %vm1075, 0.0
        %2843 = vst.msk [vmem:[#allocation2 + $0x100] sm:$0xff] %vm1075, 0.0
        %2844 = vst.msk [vmem:[#allocation2 + $0xe0] sm:$0xff] %vm1075, 0.0
        %2845 = vst.msk [vmem:[#allocation2 + $0x110] sm:$0xff] %vm1075, 0.0
        %v2846 = vld [vmem:[#allocation2 + $0x8] sm:$0xff]
        %v2847 = vld [vmem:[#allocation2 + $0x10] sm:$0xff]
        %v2848 = vld [vmem:[#allocation2 + $0x18] sm:$0xff]
        %v2849 = vld [vmem:[#allocation2 + $0x20] sm:$0xff]
        %v2850 = vld [vmem:[#allocation2 + $0x38] sm:$0xff]
        %v2851 = vld [vmem:[#allocation2 + $0x40] sm:$0xff]
        %v2852 = vld [vmem:[#allocation2 + $0x48] sm:$0xff]
        %v2853 = vld [vmem:[#allocation2 + $0x50] sm:$0xff]
        %v2854 = vld [vmem:[#allocation2 + $0x68] sm:$0xff]
        %v2855 = vld [vmem:[#allocation2 + $0x70] sm:$0xff]
        %v2856 = vld [vmem:[#allocation2 + $0x78] sm:$0xff]
        %v2857 = vld [vmem:[#allocation2 + $0x80] sm:$0xff]
        %v2858 = vld [vmem:[#allocation2 + $0x98] sm:$0xff]
        %v2859 = vld [vmem:[#allocation2 + $0xa0] sm:$0xff]
        %v2860 = vld [vmem:[#allocation2 + $0xa8] sm:$0xff]
        %v2861 = vld [vmem:[#allocation2 + $0xb0] sm:$0xff]
        %v2862 = vld [vmem:[#allocation2 + $0xc8] sm:$0xff]
        %v2863 = vld [vmem:[#allocation2 + $0xd0] sm:$0xff]
        %v2864 = vld [vmem:[#allocation2 + $0xd8] sm:$0xff]
        %v2865 = vld [vmem:[#allocation2 + $0xe0] sm:$0xff]
        %v2866 = vld [vmem:[#allocation2 + $0xf8] sm:$0xff]
        %v2867 = vld [vmem:[#allocation2 + $0x100] sm:$0xff]
        %v2868 = vld [vmem:[#allocation2 + $0x108] sm:$0xff]
        %v2869 = vld [vmem:[#allocation2 + $0x110] sm:$0xff]
        %s2870 = scalar_lea.vmem %s3, 64
        %v2871 = vld [vmem:[%s2870] sm:$0xff]
        %v2872 = vld [vmem:[%s2870 + $0x8] sm:$0xff]
        %s2873 = scalar_lea.vmem %s4, 64
        %v2874 = vld [vmem:[%s2873] sm:$0xff]
        %v2875 = vld [vmem:[%s2873 + $0x8] sm:$0xff]
        %2877 = vset.pattern.permute.xlu0 0
        %2878 = vperm.xlu0 %2877, %v2874
        %v2879 = vpop.permute.xlu0 %2878
        %2882 = vset.pattern.permute.xlu0 0
        %2883 = vperm.xlu0 %2882, %v2875
        %v2884 = vpop.permute.xlu0 %2883
        %v2887 = vsel %vm542, %v2871, 0
        %v2890 = vsel %vm542, %v2872, 0
        %2892 = vmatprep.subr.mxu0 %v2847
        %2893 = vmatpush1.msra.mxu0 %v2846
        %2894 = vmatprep.subr.mxu0 %v2851
        %2895 = vmatpush1.msra.mxu0 %v2850
        %2896 = vmatprep.subr.mxu0 %v2855
        %2897 = vmatpush1.msra.mxu0 %v2854
        %2898 = vmatprep.subr.mxu0 %v2859
        %2899 = vmatpush1.msra.mxu0 %v2858
        %2900 = vmatprep.subr.mxu0 %v2863
        %2901 = vmatpush1.msra.mxu0 %v2862
        %2902 = vmatprep.subr.mxu0 %v2867
        %2903 = vmatpush1.msra.mxu0 %v2866
        %2904 = vmatprep.subr.mxu0 0.0
        %2905 = vmatpush1.msra.mxu0 0.0
        %2906 = vmatprep.subr.mxu0 0.0
        %2907 = vmatpush1.msra.mxu0 0.0
        %2908 = vmatprep.subr.mxu0 0.0
        %2909 = vmatpush1.msra.mxu0 0.0
        %2910 = vmatprep.subr.mxu0 0.0
        %2911 = vmatpush1.msra.mxu0 0.0
        %2912 = vmatprep.subr.mxu0 0.0
        %2913 = vmatpush1.msra.mxu0 0.0
        %2914 = vmatprep.subr.mxu0 0.0
        %2915 = vmatpush1.msra.mxu0 0.0
        %2916 = vmatprep.subr.mxu0 0.0
        %2917 = vmatpush1.msra.mxu0 0.0
        %2918 = vmatprep.subr.mxu0 0.0
        %2919 = vmatpush1.msra.mxu0 0.0
        %2920 = vmatprep.subr.mxu0 0.0
        %2921 = vmatpush1.msra.mxu0 0.0
        %2922 = vmatprep.subr.mxu0 0.0
        %2923 = vmatpush1.msra.mxu0 0.0
        %2924 = vmatprep.subr.mxu0 0.0
        %2925 = vmatpush1.msra.mxu0 0.0
        %2926 = vmatprep.subr.mxu0 0.0
        %2927 = vmatpush1.msra.mxu0 0.0
        %2928 = vmatprep.subr.mxu0 0.0
        %2929 = vmatpush1.msra.mxu0 0.0
        %2930 = vmatprep.subr.mxu0 0.0
        %2931 = vmatpush1.msra.mxu0 0.0
        %2932 = vmatprep.subr.mxu0 0.0
        %2933 = vmatpush1.msra.mxu0 0.0
        %2934 = vmatprep.subr.mxu0 0.0
        %2935 = vmatpush1.msra.mxu0 0.0
        %2936 = vmatprep.subr.mxu0 0.0
        %2937 = vmatpush1.msra.mxu0 0.0
        %2938 = vmatprep.subr.mxu0 0.0
        %2939 = vmatpush1.msra.mxu0 0.0
        %2940 = vmatprep.subr.mxu0 0.0
        %2941 = vmatpush1.msra.mxu0 0.0
        %2942 = vmatprep.subr.mxu0 0.0
        %2943 = vmatpush1.msra.mxu0 0.0
        %2944 = vmatprep.subr.mxu0 0.0
        %2945 = vmatpush1.msra.mxu0 0.0
        %2946 = vmatprep.subr.mxu0 0.0
        %2947 = vmatpush1.msra.mxu0 0.0
        %2948 = vmatprep.subr.mxu0 0.0
        %2949 = vmatpush1.msra.mxu0 0.0
        %2950 = vmatprep.subr.mxu0 0.0
        %2951 = vmatpush1.msra.mxu0 0.0
        %2952 = vmatprep.subr.mxu0 0.0
        %2953 = vmatpush1.msra.mxu0 0.0
        %2954 = vmatprep.subr.mxu0 0.0
        %2955 = vmatpush1.msra.mxu0 0.0
        %2956 = vmatprep.mubr.f32.mxu0 0.0
        %2957 = vmatmul.mubr.f32.gmra.mrb[0].mxu0 %v2887
        %v2958 = vpop.f32.mrb[0].mxu0
        %v2959 = vadd.f32 %v2879, %v2958
        %v2960 = vpop.f32.mrb[0].mxu0
        %v2961 = vadd.f32 %v2879, %v2960
        %2962 = vmatprep.mubr.f32.mxu0 0.0
        %2963 = vmatmul.mubr.f32.gmra.mrb[0].mxu0 %v2890
        %v2964 = vpop.f32.mrb[0].mxu0
        %v2965 = vadd.f32 %v2884, %v2964
        %v2966 = vpop.f32.mrb[0].mxu0
        %v2967 = vadd.f32 %v2884, %v2966
        %2968 = vdwg.mxu0
        %2969 = vmatprep.subr.mxu0 %v2849
        %2970 = vmatpush1.msra.mxu0 %v2848
        %2971 = vmatprep.subr.mxu0 %v2853
        %2972 = vmatpush1.msra.mxu0 %v2852
        %2973 = vmatprep.subr.mxu0 %v2857
        %2974 = vmatpush1.msra.mxu0 %v2856
        %2975 = vmatprep.subr.mxu0 %v2861
        %2976 = vmatpush1.msra.mxu0 %v2860
        %2977 = vmatprep.subr.mxu0 %v2865
        %2978 = vmatpush1.msra.mxu0 %v2864
        %2979 = vmatprep.subr.mxu0 %v2869
        %2980 = vmatpush1.msra.mxu0 %v2868
        %2981 = vmatprep.subr.mxu0 0.0
        %2982 = vmatpush1.msra.mxu0 0.0
        %2983 = vmatprep.subr.mxu0 0.0
        %2984 = vmatpush1.msra.mxu0 0.0
        %2985 = vmatprep.subr.mxu0 0.0
        %2986 = vmatpush1.msra.mxu0 0.0
        %2987 = vmatprep.subr.mxu0 0.0
        %2988 = vmatpush1.msra.mxu0 0.0
        %2989 = vmatprep.subr.mxu0 0.0
        %2990 = vmatpush1.msra.mxu0 0.0
        %2991 = vmatprep.subr.mxu0 0.0
        %2992 = vmatpush1.msra.mxu0 0.0
        %2993 = vmatprep.subr.mxu0 0.0
        %2994 = vmatpush1.msra.mxu0 0.0
        %2995 = vmatprep.subr.mxu0 0.0
        %2996 = vmatpush1.msra.mxu0 0.0
        %2997 = vmatprep.subr.mxu0 0.0
        %2998 = vmatpush1.msra.mxu0 0.0
        %2999 = vmatprep.subr.mxu0 0.0
        %3000 = vmatpush1.msra.mxu0 0.0
        %3001 = vmatprep.subr.mxu0 0.0
        %3002 = vmatpush1.msra.mxu0 0.0
        %3003 = vmatprep.subr.mxu0 0.0
        %3004 = vmatpush1.msra.mxu0 0.0
        %3005 = vmatprep.subr.mxu0 0.0
        %3006 = vmatpush1.msra.mxu0 0.0
        %3007 = vmatprep.subr.mxu0 0.0
        %3008 = vmatpush1.msra.mxu0 0.0
        %3009 = vmatprep.subr.mxu0 0.0
        %3010 = vmatpush1.msra.mxu0 0.0
        %3011 = vmatprep.subr.mxu0 0.0
        %3012 = vmatpush1.msra.mxu0 0.0
        %3013 = vmatprep.subr.mxu0 0.0
        %3014 = vmatpush1.msra.mxu0 0.0
        %3015 = vmatprep.subr.mxu0 0.0
        %3016 = vmatpush1.msra.mxu0 0.0
        %3017 = vmatprep.subr.mxu0 0.0
        %3018 = vmatpush1.msra.mxu0 0.0
        %3019 = vmatprep.subr.mxu0 0.0
        %3020 = vmatpush1.msra.mxu0 0.0
        %3021 = vmatprep.subr.mxu0 0.0
        %3022 = vmatpush1.msra.mxu0 0.0
        %3023 = vmatprep.subr.mxu0 0.0
        %3024 = vmatpush1.msra.mxu0 0.0
        %3025 = vmatprep.subr.mxu0 0.0
        %3026 = vmatpush1.msra.mxu0 0.0
        %3027 = vmatprep.subr.mxu0 0.0
        %3028 = vmatpush1.msra.mxu0 0.0
        %3029 = vmatprep.subr.mxu0 0.0
        %3030 = vmatpush1.msra.mxu0 0.0
        %3031 = vmatprep.subr.mxu0 0.0
        %3032 = vmatpush1.msra.mxu0 0.0
        %3033 = vmatprep.mubr.f32.mxu0 0.0
        %3034 = vmatmul.mubr.f32.gmra.mrb[0].mxu0 %v2887
        %v3035 = vpop.f32.mrb[0].mxu0
        %v3036 = vadd.f32 %v2879, %v3035
        %v3037 = vpop.f32.mrb[0].mxu0
        %v3038 = vadd.f32 %v2879, %v3037
        %3039 = vmatprep.mubr.f32.mxu0 0.0
        %3040 = vmatmul.mubr.f32.gmra.mrb[0].mxu0 %v2890
        %v3041 = vpop.f32.mrb[0].mxu0
        %v3042 = vadd.f32 %v2884, %v3041
        %v3043 = vpop.f32.mrb[0].mxu0
        %v3044 = vadd.f32 %v2884, %v3043
        %3045 = vdwg.mxu0
        %v3046 = vtanh.pop %v2959
        %v3047 = vtanh.pop %v2961
        %v3048 = vtanh.pop %v3036
        %v3049 = vtanh.pop %v3038
        %v3050 = vxor.u32 %v2965, 2147483648
        %v3051 = vxor.u32 %v2967, 2147483648
        %v3052 = vxor.u32 %v3042, 2147483648
        %v3053 = vxor.u32 %v3044, 2147483648
        %v3054 = vmul.f32 %v3050, 1.442695
        %v3055 = vpow.pop %v3054
        %v3056 = vmul.f32 %v3051, 1.442695
        %v3057 = vpow.pop %v3056
        %v3058 = vmul.f32 %v3052, 1.442695
        %v3059 = vpow.pop %v3058
        %v3060 = vmul.f32 %v3053, 1.442695
        %v3061 = vpow.pop %v3060
        %v3062 = vadd.f32 %v3055, 1.0
        %v3063 = vadd.f32 %v3057, 1.0
        %v3064 = vadd.f32 %v3059, 1.0
        %v3065 = vadd.f32 %v3061, 1.0
        %v3066 = vrcp.pop %v3062
        %v3067 = vmul.f32 1.0, %v3066
        %v3068 = vrcp.pop %v3063
        %v3069 = vmul.f32 1.0, %v3068
        %v3070 = vrcp.pop %v3064
        %v3071 = vmul.f32 1.0, %v3070
        %v3072 = vrcp.pop %v3065
        %v3073 = vmul.f32 1.0, %v3072
        %v3074 = vmul.f32 %v3046, %v3067
        %v3075 = vmul.f32 %v3047, %v3069
        %v3076 = vmul.f32 %v3048, %v3071
        %v3077 = vmul.f32 %v3049, %v3073
        %s3078 = scalar_lea.vmem %s5, 128
        %v3079 = vld [vmem:[%s3078] sm:$0xff]
        %v3080 = vld [vmem:[%s3078 + $0x8] sm:$0xff]
        %v3081 = vld [vmem:[%s3078 + $0x10] sm:$0xff]
        %v3082 = vld [vmem:[%s3078 + $0x18] sm:$0xff]
        %s3083 = scalar_lea.vmem %s6, 128
        %v3084 = vld [vmem:[%s3083] sm:$0xff]
        %v3085 = vld [vmem:[%s3083 + $0x8] sm:$0xff]
        %v3086 = vld [vmem:[%s3083 + $0x10] sm:$0xff]
        %v3087 = vld [vmem:[%s3083 + $0x18] sm:$0xff]
        %3089 = vset.pattern.permute.xlu0 0
        %3090 = vperm.xlu0 %3089, %v3084
        %v3091 = vpop.permute.xlu0 %3090
        %3094 = vset.pattern.permute.xlu0 0
        %3095 = vperm.xlu0 %3094, %v3085
        %v3096 = vpop.permute.xlu0 %3095
        %3099 = vset.pattern.permute.xlu0 0
        %3100 = vperm.xlu0 %3099, %v3086
        %v3101 = vpop.permute.xlu0 %3100
        %3104 = vset.pattern.permute.xlu0 0
        %3105 = vperm.xlu0 %3104, %v3087
        %v3106 = vpop.permute.xlu0 %3105
        %v3109 = vsel %vm763, %v3079, 0
        %v3112 = vsel %vm763, %v3080, 0
        %v3115 = vsel %vm763, %v3081, 0
        %v3118 = vsel %vm763, %v3082, 0
        %3120 = vmatprep.subr.mxu0 %v3075
        %3121 = vmatpush1.msra.mxu0 %v3074
        %3122 = vmatprep.subr.mxu0 0.0
        %3123 = vmatpush1.msra.mxu0 0.0
        %3124 = vmatprep.subr.mxu0 0.0
        %3125 = vmatpush1.msra.mxu0 0.0
        %3126 = vmatprep.subr.mxu0 0.0
        %3127 = vmatpush1.msra.mxu0 0.0
        %3128 = vmatprep.subr.mxu0 0.0
        %3129 = vmatpush1.msra.mxu0 0.0
        %3130 = vmatprep.subr.mxu0 0.0
        %3131 = vmatpush1.msra.mxu0 0.0
        %3132 = vmatprep.subr.mxu0 0.0
        %3133 = vmatpush1.msra.mxu0 0.0
        %3134 = vmatprep.subr.mxu0 0.0
        %3135 = vmatpush1.msra.mxu0 0.0
        %3136 = vmatprep.subr.mxu0 0.0
        %3137 = vmatpush1.msra.mxu0 0.0
        %3138 = vmatprep.subr.mxu0 0.0
        %3139 = vmatpush1.msra.mxu0 0.0
        %3140 = vmatprep.subr.mxu0 0.0
        %3141 = vmatpush1.msra.mxu0 0.0
        %3142 = vmatprep.subr.mxu0 0.0
        %3143 = vmatpush1.msra.mxu0 0.0
        %3144 = vmatprep.subr.mxu0 0.0
        %3145 = vmatpush1.msra.mxu0 0.0
        %3146 = vmatprep.subr.mxu0 0.0
        %3147 = vmatpush1.msra.mxu0 0.0
        %3148 = vmatprep.subr.mxu0 0.0
        %3149 = vmatpush1.msra.mxu0 0.0
        %3150 = vmatprep.subr.mxu0 0.0
        %3151 = vmatpush1.msra.mxu0 0.0
        %3152 = vmatprep.subr.mxu0 0.0
        %3153 = vmatpush1.msra.mxu0 0.0
        %3154 = vmatprep.subr.mxu0 0.0
        %3155 = vmatpush1.msra.mxu0 0.0
        %3156 = vmatprep.subr.mxu0 0.0
        %3157 = vmatpush1.msra.mxu0 0.0
        %3158 = vmatprep.subr.mxu0 0.0
        %3159 = vmatpush1.msra.mxu0 0.0
        %3160 = vmatprep.subr.mxu0 0.0
        %3161 = vmatpush1.msra.mxu0 0.0
        %3162 = vmatprep.subr.mxu0 0.0
        %3163 = vmatpush1.msra.mxu0 0.0
        %3164 = vmatprep.subr.mxu0 0.0
        %3165 = vmatpush1.msra.mxu0 0.0
        %3166 = vmatprep.subr.mxu0 0.0
        %3167 = vmatpush1.msra.mxu0 0.0
        %3168 = vmatprep.subr.mxu0 0.0
        %3169 = vmatpush1.msra.mxu0 0.0
        %3170 = vmatprep.subr.mxu0 0.0
        %3171 = vmatpush1.msra.mxu0 0.0
        %3172 = vmatprep.subr.mxu0 0.0
        %3173 = vmatpush1.msra.mxu0 0.0
        %3174 = vmatprep.subr.mxu0 0.0
        %3175 = vmatpush1.msra.mxu0 0.0
        %3176 = vmatprep.subr.mxu0 0.0
        %3177 = vmatpush1.msra.mxu0 0.0
        %3178 = vmatprep.subr.mxu0 0.0
        %3179 = vmatpush1.msra.mxu0 0.0
        %3180 = vmatprep.subr.mxu0 0.0
        %3181 = vmatpush1.msra.mxu0 0.0
        %3182 = vmatprep.subr.mxu0 0.0
        %3183 = vmatpush1.msra.mxu0 0.0
        %3184 = vmatprep.mubr.f32.mxu0 0.0
        %3185 = vmatmul.mubr.f32.gmra.mrb[0].mxu0 %v3109
        %v3186 = vpop.f32.mrb[0].mxu0
        %v3187 = vadd.f32 %v3091, %v3186
        %v3188 = vpop.f32.mrb[0].mxu0
        %v3189 = vadd.f32 %v3091, %v3188
        %3190 = vmatprep.mubr.f32.mxu0 0.0
        %3191 = vmatmul.mubr.f32.gmra.mrb[0].mxu0 %v3112
        %v3192 = vpop.f32.mrb[0].mxu0
        %v3193 = vadd.f32 %v3096, %v3192
        %v3194 = vpop.f32.mrb[0].mxu0
        %v3195 = vadd.f32 %v3096, %v3194
        %3196 = vmatprep.mubr.f32.mxu0 0.0
        %3197 = vmatmul.mubr.f32.gmra.mrb[0].mxu0 %v3115
        %v3198 = vpop.f32.mrb[0].mxu0
        %v3199 = vadd.f32 %v3101, %v3198
        %v3200 = vpop.f32.mrb[0].mxu0
        %v3201 = vadd.f32 %v3101, %v3200
        %3202 = vmatprep.mubr.f32.mxu0 0.0
        %3203 = vmatmul.mubr.f32.gmra.mrb[0].mxu0 %v3118
        %v3204 = vpop.f32.mrb[0].mxu0
        %v3205 = vadd.f32 %v3106, %v3204
        %v3206 = vpop.f32.mrb[0].mxu0
        %v3207 = vadd.f32 %v3106, %v3206
        %3208 = vdwg.mxu0
        %3209 = vmatprep.subr.mxu0 %v3077
        %3210 = vmatpush1.msra.mxu0 %v3076
        %3211 = vmatprep.subr.mxu0 0.0
        %3212 = vmatpush1.msra.mxu0 0.0
        %3213 = vmatprep.subr.mxu0 0.0
        %3214 = vmatpush1.msra.mxu0 0.0
        %3215 = vmatprep.subr.mxu0 0.0
        %3216 = vmatpush1.msra.mxu0 0.0
        %3217 = vmatprep.subr.mxu0 0.0
        %3218 = vmatpush1.msra.mxu0 0.0
        %3219 = vmatprep.subr.mxu0 0.0
        %3220 = vmatpush1.msra.mxu0 0.0
        %3221 = vmatprep.subr.mxu0 0.0
        %3222 = vmatpush1.msra.mxu0 0.0
        %3223 = vmatprep.subr.mxu0 0.0
        %3224 = vmatpush1.msra.mxu0 0.0
        %3225 = vmatprep.subr.mxu0 0.0
        %3226 = vmatpush1.msra.mxu0 0.0
        %3227 = vmatprep.subr.mxu0 0.0
        %3228 = vmatpush1.msra.mxu0 0.0
        %3229 = vmatprep.subr.mxu0 0.0
        %3230 = vmatpush1.msra.mxu0 0.0
        %3231 = vmatprep.subr.mxu0 0.0
        %3232 = vmatpush1.msra.mxu0 0.0
        %3233 = vmatprep.subr.mxu0 0.0
        %3234 = vmatpush1.msra.mxu0 0.0
        %3235 = vmatprep.subr.mxu0 0.0
        %3236 = vmatpush1.msra.mxu0 0.0
        %3237 = vmatprep.subr.mxu0 0.0
        %3238 = vmatpush1.msra.mxu0 0.0
        %3239 = vmatprep.subr.mxu0 0.0
        %3240 = vmatpush1.msra.mxu0 0.0
        %3241 = vmatprep.subr.mxu0 0.0
        %3242 = vmatpush1.msra.mxu0 0.0
        %3243 = vmatprep.subr.mxu0 0.0
        %3244 = vmatpush1.msra.mxu0 0.0
        %3245 = vmatprep.subr.mxu0 0.0
        %3246 = vmatpush1.msra.mxu0 0.0
        %3247 = vmatprep.subr.mxu0 0.0
        %3248 = vmatpush1.msra.mxu0 0.0
        %3249 = vmatprep.subr.mxu0 0.0
        %3250 = vmatpush1.msra.mxu0 0.0
        %3251 = vmatprep.subr.mxu0 0.0
        %3252 = vmatpush1.msra.mxu0 0.0
        %3253 = vmatprep.subr.mxu0 0.0
        %3254 = vmatpush1.msra.mxu0 0.0
        %3255 = vmatprep.subr.mxu0 0.0
        %3256 = vmatpush1.msra.mxu0 0.0
        %3257 = vmatprep.subr.mxu0 0.0
        %3258 = vmatpush1.msra.mxu0 0.0
        %3259 = vmatprep.subr.mxu0 0.0
        %3260 = vmatpush1.msra.mxu0 0.0
        %3261 = vmatprep.subr.mxu0 0.0
        %3262 = vmatpush1.msra.mxu0 0.0
        %3263 = vmatprep.subr.mxu0 0.0
        %3264 = vmatpush1.msra.mxu0 0.0
        %3265 = vmatprep.subr.mxu0 0.0
        %3266 = vmatpush1.msra.mxu0 0.0
        %3267 = vmatprep.subr.mxu0 0.0
        %3268 = vmatpush1.msra.mxu0 0.0
        %3269 = vmatprep.subr.mxu0 0.0
        %3270 = vmatpush1.msra.mxu0 0.0
        %3271 = vmatprep.subr.mxu0 0.0
        %3272 = vmatpush1.msra.mxu0 0.0
        %3273 = vmatprep.mubr.f32.mxu0 0.0
        %3274 = vmatmul.mubr.f32.gmra.mrb[0].mxu0 %v3109
        %v3275 = vpop.f32.mrb[0].mxu0
        %v3276 = vadd.f32 %v3091, %v3275
        %v3277 = vpop.f32.mrb[0].mxu0
        %v3278 = vadd.f32 %v3091, %v3277
        %3279 = vmatprep.mubr.f32.mxu0 0.0
        %3280 = vmatmul.mubr.f32.gmra.mrb[0].mxu0 %v3112
        %v3281 = vpop.f32.mrb[0].mxu0
        %v3282 = vadd.f32 %v3096, %v3281
        %v3283 = vpop.f32.mrb[0].mxu0
        %v3284 = vadd.f32 %v3096, %v3283
        %3285 = vmatprep.mubr.f32.mxu0 0.0
        %3286 = vmatmul.mubr.f32.gmra.mrb[0].mxu0 %v3115
        %v3287 = vpop.f32.mrb[0].mxu0
        %v3288 = vadd.f32 %v3101, %v3287
        %v3289 = vpop.f32.mrb[0].mxu0
        %v3290 = vadd.f32 %v3101, %v3289
        %3291 = vmatprep.mubr.f32.mxu0 0.0
        %3292 = vmatmul.mubr.f32.gmra.mrb[0].mxu0 %v3118
        %v3293 = vpop.f32.mrb[0].mxu0
        %v3294 = vadd.f32 %v3106, %v3293
        %v3295 = vpop.f32.mrb[0].mxu0
        %v3296 = vadd.f32 %v3106, %v3295
        %3297 = vdwg.mxu0
        %v3298 = vadd.f32 %v2714, %v3187
        %v3299 = vadd.f32 %v2715, %v3189
        %v3300 = vadd.f32 %v2716, %v3276
        %v3301 = vadd.f32 %v2717, %v3278
        %v3302 = vadd.f32 %v2718, %v3193
        %v3303 = vadd.f32 %v2719, %v3195
        %v3304 = vadd.f32 %v2720, %v3282
        %v3305 = vadd.f32 %v2721, %v3284
        %v3306 = vadd.f32 %v3199, %v2730
        %v3307 = vadd.f32 %v3201, %v2731
        %v3308 = vadd.f32 %v3288, %v2732
        %v3309 = vadd.f32 %v3290, %v2733
        %v3310 = vadd.f32 %v3205, %v2734
        %v3311 = vadd.f32 %v3207, %v2735
        %v3312 = vadd.f32 %v3294, %v2736
        %v3313 = vadd.f32 %v3296, %v2737
        %v3314 = vmul.f32 %v3306, 0.70710677
        %v3315 = vmul.f32 %v3307, 0.70710677
        %v3316 = vmul.f32 %v3308, 0.70710677
        %v3317 = vmul.f32 %v3309, 0.70710677
        %v3318 = vmul.f32 %v3310, 0.70710677
        %v3319 = vmul.f32 %v3311, 0.70710677
        %v3320 = vmul.f32 %v3312, 0.70710677
        %v3321 = vmul.f32 %v3313, 0.70710677
        %3330 = vrot.lane.b32.xlu0 %v3314, 4
        %v3331 = vpop.permute.xlu0 %3330
        %3332 = vrot.lane.b32.xlu0 %v3315, 4
        %v3333 = vpop.permute.xlu0 %3332
        %3334 = vrot.lane.b32.xlu0 %v3316, 4
        %v3335 = vpop.permute.xlu0 %3334
        %3336 = vrot.lane.b32.xlu0 %v3317, 4
        %v3337 = vpop.permute.xlu0 %3336
        %3338 = vrot.lane.b32.xlu0 %v3318, 4
        %v3339 = vpop.permute.xlu0 %3338
        %3340 = vrot.lane.b32.xlu0 %v3319, 4
        %v3341 = vpop.permute.xlu0 %3340
        %3342 = vrot.lane.b32.xlu0 %v3320, 4
        %v3343 = vpop.permute.xlu0 %3342
        %3344 = vrot.lane.b32.xlu0 %v3321, 4
        %v3345 = vpop.permute.xlu0 %3344
        %v3346 = vsel %vm1590, %v3331, %v3333
        %v3347 = vsel %vm1590, %v3333, %v3335
        %v3348 = vsel %vm1590, %v3335, %v3337
        %v3349 = vsel %vm1590, %v3339, %v3341
        %v3350 = vsel %vm1590, %v3341, %v3343
        %v3351 = vsel %vm1590, %v3343, %v3345
        %3362 = vst.msk [vmem:[#allocation2 + $0x8] sm:$0xff] %vm1607, %v3331
        %3363 = vst [vmem:[#allocation2 + $0x10] sm:$0xff] %v3346
        %3364 = vst [vmem:[#allocation2 + $0x18] sm:$0xff] %v3347
        %3365 = vst [vmem:[#allocation2 + $0x20] sm:$0xff] %v3348
        %3366 = vst.msk [vmem:[#allocation2 + $0x28] sm:$0xff] %vm1590, %v3337
        %3367 = vst.msk [vmem:[#allocation2 + $0x38] sm:$0xff] %vm1607, %v3339
        %3368 = vst [vmem:[#allocation2 + $0x40] sm:$0xff] %v3349
        %3369 = vst [vmem:[#allocation2 + $0x48] sm:$0xff] %v3350
        %3370 = vst [vmem:[#allocation2 + $0x50] sm:$0xff] %v3351
        %3371 = vst.msk [vmem:[#allocation2 + $0x58] sm:$0xff] %vm1590, %v3345
        %3372 = vst.msk [vmem:[#allocation2 + $0x8] sm:$0xff] %vm1590, 0.0
        %3373 = vst.msk [vmem:[#allocation2 + $0x38] sm:$0xff] %vm1590, 0.0
        %3374 = vst.msk [vmem:[#allocation2 + $0x18] sm:$0xff] %vm1590, 0.0
        %3375 = vst.msk [vmem:[#allocation2 + $0x48] sm:$0xff] %vm1590, 0.0
        %3376 = vst [vmem:[#allocation2 + $0x68] sm:$0xff] %v3314
        %3377 = vst [vmem:[#allocation2 + $0x70] sm:$0xff] %v3315
        %3378 = vst [vmem:[#allocation2 + $0x78] sm:$0xff] %v3316
        %3379 = vst [vmem:[#allocation2 + $0x80] sm:$0xff] %v3317
        %3380 = vst [vmem:[#allocation2 + $0x98] sm:$0xff] %v3318
        %3381 = vst [vmem:[#allocation2 + $0xa0] sm:$0xff] %v3319
        %3382 = vst [vmem:[#allocation2 + $0xa8] sm:$0xff] %v3320
        %3383 = vst [vmem:[#allocation2 + $0xb0] sm:$0xff] %v3321
        %3384 = vrot.lane.b32.xlu0 %v3314, 124
        %v3385 = vpop.permute.xlu0 %3384
        %3386 = vrot.lane.b32.xlu0 %v3315, 124
        %v3387 = vpop.permute.xlu0 %3386
        %3388 = vrot.lane.b32.xlu0 %v3316, 124
        %v3389 = vpop.permute.xlu0 %3388
        %3390 = vrot.lane.b32.xlu0 %v3317, 124
        %v3391 = vpop.permute.xlu0 %3390
        %3392 = vrot.lane.b32.xlu0 %v3318, 124
        %v3393 = vpop.permute.xlu0 %3392
        %3394 = vrot.lane.b32.xlu0 %v3319, 124
        %v3395 = vpop.permute.xlu0 %3394
        %3396 = vrot.lane.b32.xlu0 %v3320, 124
        %v3397 = vpop.permute.xlu0 %3396
        %3398 = vrot.lane.b32.xlu0 %v3321, 124
        %v3399 = vpop.permute.xlu0 %3398
        %v3400 = vsel %vm1646, %v3385, %v3387
        %v3401 = vsel %vm1646, %v3387, %v3389
        %v3402 = vsel %vm1646, %v3389, %v3391
        %v3403 = vsel %vm1646, %v3393, %v3395
        %v3404 = vsel %vm1646, %v3395, %v3397
        %v3405 = vsel %vm1646, %v3397, %v3399
        %3416 = vst.msk [vmem:[#allocation2 + $0xc0] sm:$0xff] %vm1663, %v3385
        %3417 = vst [vmem:[#allocation2 + $0xc8] sm:$0xff] %v3400
        %3418 = vst [vmem:[#allocation2 + $0xd0] sm:$0xff] %v3401
        %3419 = vst [vmem:[#allocation2 + $0xd8] sm:$0xff] %v3402
        %3420 = vst.msk [vmem:[#allocation2 + $0xe0] sm:$0xff] %vm1646, %v3391
        %3421 = vst.msk [vmem:[#allocation2 + $0xf0] sm:$0xff] %vm1663, %v3393
        %3422 = vst [vmem:[#allocation2 + $0xf8] sm:$0xff] %v3403
        %3423 = vst [vmem:[#allocation2 + $0x100] sm:$0xff] %v3404
        %3424 = vst [vmem:[#allocation2 + $0x108] sm:$0xff] %v3405
        %3425 = vst.msk [vmem:[#allocation2 + $0x110] sm:$0xff] %vm1646, %v3399
        %3426 = vst.msk [vmem:[#allocation2 + $0xd0] sm:$0xff] %vm1663, 0.0
        %3427 = vst.msk [vmem:[#allocation2 + $0x100] sm:$0xff] %vm1663, 0.0
        %3428 = vst.msk [vmem:[#allocation2 + $0xe0] sm:$0xff] %vm1663, 0.0
        %3429 = vst.msk [vmem:[#allocation2 + $0x110] sm:$0xff] %vm1663, 0.0
        %v3430 = vld [vmem:[#allocation2 + $0x8] sm:$0xff]
        %v3431 = vld [vmem:[#allocation2 + $0x10] sm:$0xff]
        %v3432 = vld [vmem:[#allocation2 + $0x18] sm:$0xff]
        %v3433 = vld [vmem:[#allocation2 + $0x20] sm:$0xff]
        %v3434 = vld [vmem:[#allocation2 + $0x38] sm:$0xff]
        %v3435 = vld [vmem:[#allocation2 + $0x40] sm:$0xff]
        %v3436 = vld [vmem:[#allocation2 + $0x48] sm:$0xff]
        %v3437 = vld [vmem:[#allocation2 + $0x50] sm:$0xff]
        %v3438 = vld [vmem:[#allocation2 + $0x68] sm:$0xff]
        %v3439 = vld [vmem:[#allocation2 + $0x70] sm:$0xff]
        %v3440 = vld [vmem:[#allocation2 + $0x78] sm:$0xff]
        %v3441 = vld [vmem:[#allocation2 + $0x80] sm:$0xff]
        %v3442 = vld [vmem:[#allocation2 + $0x98] sm:$0xff]
        %v3443 = vld [vmem:[#allocation2 + $0xa0] sm:$0xff]
        %v3444 = vld [vmem:[#allocation2 + $0xa8] sm:$0xff]
        %v3445 = vld [vmem:[#allocation2 + $0xb0] sm:$0xff]
        %v3446 = vld [vmem:[#allocation2 + $0xc8] sm:$0xff]
        %v3447 = vld [vmem:[#allocation2 + $0xd0] sm:$0xff]
        %v3448 = vld [vmem:[#allocation2 + $0xd8] sm:$0xff]
        %v3449 = vld [vmem:[#allocation2 + $0xe0] sm:$0xff]
        %v3450 = vld [vmem:[#allocation2 + $0xf8] sm:$0xff]
        %v3451 = vld [vmem:[#allocation2 + $0x100] sm:$0xff]
        %v3452 = vld [vmem:[#allocation2 + $0x108] sm:$0xff]
        %v3453 = vld [vmem:[#allocation2 + $0x110] sm:$0xff]
        %s3454 = scalar_lea.vmem %s3, 80
        %v3455 = vld [vmem:[%s3454] sm:$0xff]
        %v3456 = vld [vmem:[%s3454 + $0x8] sm:$0xff]
        %s3457 = scalar_lea.vmem %s4, 80
        %v3458 = vld [vmem:[%s3457] sm:$0xff]
        %v3459 = vld [vmem:[%s3457 + $0x8] sm:$0xff]
        %3461 = vset.pattern.permute.xlu0 0
        %3462 = vperm.xlu0 %3461, %v3458
        %v3463 = vpop.permute.xlu0 %3462
        %3466 = vset.pattern.permute.xlu0 0
        %3467 = vperm.xlu0 %3466, %v3459
        %v3468 = vpop.permute.xlu0 %3467
        %v3471 = vsel %vm542, %v3455, 0
        %v3474 = vsel %vm542, %v3456, 0
        %3476 = vmatprep.subr.mxu0 %v3431
        %3477 = vmatpush1.msra.mxu0 %v3430
        %3478 = vmatprep.subr.mxu0 %v3435
        %3479 = vmatpush1.msra.mxu0 %v3434
        %3480 = vmatprep.subr.mxu0 %v3439
        %3481 = vmatpush1.msra.mxu0 %v3438
        %3482 = vmatprep.subr.mxu0 %v3443
        %3483 = vmatpush1.msra.mxu0 %v3442
        %3484 = vmatprep.subr.mxu0 %v3447
        %3485 = vmatpush1.msra.mxu0 %v3446
        %3486 = vmatprep.subr.mxu0 %v3451
        %3487 = vmatpush1.msra.mxu0 %v3450
        %3488 = vmatprep.subr.mxu0 0.0
        %3489 = vmatpush1.msra.mxu0 0.0
        %3490 = vmatprep.subr.mxu0 0.0
        %3491 = vmatpush1.msra.mxu0 0.0
        %3492 = vmatprep.subr.mxu0 0.0
        %3493 = vmatpush1.msra.mxu0 0.0
        %3494 = vmatprep.subr.mxu0 0.0
        %3495 = vmatpush1.msra.mxu0 0.0
        %3496 = vmatprep.subr.mxu0 0.0
        %3497 = vmatpush1.msra.mxu0 0.0
        %3498 = vmatprep.subr.mxu0 0.0
        %3499 = vmatpush1.msra.mxu0 0.0
        %3500 = vmatprep.subr.mxu0 0.0
        %3501 = vmatpush1.msra.mxu0 0.0
        %3502 = vmatprep.subr.mxu0 0.0
        %3503 = vmatpush1.msra.mxu0 0.0
        %3504 = vmatprep.subr.mxu0 0.0
        %3505 = vmatpush1.msra.mxu0 0.0
        %3506 = vmatprep.subr.mxu0 0.0
        %3507 = vmatpush1.msra.mxu0 0.0
        %3508 = vmatprep.subr.mxu0 0.0
        %3509 = vmatpush1.msra.mxu0 0.0
        %3510 = vmatprep.subr.mxu0 0.0
        %3511 = vmatpush1.msra.mxu0 0.0
        %3512 = vmatprep.subr.mxu0 0.0
        %3513 = vmatpush1.msra.mxu0 0.0
        %3514 = vmatprep.subr.mxu0 0.0
        %3515 = vmatpush1.msra.mxu0 0.0
        %3516 = vmatprep.subr.mxu0 0.0
        %3517 = vmatpush1.msra.mxu0 0.0
        %3518 = vmatprep.subr.mxu0 0.0
        %3519 = vmatpush1.msra.mxu0 0.0
        %3520 = vmatprep.subr.mxu0 0.0
        %3521 = vmatpush1.msra.mxu0 0.0
        %3522 = vmatprep.subr.mxu0 0.0
        %3523 = vmatpush1.msra.mxu0 0.0
        %3524 = vmatprep.subr.mxu0 0.0
        %3525 = vmatpush1.msra.mxu0 0.0
        %3526 = vmatprep.subr.mxu0 0.0
        %3527 = vmatpush1.msra.mxu0 0.0
        %3528 = vmatprep.subr.mxu0 0.0
        %3529 = vmatpush1.msra.mxu0 0.0
        %3530 = vmatprep.subr.mxu0 0.0
        %3531 = vmatpush1.msra.mxu0 0.0
        %3532 = vmatprep.subr.mxu0 0.0
        %3533 = vmatpush1.msra.mxu0 0.0
        %3534 = vmatprep.subr.mxu0 0.0
        %3535 = vmatpush1.msra.mxu0 0.0
        %3536 = vmatprep.subr.mxu0 0.0
        %3537 = vmatpush1.msra.mxu0 0.0
        %3538 = vmatprep.subr.mxu0 0.0
        %3539 = vmatpush1.msra.mxu0 0.0
        %3540 = vmatprep.mubr.f32.mxu0 0.0
        %3541 = vmatmul.mubr.f32.gmra.mrb[0].mxu0 %v3471
        %v3542 = vpop.f32.mrb[0].mxu0
        %v3543 = vadd.f32 %v3463, %v3542
        %v3544 = vpop.f32.mrb[0].mxu0
        %v3545 = vadd.f32 %v3463, %v3544
        %3546 = vmatprep.mubr.f32.mxu0 0.0
        %3547 = vmatmul.mubr.f32.gmra.mrb[0].mxu0 %v3474
        %v3548 = vpop.f32.mrb[0].mxu0
        %v3549 = vadd.f32 %v3468, %v3548
        %v3550 = vpop.f32.mrb[0].mxu0
        %v3551 = vadd.f32 %v3468, %v3550
        %3552 = vdwg.mxu0
        %3553 = vmatprep.subr.mxu0 %v3433
        %3554 = vmatpush1.msra.mxu0 %v3432
        %3555 = vmatprep.subr.mxu0 %v3437
        %3556 = vmatpush1.msra.mxu0 %v3436
        %3557 = vmatprep.subr.mxu0 %v3441
        %3558 = vmatpush1.msra.mxu0 %v3440
        %3559 = vmatprep.subr.mxu0 %v3445
        %3560 = vmatpush1.msra.mxu0 %v3444
        %3561 = vmatprep.subr.mxu0 %v3449
        %3562 = vmatpush1.msra.mxu0 %v3448
        %3563 = vmatprep.subr.mxu0 %v3453
        %3564 = vmatpush1.msra.mxu0 %v3452
        %3565 = vmatprep.subr.mxu0 0.0
        %3566 = vmatpush1.msra.mxu0 0.0
        %3567 = vmatprep.subr.mxu0 0.0
        %3568 = vmatpush1.msra.mxu0 0.0
        %3569 = vmatprep.subr.mxu0 0.0
        %3570 = vmatpush1.msra.mxu0 0.0
        %3571 = vmatprep.subr.mxu0 0.0
        %3572 = vmatpush1.msra.mxu0 0.0
        %3573 = vmatprep.subr.mxu0 0.0
        %3574 = vmatpush1.msra.mxu0 0.0
        %3575 = vmatprep.subr.mxu0 0.0
        %3576 = vmatpush1.msra.mxu0 0.0
        %3577 = vmatprep.subr.mxu0 0.0
        %3578 = vmatpush1.msra.mxu0 0.0
        %3579 = vmatprep.subr.mxu0 0.0
        %3580 = vmatpush1.msra.mxu0 0.0
        %3581 = vmatprep.subr.mxu0 0.0
        %3582 = vmatpush1.msra.mxu0 0.0
        %3583 = vmatprep.subr.mxu0 0.0
        %3584 = vmatpush1.msra.mxu0 0.0
        %3585 = vmatprep.subr.mxu0 0.0
        %3586 = vmatpush1.msra.mxu0 0.0
        %3587 = vmatprep.subr.mxu0 0.0
        %3588 = vmatpush1.msra.mxu0 0.0
        %3589 = vmatprep.subr.mxu0 0.0
        %3590 = vmatpush1.msra.mxu0 0.0
        %3591 = vmatprep.subr.mxu0 0.0
        %3592 = vmatpush1.msra.mxu0 0.0
        %3593 = vmatprep.subr.mxu0 0.0
        %3594 = vmatpush1.msra.mxu0 0.0
        %3595 = vmatprep.subr.mxu0 0.0
        %3596 = vmatpush1.msra.mxu0 0.0
        %3597 = vmatprep.subr.mxu0 0.0
        %3598 = vmatpush1.msra.mxu0 0.0
        %3599 = vmatprep.subr.mxu0 0.0
        %3600 = vmatpush1.msra.mxu0 0.0
        %3601 = vmatprep.subr.mxu0 0.0
        %3602 = vmatpush1.msra.mxu0 0.0
        %3603 = vmatprep.subr.mxu0 0.0
        %3604 = vmatpush1.msra.mxu0 0.0
        %3605 = vmatprep.subr.mxu0 0.0
        %3606 = vmatpush1.msra.mxu0 0.0
        %3607 = vmatprep.subr.mxu0 0.0
        %3608 = vmatpush1.msra.mxu0 0.0
        %3609 = vmatprep.subr.mxu0 0.0
        %3610 = vmatpush1.msra.mxu0 0.0
        %3611 = vmatprep.subr.mxu0 0.0
        %3612 = vmatpush1.msra.mxu0 0.0
        %3613 = vmatprep.subr.mxu0 0.0
        %3614 = vmatpush1.msra.mxu0 0.0
        %3615 = vmatprep.subr.mxu0 0.0
        %3616 = vmatpush1.msra.mxu0 0.0
        %3617 = vmatprep.mubr.f32.mxu0 0.0
        %3618 = vmatmul.mubr.f32.gmra.mrb[0].mxu0 %v3471
        %v3619 = vpop.f32.mrb[0].mxu0
        %v3620 = vadd.f32 %v3463, %v3619
        %v3621 = vpop.f32.mrb[0].mxu0
        %v3622 = vadd.f32 %v3463, %v3621
        %3623 = vmatprep.mubr.f32.mxu0 0.0
        %3624 = vmatmul.mubr.f32.gmra.mrb[0].mxu0 %v3474
        %v3625 = vpop.f32.mrb[0].mxu0
        %v3626 = vadd.f32 %v3468, %v3625
        %v3627 = vpop.f32.mrb[0].mxu0
        %v3628 = vadd.f32 %v3468, %v3627
        %3629 = vdwg.mxu0
        %v3630 = vtanh.pop %v3543
        %v3631 = vtanh.pop %v3545
        %v3632 = vtanh.pop %v3620
        %v3633 = vtanh.pop %v3622
        %v3634 = vxor.u32 %v3549, 2147483648
        %v3635 = vxor.u32 %v3551, 2147483648
        %v3636 = vxor.u32 %v3626, 2147483648
        %v3637 = vxor.u32 %v3628, 2147483648
        %v3638 = vmul.f32 %v3634, 1.442695
        %v3639 = vpow.pop %v3638
        %v3640 = vmul.f32 %v3635, 1.442695
        %v3641 = vpow.pop %v3640
        %v3642 = vmul.f32 %v3636, 1.442695
        %v3643 = vpow.pop %v3642
        %v3644 = vmul.f32 %v3637, 1.442695
        %v3645 = vpow.pop %v3644
        %v3646 = vadd.f32 %v3639, 1.0
        %v3647 = vadd.f32 %v3641, 1.0
        %v3648 = vadd.f32 %v3643, 1.0
        %v3649 = vadd.f32 %v3645, 1.0
        %v3650 = vrcp.pop %v3646
        %v3651 = vmul.f32 1.0, %v3650
        %v3652 = vrcp.pop %v3647
        %v3653 = vmul.f32 1.0, %v3652
        %v3654 = vrcp.pop %v3648
        %v3655 = vmul.f32 1.0, %v3654
        %v3656 = vrcp.pop %v3649
        %v3657 = vmul.f32 1.0, %v3656
        %v3658 = vmul.f32 %v3630, %v3651
        %v3659 = vmul.f32 %v3631, %v3653
        %v3660 = vmul.f32 %v3632, %v3655
        %v3661 = vmul.f32 %v3633, %v3657
        %s3662 = scalar_lea.vmem %s5, 160
        %v3663 = vld [vmem:[%s3662] sm:$0xff]
        %v3664 = vld [vmem:[%s3662 + $0x8] sm:$0xff]
        %v3665 = vld [vmem:[%s3662 + $0x10] sm:$0xff]
        %v3666 = vld [vmem:[%s3662 + $0x18] sm:$0xff]
        %s3667 = scalar_lea.vmem %s6, 160
        %v3668 = vld [vmem:[%s3667] sm:$0xff]
        %v3669 = vld [vmem:[%s3667 + $0x8] sm:$0xff]
        %v3670 = vld [vmem:[%s3667 + $0x10] sm:$0xff]
        %v3671 = vld [vmem:[%s3667 + $0x18] sm:$0xff]
        %3673 = vset.pattern.permute.xlu0 0
        %3674 = vperm.xlu0 %3673, %v3668
        %v3675 = vpop.permute.xlu0 %3674
        %3678 = vset.pattern.permute.xlu0 0
        %3679 = vperm.xlu0 %3678, %v3669
        %v3680 = vpop.permute.xlu0 %3679
        %3683 = vset.pattern.permute.xlu0 0
        %3684 = vperm.xlu0 %3683, %v3670
        %v3685 = vpop.permute.xlu0 %3684
        %3687 = vset.pattern.permute.xlu0 0
        %3688 = vperm.xlu0 %3687, %v3671
        %v3689 = vpop.permute.xlu0 %3688
        %v3691 = vsel %vm763, %v3663, 0
        %v3694 = vsel %vm763, %v3664, 0
        %v3697 = vsel %vm763, %v3665, 0
        %v3700 = vsel %vm763, %v3666, 0
        %3702 = vmatprep.subr.mxu0 %v3659
        %3703 = vmatpush1.msra.mxu0 %v3658
        %3704 = vmatprep.subr.mxu0 0.0
        %3705 = vmatpush1.msra.mxu0 0.0
        %3706 = vmatprep.subr.mxu0 0.0
        %3707 = vmatpush1.msra.mxu0 0.0
        %3708 = vmatprep.subr.mxu0 0.0
        %3709 = vmatpush1.msra.mxu0 0.0
        %3710 = vmatprep.subr.mxu0 0.0
        %3711 = vmatpush1.msra.mxu0 0.0
        %3712 = vmatprep.subr.mxu0 0.0
        %3713 = vmatpush1.msra.mxu0 0.0
        %3714 = vmatprep.subr.mxu0 0.0
        %3715 = vmatpush1.msra.mxu0 0.0
        %3716 = vmatprep.subr.mxu0 0.0
        %3717 = vmatpush1.msra.mxu0 0.0
        %3718 = vmatprep.subr.mxu0 0.0
        %3719 = vmatpush1.msra.mxu0 0.0
        %3720 = vmatprep.subr.mxu0 0.0
        %3721 = vmatpush1.msra.mxu0 0.0
        %3722 = vmatprep.subr.mxu0 0.0
        %3723 = vmatpush1.msra.mxu0 0.0
        %3724 = vmatprep.subr.mxu0 0.0
        %3725 = vmatpush1.msra.mxu0 0.0
        %3726 = vmatprep.subr.mxu0 0.0
        %3727 = vmatpush1.msra.mxu0 0.0
        %3728 = vmatprep.subr.mxu0 0.0
        %3729 = vmatpush1.msra.mxu0 0.0
        %3730 = vmatprep.subr.mxu0 0.0
        %3731 = vmatpush1.msra.mxu0 0.0
        %3732 = vmatprep.subr.mxu0 0.0
        %3733 = vmatpush1.msra.mxu0 0.0
        %3734 = vmatprep.subr.mxu0 0.0
        %3735 = vmatpush1.msra.mxu0 0.0
        %3736 = vmatprep.subr.mxu0 0.0
        %3737 = vmatpush1.msra.mxu0 0.0
        %3738 = vmatprep.subr.mxu0 0.0
        %3739 = vmatpush1.msra.mxu0 0.0
        %3740 = vmatprep.subr.mxu0 0.0
        %3741 = vmatpush1.msra.mxu0 0.0
        %3742 = vmatprep.subr.mxu0 0.0
        %3743 = vmatpush1.msra.mxu0 0.0
        %3744 = vmatprep.subr.mxu0 0.0
        %3745 = vmatpush1.msra.mxu0 0.0
        %3746 = vmatprep.subr.mxu0 0.0
        %3747 = vmatpush1.msra.mxu0 0.0
        %3748 = vmatprep.subr.mxu0 0.0
        %3749 = vmatpush1.msra.mxu0 0.0
        %3750 = vmatprep.subr.mxu0 0.0
        %3751 = vmatpush1.msra.mxu0 0.0
        %3752 = vmatprep.subr.mxu0 0.0
        %3753 = vmatpush1.msra.mxu0 0.0
        %3754 = vmatprep.subr.mxu0 0.0
        %3755 = vmatpush1.msra.mxu0 0.0
        %3756 = vmatprep.subr.mxu0 0.0
        %3757 = vmatpush1.msra.mxu0 0.0
        %3758 = vmatprep.subr.mxu0 0.0
        %3759 = vmatpush1.msra.mxu0 0.0
        %3760 = vmatprep.subr.mxu0 0.0
        %3761 = vmatpush1.msra.mxu0 0.0
        %3762 = vmatprep.subr.mxu0 0.0
        %3763 = vmatpush1.msra.mxu0 0.0
        %3764 = vmatprep.subr.mxu0 0.0
        %3765 = vmatpush1.msra.mxu0 0.0
        %3766 = vmatprep.mubr.f32.mxu0 0.0
        %3767 = vmatmul.mubr.f32.gmra.mrb[0].mxu0 %v3691
        %v3768 = vpop.f32.mrb[0].mxu0
        %v3769 = vadd.f32 %v3675, %v3768
        %v3770 = vpop.f32.mrb[0].mxu0
        %v3771 = vadd.f32 %v3675, %v3770
        %3772 = vmatprep.mubr.f32.mxu0 0.0
        %3773 = vmatmul.mubr.f32.gmra.mrb[0].mxu0 %v3694
        %v3774 = vpop.f32.mrb[0].mxu0
        %v3775 = vadd.f32 %v3680, %v3774
        %v3776 = vpop.f32.mrb[0].mxu0
        %v3777 = vadd.f32 %v3680, %v3776
        %3778 = vmatprep.mubr.f32.mxu0 0.0
        %3779 = vmatmul.mubr.f32.gmra.mrb[0].mxu0 %v3697
        %v3780 = vpop.f32.mrb[0].mxu0
        %v3781 = vpop.f32.mrb[0].mxu0
        %3782 = vmatprep.mubr.f32.mxu0 0.0
        %3783 = vmatmul.mubr.f32.gmra.mrb[0].mxu0 %v3700
        %v3784 = vpop.f32.mrb[0].mxu0
        %v3785 = vpop.f32.mrb[0].mxu0
        %3786 = vdwg.mxu0
        %3787 = vmatprep.subr.mxu0 %v3661
        %3788 = vmatpush1.msra.mxu0 %v3660
        %3789 = vmatprep.subr.mxu0 0.0
        %3790 = vmatpush1.msra.mxu0 0.0
        %3791 = vmatprep.subr.mxu0 0.0
        %3792 = vmatpush1.msra.mxu0 0.0
        %3793 = vmatprep.subr.mxu0 0.0
        %3794 = vmatpush1.msra.mxu0 0.0
        %3795 = vmatprep.subr.mxu0 0.0
        %3796 = vmatpush1.msra.mxu0 0.0
        %3797 = vmatprep.subr.mxu0 0.0
        %3798 = vmatpush1.msra.mxu0 0.0
        %3799 = vmatprep.subr.mxu0 0.0
        %3800 = vmatpush1.msra.mxu0 0.0
        %3801 = vmatprep.subr.mxu0 0.0
        %3802 = vmatpush1.msra.mxu0 0.0
        %3803 = vmatprep.subr.mxu0 0.0
        %3804 = vmatpush1.msra.mxu0 0.0
        %3805 = vmatprep.subr.mxu0 0.0
        %3806 = vmatpush1.msra.mxu0 0.0
        %3807 = vmatprep.subr.mxu0 0.0
        %3808 = vmatpush1.msra.mxu0 0.0
        %3809 = vmatprep.subr.mxu0 0.0
        %3810 = vmatpush1.msra.mxu0 0.0
        %3811 = vmatprep.subr.mxu0 0.0
        %3812 = vmatpush1.msra.mxu0 0.0
        %3813 = vmatprep.subr.mxu0 0.0
        %3814 = vmatpush1.msra.mxu0 0.0
        %3815 = vmatprep.subr.mxu0 0.0
        %3816 = vmatpush1.msra.mxu0 0.0
        %3817 = vmatprep.subr.mxu0 0.0
        %3818 = vmatpush1.msra.mxu0 0.0
        %3819 = vmatprep.subr.mxu0 0.0
        %3820 = vmatpush1.msra.mxu0 0.0
        %3821 = vmatprep.subr.mxu0 0.0
        %3822 = vmatpush1.msra.mxu0 0.0
        %3823 = vmatprep.subr.mxu0 0.0
        %3824 = vmatpush1.msra.mxu0 0.0
        %3825 = vmatprep.subr.mxu0 0.0
        %3826 = vmatpush1.msra.mxu0 0.0
        %3827 = vmatprep.subr.mxu0 0.0
        %3828 = vmatpush1.msra.mxu0 0.0
        %3829 = vmatprep.subr.mxu0 0.0
        %3830 = vmatpush1.msra.mxu0 0.0
        %3831 = vmatprep.subr.mxu0 0.0
        %3832 = vmatpush1.msra.mxu0 0.0
        %3833 = vmatprep.subr.mxu0 0.0
        %3834 = vmatpush1.msra.mxu0 0.0
        %3835 = vmatprep.subr.mxu0 0.0
        %3836 = vmatpush1.msra.mxu0 0.0
        %3837 = vmatprep.subr.mxu0 0.0
        %3838 = vmatpush1.msra.mxu0 0.0
        %3839 = vmatprep.subr.mxu0 0.0
        %3840 = vmatpush1.msra.mxu0 0.0
        %3841 = vmatprep.subr.mxu0 0.0
        %3842 = vmatpush1.msra.mxu0 0.0
        %3843 = vmatprep.subr.mxu0 0.0
        %3844 = vmatpush1.msra.mxu0 0.0
        %3845 = vmatprep.subr.mxu0 0.0
        %3846 = vmatpush1.msra.mxu0 0.0
        %3847 = vmatprep.subr.mxu0 0.0
        %3848 = vmatpush1.msra.mxu0 0.0
        %3849 = vmatprep.subr.mxu0 0.0
        %3850 = vmatpush1.msra.mxu0 0.0
        %3851 = vmatprep.mubr.f32.mxu0 0.0
        %3852 = vmatmul.mubr.f32.gmra.mrb[0].mxu0 %v3691
        %v3853 = vpop.f32.mrb[0].mxu0
        %v3854 = vadd.f32 %v3675, %v3853
        %v3855 = vpop.f32.mrb[0].mxu0
        %v3856 = vadd.f32 %v3675, %v3855
        %3857 = vmatprep.mubr.f32.mxu0 0.0
        %3858 = vmatmul.mubr.f32.gmra.mrb[0].mxu0 %v3694
        %v3859 = vpop.f32.mrb[0].mxu0
        %v3860 = vadd.f32 %v3680, %v3859
        %v3861 = vpop.f32.mrb[0].mxu0
        %v3862 = vadd.f32 %v3680, %v3861
        %3863 = vmatprep.mubr.f32.mxu0 0.0
        %3864 = vmatmul.mubr.f32.gmra.mrb[0].mxu0 %v3697
        %v3865 = vpop.f32.mrb[0].mxu0
        %v3866 = vpop.f32.mrb[0].mxu0
        %3867 = vmatprep.mubr.f32.mxu0 0.0
        %3868 = vmatmul.mubr.f32.gmra.mrb[0].mxu0 %v3700
        %v3869 = vpop.f32.mrb[0].mxu0
        %v3870 = vpop.f32.mrb[0].mxu0
        %3871 = vdwg.mxu0
        %v3872 = vadd.f32 %v3298, %v3769
        %v3873 = vadd.f32 %v3299, %v3771
        %v3874 = vadd.f32 %v3300, %v3854
        %v3875 = vadd.f32 %v3301, %v3856
        %v3876 = vadd.f32 %v3302, %v3775
        %v3877 = vadd.f32 %v3303, %v3777
        %v3878 = vadd.f32 %v3304, %v3860
        %v3879 = vadd.f32 %v3305, %v3862
        %v3880 = vmul.f32 %v3872, 0.4082483
        %v3881 = vmul.f32 %v3873, 0.4082483
        %v3882 = vmul.f32 %v3874, 0.4082483
        %v3883 = vmul.f32 %v3875, 0.4082483
        %v3884 = vmul.f32 %v3876, 0.4082483
        %v3885 = vmul.f32 %v3877, 0.4082483
        %v3886 = vmul.f32 %v3878, 0.4082483
        %v3887 = vmul.f32 %v3879, 0.4082483
        %v3888 = vld [vmem:[%s7] sm:$0xff]
        %v3889 = vld [vmem:[%s7 + $0x8] sm:$0xff]
        %3891 = vset.pattern.permute.xlu0 0
        %3892 = vperm.xlu0 %3891, %v3888
        %v3893 = vpop.permute.xlu0 %3892
        %3896 = vset.pattern.permute.xlu0 0
        %3897 = vperm.xlu0 %3896, %v3889
        %v3898 = vpop.permute.xlu0 %3897
        %v3900 = vmul.f32 %v3893, %v3880
        %v3901 = vmul.f32 %v3893, %v3881
        %v3902 = vmul.f32 %v3893, %v3882
        %v3903 = vmul.f32 %v3893, %v3883
        %v3904 = vmul.f32 %v3898, %v3884
        %v3905 = vmul.f32 %v3898, %v3885
        %v3906 = vmul.f32 %v3898, %v3886
        %v3907 = vmul.f32 %v3898, %v3887
        %v3908 = vadd.f32 %v3900, %v3904
        %v3909 = vrot.slane %v3908, 4
        %v3910 = vadd.f32 %v3908, %v3909
        %v3911 = vrot.slane %v3910, 2
        %v3912 = vadd.f32 %v3910, %v3911
        %v3913 = vrot.slane %v3912, 1
        %v3914 = vadd.f32 %v3912, %v3913
        %v3915 = vadd.f32 %v3901, %v3905
        %v3916 = vrot.slane %v3915, 4
        %v3917 = vadd.f32 %v3915, %v3916
        %v3918 = vrot.slane %v3917, 2
        %v3919 = vadd.f32 %v3917, %v3918
        %v3920 = vrot.slane %v3919, 1
        %v3921 = vadd.f32 %v3919, %v3920
        %v3922 = vadd.f32 %v3902, %v3906
        %v3923 = vrot.slane %v3922, 4
        %v3924 = vadd.f32 %v3922, %v3923
        %v3925 = vrot.slane %v3924, 2
        %v3926 = vadd.f32 %v3924, %v3925
        %v3927 = vrot.slane %v3926, 1
        %v3928 = vadd.f32 %v3926, %v3927
        %v3929 = vadd.f32 %v3903, %v3907
        %v3930 = vrot.slane %v3929, 4
        %v3931 = vadd.f32 %v3929, %v3930
        %v3932 = vrot.slane %v3931, 2
        %v3933 = vadd.f32 %v3931, %v3932
        %v3934 = vrot.slane %v3933, 1
        %v3935 = vadd.f32 %v3933, %v3934
        %v3936 = vld [vmem:[#allocation3] sm:$0x1]
        %3938 = vset.pattern.permute.xlu0 0
        %3939 = vperm.xlu0 %3938, %v3936
        %v3940 = vpop.permute.xlu0 %3939
        %v3942 = vlaneseq
        %v3943 = vshrl.u32 %v3942, 7
        %v3944 = vsub.s32 0, %v3943
        %v3945 = vrot.slane %v3940, %v3944
        %v3946 = vadd.f32 %v3914, %v3945
        %v3947 = vadd.f32 %v3921, %v3945
        %v3948 = vadd.f32 %v3928, %v3945
        %v3949 = vadd.f32 %v3935, %v3945
        %v3954 = vcombine.low %v3946, %v3947
        %v3955 = vcombine.low %v3948, %v3949
        %v3957 = vunpack.c.l.s4 1966171168
        %v3958 = vunpack.c.0.s8 %v3957
        %v3959 = vlaneseq
        %v3960 = vshrl.u32 %v3959, 7
        %v3961 = vsub.s32 %v3958, %v3960
        %v3962 = vrot.slane %v3954, %v3961
        %v3964 = vunpack.c.l.s4 1966171168
        %v3965 = vunpack.c.0.s8 %v3964
        %v3966 = vlaneseq
        %v3967 = vshrl.u32 %v3966, 7
        %v3968 = vsub.s32 %v3965, %v3967
        %v3969 = vrot.slane %v3955, %v3968
        %v3970 = vcombine.low %v3962, %v3969
        %v3972 = vunpack.c.l.s4 1966171168
        %v3973 = vunpack.c.0.s8 %v3972
        %v3974 = vlaneseq
        %v3975 = vshrl.u32 %v3974, 7
        %v3976 = vsub.s32 %v3973, %v3975
        %v3977 = vrot.slane %v3970, %v3976
        %v3979 = vlaneseq
        %vm3980 = vcmp.ge.s32.totalorder %v3979, 0
        %vm3981 = vcmp.lt.s32.totalorder %v3979, 512
        %vm3982 = vmand %vm3980, %vm3981
        %3983 = vst.msk [vmem:[%s325] sm:$0xf] %vm3982, %v3977
        %s3984 = sand.u32 %s227, 1
        %s3985 = scalar_lea.sflag [#allocation5], %s3984
        %s3986 = sand.u32 %s227, 1
        %s3987 = smul.addr %s3986, 4
        %s3988 = scalar_lea.vmem [#allocation4], %s3987
        // Predicated region
        $region57: #{tpu_custom_call.1} parent=55 // pred_check
          %p3989 = pneg %p237
        $region58: #{tpu_custom_call.1} parent=55 // pred_check_branch
          %3991 = sbr.rel (%p3989) target = $region60
        $region59: #{tpu_custom_call.1} parent=55 // pred_region
          %s3993 = ssub.s32 64, 64
          %3994 = vsyncadd %s3985, %s3993
          %s3995 = smul.addr %s25, 4
          %s3996 = smul.addr %s3995, 16
          %s3997 = scalar_lea.hbm %s9, %s3996
          %s3999 = sshll.u32 %s3988, 4
          %s4000 = int_to_ptr.vmem [resolvable:$true] %s3999
          %4002 = dma.vmem_to_hbm [thread:$0]  %s4000, 64, %s3997, %s3985
        $region60: #{tpu_custom_call.1} parent=55 // pred_fallthru
          _
      $region56: #{tpu_custom_call.1} parent=5 // pred_fallthru
        _
      %p4003 = scmp.le.s32.totalorder 2, %s20
      // Predicated region
      $region61: #{tpu_custom_call.1} parent=5 // pred_check
        %p4004 = pneg %p4003
      $region62: #{tpu_custom_call.1} parent=5 // pred_check_branch
        %4006 = sbr.rel (%p4004) target = $region64
      $region63: #{tpu_custom_call.1} parent=5 // pred_region
        %s4007 = ssub.s32 %s20, 2
        // Predicated region
        $region65: #{tpu_custom_call.1} parent=63 // pred_check
          %p4008 = pneg %p243
        $region66: #{tpu_custom_call.1} parent=63 // pred_check_branch
          %4010 = sbr.rel (%p4008) target = $region68
        $region67: #{tpu_custom_call.1} parent=63 // pred_region
          %s4011 = sand.u32 %s228, 1
          %s4012 = scalar_lea.sflag [#allocation5], %s4011
          %s4013 = sand.u32 %s228, 1
          %s4014 = smul.addr %s4013, 4
          %s4015 = scalar_lea.vmem [#allocation4], %s4014
          %4016 = dma.done %s4012, 64
        $region68: #{tpu_custom_call.1} parent=63 // pred_fallthru
          _
      $region64: #{tpu_custom_call.1} parent=5 // pred_fallthru
        _
    $region6: #{tpu_custom_call.1} parent=1 // loop_footer
      %s24 = sadd.s32 1, %s20
    $region7: #{tpu_custom_call.1} parent=1 // loop_footer_branch
      %19 = sbr.rel target = $region3
    $region8: #{tpu_custom_call.1} parent=1 // loop_exit
      _
    %4017 = vsyncpa [#allocation5], 1
    %s4018 = scalar_lea.sflag [#allocation5], 1
    %4019 = vsyncpa %s4018, 1

</llo_original>
